<compile_context>
chip_gen: v7x
topology: tpu7x:2x2x1
jax: 0.10.0
libtpu: 0.0.40
codegen_flags: <defaults>
</compile_context>

<pallas_src>
import functools
import math

import jax
import jax.numpy as jnp
from jax.experimental import pallas as pl
from jax.experimental.pallas import tpu as pltpu


def _round_up(x, m):
    return (x + m - 1) // m * m


# ----------------------------- Pallas kernels -----------------------------

def _gemm_bias_act_kernel(x_ref, w_ref, b_ref, o_ref, *, relu):
    # x: (tm, Kp) bf16, w: (Kp, Np) bf16, b: (1, Np) f32 -> o: (tm, Np)
    acc = jnp.dot(x_ref[...], w_ref[...], preferred_element_type=jnp.float32)
    acc = acc + b_ref[...]
    if relu:
        acc = jnp.maximum(acc, 0.0)
    o_ref[...] = acc.astype(o_ref.dtype)


def _tail_kernel(p3_ref, ext_ref, w3_ref, b3_ref, w4_ref, b4_ref,
                 w1f_ref, w1e_ref, b1_ref, w2_ref, b2_ref,
                 wq_ref, bq_ref, o_ref, *, bt):
    """Fused conv3 + conv4 + concat + fc1(ReLU) + fc2(ReLU) + fc3."""
    # conv3, evaluated only on the 4x4 output window conv4 reads.
    # p3 rows are (window position p, batch) so each p-slice is contiguous.
    h3 = jnp.dot(p3_ref[0, :, :], w3_ref[...],
                 preferred_element_type=jnp.float32)          # (16*bt, 128)
    h3 = jnp.maximum(h3 + b3_ref[...], 0.0).astype(jnp.bfloat16)

    # conv4 output is 1x1: sum over the 16 window positions.
    acc = jnp.zeros((bt, 128), jnp.float32)
    for p in range(16):
        acc = acc + jnp.dot(h3[p * bt:(p + 1) * bt, :],
                            w4_ref[p * 128:(p + 1) * 128, :],
                            preferred_element_type=jnp.float32)
    h4 = jnp.maximum(acc + b4_ref[...], 0.0).astype(jnp.bfloat16)   # (bt, 128)

    # MLP: fc1 split into flat-part + extras-part (avoids in-kernel concat).
    h = jnp.dot(h4, w1f_ref[...], preferred_element_type=jnp.float32)
    h = h + jnp.dot(ext_ref[0, :, :], w1e_ref[...],
                    preferred_element_type=jnp.float32)
    h = jnp.maximum(h + b1_ref[...], 0.0).astype(jnp.bfloat16)
    h = jnp.dot(h, w2_ref[...], preferred_element_type=jnp.float32)
    h = jnp.maximum(h + b2_ref[...], 0.0)
    # fc3 (N=1) as a VPU/XLU row reduction; replicate q across 128 lanes so
    # the output store stays lane-dense.
    q = jnp.sum(h * wq_ref[...], axis=-1, keepdims=True)            # (bt, 1)
    o_ref[0, :, :] = jnp.broadcast_to(q, (bt, 128)) + bq_ref[...]


# -------------------- Pallas GEMM wrapper (prepped weights) --------------------

def pallas_gemm_bias_act(x, wp, bp, *, relu, out_dtype):
    """y = relu?(x @ wp + bp).  x:(M,Kp) bf16, wp:(Kp,Np) bf16, bp:(1,Np) f32."""
    M, Kp = x.shape
    Kp_w, Np = wp.shape
    assert Kp == Kp_w

    Mp_single = _round_up(max(M, 16), 16)
    # Collapse to ONE grid step whenever input+output double buffers stay well
    # under the 32 MiB scoped-VMEM default (and v7x's 64 MiB physical VMEM):
    # at small batch each conv GEMM is then a single launch / single pipeline
    # stage.  Only tile M (and hand >=2 "parallel" steps to v7x's two
    # TensorCores) when there is real MXU work to split.
    vmem_est = 4 * Mp_single * (Kp + Np)       # bf16 in + bf16 out, 2x buffered
    if vmem_est <= (10 << 20):
        tm, Mp = Mp_single, Mp_single
    else:
        tm = 512
        Mp = _round_up(M, tm)

    xp = x if Mp == M else jnp.pad(x, ((0, Mp - M), (0, 0)))

    out = pl.pallas_call(
        functools.partial(_gemm_bias_act_kernel, relu=relu),
        out_shape=jax.ShapeDtypeStruct((Mp, Np), out_dtype),
        grid=(Mp // tm,),
        in_specs=[
            pl.BlockSpec((tm, Kp), lambda i: (i, 0)),
            pl.BlockSpec((Kp, Np), lambda i: (0, 0)),
            pl.BlockSpec((1, Np), lambda i: (0, 0)),
        ],
        out_specs=pl.BlockSpec((tm, Np), lambda i: (i, 0)),
        compiler_params=pltpu.CompilerParams(
            dimension_semantics=("parallel",)),
    )(xp, wp, bp)
    return out[:M]


# ----------------------- conv = im2col + Pallas matmul -----------------------

def conv2d_relu(x_nhwc, wp, bp, k, stride):
    """Valid-padding strided conv + ReLU via im2col + one Pallas GEMM.

    The output keeps Np=128 lanes (valid channels + zero lanes) so stores stay
    lane-dense and the next layer consumes it without a channel slice.
    """
    B, H, W, C = x_nhwc.shape
    OH = (H - k) // stride + 1
    OW = (W - k) // stride + 1

    # TODO(synk): at training-scale batches, assemble these patches inside the
    # Pallas kernel (VMEM-resident feature map) -- the XLA-materialized patch
    # matrix is up to 13x the input bytes for conv1.
    cols = []
    for i in range(k):
        for j in range(k):
            cols.append(
                x_nhwc[:, i:i + stride * OH:stride, j:j + stride * OW:stride, :])
    patches = jnp.concatenate(cols, axis=-1).reshape(B * OH * OW, k * k * C)

    out = pallas_gemm_bias_act(patches, wp, bp, relu=True,
                               out_dtype=jnp.bfloat16)
    return out.reshape(B, OH, OW, wp.shape[1])


# -------------------------- fused conv3/conv4/MLP tail --------------------------

def fused_tail(conv2_out, extras, prep):
    """conv3 + conv4 + concat + fc1/fc2/fc3 in ONE pallas_call.

    conv2_out: (B,13,13,128) bf16 (64 valid channels + 64 zero lanes).
    extras:    (B,12) f32  -- [speed, gear, rpm, act1, act2, act].
    """
    B = conv2_out.shape[0]
    Bt = min(_round_up(B, 8), 64)      # batch tile; keeps VMEM per step < ~12 MB
    nb = -(-B // Bt)
    Bpad = nb * Bt

    # conv3 im2col restricted to the 4x4 window conv4 reads; rows ordered
    # (window position, batch) so the in-kernel conv4 reduction uses
    # contiguous static slices.
    cols = []
    for ki in range(4):
        for kj in range(4):
            cols.append(conv2_out[:, ki:ki + 8:2, kj:kj + 8:2, :])   # (B,4,4,128)
    p3 = jnp.concatenate(cols, axis=-1).reshape(B, 16, 2048)
    p3 = jnp.transpose(p3, (1, 0, 2))                                # (16,B,2048)
    p3 = jnp.pad(p3, ((0, 0), (0, Bpad - B), (0, 0)))
    p3 = p3.reshape(16, nb, Bt, 2048).transpose(1, 0, 2, 3)
    p3 = p3.reshape(nb, 16 * Bt, 2048).astype(jnp.bfloat16)

    ext = jnp.pad(extras.astype(jnp.bfloat16), ((0, Bpad - B), (0, 128 - 12)))
    ext = ext.reshape(nb, Bt, 128)

    out = pl.pallas_call(
        functools.partial(_tail_kernel, bt=Bt),
        out_shape=jax.ShapeDtypeStruct((nb, Bt, 128), jnp.float32),
        grid=(nb,),
        in_specs=[
            pl.BlockSpec((1, 16 * Bt, 2048), lambda i: (i, 0, 0)),   # conv3 patches
            pl.BlockSpec((1, Bt, 128), lambda i: (i, 0, 0)),         # extras
            pl.BlockSpec((2048, 128), lambda i: (0, 0)),             # conv3 w
            pl.BlockSpec((1, 128), lambda i: (0, 0)),                # conv3 b
            pl.BlockSpec((2048, 128), lambda i: (0, 0)),             # conv4 w
            pl.BlockSpec((1, 128), lambda i: (0, 0)),                # conv4 b
            pl.BlockSpec((128, 256), lambda i: (0, 0)),              # fc1 w (flat)
            pl.BlockSpec((128, 256), lambda i: (0, 0)),              # fc1 w (extras)
            pl.BlockSpec((1, 256), lambda i: (0, 0)),                # fc1 b
            pl.BlockSpec((256, 256), lambda i: (0, 0)),              # fc2 w
            pl.BlockSpec((1, 256), lambda i: (0, 0)),                # fc2 b
            pl.BlockSpec((1, 256), lambda i: (0, 0)),                # fc3 w (row)
            pl.BlockSpec((1, 128), lambda i: (0, 0)),                # fc3 b (bcast)
        ],
        out_specs=pl.BlockSpec((1, Bt, 128), lambda i: (i, 0, 0)),
        compiler_params=pltpu.CompilerParams(
            dimension_semantics=("parallel",)),
    )(p3, ext, prep["conv3_w"], prep["conv3_b"], prep["conv4_w"],
      prep["conv4_b"], prep["fc1_w_flat"], prep["fc1_w_ext"], prep["fc1_b"],
      prep["fc2_w"], prep["fc2_b"], prep["fc3_w"], prep["fc3_b"])

    return out.reshape(nb * Bt, 128)[:B, 0]                          # (B,)


# ----------------------------- parameter init -----------------------------

def _init_conv(key, cout, cin, kh, kw):
    fan_in = cin * kh * kw
    bound = 1.0 / math.sqrt(fan_in)
    kw_, kb_ = jax.random.split(key)
    w = jax.random.uniform(kw_, (cout, cin, kh, kw), jnp.float32, -bound, bound)
    b = jax.random.uniform(kb_, (cout,), jnp.float32, -bound, bound)
    return w, b


def _init_linear(key, din, dout):
    bound = 1.0 / math.sqrt(din)
    kw_, kb_ = jax.random.split(key)
    w = jax.random.uniform(kw_, (din, dout), jnp.float32, -bound, bound)
    b = jax.random.uniform(kb_, (dout,), jnp.float32, -bound, bound)
    return w, b


def init_params(key):
    ks = jax.random.split(key, 7)
    p = {}
    p["conv1_w"], p["conv1_b"] = _init_conv(ks[0], 64, 4, 8, 8)
    p["conv2_w"], p["conv2_b"] = _init_conv(ks[1], 64, 64, 4, 4)
    p["conv3_w"], p["conv3_b"] = _init_conv(ks[2], 128, 64, 4, 4)
    p["conv4_w"], p["conv4_b"] = _init_conv(ks[3], 128, 128, 4, 4)
    # flat_features = 128 * 1 * 1 = 128 ; mlp input = 128 + 12 = 140
    p["fc1_w"], p["fc1_b"] = _init_linear(ks[4], 140, 256)
    p["fc2_w"], p["fc2_b"] = _init_linear(ks[5], 256, 256)
    p["fc3_w"], p["fc3_b"] = _init_linear(ks[6], 256, 1)
    return p


def prepare_params(p):
    """One-time weight prep: GEMM layout, zero-pad channels to 128 lanes so
    inter-layer activations stay lane-dense, cast matmul operands to bf16
    (biases stay f32 for the f32 epilogue)."""
    prep = {}

    def conv_prep(w, b, cin_pad, cout_pad):
        cout, cin, kh, kw = w.shape
        w2 = jnp.transpose(w, (2, 3, 1, 0))                  # (kh, kw, cin, cout)
        w2 = jnp.pad(w2, ((0, 0), (0, 0),
                          (0, cin_pad - cin), (0, cout_pad - cout)))
        w2 = w2.reshape(kh * kw * cin_pad, cout_pad).astype(jnp.bfloat16)
        b2 = jnp.pad(b, (0, cout_pad - cout)).reshape(1, cout_pad)
        return w2, b2.astype(jnp.float32)

    prep["conv1_w"], prep["conv1_b"] = conv_prep(p["conv1_w"], p["conv1_b"], 4, 128)
    prep["conv2_w"], prep["conv2_b"] = conv_prep(p["conv2_w"], p["conv2_b"], 128, 128)
    prep["conv3_w"], prep["conv3_b"] = conv_prep(p["conv3_w"], p["conv3_b"], 128, 128)
    prep["conv4_w"], prep["conv4_b"] = conv_prep(p["conv4_w"], p["conv4_b"], 128, 128)

    # fc1 split: torch concat order is [speed,gear,rpm, flat(128), act1,act2,act].
    w1 = p["fc1_w"]                                              # (140, 256)
    prep["fc1_w_flat"] = w1[3:131, :].astype(jnp.bfloat16)       # (128, 256)
    w1e = jnp.concatenate([w1[0:3, :], w1[131:140, :]], axis=0)  # (12, 256)
    prep["fc1_w_ext"] = jnp.pad(w1e, ((0, 128 - 12), (0, 0))).astype(jnp.bfloat16)
    prep["fc1_b"] = p["fc1_b"].reshape(1, -1).astype(jnp.float32)
    prep["fc2_w"] = p["fc2_w"].astype(jnp.bfloat16)
    prep["fc2_b"] = p["fc2_b"].reshape(1, -1).astype(jnp.float32)
    # fc3 applied as a row-reduction inside the fused tail kernel.
    prep["fc3_w"] = p["fc3_w"].reshape(1, -1).astype(jnp.float32)            # (1, 256)
    prep["fc3_b"] = jnp.tile(p["fc3_b"].reshape(1, 1), (1, 128)).astype(jnp.float32)
    return prep


# ----------------------------- forward pass -----------------------------

def vanilla_cnn_q_forward(prep, obs, act):
    speed, gear, rpm, images, act1, act2 = obs

    # PyTorch convs are NCHW; convert once to NHWC and cast to bf16 for the MXU.
    x = jnp.transpose(images, (0, 2, 3, 1)).astype(jnp.bfloat16)
    x = conv2d_relu(x, prep["conv1_w"], prep["conv1_b"], 8, 2)   # (B,29,29,128)
    x = conv2d_relu(x, prep["conv2_w"], prep["conv2_b"], 4, 2)   # (B,13,13,128)

    extras = jnp.concatenate([speed, gear, rpm, act1, act2, act], axis=-1)  # (B,12)
    return fused_tail(x, extras, prep)                           # (B,)


# ----------------------------- main -----------------------------

if __name__ == "__main__":
    key = jax.random.PRNGKey(0)
    kp_, kd = jax.random.split(key)
    params = init_params(kp_)
    prep = prepare_params(params)   # one-time transpose / pad / bf16 cast

    B = 2  # small batch; spatial must be 64x64 / 4 channels per the architecture
    ks = jax.random.split(kd, 7)
    speed = jax.random.normal(ks[0], (B, 1), jnp.float32)
    gear = jax.random.normal(ks[1], (B, 1), jnp.float32)
    rpm = jax.random.normal(ks[2], (B, 1), jnp.float32)
    images = jax.random.normal(ks[3], (B, 4, 64, 64), jnp.float32)  # NCHW
    act1 = jax.random.normal(ks[4], (B, 3), jnp.float32)
    act2 = jax.random.normal(ks[5], (B, 3), jnp.float32)
    act = jax.random.normal(ks[6], (B, 3), jnp.float32)

    obs = (speed, gear, rpm, images, act1, act2)

    fwd = jax.jit(vanilla_cnn_q_forward)
    q = fwd(prep, obs, act)
    q = jax.block_until_ready(q)
    assert q.shape == (B,)
    print("KERNEL_OK")
</pallas_src>

<mosaic_0001>
module attributes {stable_mosaic.version = 11 : i64} {
  func.func @_gemm_bias_act_kernel(%arg0: i32, %arg1: memref<1696x256xbf16, #tpu.memory_space<vmem>>, %arg2: memref<256x128xbf16, #tpu.memory_space<vmem>>, %arg3: memref<1x128xf32, #tpu.memory_space<vmem>>, %arg4: memref<1696x128xbf16, #tpu.memory_space<vmem>>) attributes {dimension_semantics = [#tpu.dimension_semantics<parallel>], iteration_bounds = array<i64: 1>, scalar_prefetch = 0 : i64, scratch_operands = 0 : i64, tpu.core_type = #tpu.core_type<tc>, window_params = [{transform_indices = @transform_0, window_bounds = array<i64: 1696, 256>}, {pipeline_mode = #tpu.pipeline_mode<synchronous>, transform_indices = @transform_1, window_bounds = array<i64: 256, 128>}, {pipeline_mode = #tpu.pipeline_mode<synchronous>, transform_indices = @transform_2, window_bounds = array<i64: 1, 128>}, {transform_indices = @transform_3, window_bounds = array<i64: 1696, 128>}]} {
    %c0 = arith.constant 0 : index
    %c0_0 = arith.constant 0 : index
    %0 = vector.load %arg1[%c0, %c0_0] : memref<1696x256xbf16, #tpu.memory_space<vmem>>, vector<1696x256xbf16>
    %c0_1 = arith.constant 0 : index
    %c0_2 = arith.constant 0 : index
    %1 = vector.load %arg2[%c0_1, %c0_2] : memref<256x128xbf16, #tpu.memory_space<vmem>>, vector<256x128xbf16>
    %cst = arith.constant dense<0.000000e+00> : vector<1696x128xf32>
    %2 = tpu.matmul %0, %1, %cst {dimension_numbers = #tpu.dot_dimension_numbers<[1], [0], [0], [1], [0, 0, 1, 1], [], []>} : vector<1696x256xbf16>, vector<256x128xbf16>, vector<1696x128xf32> -> vector<1696x128xf32>
    %c0_3 = arith.constant 0 : index
    %c0_4 = arith.constant 0 : index
    %3 = vector.load %arg3[%c0_3, %c0_4] : memref<1x128xf32, #tpu.memory_space<vmem>>, vector<1x128xf32>
    %4 = vector.broadcast %3 : vector<1x128xf32> to vector<1696x128xf32>
    %5 = arith.addf %2, %4 : vector<1696x128xf32>
    %cst_5 = arith.constant 0.000000e+00 : f32
    %6 = vector.broadcast %cst_5 : f32 to vector<1696x128xf32>
    %7 = arith.maximumf %5, %6 : vector<1696x128xf32>
    %8 = arith.truncf %7 : vector<1696x128xf32> to vector<1696x128xbf16>
    %c0_6 = arith.constant 0 : index
    %c0_7 = arith.constant 0 : index
    %9 = vector.load %arg4[%c0_6, %c0_7] : memref<1696x128xbf16, #tpu.memory_space<vmem>>, vector<1696x128xbf16>
    tpu.vector_store %arg4[%c0_6, %c0_7], %8 {strides = array<i32>} : memref<1696x128xbf16, #tpu.memory_space<vmem>>, vector<1696x128xbf16>,
    return
  }
  func.func @transform_0(%arg0: i32) -> (i32, i32) {
    %c0_i32 = arith.constant 0 : i32
    %c0_i32_0 = arith.constant 0 : i32
    return %arg0, %c0_i32 : i32, i32
  }
  func.func @transform_1(%arg0: i32) -> (i32, i32) {
    %c0_i32 = arith.constant 0 : i32
    %c0_i32_0 = arith.constant 0 : i32
    %c0_i32_1 = arith.constant 0 : i32
    return %c0_i32, %c0_i32_0 : i32, i32
  }
  func.func @transform_2(%arg0: i32) -> (i32, i32) {
    %c0_i32 = arith.constant 0 : i32
    %c0_i32_0 = arith.constant 0 : i32
    %c0_i32_1 = arith.constant 0 : i32
    return %c0_i32, %c0_i32_0 : i32, i32
  }
  func.func @transform_3(%arg0: i32) -> (i32, i32) {
    %c0_i32 = arith.constant 0 : i32
    %c0_i32_0 = arith.constant 0 : i32
    return %arg0, %c0_i32 : i32, i32
  }
}

module attributes {stable_mosaic.version = 11 : i64} {
  func.func @_gemm_bias_act_kernel(%arg0: i32, %arg1: memref<352x2048xbf16, #tpu.memory_space<vmem>>, %arg2: memref<2048x128xbf16, #tpu.memory_space<vmem>>, %arg3: memref<1x128xf32, #tpu.memory_space<vmem>>, %arg4: memref<352x128xbf16, #tpu.memory_space<vmem>>) attributes {dimension_semantics = [#tpu.dimension_semantics<parallel>], iteration_bounds = array<i64: 1>, scalar_prefetch = 0 : i64, scratch_operands = 0 : i64, tpu.core_type = #tpu.core_type<tc>, window_params = [{transform_indices = @transform_0, window_bounds = array<i64: 352, 2048>}, {pipeline_mode = #tpu.pipeline_mode<synchronous>, transform_indices = @transform_1, window_bounds = array<i64: 2048, 128>}, {pipeline_mode = #tpu.pipeline_mode<synchronous>, transform_indices = @transform_2, window_bounds = array<i64: 1, 128>}, {transform_indices = @transform_3, window_bounds = array<i64: 352, 128>}]} {
    %c0 = arith.constant 0 : index
    %c0_0 = arith.constant 0 : index
    %0 = vector.load %arg1[%c0, %c0_0] : memref<352x2048xbf16, #tpu.memory_space<vmem>>, vector<352x2048xbf16>
    %c0_1 = arith.constant 0 : index
    %c0_2 = arith.constant 0 : index
    %1 = vector.load %arg2[%c0_1, %c0_2] : memref<2048x128xbf16, #tpu.memory_space<vmem>>, vector<2048x128xbf16>
    %cst = arith.constant dense<0.000000e+00> : vector<352x128xf32>
    %2 = tpu.matmul %0, %1, %cst {dimension_numbers = #tpu.dot_dimension_numbers<[1], [0], [0], [1], [0, 0, 1, 1], [], []>} : vector<352x2048xbf16>, vector<2048x128xbf16>, vector<352x128xf32> -> vector<352x128xf32>
    %c0_3 = arith.constant 0 : index
    %c0_4 = arith.constant 0 : index
    %3 = vector.load %arg3[%c0_3, %c0_4] : memref<1x128xf32, #tpu.memory_space<vmem>>, vector<1x128xf32>
    %4 = vector.broadcast %3 : vector<1x128xf32> to vector<352x128xf32>
    %5 = arith.addf %2, %4 : vector<352x128xf32>
    %cst_5 = arith.constant 0.000000e+00 : f32
    %6 = vector.broadcast %cst_5 : f32 to vector<352x128xf32>
    %7 = arith.maximumf %5, %6 : vector<352x128xf32>
    %8 = arith.truncf %7 : vector<352x128xf32> to vector<352x128xbf16>
    %c0_6 = arith.constant 0 : index
    %c0_7 = arith.constant 0 : index
    %9 = vector.load %arg4[%c0_6, %c0_7] : memref<352x128xbf16, #tpu.memory_space<vmem>>, vector<352x128xbf16>
    tpu.vector_store %arg4[%c0_6, %c0_7], %8 {strides = array<i32>} : memref<352x128xbf16, #tpu.memory_space<vmem>>, vector<352x128xbf16>,
    return
  }
  func.func @transform_0(%arg0: i32) -> (i32, i32) {
    %c0_i32 = arith.constant 0 : i32
    %c0_i32_0 = arith.constant 0 : i32
    return %arg0, %c0_i32 : i32, i32
  }
  func.func @transform_1(%arg0: i32) -> (i32, i32) {
    %c0_i32 = arith.constant 0 : i32
    %c0_i32_0 = arith.constant 0 : i32
    %c0_i32_1 = arith.constant 0 : i32
    return %c0_i32, %c0_i32_0 : i32, i32
  }
  func.func @transform_2(%arg0: i32) -> (i32, i32) {
    %c0_i32 = arith.constant 0 : i32
    %c0_i32_0 = arith.constant 0 : i32
    %c0_i32_1 = arith.constant 0 : i32
    return %c0_i32, %c0_i32_0 : i32, i32
  }
  func.func @transform_3(%arg0: i32) -> (i32, i32) {
    %c0_i32 = arith.constant 0 : i32
    %c0_i32_0 = arith.constant 0 : i32
    return %arg0, %c0_i32 : i32, i32
  }
}

module attributes {stable_mosaic.version = 11 : i64} {
  func.func @_tail_kernel(%arg0: i32, %arg1: memref<1x128x2048xbf16, #tpu.memory_space<vmem>>, %arg2: memref<1x8x128xbf16, #tpu.memory_space<vmem>>, %arg3: memref<2048x128xbf16, #tpu.memory_space<vmem>>, %arg4: memref<1x128xf32, #tpu.memory_space<vmem>>, %arg5: memref<2048x128xbf16, #tpu.memory_space<vmem>>, %arg6: memref<1x128xf32, #tpu.memory_space<vmem>>, %arg7: memref<128x256xbf16, #tpu.memory_space<vmem>>, %arg8: memref<128x256xbf16, #tpu.memory_space<vmem>>, %arg9: memref<1x256xf32, #tpu.memory_space<vmem>>, %arg10: memref<256x256xbf16, #tpu.memory_space<vmem>>, %arg11: memref<1x256xf32, #tpu.memory_space<vmem>>, %arg12: memref<1x256xf32, #tpu.memory_space<vmem>>, %arg13: memref<1x128xf32, #tpu.memory_space<vmem>>, %arg14: memref<1x8x128xf32, #tpu.memory_space<vmem>>) attributes {dimension_semantics = [#tpu.dimension_semantics<parallel>], iteration_bounds = array<i64: 1>, scalar_prefetch = 0 : i64, scratch_operands = 0 : i64, tpu.core_type = #tpu.core_type<tc>, window_params = [{transform_indices = @transform_0, window_bounds = array<i64: 1, 128, 2048>}, {transform_indices = @transform_1, window_bounds = array<i64: 1, 8, 128>}, {pipeline_mode = #tpu.pipeline_mode<synchronous>, transform_indices = @transform_2, window_bounds = array<i64: 2048, 128>}, {pipeline_mode = #tpu.pipeline_mode<synchronous>, transform_indices = @transform_3, window_bounds = array<i64: 1, 128>}, {pipeline_mode = #tpu.pipeline_mode<synchronous>, transform_indices = @transform_4, window_bounds = array<i64: 2048, 128>}, {pipeline_mode = #tpu.pipeline_mode<synchronous>, transform_indices = @transform_5, window_bounds = array<i64: 1, 128>}, {pipeline_mode = #tpu.pipeline_mode<synchronous>, transform_indices = @transform_6, window_bounds = array<i64: 128, 256>}, {pipeline_mode = #tpu.pipeline_mode<synchronous>, transform_indices = @transform_7, window_bounds = array<i64: 128, 256>}, {pipeline_mode = #tpu.pipeline_mode<synchronous>, transform_indices = @transform_8, window_bounds = array<i64: 1, 256>}, {pipeline_mode = #tpu.pipeline_mode<synchronous>, transform_indices = @transform_9, window_bounds = array<i64: 256, 256>}, {pipeline_mode = #tpu.pipeline_mode<synchronous>, transform_indices = @transform_10, window_bounds = array<i64: 1, 256>}, {pipeline_mode = #tpu.pipeline_mode<synchronous>, transform_indices = @transform_11, window_bounds = array<i64: 1, 256>}, {pipeline_mode = #tpu.pipeline_mode<synchronous>, transform_indices = @transform_12, window_bounds = array<i64: 1, 128>}, {transform_indices = @transform_13, window_bounds = array<i64: 1, 8, 128>}]} {
    %c0 = arith.constant 0 : index
    %c0_0 = arith.constant 0 : index
    %c0_1 = arith.constant 0 : index
    %0 = vector.load %arg1[%c0, %c0_0, %c0_1] : memref<1x128x2048xbf16, #tpu.memory_space<vmem>>, vector<1x128x2048xbf16>
    %1 = vector.shape_cast %0 : vector<1x128x2048xbf16> to vector<128x2048xbf16>
    %c0_2 = arith.constant 0 : index
    %c0_3 = arith.constant 0 : index
    %2 = vector.load %arg3[%c0_2, %c0_3] : memref<2048x128xbf16, #tpu.memory_space<vmem>>, vector<2048x128xbf16>
    %cst = arith.constant dense<0.000000e+00> : vector<128x128xf32>
    %3 = tpu.matmul %1, %2, %cst {dimension_numbers = #tpu.dot_dimension_numbers<[1], [0], [0], [1], [0, 0, 1, 1], [], []>} : vector<128x2048xbf16>, vector<2048x128xbf16>, vector<128x128xf32> -> vector<128x128xf32>
    %c0_4 = arith.constant 0 : index
    %c0_5 = arith.constant 0 : index
    %4 = vector.load %arg4[%c0_4, %c0_5] : memref<1x128xf32, #tpu.memory_space<vmem>>, vector<1x128xf32>
    %5 = vector.broadcast %4 : vector<1x128xf32> to vector<128x128xf32>
    %6 = arith.addf %3, %5 : vector<128x128xf32>
    %cst_6 = arith.constant 0.000000e+00 : f32
    %7 = vector.broadcast %cst_6 : f32 to vector<128x128xf32>
    %8 = arith.maximumf %6, %7 : vector<128x128xf32>
    %9 = arith.truncf %8 : vector<128x128xf32> to vector<128x128xbf16>
    %cst_7 = arith.constant 0.000000e+00 : f32
    %10 = vector.broadcast %cst_7 : f32 to vector<8x128xf32>
    %11 = vector.extract_strided_slice %9 {offsets = [0, 0], sizes = [8, 128], strides = [1, 1]} : vector<128x128xbf16> to vector<8x128xbf16>
    %c0_8 = arith.constant 0 : index
    %c0_9 = arith.constant 0 : index
    %12 = vector.load %arg5[%c0_8, %c0_9] : memref<2048x128xbf16, #tpu.memory_space<vmem>>, vector<128x128xbf16>
    %cst_10 = arith.constant dense<0.000000e+00> : vector<8x128xf32>
    %13 = tpu.matmul %11, %12, %cst_10 {dimension_numbers = #tpu.dot_dimension_numbers<[1], [0], [0], [1], [0, 0, 1, 1], [], []>} : vector<8x128xbf16>, vector<128x128xbf16>, vector<8x128xf32> -> vector<8x128xf32>
    %14 = arith.addf %10, %13 : vector<8x128xf32>
    %15 = vector.extract_strided_slice %9 {offsets = [8, 0], sizes = [8, 128], strides = [1, 1]} : vector<128x128xbf16> to vector<8x128xbf16>
    %c128 = arith.constant 128 : index
    %c0_11 = arith.constant 0 : index
    %16 = vector.load %arg5[%c128, %c0_11] : memref<2048x128xbf16, #tpu.memory_space<vmem>>, vector<128x128xbf16>
    %cst_12 = arith.constant dense<0.000000e+00> : vector<8x128xf32>
    %17 = tpu.matmul %15, %16, %cst_12 {dimension_numbers = #tpu.dot_dimension_numbers<[1], [0], [0], [1], [0, 0, 1, 1], [], []>} : vector<8x128xbf16>, vector<128x128xbf16>, vector<8x128xf32> -> vector<8x128xf32>
    %18 = arith.addf %14, %17 : vector<8x128xf32>
    %19 = vector.extract_strided_slice %9 {offsets = [16, 0], sizes = [8, 128], strides = [1, 1]} : vector<128x128xbf16> to vector<8x128xbf16>
    %c256 = arith.constant 256 : index
    %c0_13 = arith.constant 0 : index
    %20 = vector.load %arg5[%c256, %c0_13] : memref<2048x128xbf16, #tpu.memory_space<vmem>>, vector<128x128xbf16>
    %cst_14 = arith.constant dense<0.000000e+00> : vector<8x128xf32>
    %21 = tpu.matmul %19, %20, %cst_14 {dimension_numbers = #tpu.dot_dimension_numbers<[1], [0], [0], [1], [0, 0, 1, 1], [], []>} : vector<8x128xbf16>, vector<128x128xbf16>, vector<8x128xf32> -> vector<8x128xf32>
    %22 = arith.addf %18, %21 : vector<8x128xf32>
    %23 = vector.extract_strided_slice %9 {offsets = [24, 0], sizes = [8, 128], strides = [1, 1]} : vector<128x128xbf16> to vector<8x128xbf16>
    %c384 = arith.constant 384 : index
    %c0_15 = arith.constant 0 : index
    %24 = vector.load %arg5[%c384, %c0_15] : memref<2048x128xbf16, #tpu.memory_space<vmem>>, vector<128x128xbf16>
    %cst_16 = arith.constant dense<0.000000e+00> : vector<8x128xf32>
    %25 = tpu.matmul %23, %24, %cst_16 {dimension_numbers = #tpu.dot_dimension_numbers<[1], [0], [0], [1], [0, 0, 1, 1], [], []>} : vector<8x128xbf16>, vector<128x128xbf16>, vector<8x128xf32> -> vector<8x128xf32>
    %26 = arith.addf %22, %25 : vector<8x128xf32>
    %27 = vector.extract_strided_slice %9 {offsets = [32, 0], sizes = [8, 128], strides = [1, 1]} : vector<128x128xbf16> to vector<8x128xbf16>
    %c512 = arith.constant 512 : index
    %c0_17 = arith.constant 0 : index
    %28 = vector.load %arg5[%c512, %c0_17] : memref<2048x128xbf16, #tpu.memory_space<vmem>>, vector<128x128xbf16>
    %cst_18 = arith.constant dense<0.000000e+00> : vector<8x128xf32>
    %29 = tpu.matmul %27, %28, %cst_18 {dimension_numbers = #tpu.dot_dimension_numbers<[1], [0], [0], [1], [0, 0, 1, 1], [], []>} : vector<8x128xbf16>, vector<128x128xbf16>, vector<8x128xf32> -> vector<8x128xf32>
    %30 = arith.addf %26, %29 : vector<8x128xf32>
    %31 = vector.extract_strided_slice %9 {offsets = [40, 0], sizes = [8, 128], strides = [1, 1]} : vector<128x128xbf16> to vector<8x128xbf16>
    %c640 = arith.constant 640 : index
    %c0_19 = arith.constant 0 : index
    %32 = vector.load %arg5[%c640, %c0_19] : memref<2048x128xbf16, #tpu.memory_space<vmem>>, vector<128x128xbf16>
    %cst_20 = arith.constant dense<0.000000e+00> : vector<8x128xf32>
    %33 = tpu.matmul %31, %32, %cst_20 {dimension_numbers = #tpu.dot_dimension_numbers<[1], [0], [0], [1], [0, 0, 1, 1], [], []>} : vector<8x128xbf16>, vector<128x128xbf16>, vector<8x128xf32> -> vector<8x128xf32>
    %34 = arith.addf %30, %33 : vector<8x128xf32>
    %35 = vector.extract_strided_slice %9 {offsets = [48, 0], sizes = [8, 128], strides = [1, 1]} : vector<128x128xbf16> to vector<8x128xbf16>
    %c768 = arith.constant 768 : index
    %c0_21 = arith.constant 0 : index
    %36 = vector.load %arg5[%c768, %c0_21] : memref<2048x128xbf16, #tpu.memory_space<vmem>>, vector<128x128xbf16>
    %cst_22 = arith.constant dense<0.000000e+00> : vector<8x128xf32>
    %37 = tpu.matmul %35, %36, %cst_22 {dimension_numbers = #tpu.dot_dimension_numbers<[1], [0], [0], [1], [0, 0, 1, 1], [], []>} : vector<8x128xbf16>, vector<128x128xbf16>, vector<8x128xf32> -> vector<8x128xf32>
    %38 = arith.addf %34, %37 : vector<8x128xf32>
    %39 = vector.extract_strided_slice %9 {offsets = [56, 0], sizes = [8, 128], strides = [1, 1]} : vector<128x128xbf16> to vector<8x128xbf16>
    %c896 = arith.constant 896 : index
    %c0_23 = arith.constant 0 : index
    %40 = vector.load %arg5[%c896, %c0_23] : memref<2048x128xbf16, #tpu.memory_space<vmem>>, vector<128x128xbf16>
    %cst_24 = arith.constant dense<0.000000e+00> : vector<8x128xf32>
    %41 = tpu.matmul %39, %40, %cst_24 {dimension_numbers = #tpu.dot_dimension_numbers<[1], [0], [0], [1], [0, 0, 1, 1], [], []>} : vector<8x128xbf16>, vector<128x128xbf16>, vector<8x128xf32> -> vector<8x128xf32>
    %42 = arith.addf %38, %41 : vector<8x128xf32>
    %43 = vector.extract_strided_slice %9 {offsets = [64, 0], sizes = [8, 128], strides = [1, 1]} : vector<128x128xbf16> to vector<8x128xbf16>
    %c1024 = arith.constant 1024 : index
    %c0_25 = arith.constant 0 : index
    %44 = vector.load %arg5[%c1024, %c0_25] : memref<2048x128xbf16, #tpu.memory_space<vmem>>, vector<128x128xbf16>
    %cst_26 = arith.constant dense<0.000000e+00> : vector<8x128xf32>
    %45 = tpu.matmul %43, %44, %cst_26 {dimension_numbers = #tpu.dot_dimension_numbers<[1], [0], [0], [1], [0, 0, 1, 1], [], []>} : vector<8x128xbf16>, vector<128x128xbf16>, vector<8x128xf32> -> vector<8x128xf32>
    %46 = arith.addf %42, %45 : vector<8x128xf32>
    %47 = vector.extract_strided_slice %9 {offsets = [72, 0], sizes = [8, 128], strides = [1, 1]} : vector<128x128xbf16> to vector<8x128xbf16>
    %c1152 = arith.constant 1152 : index
    %c0_27 = arith.constant 0 : index
    %48 = vector.load %arg5[%c1152, %c0_27] : memref<2048x128xbf16, #tpu.memory_space<vmem>>, vector<128x128xbf16>
    %cst_28 = arith.constant dense<0.000000e+00> : vector<8x128xf32>
    %49 = tpu.matmul %47, %48, %cst_28 {dimension_numbers = #tpu.dot_dimension_numbers<[1], [0], [0], [1], [0, 0, 1, 1], [], []>} : vector<8x128xbf16>, vector<128x128xbf16>, vector<8x128xf32> -> vector<8x128xf32>
    %50 = arith.addf %46, %49 : vector<8x128xf32>
    %51 = vector.extract_strided_slice %9 {offsets = [80, 0], sizes = [8, 128], strides = [1, 1]} : vector<128x128xbf16> to vector<8x128xbf16>
    %c1280 = arith.constant 1280 : index
    %c0_29 = arith.constant 0 : index
    %52 = vector.load %arg5[%c1280, %c0_29] : memref<2048x128xbf16, #tpu.memory_space<vmem>>, vector<128x128xbf16>
    %cst_30 = arith.constant dense<0.000000e+00> : vector<8x128xf32>
    %53 = tpu.matmul %51, %52, %cst_30 {dimension_numbers = #tpu.dot_dimension_numbers<[1], [0], [0], [1], [0, 0, 1, 1], [], []>} : vector<8x128xbf16>, vector<128x128xbf16>, vector<8x128xf32> -> vector<8x128xf32>
    %54 = arith.addf %50, %53 : vector<8x128xf32>
    %55 = vector.extract_strided_slice %9 {offsets = [88, 0], sizes = [8, 128], strides = [1, 1]} : vector<128x128xbf16> to vector<8x128xbf16>
    %c1408 = arith.constant 1408 : index
    %c0_31 = arith.constant 0 : index
    %56 = vector.load %arg5[%c1408, %c0_31] : memref<2048x128xbf16, #tpu.memory_space<vmem>>, vector<128x128xbf16>
    %cst_32 = arith.constant dense<0.000000e+00> : vector<8x128xf32>
    %57 = tpu.matmul %55, %56, %cst_32 {dimension_numbers = #tpu.dot_dimension_numbers<[1], [0], [0], [1], [0, 0, 1, 1], [], []>} : vector<8x128xbf16>, vector<128x128xbf16>, vector<8x128xf32> -> vector<8x128xf32>
    %58 = arith.addf %54, %57 : vector<8x128xf32>
    %59 = vector.extract_strided_slice %9 {offsets = [96, 0], sizes = [8, 128], strides = [1, 1]} : vector<128x128xbf16> to vector<8x128xbf16>
    %c1536 = arith.constant 1536 : index
    %c0_33 = arith.constant 0 : index
    %60 = vector.load %arg5[%c1536, %c0_33] : memref<2048x128xbf16, #tpu.memory_space<vmem>>, vector<128x128xbf16>
    %cst_34 = arith.constant dense<0.000000e+00> : vector<8x128xf32>
    %61 = tpu.matmul %59, %60, %cst_34 {dimension_numbers = #tpu.dot_dimension_numbers<[1], [0], [0], [1], [0, 0, 1, 1], [], []>} : vector<8x128xbf16>, vector<128x128xbf16>, vector<8x128xf32> -> vector<8x128xf32>
    %62 = arith.addf %58, %61 : vector<8x128xf32>
    %63 = vector.extract_strided_slice %9 {offsets = [104, 0], sizes = [8, 128], strides = [1, 1]} : vector<128x128xbf16> to vector<8x128xbf16>
    %c1664 = arith.constant 1664 : index
    %c0_35 = arith.constant 0 : index
    %64 = vector.load %arg5[%c1664, %c0_35] : memref<2048x128xbf16, #tpu.memory_space<vmem>>, vector<128x128xbf16>
    %cst_36 = arith.constant dense<0.000000e+00> : vector<8x128xf32>
    %65 = tpu.matmul %63, %64, %cst_36 {dimension_numbers = #tpu.dot_dimension_numbers<[1], [0], [0], [1], [0, 0, 1, 1], [], []>} : vector<8x128xbf16>, vector<128x128xbf16>, vector<8x128xf32> -> vector<8x128xf32>
    %66 = arith.addf %62, %65 : vector<8x128xf32>
    %67 = vector.extract_strided_slice %9 {offsets = [112, 0], sizes = [8, 128], strides = [1, 1]} : vector<128x128xbf16> to vector<8x128xbf16>
    %c1792 = arith.constant 1792 : index
    %c0_37 = arith.constant 0 : index
    %68 = vector.load %arg5[%c1792, %c0_37] : memref<2048x128xbf16, #tpu.memory_space<vmem>>, vector<128x128xbf16>
    %cst_38 = arith.constant dense<0.000000e+00> : vector<8x128xf32>
    %69 = tpu.matmul %67, %68, %cst_38 {dimension_numbers = #tpu.dot_dimension_numbers<[1], [0], [0], [1], [0, 0, 1, 1], [], []>} : vector<8x128xbf16>, vector<128x128xbf16>, vector<8x128xf32> -> vector<8x128xf32>
    %70 = arith.addf %66, %69 : vector<8x128xf32>
    %71 = vector.extract_strided_slice %9 {offsets = [120, 0], sizes = [8, 128], strides = [1, 1]} : vector<128x128xbf16> to vector<8x128xbf16>
    %c1920 = arith.constant 1920 : index
    %c0_39 = arith.constant 0 : index
    %72 = vector.load %arg5[%c1920, %c0_39] : memref<2048x128xbf16, #tpu.memory_space<vmem>>, vector<128x128xbf16>
    %cst_40 = arith.constant dense<0.000000e+00> : vector<8x128xf32>
    %73 = tpu.matmul %71, %72, %cst_40 {dimension_numbers = #tpu.dot_dimension_numbers<[1], [0], [0], [1], [0, 0, 1, 1], [], []>} : vector<8x128xbf16>, vector<128x128xbf16>, vector<8x128xf32> -> vector<8x128xf32>
    %74 = arith.addf %70, %73 : vector<8x128xf32>
    %c0_41 = arith.constant 0 : index
    %c0_42 = arith.constant 0 : index
    %75 = vector.load %arg6[%c0_41, %c0_42] : memref<1x128xf32, #tpu.memory_space<vmem>>, vector<1x128xf32>
    %76 = vector.broadcast %75 : vector<1x128xf32> to vector<8x128xf32>
    %77 = arith.addf %74, %76 : vector<8x128xf32>
    %cst_43 = arith.constant 0.000000e+00 : f32
    %78 = vector.broadcast %cst_43 : f32 to vector<8x128xf32>
    %79 = arith.maximumf %77, %78 : vector<8x128xf32>
    %80 = arith.truncf %79 : vector<8x128xf32> to vector<8x128xbf16>
    %c0_44 = arith.constant 0 : index
    %c0_45 = arith.constant 0 : index
    %81 = vector.load %arg7[%c0_44, %c0_45] : memref<128x256xbf16, #tpu.memory_space<vmem>>, vector<128x256xbf16>
    %cst_46 = arith.constant dense<0.000000e+00> : vector<8x256xf32>
    %82 = tpu.matmul %80, %81, %cst_46 {dimension_numbers = #tpu.dot_dimension_numbers<[1], [0], [0], [1], [0, 0, 1, 1], [], []>} : vector<8x128xbf16>, vector<128x256xbf16>, vector<8x256xf32> -> vector<8x256xf32>
    %c0_47 = arith.constant 0 : index
    %c0_48 = arith.constant 0 : index
    %c0_49 = arith.constant 0 : index
    %83 = vector.load %arg2[%c0_47, %c0_48, %c0_49] : memref<1x8x128xbf16, #tpu.memory_space<vmem>>, vector<1x8x128xbf16>
    %84 = vector.shape_cast %83 : vector<1x8x128xbf16> to vector<8x128xbf16>
    %c0_50 = arith.constant 0 : index
    %c0_51 = arith.constant 0 : index
    %85 = vector.load %arg8[%c0_50, %c0_51] : memref<128x256xbf16, #tpu.memory_space<vmem>>, vector<128x256xbf16>
    %cst_52 = arith.constant dense<0.000000e+00> : vector<8x256xf32>
    %86 = tpu.matmul %84, %85, %cst_52 {dimension_numbers = #tpu.dot_dimension_numbers<[1], [0], [0], [1], [0, 0, 1, 1], [], []>} : vector<8x128xbf16>, vector<128x256xbf16>, vector<8x256xf32> -> vector<8x256xf32>
    %87 = arith.addf %82, %86 : vector<8x256xf32>
    %c0_53 = arith.constant 0 : index
    %c0_54 = arith.constant 0 : index
    %88 = vector.load %arg9[%c0_53, %c0_54] : memref<1x256xf32, #tpu.memory_space<vmem>>, vector<1x256xf32>
    %89 = vector.broadcast %88 : vector<1x256xf32> to vector<8x256xf32>
    %90 = arith.addf %87, %89 : vector<8x256xf32>
    %cst_55 = arith.constant 0.000000e+00 : f32
    %91 = vector.broadcast %cst_55 : f32 to vector<8x256xf32>
    %92 = arith.maximumf %90, %91 : vector<8x256xf32>
    %93 = arith.truncf %92 : vector<8x256xf32> to vector<8x256xbf16>
    %c0_56 = arith.constant 0 : index
    %c0_57 = arith.constant 0 : index
    %94 = vector.load %arg10[%c0_56, %c0_57] : memref<256x256xbf16, #tpu.memory_space<vmem>>, vector<256x256xbf16>
    %cst_58 = arith.constant dense<0.000000e+00> : vector<8x256xf32>
    %95 = tpu.matmul %93, %94, %cst_58 {dimension_numbers = #tpu.dot_dimension_numbers<[1], [0], [0], [1], [0, 0, 1, 1], [], []>} : vector<8x256xbf16>, vector<256x256xbf16>, vector<8x256xf32> -> vector<8x256xf32>
    %c0_59 = arith.constant 0 : index
    %c0_60 = arith.constant 0 : index
    %96 = vector.load %arg11[%c0_59, %c0_60] : memref<1x256xf32, #tpu.memory_space<vmem>>, vector<1x256xf32>
    %97 = vector.broadcast %96 : vector<1x256xf32> to vector<8x256xf32>
    %98 = arith.addf %95, %97 : vector<8x256xf32>
    %cst_61 = arith.constant 0.000000e+00 : f32
    %99 = vector.broadcast %cst_61 : f32 to vector<8x256xf32>
    %100 = arith.maximumf %98, %99 : vector<8x256xf32>
    %c0_62 = arith.constant 0 : index
    %c0_63 = arith.constant 0 : index
    %101 = vector.load %arg12[%c0_62, %c0_63] : memref<1x256xf32, #tpu.memory_space<vmem>>, vector<1x256xf32>
    %102 = vector.broadcast %101 : vector<1x256xf32> to vector<8x256xf32>
    %103 = arith.mulf %100, %102 : vector<8x256xf32>
    %cst_64 = arith.constant dense<0.000000e+00> : vector<8xf32>
    %104 = vector.multi_reduction <add>, %103, %cst_64 [1] : vector<8x256xf32> to vector<8xf32>
    %105 = vector.shape_cast %104 : vector<8xf32> to vector<8x1xf32>
    %106 = vector.shape_cast %105 : vector<8x1xf32> to vector<8x1xf32>
    %107 = vector.broadcast %106 : vector<8x1xf32> to vector<8x128xf32>
    %c0_65 = arith.constant 0 : index
    %c0_66 = arith.constant 0 : index
    %108 = vector.load %arg13[%c0_65, %c0_66] : memref<1x128xf32, #tpu.memory_space<vmem>>, vector<1x128xf32>
    %109 = vector.broadcast %108 : vector<1x128xf32> to vector<8x128xf32>
    %110 = arith.addf %107, %109 : vector<8x128xf32>
    %c0_67 = arith.constant 0 : index
    %c0_68 = arith.constant 0 : index
    %c0_69 = arith.constant 0 : index
    %111 = vector.load %arg14[%c0_67, %c0_68, %c0_69] : memref<1x8x128xf32, #tpu.memory_space<vmem>>, vector<1x8x128xf32>
    %112 = vector.shape_cast %111 : vector<1x8x128xf32> to vector<8x128xf32>
    %113 = vector.shape_cast %110 : vector<8x128xf32> to vector<1x8x128xf32>
    tpu.vector_store %arg14[%c0_67, %c0_68, %c0_69], %113 {strides = array<i32>} : memref<1x8x128xf32, #tpu.memory_space<vmem>>, vector<1x8x128xf32>,
    return
  }
  func.func @transform_0(%arg0: i32) -> (i32, i32, i32) {
    %c0_i32 = arith.constant 0 : i32
    %c0_i32_0 = arith.constant 0 : i32
    %c0_i32_1 = arith.constant 0 : i32
    return %arg0, %c0_i32, %c0_i32_0 : i32, i32, i32
  }
  func.func @transform_1(%arg0: i32) -> (i32, i32, i32) {
    %c0_i32 = arith.constant 0 : i32
    %c0_i32_0 = arith.constant 0 : i32
    %c0_i32_1 = arith.constant 0 : i32
    return %arg0, %c0_i32, %c0_i32_0 : i32, i32, i32
  }
  func.func @transform_2(%arg0: i32) -> (i32, i32) {
    %c0_i32 = arith.constant 0 : i32
    %c0_i32_0 = arith.constant 0 : i32
    %c0_i32_1 = arith.constant 0 : i32
    return %c0_i32, %c0_i32_0 : i32, i32
  }
  func.func @transform_3(%arg0: i32) -> (i32, i32) {
    %c0_i32 = arith.constant 0 : i32
    %c0_i32_0 = arith.constant 0 : i32
    %c0_i32_1 = arith.constant 0 : i32
    return %c0_i32, %c0_i32_0 : i32, i32
  }
  func.func @transform_4(%arg0: i32) -> (i32, i32) {
    %c0_i32 = arith.constant 0 : i32
    %c0_i32_0 = arith.constant 0 : i32
    %c0_i32_1 = arith.constant 0 : i32
    return %c0_i32, %c0_i32_0 : i32, i32
  }
  func.func @transform_5(%arg0: i32) -> (i32, i32) {
    %c0_i32 = arith.constant 0 : i32
    %c0_i32_0 = arith.constant 0 : i32
    %c0_i32_1 = arith.constant 0 : i32
    return %c0_i32, %c0_i32_0 : i32, i32
  }
  func.func @transform_6(%arg0: i32) -> (i32, i32) {
    %c0_i32 = arith.constant 0 : i32
    %c0_i32_0 = arith.constant 0 : i32
    %c0_i32_1 = arith.constant 0 : i32
    return %c0_i32, %c0_i32_0 : i32, i32
  }
  func.func @transform_7(%arg0: i32) -> (i32, i32) {
    %c0_i32 = arith.constant 0 : i32
    %c0_i32_0 = arith.constant 0 : i32
    %c0_i32_1 = arith.constant 0 : i32
    return %c0_i32, %c0_i32_0 : i32, i32
  }
  func.func @transform_8(%arg0: i32) -> (i32, i32) {
    %c0_i32 = arith.constant 0 : i32
    %c0_i32_0 = arith.constant 0 : i32
    %c0_i32_1 = arith.constant 0 : i32
    return %c0_i32, %c0_i32_0 : i32, i32
  }
  func.func @transform_9(%arg0: i32) -> (i32, i32) {
    %c0_i32 = arith.constant 0 : i32
    %c0_i32_0 = arith.constant 0 : i32
    %c0_i32_1 = arith.constant 0 : i32
    return %c0_i32, %c0_i32_0 : i32, i32
  }
  func.func @transform_10(%arg0: i32) -> (i32, i32) {
    %c0_i32 = arith.constant 0 : i32
    %c0_i32_0 = arith.constant 0 : i32
    %c0_i32_1 = arith.constant 0 : i32
    return %c0_i32, %c0_i32_0 : i32, i32
  }
  func.func @transform_11(%arg0: i32) -> (i32, i32) {
    %c0_i32 = arith.constant 0 : i32
    %c0_i32_0 = arith.constant 0 : i32
    %c0_i32_1 = arith.constant 0 : i32
    return %c0_i32, %c0_i32_0 : i32, i32
  }
  func.func @transform_12(%arg0: i32) -> (i32, i32) {
    %c0_i32 = arith.constant 0 : i32
    %c0_i32_0 = arith.constant 0 : i32
    %c0_i32_1 = arith.constant 0 : i32
    return %c0_i32, %c0_i32_0 : i32, i32
  }
  func.func @transform_13(%arg0: i32) -> (i32, i32, i32) {
    %c0_i32 = arith.constant 0 : i32
    %c0_i32_0 = arith.constant 0 : i32
    %c0_i32_1 = arith.constant 0 : i32
    return %arg0, %c0_i32, %c0_i32_0 : i32, i32, i32
  }
}

</mosaic_0001>

<llo_original>
// kernel: vanilla_cnn_q_forward.3
$region0: #{vanilla_cnn_q_forward.3}
  #allocation0 [shape = 'u32[]', space=smem, size = 0x4, offset = 0x4, fixed_abs, tag = 'smem constant byte address 0x4 - core index']
  #allocation1 [shape = 'u32[144,128]{1,0:T(1,128)}', space=vmem, size = 0x12000, scoped, tag = 'internal scratch']
  %s0 = inlined_call_operand.vmem [shape: bf16[1696,256], index: 0, kind: input, shape index: {}]
  %s1 = inlined_call_operand.vmem [shape: bf16[256,128], index: 1, kind: input, shape index: {}]
  %s2 = inlined_call_operand.vmem [shape: f32[1,128], index: 2, kind: input, shape index: {}]
  %s3 = inlined_call_operand.vmem [shape: bf16[1696,128], index: 3, kind: output, shape index: {}]
  %s4 = sld [smem:[#allocation0]]
  $region22: #{vanilla_cnn_q_forward.3} parent=0
    _
  %s6 = ssub.s32 1, %s4
  %s7 = scalar_select 0, %s6, %s4
  // Predicated region
  $region2: #{vanilla_cnn_q_forward.3} parent=0 // pred_check
    _
  $region3: #{vanilla_cnn_q_forward.3} parent=0 // pred_check_branch
    %9 = sbr.rel (0) target = $region5
  $region4: #{vanilla_cnn_q_forward.3} parent=0 // pred_region
    _
  $region5: #{vanilla_cnn_q_forward.3} parent=0 // pred_fallthru
    _
  // Predicated region
  $region6: #{vanilla_cnn_q_forward.3} parent=0 // pred_check
    _
  $region7: #{vanilla_cnn_q_forward.3} parent=0 // pred_check_branch
    %11 = sbr.rel (0) target = $region9
  $region8: #{vanilla_cnn_q_forward.3} parent=0 // pred_region
    _
  $region9: #{vanilla_cnn_q_forward.3} parent=0 // pred_fallthru
    _
  // Predicated region
  $region10: #{vanilla_cnn_q_forward.3} parent=0 // pred_check
    _
  $region11: #{vanilla_cnn_q_forward.3} parent=0 // pred_check_branch
    %13 = sbr.rel (0) target = $region13
  $region12: #{vanilla_cnn_q_forward.3} parent=0 // pred_region
    _
  $region13: #{vanilla_cnn_q_forward.3} parent=0 // pred_fallthru
    _
  %v15 = vld [vmem:[%s0] sm:$0xff]
  %v16 = vld [vmem:[%s0 + $0x8] sm:$0xff]
  %v17 = vld [vmem:[%s0 + $0x10] sm:$0xff]
  %v18 = vld [vmem:[%s0 + $0x18] sm:$0xff]
  %v19 = vld [vmem:[%s0 + $0x20] sm:$0xff]
  %v20 = vld [vmem:[%s0 + $0x28] sm:$0xff]
  %v21 = vld [vmem:[%s0 + $0x30] sm:$0xff]
  %v22 = vld [vmem:[%s0 + $0x38] sm:$0xff]
  %v23 = vld [vmem:[%s0 + $0x40] sm:$0xff]
  %v24 = vld [vmem:[%s0 + $0x48] sm:$0xff]
  %v25 = vld [vmem:[%s0 + $0x50] sm:$0xff]
  %v26 = vld [vmem:[%s0 + $0x58] sm:$0xff]
  %v27 = vld [vmem:[%s0 + $0x60] sm:$0xff]
  %v28 = vld [vmem:[%s0 + $0x68] sm:$0xff]
  %v29 = vld [vmem:[%s0 + $0x70] sm:$0xff]
  %v30 = vld [vmem:[%s0 + $0x78] sm:$0xff]
  %v31 = vld [vmem:[%s0 + $0x80] sm:$0xff]
  %v32 = vld [vmem:[%s0 + $0x88] sm:$0xff]
  %v33 = vld [vmem:[%s0 + $0x90] sm:$0xff]
  %v34 = vld [vmem:[%s0 + $0x98] sm:$0xff]
  %v35 = vld [vmem:[%s0 + $0xa0] sm:$0xff]
  %v36 = vld [vmem:[%s0 + $0xa8] sm:$0xff]
  %v37 = vld [vmem:[%s0 + $0xb0] sm:$0xff]
  %v38 = vld [vmem:[%s0 + $0xb8] sm:$0xff]
  %v39 = vld [vmem:[%s0 + $0xc0] sm:$0xff]
  %v40 = vld [vmem:[%s0 + $0xc8] sm:$0xff]
  %v41 = vld [vmem:[%s0 + $0xd0] sm:$0xff]
  %v42 = vld [vmem:[%s0 + $0xd8] sm:$0xff]
  %v43 = vld [vmem:[%s0 + $0xe0] sm:$0xff]
  %v44 = vld [vmem:[%s0 + $0xe8] sm:$0xff]
  %v45 = vld [vmem:[%s0 + $0xf0] sm:$0xff]
  %v46 = vld [vmem:[%s0 + $0xf8] sm:$0xff]
  %v47 = vld [vmem:[%s0 + $0x100] sm:$0xff]
  %v48 = vld [vmem:[%s0 + $0x108] sm:$0xff]
  %v49 = vld [vmem:[%s0 + $0x110] sm:$0xff]
  %v50 = vld [vmem:[%s0 + $0x118] sm:$0xff]
  %v51 = vld [vmem:[%s0 + $0x120] sm:$0xff]
  %v52 = vld [vmem:[%s0 + $0x128] sm:$0xff]
  %v53 = vld [vmem:[%s0 + $0x130] sm:$0xff]
  %v54 = vld [vmem:[%s0 + $0x138] sm:$0xff]
  %v55 = vld [vmem:[%s0 + $0x140] sm:$0xff]
  %v56 = vld [vmem:[%s0 + $0x148] sm:$0xff]
  %v57 = vld [vmem:[%s0 + $0x150] sm:$0xff]
  %v58 = vld [vmem:[%s0 + $0x158] sm:$0xff]
  %v59 = vld [vmem:[%s0 + $0x160] sm:$0xff]
  %v60 = vld [vmem:[%s0 + $0x168] sm:$0xff]
  %v61 = vld [vmem:[%s0 + $0x170] sm:$0xff]
  %v62 = vld [vmem:[%s0 + $0x178] sm:$0xff]
  %v63 = vld [vmem:[%s0 + $0x180] sm:$0xff]
  %v64 = vld [vmem:[%s0 + $0x188] sm:$0xff]
  %v65 = vld [vmem:[%s0 + $0x190] sm:$0xff]
  %v66 = vld [vmem:[%s0 + $0x198] sm:$0xff]
  %v67 = vld [vmem:[%s0 + $0x1a0] sm:$0xff]
  %v68 = vld [vmem:[%s0 + $0x1a8] sm:$0xff]
  %v69 = vld [vmem:[%s0 + $0x1b0] sm:$0xff]
  %v70 = vld [vmem:[%s0 + $0x1b8] sm:$0xff]
  %v71 = vld [vmem:[%s0 + $0x1c0] sm:$0xff]
  %v72 = vld [vmem:[%s0 + $0x1c8] sm:$0xff]
  %v73 = vld [vmem:[%s0 + $0x1d0] sm:$0xff]
  %v74 = vld [vmem:[%s0 + $0x1d8] sm:$0xff]
  %v75 = vld [vmem:[%s0 + $0x1e0] sm:$0xff]
  %v76 = vld [vmem:[%s0 + $0x1e8] sm:$0xff]
  %v77 = vld [vmem:[%s0 + $0x1f0] sm:$0xff]
  %v78 = vld [vmem:[%s0 + $0x1f8] sm:$0xff]
  %v79 = vld [vmem:[%s0 + $0x200] sm:$0xff]
  %v80 = vld [vmem:[%s0 + $0x208] sm:$0xff]
  %v81 = vld [vmem:[%s0 + $0x210] sm:$0xff]
  %v82 = vld [vmem:[%s0 + $0x218] sm:$0xff]
  %v83 = vld [vmem:[%s0 + $0x220] sm:$0xff]
  %v84 = vld [vmem:[%s0 + $0x228] sm:$0xff]
  %v85 = vld [vmem:[%s0 + $0x230] sm:$0xff]
  %v86 = vld [vmem:[%s0 + $0x238] sm:$0xff]
  %v87 = vld [vmem:[%s0 + $0x240] sm:$0xff]
  %v88 = vld [vmem:[%s0 + $0x248] sm:$0xff]
  %v89 = vld [vmem:[%s0 + $0x250] sm:$0xff]
  %v90 = vld [vmem:[%s0 + $0x258] sm:$0xff]
  %v91 = vld [vmem:[%s0 + $0x260] sm:$0xff]
  %v92 = vld [vmem:[%s0 + $0x268] sm:$0xff]
  %v93 = vld [vmem:[%s0 + $0x270] sm:$0xff]
  %v94 = vld [vmem:[%s0 + $0x278] sm:$0xff]
  %v95 = vld [vmem:[%s0 + $0x280] sm:$0xff]
  %v96 = vld [vmem:[%s0 + $0x288] sm:$0xff]
  %v97 = vld [vmem:[%s0 + $0x290] sm:$0xff]
  %v98 = vld [vmem:[%s0 + $0x298] sm:$0xff]
  %v99 = vld [vmem:[%s0 + $0x2a0] sm:$0xff]
  %v100 = vld [vmem:[%s0 + $0x2a8] sm:$0xff]
  %v101 = vld [vmem:[%s0 + $0x2b0] sm:$0xff]
  %v102 = vld [vmem:[%s0 + $0x2b8] sm:$0xff]
  %v103 = vld [vmem:[%s0 + $0x2c0] sm:$0xff]
  %v104 = vld [vmem:[%s0 + $0x2c8] sm:$0xff]
  %v105 = vld [vmem:[%s0 + $0x2d0] sm:$0xff]
  %v106 = vld [vmem:[%s0 + $0x2d8] sm:$0xff]
  %v107 = vld [vmem:[%s0 + $0x2e0] sm:$0xff]
  %v108 = vld [vmem:[%s0 + $0x2e8] sm:$0xff]
  %v109 = vld [vmem:[%s0 + $0x2f0] sm:$0xff]
  %v110 = vld [vmem:[%s0 + $0x2f8] sm:$0xff]
  %v111 = vld [vmem:[%s0 + $0x300] sm:$0xff]
  %v112 = vld [vmem:[%s0 + $0x308] sm:$0xff]
  %v113 = vld [vmem:[%s0 + $0x310] sm:$0xff]
  %v114 = vld [vmem:[%s0 + $0x318] sm:$0xff]
  %v115 = vld [vmem:[%s0 + $0x320] sm:$0xff]
  %v116 = vld [vmem:[%s0 + $0x328] sm:$0xff]
  %v117 = vld [vmem:[%s0 + $0x330] sm:$0xff]
  %v118 = vld [vmem:[%s0 + $0x338] sm:$0xff]
  %v119 = vld [vmem:[%s0 + $0x340] sm:$0xff]
  %v120 = vld [vmem:[%s0 + $0x348] sm:$0xff]
  %v121 = vld [vmem:[%s0 + $0x350] sm:$0xff]
  %v122 = vld [vmem:[%s0 + $0x358] sm:$0xff]
  %v123 = vld [vmem:[%s0 + $0x360] sm:$0xff]
  %v124 = vld [vmem:[%s0 + $0x368] sm:$0xff]
  %v125 = vld [vmem:[%s0 + $0x370] sm:$0xff]
  %v126 = vld [vmem:[%s0 + $0x378] sm:$0xff]
  %v127 = vld [vmem:[%s0 + $0x380] sm:$0xff]
  %v128 = vld [vmem:[%s0 + $0x388] sm:$0xff]
  %v129 = vld [vmem:[%s0 + $0x390] sm:$0xff]
  %v130 = vld [vmem:[%s0 + $0x398] sm:$0xff]
  %v131 = vld [vmem:[%s0 + $0x3a0] sm:$0xff]
  %v132 = vld [vmem:[%s0 + $0x3a8] sm:$0xff]
  %v133 = vld [vmem:[%s0 + $0x3b0] sm:$0xff]
  %v134 = vld [vmem:[%s0 + $0x3b8] sm:$0xff]
  %v135 = vld [vmem:[%s0 + $0x3c0] sm:$0xff]
  %v136 = vld [vmem:[%s0 + $0x3c8] sm:$0xff]
  %v137 = vld [vmem:[%s0 + $0x3d0] sm:$0xff]
  %v138 = vld [vmem:[%s0 + $0x3d8] sm:$0xff]
  %v139 = vld [vmem:[%s0 + $0x3e0] sm:$0xff]
  %v140 = vld [vmem:[%s0 + $0x3e8] sm:$0xff]
  %v141 = vld [vmem:[%s0 + $0x3f0] sm:$0xff]
  %v142 = vld [vmem:[%s0 + $0x3f8] sm:$0xff]
  %v143 = vld [vmem:[%s0 + $0x400] sm:$0xff]
  %v144 = vld [vmem:[%s0 + $0x408] sm:$0xff]
  %v145 = vld [vmem:[%s0 + $0x410] sm:$0xff]
  %v146 = vld [vmem:[%s0 + $0x418] sm:$0xff]
  %v147 = vld [vmem:[%s0 + $0x420] sm:$0xff]
  %v148 = vld [vmem:[%s0 + $0x428] sm:$0xff]
  %v149 = vld [vmem:[%s0 + $0x430] sm:$0xff]
  %v150 = vld [vmem:[%s0 + $0x438] sm:$0xff]
  %v151 = vld [vmem:[%s0 + $0x440] sm:$0xff]
  %v152 = vld [vmem:[%s0 + $0x448] sm:$0xff]
  %v153 = vld [vmem:[%s0 + $0x450] sm:$0xff]
  %v154 = vld [vmem:[%s0 + $0x458] sm:$0xff]
  %v155 = vld [vmem:[%s0 + $0x460] sm:$0xff]
  %v156 = vld [vmem:[%s0 + $0x468] sm:$0xff]
  %v157 = vld [vmem:[%s0 + $0x470] sm:$0xff]
  %v158 = vld [vmem:[%s0 + $0x478] sm:$0xff]
  %v159 = vld [vmem:[%s0 + $0x480] sm:$0xff]
  %v160 = vld [vmem:[%s0 + $0x488] sm:$0xff]
  %v161 = vld [vmem:[%s0 + $0x490] sm:$0xff]
  %v162 = vld [vmem:[%s0 + $0x498] sm:$0xff]
  %v163 = vld [vmem:[%s0 + $0x4a0] sm:$0xff]
  %v164 = vld [vmem:[%s0 + $0x4a8] sm:$0xff]
  %v165 = vld [vmem:[%s0 + $0x4b0] sm:$0xff]
  %v166 = vld [vmem:[%s0 + $0x4b8] sm:$0xff]
  %v167 = vld [vmem:[%s0 + $0x4c0] sm:$0xff]
  %v168 = vld [vmem:[%s0 + $0x4c8] sm:$0xff]
  %v169 = vld [vmem:[%s0 + $0x4d0] sm:$0xff]
  %v170 = vld [vmem:[%s0 + $0x4d8] sm:$0xff]
  %v171 = vld [vmem:[%s0 + $0x4e0] sm:$0xff]
  %v172 = vld [vmem:[%s0 + $0x4e8] sm:$0xff]
  %v173 = vld [vmem:[%s0 + $0x4f0] sm:$0xff]
  %v174 = vld [vmem:[%s0 + $0x4f8] sm:$0xff]
  %v175 = vld [vmem:[%s0 + $0x500] sm:$0xff]
  %v176 = vld [vmem:[%s0 + $0x508] sm:$0xff]
  %v177 = vld [vmem:[%s0 + $0x510] sm:$0xff]
  %v178 = vld [vmem:[%s0 + $0x518] sm:$0xff]
  %v179 = vld [vmem:[%s0 + $0x520] sm:$0xff]
  %v180 = vld [vmem:[%s0 + $0x528] sm:$0xff]
  %v181 = vld [vmem:[%s0 + $0x530] sm:$0xff]
  %v182 = vld [vmem:[%s0 + $0x538] sm:$0xff]
  %v183 = vld [vmem:[%s0 + $0x540] sm:$0xff]
  %v184 = vld [vmem:[%s0 + $0x548] sm:$0xff]
  %v185 = vld [vmem:[%s0 + $0x550] sm:$0xff]
  %v186 = vld [vmem:[%s0 + $0x558] sm:$0xff]
  %v187 = vld [vmem:[%s0 + $0x560] sm:$0xff]
  %v188 = vld [vmem:[%s0 + $0x568] sm:$0xff]
  %v189 = vld [vmem:[%s0 + $0x570] sm:$0xff]
  %v190 = vld [vmem:[%s0 + $0x578] sm:$0xff]
  %v191 = vld [vmem:[%s0 + $0x580] sm:$0xff]
  %v192 = vld [vmem:[%s0 + $0x588] sm:$0xff]
  %v193 = vld [vmem:[%s0 + $0x590] sm:$0xff]
  %v194 = vld [vmem:[%s0 + $0x598] sm:$0xff]
  %v195 = vld [vmem:[%s0 + $0x5a0] sm:$0xff]
  %v196 = vld [vmem:[%s0 + $0x5a8] sm:$0xff]
  %v197 = vld [vmem:[%s0 + $0x5b0] sm:$0xff]
  %v198 = vld [vmem:[%s0 + $0x5b8] sm:$0xff]
  %v199 = vld [vmem:[%s0 + $0x5c0] sm:$0xff]
  %v200 = vld [vmem:[%s0 + $0x5c8] sm:$0xff]
  %v201 = vld [vmem:[%s0 + $0x5d0] sm:$0xff]
  %v202 = vld [vmem:[%s0 + $0x5d8] sm:$0xff]
  %v203 = vld [vmem:[%s0 + $0x5e0] sm:$0xff]
  %v204 = vld [vmem:[%s0 + $0x5e8] sm:$0xff]
  %v205 = vld [vmem:[%s0 + $0x5f0] sm:$0xff]
  %v206 = vld [vmem:[%s0 + $0x5f8] sm:$0xff]
  %v207 = vld [vmem:[%s0 + $0x600] sm:$0xff]
  %v208 = vld [vmem:[%s0 + $0x608] sm:$0xff]
  %v209 = vld [vmem:[%s0 + $0x610] sm:$0xff]
  %v210 = vld [vmem:[%s0 + $0x618] sm:$0xff]
  %v211 = vld [vmem:[%s0 + $0x620] sm:$0xff]
  %v212 = vld [vmem:[%s0 + $0x628] sm:$0xff]
  %v213 = vld [vmem:[%s0 + $0x630] sm:$0xff]
  %v214 = vld [vmem:[%s0 + $0x638] sm:$0xff]
  %v215 = vld [vmem:[%s0 + $0x640] sm:$0xff]
  %v216 = vld [vmem:[%s0 + $0x648] sm:$0xff]
  %v217 = vld [vmem:[%s0 + $0x650] sm:$0xff]
  %v218 = vld [vmem:[%s0 + $0x658] sm:$0xff]
  %v219 = vld [vmem:[%s0 + $0x660] sm:$0xff]
  %v220 = vld [vmem:[%s0 + $0x668] sm:$0xff]
  %v221 = vld [vmem:[%s0 + $0x670] sm:$0xff]
  %v222 = vld [vmem:[%s0 + $0x678] sm:$0xff]
  %v223 = vld [vmem:[%s0 + $0x680] sm:$0xff]
  %v224 = vld [vmem:[%s0 + $0x688] sm:$0xff]
  %v225 = vld [vmem:[%s0 + $0x690] sm:$0xff]
  %v226 = vld [vmem:[%s0 + $0x698] sm:$0xff]
  %v227 = vld [vmem:[%s1] sm:$0xf]
  %v228 = vld [vmem:[%s1 + $0x4] sm:$0xf]
  %v229 = vld [vmem:[%s1 + $0x8] sm:$0xf]
  %v230 = vld [vmem:[%s1 + $0xc] sm:$0xf]
  %v231 = vld [vmem:[%s1 + $0x10] sm:$0xf]
  %v232 = vld [vmem:[%s1 + $0x14] sm:$0xf]
  %v233 = vld [vmem:[%s1 + $0x18] sm:$0xf]
  %v234 = vld [vmem:[%s1 + $0x1c] sm:$0xf]
  %v235 = vld [vmem:[%s1 + $0x20] sm:$0xf]
  %v236 = vld [vmem:[%s1 + $0x24] sm:$0xf]
  %v237 = vld [vmem:[%s1 + $0x28] sm:$0xf]
  %v238 = vld [vmem:[%s1 + $0x2c] sm:$0xf]
  %v239 = vld [vmem:[%s1 + $0x30] sm:$0xf]
  %v240 = vld [vmem:[%s1 + $0x34] sm:$0xf]
  %v241 = vld [vmem:[%s1 + $0x38] sm:$0xf]
  %v242 = vld [vmem:[%s1 + $0x3c] sm:$0xf]
  %v243 = vld [vmem:[%s1 + $0x40] sm:$0xf]
  %v244 = vld [vmem:[%s1 + $0x44] sm:$0xf]
  %v245 = vld [vmem:[%s1 + $0x48] sm:$0xf]
  %v246 = vld [vmem:[%s1 + $0x4c] sm:$0xf]
  %v247 = vld [vmem:[%s1 + $0x50] sm:$0xf]
  %v248 = vld [vmem:[%s1 + $0x54] sm:$0xf]
  %v249 = vld [vmem:[%s1 + $0x58] sm:$0xf]
  %v250 = vld [vmem:[%s1 + $0x5c] sm:$0xf]
  %v251 = vld [vmem:[%s1 + $0x60] sm:$0xf]
  %v252 = vld [vmem:[%s1 + $0x64] sm:$0xf]
  %v253 = vld [vmem:[%s1 + $0x68] sm:$0xf]
  %v254 = vld [vmem:[%s1 + $0x6c] sm:$0xf]
  %v255 = vld [vmem:[%s1 + $0x70] sm:$0xf]
  %v256 = vld [vmem:[%s1 + $0x74] sm:$0xf]
  %v257 = vld [vmem:[%s1 + $0x78] sm:$0xf]
  %v258 = vld [vmem:[%s1 + $0x7c] sm:$0xf]
  %v259 = vld [vmem:[%s2] sm:$0x1]
  %v261 = vlaneseq
  %v262 = vshrl.u32 %v261, 7
  %v263 = vsub.s32 0, %v262
  %v264 = vrot.slane %v259, %v263
  %v478 = vunpack.c.l.b16 %v15
  %v479 = vunpack.c.h.b16 %v15
  %v480 = vunpack.c.l.b16 %v16
  %v481 = vunpack.c.h.b16 %v16
  %v482 = vunpack.c.l.b16 %v17
  %v483 = vunpack.c.h.b16 %v17
  %v484 = vunpack.c.l.b16 %v18
  %v485 = vunpack.c.h.b16 %v18
  %v486 = vunpack.c.l.b16 %v19
  %v487 = vunpack.c.h.b16 %v19
  %v488 = vunpack.c.l.b16 %v20
  %v489 = vunpack.c.h.b16 %v20
  %v490 = vunpack.c.l.b16 %v21
  %v491 = vunpack.c.h.b16 %v21
  %v492 = vunpack.c.l.b16 %v22
  %v493 = vunpack.c.h.b16 %v22
  %v494 = vunpack.c.l.b16 %v23
  %v495 = vunpack.c.h.b16 %v23
  %v496 = vunpack.c.l.b16 %v24
  %v497 = vunpack.c.h.b16 %v24
  %v498 = vunpack.c.l.b16 %v25
  %v499 = vunpack.c.h.b16 %v25
  %v500 = vunpack.c.l.b16 %v26
  %v501 = vunpack.c.h.b16 %v26
  %v502 = vunpack.c.l.b16 %v27
  %v503 = vunpack.c.h.b16 %v27
  %v504 = vunpack.c.l.b16 %v28
  %v505 = vunpack.c.h.b16 %v28
  %v506 = vunpack.c.l.b16 %v29
  %v507 = vunpack.c.h.b16 %v29
  %v508 = vunpack.c.l.b16 %v30
  %v509 = vunpack.c.h.b16 %v30
  %v510 = vunpack.c.l.b16 %v31
  %v511 = vunpack.c.h.b16 %v31
  %v512 = vunpack.c.l.b16 %v32
  %v513 = vunpack.c.h.b16 %v32
  %v514 = vunpack.c.l.b16 %v33
  %v515 = vunpack.c.h.b16 %v33
  %v516 = vunpack.c.l.b16 %v34
  %v517 = vunpack.c.h.b16 %v34
  %v518 = vunpack.c.l.b16 %v35
  %v519 = vunpack.c.h.b16 %v35
  %v520 = vunpack.c.l.b16 %v36
  %v521 = vunpack.c.h.b16 %v36
  %v522 = vunpack.c.l.b16 %v37
  %v523 = vunpack.c.h.b16 %v37
  %v524 = vunpack.c.l.b16 %v38
  %v525 = vunpack.c.h.b16 %v38
  %v526 = vunpack.c.l.b16 %v39
  %v527 = vunpack.c.h.b16 %v39
  %v528 = vunpack.c.l.b16 %v40
  %v529 = vunpack.c.h.b16 %v40
  %v530 = vunpack.c.l.b16 %v41
  %v531 = vunpack.c.h.b16 %v41
  %v532 = vunpack.c.l.b16 %v42
  %v533 = vunpack.c.h.b16 %v42
  %v534 = vunpack.c.l.b16 %v43
  %v535 = vunpack.c.h.b16 %v43
  %v536 = vunpack.c.l.b16 %v44
  %v537 = vunpack.c.h.b16 %v44
  %v538 = vunpack.c.l.b16 %v45
  %v539 = vunpack.c.h.b16 %v45
  %v540 = vunpack.c.l.b16 %v46
  %v541 = vunpack.c.h.b16 %v46
  %v542 = vunpack.c.l.b16 %v47
  %v543 = vunpack.c.h.b16 %v47
  %v544 = vunpack.c.l.b16 %v48
  %v545 = vunpack.c.h.b16 %v48
  %v546 = vunpack.c.l.b16 %v49
  %v547 = vunpack.c.h.b16 %v49
  %v548 = vunpack.c.l.b16 %v50
  %v549 = vunpack.c.h.b16 %v50
  %v550 = vunpack.c.l.b16 %v51
  %v551 = vunpack.c.h.b16 %v51
  %v552 = vunpack.c.l.b16 %v52
  %v553 = vunpack.c.h.b16 %v52
  %v554 = vunpack.c.l.b16 %v53
  %v555 = vunpack.c.h.b16 %v53
  %v556 = vunpack.c.l.b16 %v54
  %v557 = vunpack.c.h.b16 %v54
  %v558 = vunpack.c.l.b16 %v55
  %v559 = vunpack.c.h.b16 %v55
  %v560 = vunpack.c.l.b16 %v56
  %v561 = vunpack.c.h.b16 %v56
  %v562 = vunpack.c.l.b16 %v57
  %v563 = vunpack.c.h.b16 %v57
  %v564 = vunpack.c.l.b16 %v58
  %v565 = vunpack.c.h.b16 %v58
  %v566 = vunpack.c.l.b16 %v59
  %v567 = vunpack.c.h.b16 %v59
  %v568 = vunpack.c.l.b16 %v60
  %v569 = vunpack.c.h.b16 %v60
  %v570 = vunpack.c.l.b16 %v61
  %v571 = vunpack.c.h.b16 %v61
  %v572 = vunpack.c.l.b16 %v62
  %v573 = vunpack.c.h.b16 %v62
  %v574 = vunpack.c.l.b16 %v63
  %v575 = vunpack.c.h.b16 %v63
  %v576 = vunpack.c.l.b16 %v64
  %v577 = vunpack.c.h.b16 %v64
  %v578 = vunpack.c.l.b16 %v65
  %v579 = vunpack.c.h.b16 %v65
  %v580 = vunpack.c.l.b16 %v66
  %v581 = vunpack.c.h.b16 %v66
  %v582 = vunpack.c.l.b16 %v67
  %v583 = vunpack.c.h.b16 %v67
  %v584 = vunpack.c.l.b16 %v68
  %v585 = vunpack.c.h.b16 %v68
  %v586 = vunpack.c.l.b16 %v69
  %v587 = vunpack.c.h.b16 %v69
  %v588 = vunpack.c.l.b16 %v70
  %v589 = vunpack.c.h.b16 %v70
  %v590 = vunpack.c.l.b16 %v71
  %v591 = vunpack.c.h.b16 %v71
  %v592 = vunpack.c.l.b16 %v72
  %v593 = vunpack.c.h.b16 %v72
  %v594 = vunpack.c.l.b16 %v73
  %v595 = vunpack.c.h.b16 %v73
  %v596 = vunpack.c.l.b16 %v74
  %v597 = vunpack.c.h.b16 %v74
  %v598 = vunpack.c.l.b16 %v75
  %v599 = vunpack.c.h.b16 %v75
  %v600 = vunpack.c.l.b16 %v76
  %v601 = vunpack.c.h.b16 %v76
  %v602 = vunpack.c.l.b16 %v77
  %v603 = vunpack.c.h.b16 %v77
  %v604 = vunpack.c.l.b16 %v78
  %v605 = vunpack.c.h.b16 %v78
  %v606 = vunpack.c.l.b16 %v79
  %v607 = vunpack.c.h.b16 %v79
  %v608 = vunpack.c.l.b16 %v80
  %v609 = vunpack.c.h.b16 %v80
  %v610 = vunpack.c.l.b16 %v81
  %v611 = vunpack.c.h.b16 %v81
  %v612 = vunpack.c.l.b16 %v82
  %v613 = vunpack.c.h.b16 %v82
  %v614 = vunpack.c.l.b16 %v83
  %v615 = vunpack.c.h.b16 %v83
  %v616 = vunpack.c.l.b16 %v84
  %v617 = vunpack.c.h.b16 %v84
  %v618 = vunpack.c.l.b16 %v85
  %v619 = vunpack.c.h.b16 %v85
  %v620 = vunpack.c.l.b16 %v86
  %v621 = vunpack.c.h.b16 %v86
  %v622 = vunpack.c.l.b16 %v87
  %v623 = vunpack.c.h.b16 %v87
  %v624 = vunpack.c.l.b16 %v88
  %v625 = vunpack.c.h.b16 %v88
  %v626 = vunpack.c.l.b16 %v89
  %v627 = vunpack.c.h.b16 %v89
  %v628 = vunpack.c.l.b16 %v90
  %v629 = vunpack.c.h.b16 %v90
  %v630 = vunpack.c.l.b16 %v91
  %v631 = vunpack.c.h.b16 %v91
  %v632 = vunpack.c.l.b16 %v92
  %v633 = vunpack.c.h.b16 %v92
  %v634 = vunpack.c.l.b16 %v93
  %v635 = vunpack.c.h.b16 %v93
  %v636 = vunpack.c.l.b16 %v94
  %v637 = vunpack.c.h.b16 %v94
  %v638 = vunpack.c.l.b16 %v95
  %v639 = vunpack.c.h.b16 %v95
  %v640 = vunpack.c.l.b16 %v96
  %v641 = vunpack.c.h.b16 %v96
  %v642 = vunpack.c.l.b16 %v97
  %v643 = vunpack.c.h.b16 %v97
  %v644 = vunpack.c.l.b16 %v98
  %v645 = vunpack.c.h.b16 %v98
  %v646 = vunpack.c.l.b16 %v99
  %v647 = vunpack.c.h.b16 %v99
  %v648 = vunpack.c.l.b16 %v100
  %v649 = vunpack.c.h.b16 %v100
  %v650 = vunpack.c.l.b16 %v101
  %v651 = vunpack.c.h.b16 %v101
  %v652 = vunpack.c.l.b16 %v102
  %v653 = vunpack.c.h.b16 %v102
  %v654 = vunpack.c.l.b16 %v103
  %v655 = vunpack.c.h.b16 %v103
  %v656 = vunpack.c.l.b16 %v104
  %v657 = vunpack.c.h.b16 %v104
  %v658 = vunpack.c.l.b16 %v105
  %v659 = vunpack.c.h.b16 %v105
  %v660 = vunpack.c.l.b16 %v106
  %v661 = vunpack.c.h.b16 %v106
  %v662 = vunpack.c.l.b16 %v107
  %v663 = vunpack.c.h.b16 %v107
  %v664 = vunpack.c.l.b16 %v108
  %v665 = vunpack.c.h.b16 %v108
  %v666 = vunpack.c.l.b16 %v109
  %v667 = vunpack.c.h.b16 %v109
  %v668 = vunpack.c.l.b16 %v110
  %v669 = vunpack.c.h.b16 %v110
  %v670 = vunpack.c.l.b16 %v111
  %v671 = vunpack.c.h.b16 %v111
  %v672 = vunpack.c.l.b16 %v112
  %v673 = vunpack.c.h.b16 %v112
  %v674 = vunpack.c.l.b16 %v113
  %v675 = vunpack.c.h.b16 %v113
  %v676 = vunpack.c.l.b16 %v114
  %v677 = vunpack.c.h.b16 %v114
  %v678 = vunpack.c.l.b16 %v115
  %v679 = vunpack.c.h.b16 %v115
  %v680 = vunpack.c.l.b16 %v116
  %v681 = vunpack.c.h.b16 %v116
  %v682 = vunpack.c.l.b16 %v117
  %v683 = vunpack.c.h.b16 %v117
  %v684 = vunpack.c.l.b16 %v118
  %v685 = vunpack.c.h.b16 %v118
  %v686 = vunpack.c.l.b16 %v119
  %v687 = vunpack.c.h.b16 %v119
  %v688 = vunpack.c.l.b16 %v120
  %v689 = vunpack.c.h.b16 %v120
  %v690 = vunpack.c.l.b16 %v121
  %v691 = vunpack.c.h.b16 %v121
  %v692 = vunpack.c.l.b16 %v122
  %v693 = vunpack.c.h.b16 %v122
  %v694 = vunpack.c.l.b16 %v123
  %v695 = vunpack.c.h.b16 %v123
  %v696 = vunpack.c.l.b16 %v124
  %v697 = vunpack.c.h.b16 %v124
  %v698 = vunpack.c.l.b16 %v125
  %v699 = vunpack.c.h.b16 %v125
  %v700 = vunpack.c.l.b16 %v126
  %v701 = vunpack.c.h.b16 %v126
  %v702 = vunpack.c.l.b16 %v127
  %v703 = vunpack.c.h.b16 %v127
  %v704 = vunpack.c.l.b16 %v128
  %v705 = vunpack.c.h.b16 %v128
  %v706 = vunpack.c.l.b16 %v129
  %v707 = vunpack.c.h.b16 %v129
  %v708 = vunpack.c.l.b16 %v130
  %v709 = vunpack.c.h.b16 %v130
  %v710 = vunpack.c.l.b16 %v131
  %v711 = vunpack.c.h.b16 %v131
  %v712 = vunpack.c.l.b16 %v132
  %v713 = vunpack.c.h.b16 %v132
  %v714 = vunpack.c.l.b16 %v133
  %v715 = vunpack.c.h.b16 %v133
  %v716 = vunpack.c.l.b16 %v134
  %v717 = vunpack.c.h.b16 %v134
  %v718 = vunpack.c.l.b16 %v135
  %v719 = vunpack.c.h.b16 %v135
  %v720 = vunpack.c.l.b16 %v136
  %v721 = vunpack.c.h.b16 %v136
  %v722 = vunpack.c.l.b16 %v137
  %v723 = vunpack.c.h.b16 %v137
  %v724 = vunpack.c.l.b16 %v138
  %v725 = vunpack.c.h.b16 %v138
  %v726 = vunpack.c.l.b16 %v139
  %v727 = vunpack.c.h.b16 %v139
  %v728 = vunpack.c.l.b16 %v140
  %v729 = vunpack.c.h.b16 %v140
  %v730 = vunpack.c.l.b16 %v141
  %v731 = vunpack.c.h.b16 %v141
  %v732 = vunpack.c.l.b16 %v142
  %v733 = vunpack.c.h.b16 %v142
  %v734 = vunpack.c.l.b16 %v143
  %v735 = vunpack.c.h.b16 %v143
  %v736 = vunpack.c.l.b16 %v144
  %v737 = vunpack.c.h.b16 %v144
  %v738 = vunpack.c.l.b16 %v145
  %v739 = vunpack.c.h.b16 %v145
  %v740 = vunpack.c.l.b16 %v146
  %v741 = vunpack.c.h.b16 %v146
  %v742 = vunpack.c.l.b16 %v147
  %v743 = vunpack.c.h.b16 %v147
  %v744 = vunpack.c.l.b16 %v148
  %v745 = vunpack.c.h.b16 %v148
  %v746 = vunpack.c.l.b16 %v149
  %v747 = vunpack.c.h.b16 %v149
  %v748 = vunpack.c.l.b16 %v150
  %v749 = vunpack.c.h.b16 %v150
  %v750 = vunpack.c.l.b16 %v151
  %v751 = vunpack.c.h.b16 %v151
  %v752 = vunpack.c.l.b16 %v152
  %v753 = vunpack.c.h.b16 %v152
  %v754 = vunpack.c.l.b16 %v153
  %v755 = vunpack.c.h.b16 %v153
  %v756 = vunpack.c.l.b16 %v154
  %v757 = vunpack.c.h.b16 %v154
  %v758 = vunpack.c.l.b16 %v155
  %v759 = vunpack.c.h.b16 %v155
  %v760 = vunpack.c.l.b16 %v156
  %v761 = vunpack.c.h.b16 %v156
  %v762 = vunpack.c.l.b16 %v157
  %v763 = vunpack.c.h.b16 %v157
  %v764 = vunpack.c.l.b16 %v158
  %v765 = vunpack.c.h.b16 %v158
  %v766 = vunpack.c.l.b16 %v159
  %v767 = vunpack.c.h.b16 %v159
  %v768 = vunpack.c.l.b16 %v160
  %v769 = vunpack.c.h.b16 %v160
  %v770 = vunpack.c.l.b16 %v161
  %v771 = vunpack.c.h.b16 %v161
  %v772 = vunpack.c.l.b16 %v162
  %v773 = vunpack.c.h.b16 %v162
  %v774 = vunpack.c.l.b16 %v163
  %v775 = vunpack.c.h.b16 %v163
  %v776 = vunpack.c.l.b16 %v164
  %v777 = vunpack.c.h.b16 %v164
  %v778 = vunpack.c.l.b16 %v165
  %v779 = vunpack.c.h.b16 %v165
  %v780 = vunpack.c.l.b16 %v166
  %v781 = vunpack.c.h.b16 %v166
  %v782 = vunpack.c.l.b16 %v167
  %v783 = vunpack.c.h.b16 %v167
  %v784 = vunpack.c.l.b16 %v168
  %v785 = vunpack.c.h.b16 %v168
  %v786 = vunpack.c.l.b16 %v169
  %v787 = vunpack.c.h.b16 %v169
  %v788 = vunpack.c.l.b16 %v170
  %v789 = vunpack.c.h.b16 %v170
  %v790 = vunpack.c.l.b16 %v171
  %v791 = vunpack.c.h.b16 %v171
  %v792 = vunpack.c.l.b16 %v172
  %v793 = vunpack.c.h.b16 %v172
  %v794 = vunpack.c.l.b16 %v173
  %v795 = vunpack.c.h.b16 %v173
  %v796 = vunpack.c.l.b16 %v174
  %v797 = vunpack.c.h.b16 %v174
  %v798 = vunpack.c.l.b16 %v175
  %v799 = vunpack.c.h.b16 %v175
  %v800 = vunpack.c.l.b16 %v176
  %v801 = vunpack.c.h.b16 %v176
  %v802 = vunpack.c.l.b16 %v177
  %v803 = vunpack.c.h.b16 %v177
  %v804 = vunpack.c.l.b16 %v178
  %v805 = vunpack.c.h.b16 %v178
  %v806 = vunpack.c.l.b16 %v179
  %v807 = vunpack.c.h.b16 %v179
  %v808 = vunpack.c.l.b16 %v180
  %v809 = vunpack.c.h.b16 %v180
  %v810 = vunpack.c.l.b16 %v181
  %v811 = vunpack.c.h.b16 %v181
  %v812 = vunpack.c.l.b16 %v182
  %v813 = vunpack.c.h.b16 %v182
  %v814 = vunpack.c.l.b16 %v183
  %v815 = vunpack.c.h.b16 %v183
  %v816 = vunpack.c.l.b16 %v184
  %v817 = vunpack.c.h.b16 %v184
  %v818 = vunpack.c.l.b16 %v185
  %v819 = vunpack.c.h.b16 %v185
  %v820 = vunpack.c.l.b16 %v186
  %v821 = vunpack.c.h.b16 %v186
  %v822 = vunpack.c.l.b16 %v187
  %v823 = vunpack.c.h.b16 %v187
  %v824 = vunpack.c.l.b16 %v188
  %v825 = vunpack.c.h.b16 %v188
  %v826 = vunpack.c.l.b16 %v189
  %v827 = vunpack.c.h.b16 %v189
  %v828 = vunpack.c.l.b16 %v190
  %v829 = vunpack.c.h.b16 %v190
  %v830 = vunpack.c.l.b16 %v191
  %v831 = vunpack.c.h.b16 %v191
  %v832 = vunpack.c.l.b16 %v192
  %v833 = vunpack.c.h.b16 %v192
  %v834 = vunpack.c.l.b16 %v193
  %v835 = vunpack.c.h.b16 %v193
  %v836 = vunpack.c.l.b16 %v194
  %v837 = vunpack.c.h.b16 %v194
  %v838 = vunpack.c.l.b16 %v195
  %v839 = vunpack.c.h.b16 %v195
  %v840 = vunpack.c.l.b16 %v196
  %v841 = vunpack.c.h.b16 %v196
  %v842 = vunpack.c.l.b16 %v197
  %v843 = vunpack.c.h.b16 %v197
  %v844 = vunpack.c.l.b16 %v198
  %v845 = vunpack.c.h.b16 %v198
  %v846 = vunpack.c.l.b16 %v199
  %v847 = vunpack.c.h.b16 %v199
  %v848 = vunpack.c.l.b16 %v200
  %v849 = vunpack.c.h.b16 %v200
  %v850 = vunpack.c.l.b16 %v201
  %v851 = vunpack.c.h.b16 %v201
  %v852 = vunpack.c.l.b16 %v202
  %v853 = vunpack.c.h.b16 %v202
  %v854 = vunpack.c.l.b16 %v203
  %v855 = vunpack.c.h.b16 %v203
  %v856 = vunpack.c.l.b16 %v204
  %v857 = vunpack.c.h.b16 %v204
  %v858 = vunpack.c.l.b16 %v205
  %v859 = vunpack.c.h.b16 %v205
  %v860 = vunpack.c.l.b16 %v206
  %v861 = vunpack.c.h.b16 %v206
  %v862 = vunpack.c.l.b16 %v207
  %v863 = vunpack.c.h.b16 %v207
  %v864 = vunpack.c.l.b16 %v208
  %v865 = vunpack.c.h.b16 %v208
  %v866 = vunpack.c.l.b16 %v209
  %v867 = vunpack.c.h.b16 %v209
  %v868 = vunpack.c.l.b16 %v210
  %v869 = vunpack.c.h.b16 %v210
  %v870 = vunpack.c.l.b16 %v211
  %v871 = vunpack.c.h.b16 %v211
  %v872 = vunpack.c.l.b16 %v212
  %v873 = vunpack.c.h.b16 %v212
  %v874 = vunpack.c.l.b16 %v213
  %v875 = vunpack.c.h.b16 %v213
  %v876 = vunpack.c.l.b16 %v214
  %v877 = vunpack.c.h.b16 %v214
  %v878 = vunpack.c.l.b16 %v215
  %v879 = vunpack.c.h.b16 %v215
  %v880 = vunpack.c.l.b16 %v216
  %v881 = vunpack.c.h.b16 %v216
  %v882 = vunpack.c.l.b16 %v217
  %v883 = vunpack.c.h.b16 %v217
  %v884 = vunpack.c.l.b16 %v218
  %v885 = vunpack.c.h.b16 %v218
  %v886 = vunpack.c.l.b16 %v219
  %v887 = vunpack.c.h.b16 %v219
  %v888 = vunpack.c.l.b16 %v220
  %v889 = vunpack.c.h.b16 %v220
  %v890 = vunpack.c.l.b16 %v221
  %v891 = vunpack.c.h.b16 %v221
  %v892 = vunpack.c.l.b16 %v222
  %v893 = vunpack.c.h.b16 %v222
  %v894 = vunpack.c.l.b16 %v223
  %v895 = vunpack.c.h.b16 %v223
  %v896 = vunpack.c.l.b16 %v224
  %v897 = vunpack.c.h.b16 %v224
  %v898 = vunpack.c.l.b16 %v225
  %v899 = vunpack.c.h.b16 %v225
  %v900 = vunpack.c.l.b16 %v226
  %v901 = vunpack.c.h.b16 %v226
  %v902 = vpack.c.b16 %v480, %v478
  %v903 = vpack.c.b16 %v481, %v479
  %v904 = vpack.c.b16 %v484, %v482
  %v905 = vpack.c.b16 %v485, %v483
  %v906 = vpack.c.b16 %v488, %v486
  %v907 = vpack.c.b16 %v489, %v487
  %v908 = vpack.c.b16 %v492, %v490
  %v909 = vpack.c.b16 %v493, %v491
  %v910 = vpack.c.b16 %v496, %v494
  %v911 = vpack.c.b16 %v497, %v495
  %v912 = vpack.c.b16 %v500, %v498
  %v913 = vpack.c.b16 %v501, %v499
  %v914 = vpack.c.b16 %v504, %v502
  %v915 = vpack.c.b16 %v505, %v503
  %v916 = vpack.c.b16 %v508, %v506
  %v917 = vpack.c.b16 %v509, %v507
  %v918 = vpack.c.b16 %v512, %v510
  %v919 = vpack.c.b16 %v513, %v511
  %v920 = vpack.c.b16 %v516, %v514
  %v921 = vpack.c.b16 %v517, %v515
  %v922 = vpack.c.b16 %v520, %v518
  %v923 = vpack.c.b16 %v521, %v519
  %v924 = vpack.c.b16 %v524, %v522
  %v925 = vpack.c.b16 %v525, %v523
  %v926 = vpack.c.b16 %v528, %v526
  %v927 = vpack.c.b16 %v529, %v527
  %v928 = vpack.c.b16 %v532, %v530
  %v929 = vpack.c.b16 %v533, %v531
  %v930 = vpack.c.b16 %v536, %v534
  %v931 = vpack.c.b16 %v537, %v535
  %v932 = vpack.c.b16 %v540, %v538
  %v933 = vpack.c.b16 %v541, %v539
  %v934 = vpack.c.b16 %v544, %v542
  %v935 = vpack.c.b16 %v545, %v543
  %v936 = vpack.c.b16 %v548, %v546
  %v937 = vpack.c.b16 %v549, %v547
  %v938 = vpack.c.b16 %v552, %v550
  %v939 = vpack.c.b16 %v553, %v551
  %v940 = vpack.c.b16 %v556, %v554
  %v941 = vpack.c.b16 %v557, %v555
  %v942 = vpack.c.b16 %v560, %v558
  %v943 = vpack.c.b16 %v561, %v559
  %v944 = vpack.c.b16 %v564, %v562
  %v945 = vpack.c.b16 %v565, %v563
  %v946 = vpack.c.b16 %v568, %v566
  %v947 = vpack.c.b16 %v569, %v567
  %v948 = vpack.c.b16 %v572, %v570
  %v949 = vpack.c.b16 %v573, %v571
  %v950 = vpack.c.b16 %v576, %v574
  %v951 = vpack.c.b16 %v577, %v575
  %v952 = vpack.c.b16 %v580, %v578
  %v953 = vpack.c.b16 %v581, %v579
  %v954 = vpack.c.b16 %v584, %v582
  %v955 = vpack.c.b16 %v585, %v583
  %v956 = vpack.c.b16 %v588, %v586
  %v957 = vpack.c.b16 %v589, %v587
  %v958 = vpack.c.b16 %v592, %v590
  %v959 = vpack.c.b16 %v593, %v591
  %v960 = vpack.c.b16 %v596, %v594
  %v961 = vpack.c.b16 %v597, %v595
  %v962 = vpack.c.b16 %v600, %v598
  %v963 = vpack.c.b16 %v601, %v599
  %v964 = vpack.c.b16 %v604, %v602
  %v965 = vpack.c.b16 %v605, %v603
  %v966 = vpack.c.b16 %v608, %v606
  %v967 = vpack.c.b16 %v609, %v607
  %v968 = vpack.c.b16 %v612, %v610
  %v969 = vpack.c.b16 %v613, %v611
  %v970 = vpack.c.b16 %v616, %v614
  %v971 = vpack.c.b16 %v617, %v615
  %v972 = vpack.c.b16 %v620, %v618
  %v973 = vpack.c.b16 %v621, %v619
  %v974 = vpack.c.b16 %v624, %v622
  %v975 = vpack.c.b16 %v625, %v623
  %v976 = vpack.c.b16 %v628, %v626
  %v977 = vpack.c.b16 %v629, %v627
  %v978 = vpack.c.b16 %v632, %v630
  %v979 = vpack.c.b16 %v633, %v631
  %v980 = vpack.c.b16 %v636, %v634
  %v981 = vpack.c.b16 %v637, %v635
  %v982 = vpack.c.b16 %v640, %v638
  %v983 = vpack.c.b16 %v641, %v639
  %v984 = vpack.c.b16 %v644, %v642
  %v985 = vpack.c.b16 %v645, %v643
  %v986 = vpack.c.b16 %v648, %v646
  %v987 = vpack.c.b16 %v649, %v647
  %v988 = vpack.c.b16 %v652, %v650
  %v989 = vpack.c.b16 %v653, %v651
  %v990 = vpack.c.b16 %v656, %v654
  %v991 = vpack.c.b16 %v657, %v655
  %v992 = vpack.c.b16 %v660, %v658
  %v993 = vpack.c.b16 %v661, %v659
  %v994 = vpack.c.b16 %v664, %v662
  %v995 = vpack.c.b16 %v665, %v663
  %v996 = vpack.c.b16 %v668, %v666
  %v997 = vpack.c.b16 %v669, %v667
  %v998 = vpack.c.b16 %v672, %v670
  %v999 = vpack.c.b16 %v673, %v671
  %v1000 = vpack.c.b16 %v676, %v674
  %v1001 = vpack.c.b16 %v677, %v675
  %v1002 = vpack.c.b16 %v680, %v678
  %v1003 = vpack.c.b16 %v681, %v679
  %v1004 = vpack.c.b16 %v684, %v682
  %v1005 = vpack.c.b16 %v685, %v683
  %v1006 = vpack.c.b16 %v688, %v686
  %v1007 = vpack.c.b16 %v689, %v687
  %v1008 = vpack.c.b16 %v692, %v690
  %v1009 = vpack.c.b16 %v693, %v691
  %v1010 = vpack.c.b16 %v696, %v694
  %v1011 = vpack.c.b16 %v697, %v695
  %v1012 = vpack.c.b16 %v700, %v698
  %v1013 = vpack.c.b16 %v701, %v699
  %v1014 = vpack.c.b16 %v704, %v702
  %v1015 = vpack.c.b16 %v705, %v703
  %v1016 = vpack.c.b16 %v708, %v706
  %v1017 = vpack.c.b16 %v709, %v707
  %v1018 = vpack.c.b16 %v712, %v710
  %v1019 = vpack.c.b16 %v713, %v711
  %v1020 = vpack.c.b16 %v716, %v714
  %v1021 = vpack.c.b16 %v717, %v715
  %v1022 = vpack.c.b16 %v720, %v718
  %v1023 = vpack.c.b16 %v721, %v719
  %v1024 = vpack.c.b16 %v724, %v722
  %v1025 = vpack.c.b16 %v725, %v723
  %v1026 = vpack.c.b16 %v728, %v726
  %v1027 = vpack.c.b16 %v729, %v727
  %v1028 = vpack.c.b16 %v732, %v730
  %v1029 = vpack.c.b16 %v733, %v731
  %v1030 = vpack.c.b16 %v736, %v734
  %v1031 = vpack.c.b16 %v737, %v735
  %v1032 = vpack.c.b16 %v740, %v738
  %v1033 = vpack.c.b16 %v741, %v739
  %v1034 = vpack.c.b16 %v744, %v742
  %v1035 = vpack.c.b16 %v745, %v743
  %v1036 = vpack.c.b16 %v748, %v746
  %v1037 = vpack.c.b16 %v749, %v747
  %v1038 = vpack.c.b16 %v752, %v750
  %v1039 = vpack.c.b16 %v753, %v751
  %v1040 = vpack.c.b16 %v756, %v754
  %v1041 = vpack.c.b16 %v757, %v755
  %v1042 = vpack.c.b16 %v760, %v758
  %v1043 = vpack.c.b16 %v761, %v759
  %v1044 = vpack.c.b16 %v764, %v762
  %v1045 = vpack.c.b16 %v765, %v763
  %v1046 = vpack.c.b16 %v768, %v766
  %v1047 = vpack.c.b16 %v769, %v767
  %v1048 = vpack.c.b16 %v772, %v770
  %v1049 = vpack.c.b16 %v773, %v771
  %v1050 = vpack.c.b16 %v776, %v774
  %v1051 = vpack.c.b16 %v777, %v775
  %v1052 = vpack.c.b16 %v780, %v778
  %v1053 = vpack.c.b16 %v781, %v779
  %v1054 = vpack.c.b16 %v784, %v782
  %v1055 = vpack.c.b16 %v785, %v783
  %v1056 = vpack.c.b16 %v788, %v786
  %v1057 = vpack.c.b16 %v789, %v787
  %v1058 = vpack.c.b16 %v792, %v790
  %v1059 = vpack.c.b16 %v793, %v791
  %v1060 = vpack.c.b16 %v796, %v794
  %v1061 = vpack.c.b16 %v797, %v795
  %v1062 = vpack.c.b16 %v800, %v798
  %v1063 = vpack.c.b16 %v801, %v799
  %v1064 = vpack.c.b16 %v804, %v802
  %v1065 = vpack.c.b16 %v805, %v803
  %v1066 = vpack.c.b16 %v808, %v806
  %v1067 = vpack.c.b16 %v809, %v807
  %v1068 = vpack.c.b16 %v812, %v810
  %v1069 = vpack.c.b16 %v813, %v811
  %v1070 = vpack.c.b16 %v816, %v814
  %v1071 = vpack.c.b16 %v817, %v815
  %v1072 = vpack.c.b16 %v820, %v818
  %v1073 = vpack.c.b16 %v821, %v819
  %v1074 = vpack.c.b16 %v824, %v822
  %v1075 = vpack.c.b16 %v825, %v823
  %v1076 = vpack.c.b16 %v828, %v826
  %v1077 = vpack.c.b16 %v829, %v827
  %v1078 = vpack.c.b16 %v832, %v830
  %v1079 = vpack.c.b16 %v833, %v831
  %v1080 = vpack.c.b16 %v836, %v834
  %v1081 = vpack.c.b16 %v837, %v835
  %v1082 = vpack.c.b16 %v840, %v838
  %v1083 = vpack.c.b16 %v841, %v839
  %v1084 = vpack.c.b16 %v844, %v842
  %v1085 = vpack.c.b16 %v845, %v843
  %v1086 = vpack.c.b16 %v848, %v846
  %v1087 = vpack.c.b16 %v849, %v847
  %v1088 = vpack.c.b16 %v852, %v850
  %v1089 = vpack.c.b16 %v853, %v851
  %v1090 = vpack.c.b16 %v856, %v854
  %v1091 = vpack.c.b16 %v857, %v855
  %v1092 = vpack.c.b16 %v860, %v858
  %v1093 = vpack.c.b16 %v861, %v859
  %v1094 = vpack.c.b16 %v864, %v862
  %v1095 = vpack.c.b16 %v865, %v863
  %v1096 = vpack.c.b16 %v868, %v866
  %v1097 = vpack.c.b16 %v869, %v867
  %v1098 = vpack.c.b16 %v872, %v870
  %v1099 = vpack.c.b16 %v873, %v871
  %v1100 = vpack.c.b16 %v876, %v874
  %v1101 = vpack.c.b16 %v877, %v875
  %v1102 = vpack.c.b16 %v880, %v878
  %v1103 = vpack.c.b16 %v881, %v879
  %v1104 = vpack.c.b16 %v884, %v882
  %v1105 = vpack.c.b16 %v885, %v883
  %v1106 = vpack.c.b16 %v888, %v886
  %v1107 = vpack.c.b16 %v889, %v887
  %v1108 = vpack.c.b16 %v892, %v890
  %v1109 = vpack.c.b16 %v893, %v891
  %v1110 = vpack.c.b16 %v896, %v894
  %v1111 = vpack.c.b16 %v897, %v895
  %v1112 = vpack.c.b16 %v900, %v898
  %v1113 = vpack.c.b16 %v901, %v899
  %v1358 = vunpack.c.l.b16 %v227
  %v1359 = vunpack.c.l.b16 %v228
  %v1360 = vunpack.c.l.b16 %v229
  %v1361 = vunpack.c.l.b16 %v230
  %v1362 = vunpack.c.l.b16 %v231
  %v1363 = vunpack.c.l.b16 %v232
  %v1364 = vunpack.c.l.b16 %v233
  %v1365 = vunpack.c.l.b16 %v234
  %v1366 = vunpack.c.l.b16 %v235
  %v1367 = vunpack.c.l.b16 %v236
  %v1368 = vunpack.c.l.b16 %v237
  %v1369 = vunpack.c.l.b16 %v238
  %v1370 = vunpack.c.l.b16 %v239
  %v1371 = vunpack.c.l.b16 %v240
  %v1372 = vunpack.c.l.b16 %v241
  %v1373 = vunpack.c.l.b16 %v242
  %v1374 = vunpack.c.l.b16 %v243
  %v1375 = vunpack.c.l.b16 %v244
  %v1376 = vunpack.c.l.b16 %v245
  %v1377 = vunpack.c.l.b16 %v246
  %v1378 = vunpack.c.l.b16 %v247
  %v1379 = vunpack.c.l.b16 %v248
  %v1380 = vunpack.c.l.b16 %v249
  %v1381 = vunpack.c.l.b16 %v250
  %v1382 = vunpack.c.l.b16 %v251
  %v1383 = vunpack.c.l.b16 %v252
  %v1384 = vunpack.c.l.b16 %v253
  %v1385 = vunpack.c.l.b16 %v254
  %v1386 = vunpack.c.l.b16 %v255
  %v1387 = vunpack.c.l.b16 %v256
  %v1388 = vunpack.c.l.b16 %v257
  %v1389 = vunpack.c.l.b16 %v258
  %v1390 = vpack.c.b16 %v1359, %v1358
  %v1391 = vpack.c.b16 %v1361, %v1360
  %v1392 = vpack.c.b16 %v1363, %v1362
  %v1393 = vpack.c.b16 %v1365, %v1364
  %v1394 = vpack.c.b16 %v1367, %v1366
  %v1395 = vpack.c.b16 %v1369, %v1368
  %v1396 = vpack.c.b16 %v1371, %v1370
  %v1397 = vpack.c.b16 %v1373, %v1372
  %v1398 = vpack.c.b16 %v1375, %v1374
  %v1399 = vpack.c.b16 %v1377, %v1376
  %v1400 = vpack.c.b16 %v1379, %v1378
  %v1401 = vpack.c.b16 %v1381, %v1380
  %v1402 = vpack.c.b16 %v1383, %v1382
  %v1403 = vpack.c.b16 %v1385, %v1384
  %v1404 = vpack.c.b16 %v1387, %v1386
  %v1405 = vpack.c.b16 %v1389, %v1388
  %1422 = vmatprep.subr.bf16.mxu0 0
  %1423 = vmatpush1.bf16.msra.mxu0 %v1390
  %1424 = vmatprep.subr.bf16.mxu0 0
  %1425 = vmatpush1.bf16.msra.mxu0 %v1391
  %1426 = vmatprep.subr.bf16.mxu0 0
  %1427 = vmatpush1.bf16.msra.mxu0 %v1392
  %1428 = vmatprep.subr.bf16.mxu0 0
  %1429 = vmatpush1.bf16.msra.mxu0 %v1393
  %1430 = vmatprep.subr.bf16.mxu0 0
  %1431 = vmatpush1.bf16.msra.mxu0 %v1394
  %1432 = vmatprep.subr.bf16.mxu0 0
  %1433 = vmatpush1.bf16.msra.mxu0 %v1395
  %1434 = vmatprep.subr.bf16.mxu0 0
  %1435 = vmatpush1.bf16.msra.mxu0 %v1396
  %1436 = vmatprep.subr.bf16.mxu0 0
  %1437 = vmatpush1.bf16.msra.mxu0 %v1397
  %1438 = vmatprep.subr.bf16.mxu0 0
  %1439 = vmatpush1.bf16.msra.mxu0 %v1398
  %1440 = vmatprep.subr.bf16.mxu0 0
  %1441 = vmatpush1.bf16.msra.mxu0 %v1399
  %1442 = vmatprep.subr.bf16.mxu0 0
  %1443 = vmatpush1.bf16.msra.mxu0 %v1400
  %1444 = vmatprep.subr.bf16.mxu0 0
  %1445 = vmatpush1.bf16.msra.mxu0 %v1401
  %1446 = vmatprep.subr.bf16.mxu0 0
  %1447 = vmatpush1.bf16.msra.mxu0 %v1402
  %1448 = vmatprep.subr.bf16.mxu0 0
  %1449 = vmatpush1.bf16.msra.mxu0 %v1403
  %1450 = vmatprep.subr.bf16.mxu0 0
  %1451 = vmatpush1.bf16.msra.mxu0 %v1404
  %1452 = vmatprep.subr.bf16.mxu0 0
  %1453 = vmatpush1.bf16.msra.mxu0 %v1405
  %1454 = vmatprep.mubr.bf16.mxu0 %v903
  %1455 = vmatmul.mubr.bf16.gmra.mrb[0].mxu0 %v902
  %v1456 = vpop.f32.mrb[0].mxu0
  %v1457 = vadd.f32 %v264, %v1456
  %v1458 = vpop.f32.mrb[0].mxu0
  %v1459 = vpop.f32.mrb[0].mxu0
  %v1460 = vadd.f32 %v264, %v1459
  %v1461 = vpop.f32.mrb[0].mxu0
  %1462 = vmatprep.mubr.bf16.mxu0 %v905
  %1463 = vmatmul.mubr.bf16.gmra.mrb[0].mxu0 %v904
  %v1464 = vpop.f32.mrb[0].mxu0
  %v1465 = vadd.f32 %v264, %v1464
  %v1466 = vpop.f32.mrb[0].mxu0
  %v1467 = vpop.f32.mrb[0].mxu0
  %v1468 = vadd.f32 %v264, %v1467
  %v1469 = vpop.f32.mrb[0].mxu0
  %1470 = vmatprep.mubr.bf16.mxu0 %v907
  %1471 = vmatmul.mubr.bf16.gmra.mrb[0].mxu0 %v906
  %v1472 = vpop.f32.mrb[0].mxu0
  %v1473 = vadd.f32 %v264, %v1472
  %v1474 = vpop.f32.mrb[0].mxu0
  %v1475 = vpop.f32.mrb[0].mxu0
  %v1476 = vadd.f32 %v264, %v1475
  %v1477 = vpop.f32.mrb[0].mxu0
  %1478 = vmatprep.mubr.bf16.mxu0 %v909
  %1479 = vmatmul.mubr.bf16.gmra.mrb[0].mxu0 %v908
  %v1480 = vpop.f32.mrb[0].mxu0
  %v1481 = vadd.f32 %v264, %v1480
  %v1482 = vpop.f32.mrb[0].mxu0
  %v1483 = vpop.f32.mrb[0].mxu0
  %v1484 = vadd.f32 %v264, %v1483
  %v1485 = vpop.f32.mrb[0].mxu0
  %1486 = vmatprep.mubr.bf16.mxu0 %v911
  %1487 = vmatmul.mubr.bf16.gmra.mrb[0].mxu0 %v910
  %v1488 = vpop.f32.mrb[0].mxu0
  %v1489 = vadd.f32 %v264, %v1488
  %v1490 = vpop.f32.mrb[0].mxu0
  %v1491 = vpop.f32.mrb[0].mxu0
  %v1492 = vadd.f32 %v264, %v1491
  %v1493 = vpop.f32.mrb[0].mxu0
  %1494 = vmatprep.mubr.bf16.mxu0 %v913
  %1495 = vmatmul.mubr.bf16.gmra.mrb[0].mxu0 %v912
  %v1496 = vpop.f32.mrb[0].mxu0
  %v1497 = vadd.f32 %v264, %v1496
  %v1498 = vpop.f32.mrb[0].mxu0
  %v1499 = vpop.f32.mrb[0].mxu0
  %v1500 = vadd.f32 %v264, %v1499
  %v1501 = vpop.f32.mrb[0].mxu0
  %1502 = vmatprep.mubr.bf16.mxu0 %v915
  %1503 = vmatmul.mubr.bf16.gmra.mrb[0].mxu0 %v914
  %v1504 = vpop.f32.mrb[0].mxu0
  %v1505 = vadd.f32 %v264, %v1504
  %v1506 = vpop.f32.mrb[0].mxu0
  %v1507 = vpop.f32.mrb[0].mxu0
  %v1508 = vadd.f32 %v264, %v1507
  %v1509 = vpop.f32.mrb[0].mxu0
  %1510 = vmatprep.mubr.bf16.mxu0 %v917
  %1511 = vmatmul.mubr.bf16.gmra.mrb[0].mxu0 %v916
  %v1512 = vpop.f32.mrb[0].mxu0
  %v1513 = vadd.f32 %v264, %v1512
  %v1514 = vpop.f32.mrb[0].mxu0
  %v1515 = vpop.f32.mrb[0].mxu0
  %v1516 = vadd.f32 %v264, %v1515
  %v1517 = vpop.f32.mrb[0].mxu0
  %1518 = vmatprep.mubr.bf16.mxu0 %v919
  %1519 = vmatmul.mubr.bf16.gmra.mrb[0].mxu0 %v918
  %v1520 = vpop.f32.mrb[0].mxu0
  %v1521 = vadd.f32 %v264, %v1520
  %v1522 = vpop.f32.mrb[0].mxu0
  %v1523 = vpop.f32.mrb[0].mxu0
  %v1524 = vadd.f32 %v264, %v1523
  %v1525 = vpop.f32.mrb[0].mxu0
  %1526 = vmatprep.mubr.bf16.mxu0 %v921
  %1527 = vmatmul.mubr.bf16.gmra.mrb[0].mxu0 %v920
  %v1528 = vpop.f32.mrb[0].mxu0
  %v1529 = vadd.f32 %v264, %v1528
  %v1530 = vpop.f32.mrb[0].mxu0
  %v1531 = vpop.f32.mrb[0].mxu0
  %v1532 = vadd.f32 %v264, %v1531
  %v1533 = vpop.f32.mrb[0].mxu0
  %1534 = vmatprep.mubr.bf16.mxu0 %v923
  %1535 = vmatmul.mubr.bf16.gmra.mrb[0].mxu0 %v922
  %v1536 = vpop.f32.mrb[0].mxu0
  %v1537 = vadd.f32 %v264, %v1536
  %v1538 = vpop.f32.mrb[0].mxu0
  %v1539 = vpop.f32.mrb[0].mxu0
  %v1540 = vadd.f32 %v264, %v1539
  %v1541 = vpop.f32.mrb[0].mxu0
  %1542 = vmatprep.mubr.bf16.mxu0 %v925
  %1543 = vmatmul.mubr.bf16.gmra.mrb[0].mxu0 %v924
  %v1544 = vpop.f32.mrb[0].mxu0
  %v1545 = vadd.f32 %v264, %v1544
  %v1546 = vpop.f32.mrb[0].mxu0
  %v1547 = vpop.f32.mrb[0].mxu0
  %v1548 = vadd.f32 %v264, %v1547
  %v1549 = vpop.f32.mrb[0].mxu0
  %1550 = vmatprep.mubr.bf16.mxu0 %v927
  %1551 = vmatmul.mubr.bf16.gmra.mrb[0].mxu0 %v926
  %v1552 = vpop.f32.mrb[0].mxu0
  %v1553 = vadd.f32 %v264, %v1552
  %v1554 = vpop.f32.mrb[0].mxu0
  %v1555 = vpop.f32.mrb[0].mxu0
  %v1556 = vadd.f32 %v264, %v1555
  %v1557 = vpop.f32.mrb[0].mxu0
  %1558 = vmatprep.mubr.bf16.mxu0 %v929
  %1559 = vmatmul.mubr.bf16.gmra.mrb[0].mxu0 %v928
  %v1560 = vpop.f32.mrb[0].mxu0
  %v1561 = vadd.f32 %v264, %v1560
  %v1562 = vpop.f32.mrb[0].mxu0
  %v1563 = vpop.f32.mrb[0].mxu0
  %v1564 = vadd.f32 %v264, %v1563
  %v1565 = vpop.f32.mrb[0].mxu0
  %1566 = vmatprep.mubr.bf16.mxu0 %v931
  %1567 = vmatmul.mubr.bf16.gmra.mrb[0].mxu0 %v930
  %v1568 = vpop.f32.mrb[0].mxu0
  %v1569 = vadd.f32 %v264, %v1568
  %v1570 = vpop.f32.mrb[0].mxu0
  %v1571 = vpop.f32.mrb[0].mxu0
  %v1572 = vadd.f32 %v264, %v1571
  %v1573 = vpop.f32.mrb[0].mxu0
  %1574 = vmatprep.mubr.bf16.mxu0 %v933
  %1575 = vmatmul.mubr.bf16.gmra.mrb[0].mxu0 %v932
  %v1576 = vpop.f32.mrb[0].mxu0
  %v1577 = vadd.f32 %v264, %v1576
  %v1578 = vpop.f32.mrb[0].mxu0
  %v1579 = vpop.f32.mrb[0].mxu0
  %v1580 = vadd.f32 %v264, %v1579
  %v1581 = vpop.f32.mrb[0].mxu0
  %1582 = vmatprep.mubr.bf16.mxu0 %v935
  %1583 = vmatmul.mubr.bf16.gmra.mrb[0].mxu0 %v934
  %v1584 = vpop.f32.mrb[0].mxu0
  %v1585 = vadd.f32 %v264, %v1584
  %v1586 = vpop.f32.mrb[0].mxu0
  %v1587 = vpop.f32.mrb[0].mxu0
  %v1588 = vadd.f32 %v264, %v1587
  %v1589 = vpop.f32.mrb[0].mxu0
  %1590 = vmatprep.mubr.bf16.mxu0 %v937
  %1591 = vmatmul.mubr.bf16.gmra.mrb[0].mxu0 %v936
  %v1592 = vpop.f32.mrb[0].mxu0
  %v1593 = vadd.f32 %v264, %v1592
  %v1594 = vpop.f32.mrb[0].mxu0
  %v1595 = vpop.f32.mrb[0].mxu0
  %v1596 = vadd.f32 %v264, %v1595
  %v1597 = vpop.f32.mrb[0].mxu0
  %1598 = vmatprep.mubr.bf16.mxu0 %v939
  %1599 = vmatmul.mubr.bf16.gmra.mrb[0].mxu0 %v938
  %v1600 = vpop.f32.mrb[0].mxu0
  %v1601 = vadd.f32 %v264, %v1600
  %v1602 = vpop.f32.mrb[0].mxu0
  %v1603 = vpop.f32.mrb[0].mxu0
  %v1604 = vadd.f32 %v264, %v1603
  %v1605 = vpop.f32.mrb[0].mxu0
  %1606 = vmatprep.mubr.bf16.mxu0 %v941
  %1607 = vmatmul.mubr.bf16.gmra.mrb[0].mxu0 %v940
  %v1608 = vpop.f32.mrb[0].mxu0
  %v1609 = vadd.f32 %v264, %v1608
  %v1610 = vpop.f32.mrb[0].mxu0
  %v1611 = vpop.f32.mrb[0].mxu0
  %v1612 = vadd.f32 %v264, %v1611
  %v1613 = vpop.f32.mrb[0].mxu0
  %1614 = vmatprep.mubr.bf16.mxu0 %v943
  %1615 = vmatmul.mubr.bf16.gmra.mrb[0].mxu0 %v942
  %v1616 = vpop.f32.mrb[0].mxu0
  %v1617 = vadd.f32 %v264, %v1616
  %v1618 = vpop.f32.mrb[0].mxu0
  %v1619 = vpop.f32.mrb[0].mxu0
  %v1620 = vadd.f32 %v264, %v1619
  %v1621 = vpop.f32.mrb[0].mxu0
  %1622 = vmatprep.mubr.bf16.mxu0 %v945
  %1623 = vmatmul.mubr.bf16.gmra.mrb[0].mxu0 %v944
  %v1624 = vpop.f32.mrb[0].mxu0
  %v1625 = vadd.f32 %v264, %v1624
  %v1626 = vpop.f32.mrb[0].mxu0
  %v1627 = vpop.f32.mrb[0].mxu0
  %v1628 = vadd.f32 %v264, %v1627
  %v1629 = vpop.f32.mrb[0].mxu0
  %1630 = vmatprep.mubr.bf16.mxu0 %v947
  %1631 = vmatmul.mubr.bf16.gmra.mrb[0].mxu0 %v946
  %v1632 = vpop.f32.mrb[0].mxu0
  %v1633 = vadd.f32 %v264, %v1632
  %v1634 = vpop.f32.mrb[0].mxu0
  %v1635 = vpop.f32.mrb[0].mxu0
  %v1636 = vadd.f32 %v264, %v1635
  %v1637 = vpop.f32.mrb[0].mxu0
  %1638 = vmatprep.mubr.bf16.mxu0 %v949
  %1639 = vmatmul.mubr.bf16.gmra.mrb[0].mxu0 %v948
  %v1640 = vpop.f32.mrb[0].mxu0
  %v1641 = vadd.f32 %v264, %v1640
  %v1642 = vpop.f32.mrb[0].mxu0
  %v1643 = vpop.f32.mrb[0].mxu0
  %v1644 = vadd.f32 %v264, %v1643
  %v1645 = vpop.f32.mrb[0].mxu0
  %1646 = vmatprep.mubr.bf16.mxu0 %v951
  %1647 = vmatmul.mubr.bf16.gmra.mrb[0].mxu0 %v950
  %v1648 = vpop.f32.mrb[0].mxu0
  %v1649 = vadd.f32 %v264, %v1648
  %v1650 = vpop.f32.mrb[0].mxu0
  %v1651 = vpop.f32.mrb[0].mxu0
  %v1652 = vadd.f32 %v264, %v1651
  %v1653 = vpop.f32.mrb[0].mxu0
  %1654 = vmatprep.mubr.bf16.mxu0 %v953
  %1655 = vmatmul.mubr.bf16.gmra.mrb[0].mxu0 %v952
  %v1656 = vpop.f32.mrb[0].mxu0
  %v1657 = vadd.f32 %v264, %v1656
  %v1658 = vpop.f32.mrb[0].mxu0
  %v1659 = vpop.f32.mrb[0].mxu0
  %v1660 = vadd.f32 %v264, %v1659
  %v1661 = vpop.f32.mrb[0].mxu0
  %1662 = vmatprep.mubr.bf16.mxu0 %v955
  %1663 = vmatmul.mubr.bf16.gmra.mrb[0].mxu0 %v954
  %v1664 = vpop.f32.mrb[0].mxu0
  %v1665 = vadd.f32 %v264, %v1664
  %v1666 = vpop.f32.mrb[0].mxu0
  %v1667 = vpop.f32.mrb[0].mxu0
  %v1668 = vadd.f32 %v264, %v1667
  %v1669 = vpop.f32.mrb[0].mxu0
  %1670 = vmatprep.mubr.bf16.mxu0 %v957
  %1671 = vmatmul.mubr.bf16.gmra.mrb[0].mxu0 %v956
  %v1672 = vpop.f32.mrb[0].mxu0
  %v1673 = vadd.f32 %v264, %v1672
  %v1674 = vpop.f32.mrb[0].mxu0
  %v1675 = vpop.f32.mrb[0].mxu0
  %v1676 = vadd.f32 %v264, %v1675
  %v1677 = vpop.f32.mrb[0].mxu0
  %1678 = vmatprep.mubr.bf16.mxu0 %v959
  %1679 = vmatmul.mubr.bf16.gmra.mrb[0].mxu0 %v958
  %v1680 = vpop.f32.mrb[0].mxu0
  %v1681 = vadd.f32 %v264, %v1680
  %v1682 = vpop.f32.mrb[0].mxu0
  %v1683 = vpop.f32.mrb[0].mxu0
  %v1684 = vadd.f32 %v264, %v1683
  %v1685 = vpop.f32.mrb[0].mxu0
  %1686 = vmatprep.mubr.bf16.mxu0 %v961
  %1687 = vmatmul.mubr.bf16.gmra.mrb[0].mxu0 %v960
  %v1688 = vpop.f32.mrb[0].mxu0
  %v1689 = vadd.f32 %v264, %v1688
  %v1690 = vpop.f32.mrb[0].mxu0
  %v1691 = vpop.f32.mrb[0].mxu0
  %v1692 = vadd.f32 %v264, %v1691
  %v1693 = vpop.f32.mrb[0].mxu0
  %1694 = vmatprep.mubr.bf16.mxu0 %v963
  %1695 = vmatmul.mubr.bf16.gmra.mrb[0].mxu0 %v962
  %v1696 = vpop.f32.mrb[0].mxu0
  %v1697 = vadd.f32 %v264, %v1696
  %v1698 = vpop.f32.mrb[0].mxu0
  %v1699 = vpop.f32.mrb[0].mxu0
  %v1700 = vadd.f32 %v264, %v1699
  %v1701 = vpop.f32.mrb[0].mxu0
  %1702 = vmatprep.mubr.bf16.mxu0 %v965
  %1703 = vmatmul.mubr.bf16.gmra.mrb[0].mxu0 %v964
  %v1704 = vpop.f32.mrb[0].mxu0
  %v1705 = vadd.f32 %v264, %v1704
  %v1706 = vpop.f32.mrb[0].mxu0
  %v1707 = vpop.f32.mrb[0].mxu0
  %v1708 = vadd.f32 %v264, %v1707
  %v1709 = vpop.f32.mrb[0].mxu0
  %1710 = vmatprep.mubr.bf16.mxu0 %v967
  %1711 = vmatmul.mubr.bf16.gmra.mrb[0].mxu0 %v966
  %v1712 = vpop.f32.mrb[0].mxu0
  %v1713 = vadd.f32 %v264, %v1712
  %v1714 = vpop.f32.mrb[0].mxu0
  %v1715 = vpop.f32.mrb[0].mxu0
  %v1716 = vadd.f32 %v264, %v1715
  %v1717 = vpop.f32.mrb[0].mxu0
  %1718 = vmatprep.mubr.bf16.mxu0 %v969
  %1719 = vmatmul.mubr.bf16.gmra.mrb[0].mxu0 %v968
  %v1720 = vpop.f32.mrb[0].mxu0
  %v1721 = vadd.f32 %v264, %v1720
  %v1722 = vpop.f32.mrb[0].mxu0
  %v1723 = vpop.f32.mrb[0].mxu0
  %v1724 = vadd.f32 %v264, %v1723
  %v1725 = vpop.f32.mrb[0].mxu0
  %1726 = vmatprep.mubr.bf16.mxu0 %v971
  %1727 = vmatmul.mubr.bf16.gmra.mrb[0].mxu0 %v970
  %v1728 = vpop.f32.mrb[0].mxu0
  %v1729 = vadd.f32 %v264, %v1728
  %v1730 = vpop.f32.mrb[0].mxu0
  %v1731 = vpop.f32.mrb[0].mxu0
  %v1732 = vadd.f32 %v264, %v1731
  %v1733 = vpop.f32.mrb[0].mxu0
  %1734 = vmatprep.mubr.bf16.mxu0 %v973
  %1735 = vmatmul.mubr.bf16.gmra.mrb[0].mxu0 %v972
  %v1736 = vpop.f32.mrb[0].mxu0
  %v1737 = vadd.f32 %v264, %v1736
  %v1738 = vpop.f32.mrb[0].mxu0
  %v1739 = vpop.f32.mrb[0].mxu0
  %v1740 = vadd.f32 %v264, %v1739
  %v1741 = vpop.f32.mrb[0].mxu0
  %1742 = vmatprep.mubr.bf16.mxu0 %v975
  %1743 = vmatmul.mubr.bf16.gmra.mrb[0].mxu0 %v974
  %v1744 = vpop.f32.mrb[0].mxu0
  %v1745 = vadd.f32 %v264, %v1744
  %v1746 = vpop.f32.mrb[0].mxu0
  %v1747 = vpop.f32.mrb[0].mxu0
  %v1748 = vadd.f32 %v264, %v1747
  %v1749 = vpop.f32.mrb[0].mxu0
  %1750 = vmatprep.mubr.bf16.mxu0 %v977
  %1751 = vmatmul.mubr.bf16.gmra.mrb[0].mxu0 %v976
  %v1752 = vpop.f32.mrb[0].mxu0
  %v1753 = vadd.f32 %v264, %v1752
  %v1754 = vpop.f32.mrb[0].mxu0
  %v1755 = vpop.f32.mrb[0].mxu0
  %v1756 = vadd.f32 %v264, %v1755
  %v1757 = vpop.f32.mrb[0].mxu0
  %1758 = vmatprep.mubr.bf16.mxu0 %v979
  %1759 = vmatmul.mubr.bf16.gmra.mrb[0].mxu0 %v978
  %v1760 = vpop.f32.mrb[0].mxu0
  %v1761 = vadd.f32 %v264, %v1760
  %v1762 = vpop.f32.mrb[0].mxu0
  %v1763 = vpop.f32.mrb[0].mxu0
  %v1764 = vadd.f32 %v264, %v1763
  %v1765 = vpop.f32.mrb[0].mxu0
  %1766 = vmatprep.mubr.bf16.mxu0 %v981
  %1767 = vmatmul.mubr.bf16.gmra.mrb[0].mxu0 %v980
  %v1768 = vpop.f32.mrb[0].mxu0
  %v1769 = vadd.f32 %v264, %v1768
  %v1770 = vpop.f32.mrb[0].mxu0
  %v1771 = vpop.f32.mrb[0].mxu0
  %v1772 = vadd.f32 %v264, %v1771
  %v1773 = vpop.f32.mrb[0].mxu0
  %1774 = vmatprep.mubr.bf16.mxu0 %v983
  %1775 = vmatmul.mubr.bf16.gmra.mrb[0].mxu0 %v982
  %v1776 = vpop.f32.mrb[0].mxu0
  %v1777 = vadd.f32 %v264, %v1776
  %v1778 = vpop.f32.mrb[0].mxu0
  %v1779 = vpop.f32.mrb[0].mxu0
  %v1780 = vadd.f32 %v264, %v1779
  %v1781 = vpop.f32.mrb[0].mxu0
  %1782 = vmatprep.mubr.bf16.mxu0 %v985
  %1783 = vmatmul.mubr.bf16.gmra.mrb[0].mxu0 %v984
  %v1784 = vpop.f32.mrb[0].mxu0
  %v1785 = vadd.f32 %v264, %v1784
  %v1786 = vpop.f32.mrb[0].mxu0
  %v1787 = vpop.f32.mrb[0].mxu0
  %v1788 = vadd.f32 %v264, %v1787
  %v1789 = vpop.f32.mrb[0].mxu0
  %1790 = vmatprep.mubr.bf16.mxu0 %v987
  %1791 = vmatmul.mubr.bf16.gmra.mrb[0].mxu0 %v986
  %v1792 = vpop.f32.mrb[0].mxu0
  %v1793 = vadd.f32 %v264, %v1792
  %v1794 = vpop.f32.mrb[0].mxu0
  %v1795 = vpop.f32.mrb[0].mxu0
  %v1796 = vadd.f32 %v264, %v1795
  %v1797 = vpop.f32.mrb[0].mxu0
  %1798 = vmatprep.mubr.bf16.mxu0 %v989
  %1799 = vmatmul.mubr.bf16.gmra.mrb[0].mxu0 %v988
  %v1800 = vpop.f32.mrb[0].mxu0
  %v1801 = vadd.f32 %v264, %v1800
  %v1802 = vpop.f32.mrb[0].mxu0
  %v1803 = vpop.f32.mrb[0].mxu0
  %v1804 = vadd.f32 %v264, %v1803
  %v1805 = vpop.f32.mrb[0].mxu0
  %1806 = vmatprep.mubr.bf16.mxu0 %v991
  %1807 = vmatmul.mubr.bf16.gmra.mrb[0].mxu0 %v990
  %v1808 = vpop.f32.mrb[0].mxu0
  %v1809 = vadd.f32 %v264, %v1808
  %v1810 = vpop.f32.mrb[0].mxu0
  %v1811 = vpop.f32.mrb[0].mxu0
  %v1812 = vadd.f32 %v264, %v1811
  %v1813 = vpop.f32.mrb[0].mxu0
  %1814 = vmatprep.mubr.bf16.mxu0 %v993
  %1815 = vmatmul.mubr.bf16.gmra.mrb[0].mxu0 %v992
  %v1816 = vpop.f32.mrb[0].mxu0
  %v1817 = vadd.f32 %v264, %v1816
  %v1818 = vpop.f32.mrb[0].mxu0
  %v1819 = vpop.f32.mrb[0].mxu0
  %v1820 = vadd.f32 %v264, %v1819
  %v1821 = vpop.f32.mrb[0].mxu0
  %1822 = vmatprep.mubr.bf16.mxu0 %v995
  %1823 = vmatmul.mubr.bf16.gmra.mrb[0].mxu0 %v994
  %v1824 = vpop.f32.mrb[0].mxu0
  %v1825 = vadd.f32 %v264, %v1824
  %v1826 = vpop.f32.mrb[0].mxu0
  %v1827 = vpop.f32.mrb[0].mxu0
  %v1828 = vadd.f32 %v264, %v1827
  %v1829 = vpop.f32.mrb[0].mxu0
  %1830 = vmatprep.mubr.bf16.mxu0 %v997
  %1831 = vmatmul.mubr.bf16.gmra.mrb[0].mxu0 %v996
  %v1832 = vpop.f32.mrb[0].mxu0
  %v1833 = vadd.f32 %v264, %v1832
  %v1834 = vpop.f32.mrb[0].mxu0
  %v1835 = vpop.f32.mrb[0].mxu0
  %v1836 = vadd.f32 %v264, %v1835
  %v1837 = vpop.f32.mrb[0].mxu0
  %1838 = vmatprep.mubr.bf16.mxu0 %v999
  %1839 = vmatmul.mubr.bf16.gmra.mrb[0].mxu0 %v998
  %v1840 = vpop.f32.mrb[0].mxu0
  %v1841 = vadd.f32 %v264, %v1840
  %v1842 = vpop.f32.mrb[0].mxu0
  %v1843 = vpop.f32.mrb[0].mxu0
  %v1844 = vadd.f32 %v264, %v1843
  %v1845 = vpop.f32.mrb[0].mxu0
  %1846 = vmatprep.mubr.bf16.mxu0 %v1001
  %1847 = vmatmul.mubr.bf16.gmra.mrb[0].mxu0 %v1000
  %v1848 = vpop.f32.mrb[0].mxu0
  %v1849 = vadd.f32 %v264, %v1848
  %v1850 = vpop.f32.mrb[0].mxu0
  %v1851 = vpop.f32.mrb[0].mxu0
  %v1852 = vadd.f32 %v264, %v1851
  %v1853 = vpop.f32.mrb[0].mxu0
  %1854 = vmatprep.mubr.bf16.mxu0 %v1003
  %1855 = vmatmul.mubr.bf16.gmra.mrb[0].mxu0 %v1002
  %v1856 = vpop.f32.mrb[0].mxu0
  %v1857 = vadd.f32 %v264, %v1856
  %v1858 = vpop.f32.mrb[0].mxu0
  %v1859 = vpop.f32.mrb[0].mxu0
  %v1860 = vadd.f32 %v264, %v1859
  %v1861 = vpop.f32.mrb[0].mxu0
  %1862 = vmatprep.mubr.bf16.mxu0 %v1005
  %1863 = vmatmul.mubr.bf16.gmra.mrb[0].mxu0 %v1004
  %v1864 = vpop.f32.mrb[0].mxu0
  %v1865 = vadd.f32 %v264, %v1864
  %v1866 = vpop.f32.mrb[0].mxu0
  %v1867 = vpop.f32.mrb[0].mxu0
  %v1868 = vadd.f32 %v264, %v1867
  %v1869 = vpop.f32.mrb[0].mxu0
  %1870 = vmatprep.mubr.bf16.mxu0 %v1007
  %1871 = vmatmul.mubr.bf16.gmra.mrb[0].mxu0 %v1006
  %v1872 = vpop.f32.mrb[0].mxu0
  %v1873 = vadd.f32 %v264, %v1872
  %v1874 = vpop.f32.mrb[0].mxu0
  %v1875 = vpop.f32.mrb[0].mxu0
  %v1876 = vadd.f32 %v264, %v1875
  %v1877 = vpop.f32.mrb[0].mxu0
  %1878 = vmatprep.mubr.bf16.mxu0 %v1009
  %1879 = vmatmul.mubr.bf16.gmra.mrb[0].mxu0 %v1008
  %v1880 = vpop.f32.mrb[0].mxu0
  %v1881 = vadd.f32 %v264, %v1880
  %v1882 = vpop.f32.mrb[0].mxu0
  %v1883 = vpop.f32.mrb[0].mxu0
  %v1884 = vadd.f32 %v264, %v1883
  %v1885 = vpop.f32.mrb[0].mxu0
  %1886 = vmatprep.mubr.bf16.mxu0 %v1011
  %1887 = vmatmul.mubr.bf16.gmra.mrb[0].mxu0 %v1010
  %v1888 = vpop.f32.mrb[0].mxu0
  %v1889 = vadd.f32 %v264, %v1888
  %v1890 = vpop.f32.mrb[0].mxu0
  %v1891 = vpop.f32.mrb[0].mxu0
  %v1892 = vadd.f32 %v264, %v1891
  %v1893 = vpop.f32.mrb[0].mxu0
  %1894 = vmatprep.mubr.bf16.mxu0 %v1013
  %1895 = vmatmul.mubr.bf16.gmra.mrb[0].mxu0 %v1012
  %v1896 = vpop.f32.mrb[0].mxu0
  %v1897 = vadd.f32 %v264, %v1896
  %v1898 = vpop.f32.mrb[0].mxu0
  %v1899 = vpop.f32.mrb[0].mxu0
  %v1900 = vadd.f32 %v264, %v1899
  %v1901 = vpop.f32.mrb[0].mxu0
  %1902 = vmatprep.mubr.bf16.mxu0 %v1015
  %1903 = vmatmul.mubr.bf16.gmra.mrb[0].mxu0 %v1014
  %v1904 = vpop.f32.mrb[0].mxu0
  %v1905 = vadd.f32 %v264, %v1904
  %v1906 = vpop.f32.mrb[0].mxu0
  %v1907 = vpop.f32.mrb[0].mxu0
  %v1908 = vadd.f32 %v264, %v1907
  %v1909 = vpop.f32.mrb[0].mxu0
  %1910 = vmatprep.mubr.bf16.mxu0 %v1017
  %1911 = vmatmul.mubr.bf16.gmra.mrb[0].mxu0 %v1016
  %v1912 = vpop.f32.mrb[0].mxu0
  %v1913 = vadd.f32 %v264, %v1912
  %v1914 = vpop.f32.mrb[0].mxu0
  %v1915 = vpop.f32.mrb[0].mxu0
  %v1916 = vadd.f32 %v264, %v1915
  %v1917 = vpop.f32.mrb[0].mxu0
  %1918 = vmatprep.mubr.bf16.mxu0 %v1019
  %1919 = vmatmul.mubr.bf16.gmra.mrb[0].mxu0 %v1018
  %v1920 = vpop.f32.mrb[0].mxu0
  %v1921 = vadd.f32 %v264, %v1920
  %v1922 = vpop.f32.mrb[0].mxu0
  %v1923 = vpop.f32.mrb[0].mxu0
  %v1924 = vadd.f32 %v264, %v1923
  %v1925 = vpop.f32.mrb[0].mxu0
  %1926 = vmatprep.mubr.bf16.mxu0 %v1021
  %1927 = vmatmul.mubr.bf16.gmra.mrb[0].mxu0 %v1020
  %v1928 = vpop.f32.mrb[0].mxu0
  %v1929 = vadd.f32 %v264, %v1928
  %v1930 = vpop.f32.mrb[0].mxu0
  %v1931 = vpop.f32.mrb[0].mxu0
  %v1932 = vadd.f32 %v264, %v1931
  %v1933 = vpop.f32.mrb[0].mxu0
  %1934 = vmatprep.mubr.bf16.mxu0 %v1023
  %1935 = vmatmul.mubr.bf16.gmra.mrb[0].mxu0 %v1022
  %v1936 = vpop.f32.mrb[0].mxu0
  %v1937 = vadd.f32 %v264, %v1936
  %v1938 = vpop.f32.mrb[0].mxu0
  %v1939 = vpop.f32.mrb[0].mxu0
  %v1940 = vadd.f32 %v264, %v1939
  %v1941 = vpop.f32.mrb[0].mxu0
  %1942 = vmatprep.mubr.bf16.mxu0 %v1025
  %1943 = vmatmul.mubr.bf16.gmra.mrb[0].mxu0 %v1024
  %v1944 = vpop.f32.mrb[0].mxu0
  %v1945 = vadd.f32 %v264, %v1944
  %v1946 = vpop.f32.mrb[0].mxu0
  %v1947 = vpop.f32.mrb[0].mxu0
  %v1948 = vadd.f32 %v264, %v1947
  %v1949 = vpop.f32.mrb[0].mxu0
  %1950 = vmatprep.mubr.bf16.mxu0 %v1027
  %1951 = vmatmul.mubr.bf16.gmra.mrb[0].mxu0 %v1026
  %v1952 = vpop.f32.mrb[0].mxu0
  %v1953 = vadd.f32 %v264, %v1952
  %v1954 = vpop.f32.mrb[0].mxu0
  %v1955 = vpop.f32.mrb[0].mxu0
  %v1956 = vadd.f32 %v264, %v1955
  %v1957 = vpop.f32.mrb[0].mxu0
  %1958 = vmatprep.mubr.bf16.mxu0 %v1029
  %1959 = vmatmul.mubr.bf16.gmra.mrb[0].mxu0 %v1028
  %v1960 = vpop.f32.mrb[0].mxu0
  %v1961 = vadd.f32 %v264, %v1960
  %v1962 = vpop.f32.mrb[0].mxu0
  %v1963 = vpop.f32.mrb[0].mxu0
  %v1964 = vadd.f32 %v264, %v1963
  %v1965 = vpop.f32.mrb[0].mxu0
  %1966 = vmatprep.mubr.bf16.mxu0 %v1031
  %1967 = vmatmul.mubr.bf16.gmra.mrb[0].mxu0 %v1030
  %v1968 = vpop.f32.mrb[0].mxu0
  %v1969 = vadd.f32 %v264, %v1968
  %v1970 = vpop.f32.mrb[0].mxu0
  %v1971 = vpop.f32.mrb[0].mxu0
  %v1972 = vadd.f32 %v264, %v1971
  %v1973 = vpop.f32.mrb[0].mxu0
  %1974 = vmatprep.mubr.bf16.mxu0 %v1033
  %1975 = vmatmul.mubr.bf16.gmra.mrb[0].mxu0 %v1032
  %v1976 = vpop.f32.mrb[0].mxu0
  %v1977 = vadd.f32 %v264, %v1976
  %v1978 = vpop.f32.mrb[0].mxu0
  %v1979 = vpop.f32.mrb[0].mxu0
  %v1980 = vadd.f32 %v264, %v1979
  %v1981 = vpop.f32.mrb[0].mxu0
  %1982 = vmatprep.mubr.bf16.mxu0 %v1035
  %1983 = vmatmul.mubr.bf16.gmra.mrb[0].mxu0 %v1034
  %v1984 = vpop.f32.mrb[0].mxu0
  %v1985 = vadd.f32 %v264, %v1984
  %v1986 = vpop.f32.mrb[0].mxu0
  %v1987 = vpop.f32.mrb[0].mxu0
  %v1988 = vadd.f32 %v264, %v1987
  %v1989 = vpop.f32.mrb[0].mxu0
  %1990 = vmatprep.mubr.bf16.mxu0 %v1037
  %1991 = vmatmul.mubr.bf16.gmra.mrb[0].mxu0 %v1036
  %v1992 = vpop.f32.mrb[0].mxu0
  %v1993 = vadd.f32 %v264, %v1992
  %v1994 = vpop.f32.mrb[0].mxu0
  %v1995 = vpop.f32.mrb[0].mxu0
  %v1996 = vadd.f32 %v264, %v1995
  %v1997 = vpop.f32.mrb[0].mxu0
  %1998 = vmatprep.mubr.bf16.mxu0 %v1039
  %1999 = vmatmul.mubr.bf16.gmra.mrb[0].mxu0 %v1038
  %v2000 = vpop.f32.mrb[0].mxu0
  %v2001 = vadd.f32 %v264, %v2000
  %v2002 = vpop.f32.mrb[0].mxu0
  %v2003 = vpop.f32.mrb[0].mxu0
  %v2004 = vadd.f32 %v264, %v2003
  %v2005 = vpop.f32.mrb[0].mxu0
  %2006 = vmatprep.mubr.bf16.mxu0 %v1041
  %2007 = vmatmul.mubr.bf16.gmra.mrb[0].mxu0 %v1040
  %v2008 = vpop.f32.mrb[0].mxu0
  %v2009 = vadd.f32 %v264, %v2008
  %v2010 = vpop.f32.mrb[0].mxu0
  %v2011 = vpop.f32.mrb[0].mxu0
  %v2012 = vadd.f32 %v264, %v2011
  %v2013 = vpop.f32.mrb[0].mxu0
  %2014 = vmatprep.mubr.bf16.mxu0 %v1043
  %2015 = vmatmul.mubr.bf16.gmra.mrb[0].mxu0 %v1042
  %v2016 = vpop.f32.mrb[0].mxu0
  %v2017 = vadd.f32 %v264, %v2016
  %v2018 = vpop.f32.mrb[0].mxu0
  %v2019 = vpop.f32.mrb[0].mxu0
  %v2020 = vadd.f32 %v264, %v2019
  %v2021 = vpop.f32.mrb[0].mxu0
  %2022 = vmatprep.mubr.bf16.mxu0 %v1045
  %2023 = vmatmul.mubr.bf16.gmra.mrb[0].mxu0 %v1044
  %v2024 = vpop.f32.mrb[0].mxu0
  %v2025 = vadd.f32 %v264, %v2024
  %v2026 = vpop.f32.mrb[0].mxu0
  %v2027 = vpop.f32.mrb[0].mxu0
  %v2028 = vadd.f32 %v264, %v2027
  %v2029 = vpop.f32.mrb[0].mxu0
  %2030 = vmatprep.mubr.bf16.mxu0 %v1047
  %2031 = vmatmul.mubr.bf16.gmra.mrb[0].mxu0 %v1046
  %v2032 = vpop.f32.mrb[0].mxu0
  %v2033 = vadd.f32 %v264, %v2032
  %v2034 = vpop.f32.mrb[0].mxu0
  %v2035 = vpop.f32.mrb[0].mxu0
  %v2036 = vadd.f32 %v264, %v2035
  %v2037 = vpop.f32.mrb[0].mxu0
  %2038 = vmatprep.mubr.bf16.mxu0 %v1049
  %2039 = vmatmul.mubr.bf16.gmra.mrb[0].mxu0 %v1048
  %v2040 = vpop.f32.mrb[0].mxu0
  %v2041 = vadd.f32 %v264, %v2040
  %v2042 = vpop.f32.mrb[0].mxu0
  %v2043 = vpop.f32.mrb[0].mxu0
  %v2044 = vadd.f32 %v264, %v2043
  %v2045 = vpop.f32.mrb[0].mxu0
  %2046 = vmatprep.mubr.bf16.mxu0 %v1051
  %2047 = vmatmul.mubr.bf16.gmra.mrb[0].mxu0 %v1050
  %v2048 = vpop.f32.mrb[0].mxu0
  %v2049 = vadd.f32 %v264, %v2048
  %v2050 = vpop.f32.mrb[0].mxu0
  %v2051 = vpop.f32.mrb[0].mxu0
  %v2052 = vadd.f32 %v264, %v2051
  %v2053 = vpop.f32.mrb[0].mxu0
  %2054 = vmatprep.mubr.bf16.mxu0 %v1053
  %2055 = vmatmul.mubr.bf16.gmra.mrb[0].mxu0 %v1052
  %v2056 = vpop.f32.mrb[0].mxu0
  %v2057 = vadd.f32 %v264, %v2056
  %v2058 = vpop.f32.mrb[0].mxu0
  %v2059 = vpop.f32.mrb[0].mxu0
  %v2060 = vadd.f32 %v264, %v2059
  %v2061 = vpop.f32.mrb[0].mxu0
  %2062 = vmatprep.mubr.bf16.mxu0 %v1055
  %2063 = vmatmul.mubr.bf16.gmra.mrb[0].mxu0 %v1054
  %v2064 = vpop.f32.mrb[0].mxu0
  %v2065 = vadd.f32 %v264, %v2064
  %v2066 = vpop.f32.mrb[0].mxu0
  %v2067 = vpop.f32.mrb[0].mxu0
  %v2068 = vadd.f32 %v264, %v2067
  %v2069 = vpop.f32.mrb[0].mxu0
  %2070 = vmatprep.mubr.bf16.mxu0 %v1057
  %2071 = vmatmul.mubr.bf16.gmra.mrb[0].mxu0 %v1056
  %v2072 = vpop.f32.mrb[0].mxu0
  %v2073 = vadd.f32 %v264, %v2072
  %v2074 = vpop.f32.mrb[0].mxu0
  %v2075 = vpop.f32.mrb[0].mxu0
  %v2076 = vadd.f32 %v264, %v2075
  %v2077 = vpop.f32.mrb[0].mxu0
  %2078 = vmatprep.mubr.bf16.mxu0 %v1059
  %2079 = vmatmul.mubr.bf16.gmra.mrb[0].mxu0 %v1058
  %v2080 = vpop.f32.mrb[0].mxu0
  %v2081 = vadd.f32 %v264, %v2080
  %v2082 = vpop.f32.mrb[0].mxu0
  %v2083 = vpop.f32.mrb[0].mxu0
  %v2084 = vadd.f32 %v264, %v2083
  %v2085 = vpop.f32.mrb[0].mxu0
  %2086 = vmatprep.mubr.bf16.mxu0 %v1061
  %2087 = vmatmul.mubr.bf16.gmra.mrb[0].mxu0 %v1060
  %v2088 = vpop.f32.mrb[0].mxu0
  %v2089 = vadd.f32 %v264, %v2088
  %v2090 = vpop.f32.mrb[0].mxu0
  %v2091 = vpop.f32.mrb[0].mxu0
  %v2092 = vadd.f32 %v264, %v2091
  %v2093 = vpop.f32.mrb[0].mxu0
  %2094 = vmatprep.mubr.bf16.mxu0 %v1063
  %2095 = vmatmul.mubr.bf16.gmra.mrb[0].mxu0 %v1062
  %v2096 = vpop.f32.mrb[0].mxu0
  %v2097 = vadd.f32 %v264, %v2096
  %v2098 = vpop.f32.mrb[0].mxu0
  %v2099 = vpop.f32.mrb[0].mxu0
  %v2100 = vadd.f32 %v264, %v2099
  %v2101 = vpop.f32.mrb[0].mxu0
  %2102 = vmatprep.mubr.bf16.mxu0 %v1065
  %2103 = vmatmul.mubr.bf16.gmra.mrb[0].mxu0 %v1064
  %v2104 = vpop.f32.mrb[0].mxu0
  %v2105 = vadd.f32 %v264, %v2104
  %v2106 = vpop.f32.mrb[0].mxu0
  %v2107 = vpop.f32.mrb[0].mxu0
  %v2108 = vadd.f32 %v264, %v2107
  %v2109 = vpop.f32.mrb[0].mxu0
  %2110 = vmatprep.mubr.bf16.mxu0 %v1067
  %2111 = vmatmul.mubr.bf16.gmra.mrb[0].mxu0 %v1066
  %v2112 = vpop.f32.mrb[0].mxu0
  %v2113 = vadd.f32 %v264, %v2112
  %v2114 = vpop.f32.mrb[0].mxu0
  %v2115 = vpop.f32.mrb[0].mxu0
  %v2116 = vadd.f32 %v264, %v2115
  %v2117 = vpop.f32.mrb[0].mxu0
  %2118 = vmatprep.mubr.bf16.mxu0 %v1069
  %2119 = vmatmul.mubr.bf16.gmra.mrb[0].mxu0 %v1068
  %v2120 = vpop.f32.mrb[0].mxu0
  %v2121 = vadd.f32 %v264, %v2120
  %v2122 = vpop.f32.mrb[0].mxu0
  %v2123 = vpop.f32.mrb[0].mxu0
  %v2124 = vadd.f32 %v264, %v2123
  %v2125 = vpop.f32.mrb[0].mxu0
  %2126 = vmatprep.mubr.bf16.mxu0 %v1071
  %2127 = vmatmul.mubr.bf16.gmra.mrb[0].mxu0 %v1070
  %v2128 = vpop.f32.mrb[0].mxu0
  %v2129 = vadd.f32 %v264, %v2128
  %v2130 = vpop.f32.mrb[0].mxu0
  %v2131 = vpop.f32.mrb[0].mxu0
  %v2132 = vadd.f32 %v264, %v2131
  %v2133 = vpop.f32.mrb[0].mxu0
  %2134 = vmatprep.mubr.bf16.mxu0 %v1073
  %2135 = vmatmul.mubr.bf16.gmra.mrb[0].mxu0 %v1072
  %v2136 = vpop.f32.mrb[0].mxu0
  %v2137 = vadd.f32 %v264, %v2136
  %v2138 = vpop.f32.mrb[0].mxu0
  %v2139 = vpop.f32.mrb[0].mxu0
  %v2140 = vadd.f32 %v264, %v2139
  %v2141 = vpop.f32.mrb[0].mxu0
  %2142 = vmatprep.mubr.bf16.mxu0 %v1075
  %2143 = vmatmul.mubr.bf16.gmra.mrb[0].mxu0 %v1074
  %v2144 = vpop.f32.mrb[0].mxu0
  %v2145 = vadd.f32 %v264, %v2144
  %v2146 = vpop.f32.mrb[0].mxu0
  %v2147 = vpop.f32.mrb[0].mxu0
  %v2148 = vadd.f32 %v264, %v2147
  %v2149 = vpop.f32.mrb[0].mxu0
  %2150 = vmatprep.mubr.bf16.mxu0 %v1077
  %2151 = vmatmul.mubr.bf16.gmra.mrb[0].mxu0 %v1076
  %v2152 = vpop.f32.mrb[0].mxu0
  %v2153 = vadd.f32 %v264, %v2152
  %v2154 = vpop.f32.mrb[0].mxu0
  %v2155 = vpop.f32.mrb[0].mxu0
  %v2156 = vadd.f32 %v264, %v2155
  %v2157 = vpop.f32.mrb[0].mxu0
  %2158 = vmatprep.mubr.bf16.mxu0 %v1079
  %2159 = vmatmul.mubr.bf16.gmra.mrb[0].mxu0 %v1078
  %v2160 = vpop.f32.mrb[0].mxu0
  %v2161 = vadd.f32 %v264, %v2160
  %v2162 = vpop.f32.mrb[0].mxu0
  %v2163 = vpop.f32.mrb[0].mxu0
  %v2164 = vadd.f32 %v264, %v2163
  %v2165 = vpop.f32.mrb[0].mxu0
  %2166 = vmatprep.mubr.bf16.mxu0 %v1081
  %2167 = vmatmul.mubr.bf16.gmra.mrb[0].mxu0 %v1080
  %v2168 = vpop.f32.mrb[0].mxu0
  %v2169 = vadd.f32 %v264, %v2168
  %v2170 = vpop.f32.mrb[0].mxu0
  %v2171 = vpop.f32.mrb[0].mxu0
  %v2172 = vadd.f32 %v264, %v2171
  %v2173 = vpop.f32.mrb[0].mxu0
  %2174 = vmatprep.mubr.bf16.mxu0 %v1083
  %2175 = vmatmul.mubr.bf16.gmra.mrb[0].mxu0 %v1082
  %v2176 = vpop.f32.mrb[0].mxu0
  %v2177 = vadd.f32 %v264, %v2176
  %v2178 = vpop.f32.mrb[0].mxu0
  %v2179 = vpop.f32.mrb[0].mxu0
  %v2180 = vadd.f32 %v264, %v2179
  %v2181 = vpop.f32.mrb[0].mxu0
  %2182 = vmatprep.mubr.bf16.mxu0 %v1085
  %2183 = vmatmul.mubr.bf16.gmra.mrb[0].mxu0 %v1084
  %v2184 = vpop.f32.mrb[0].mxu0
  %v2185 = vadd.f32 %v264, %v2184
  %v2186 = vpop.f32.mrb[0].mxu0
  %v2187 = vpop.f32.mrb[0].mxu0
  %v2188 = vadd.f32 %v264, %v2187
  %v2189 = vpop.f32.mrb[0].mxu0
  %2190 = vmatprep.mubr.bf16.mxu0 %v1087
  %2191 = vmatmul.mubr.bf16.gmra.mrb[0].mxu0 %v1086
  %v2192 = vpop.f32.mrb[0].mxu0
  %v2193 = vadd.f32 %v264, %v2192
  %v2194 = vpop.f32.mrb[0].mxu0
  %v2195 = vpop.f32.mrb[0].mxu0
  %v2196 = vadd.f32 %v264, %v2195
  %v2197 = vpop.f32.mrb[0].mxu0
  %2198 = vmatprep.mubr.bf16.mxu0 %v1089
  %2199 = vmatmul.mubr.bf16.gmra.mrb[0].mxu0 %v1088
  %v2200 = vpop.f32.mrb[0].mxu0
  %v2201 = vadd.f32 %v264, %v2200
  %v2202 = vpop.f32.mrb[0].mxu0
  %v2203 = vpop.f32.mrb[0].mxu0
  %v2204 = vadd.f32 %v264, %v2203
  %v2205 = vpop.f32.mrb[0].mxu0
  %2206 = vmatprep.mubr.bf16.mxu0 %v1091
  %2207 = vmatmul.mubr.bf16.gmra.mrb[0].mxu0 %v1090
  %v2208 = vpop.f32.mrb[0].mxu0
  %v2209 = vadd.f32 %v264, %v2208
  %v2210 = vpop.f32.mrb[0].mxu0
  %v2211 = vpop.f32.mrb[0].mxu0
  %v2212 = vadd.f32 %v264, %v2211
  %v2213 = vpop.f32.mrb[0].mxu0
  %2214 = vmatprep.mubr.bf16.mxu0 %v1093
  %2215 = vmatmul.mubr.bf16.gmra.mrb[0].mxu0 %v1092
  %v2216 = vpop.f32.mrb[0].mxu0
  %v2217 = vadd.f32 %v264, %v2216
  %v2218 = vpop.f32.mrb[0].mxu0
  %v2219 = vpop.f32.mrb[0].mxu0
  %v2220 = vadd.f32 %v264, %v2219
  %v2221 = vpop.f32.mrb[0].mxu0
  %2222 = vmatprep.mubr.bf16.mxu0 %v1095
  %2223 = vmatmul.mubr.bf16.gmra.mrb[0].mxu0 %v1094
  %v2224 = vpop.f32.mrb[0].mxu0
  %v2225 = vadd.f32 %v264, %v2224
  %v2226 = vpop.f32.mrb[0].mxu0
  %v2227 = vpop.f32.mrb[0].mxu0
  %v2228 = vadd.f32 %v264, %v2227
  %v2229 = vpop.f32.mrb[0].mxu0
  %2230 = vmatprep.mubr.bf16.mxu0 %v1097
  %2231 = vmatmul.mubr.bf16.gmra.mrb[0].mxu0 %v1096
  %v2232 = vpop.f32.mrb[0].mxu0
  %v2233 = vadd.f32 %v264, %v2232
  %v2234 = vpop.f32.mrb[0].mxu0
  %v2235 = vpop.f32.mrb[0].mxu0
  %v2236 = vadd.f32 %v264, %v2235
  %v2237 = vpop.f32.mrb[0].mxu0
  %2238 = vmatprep.mubr.bf16.mxu0 %v1099
  %2239 = vmatmul.mubr.bf16.gmra.mrb[0].mxu0 %v1098
  %v2240 = vpop.f32.mrb[0].mxu0
  %v2241 = vadd.f32 %v264, %v2240
  %v2242 = vpop.f32.mrb[0].mxu0
  %v2243 = vpop.f32.mrb[0].mxu0
  %v2244 = vadd.f32 %v264, %v2243
  %v2245 = vpop.f32.mrb[0].mxu0
  %2246 = vmatprep.mubr.bf16.mxu0 %v1101
  %2247 = vmatmul.mubr.bf16.gmra.mrb[0].mxu0 %v1100
  %v2248 = vpop.f32.mrb[0].mxu0
  %v2249 = vadd.f32 %v264, %v2248
  %v2250 = vpop.f32.mrb[0].mxu0
  %v2251 = vpop.f32.mrb[0].mxu0
  %v2252 = vadd.f32 %v264, %v2251
  %v2253 = vpop.f32.mrb[0].mxu0
  %2254 = vmatprep.mubr.bf16.mxu0 %v1103
  %2255 = vmatmul.mubr.bf16.gmra.mrb[0].mxu0 %v1102
  %v2256 = vpop.f32.mrb[0].mxu0
  %v2257 = vadd.f32 %v264, %v2256
  %v2258 = vpop.f32.mrb[0].mxu0
  %v2259 = vpop.f32.mrb[0].mxu0
  %v2260 = vadd.f32 %v264, %v2259
  %v2261 = vpop.f32.mrb[0].mxu0
  %2262 = vmatprep.mubr.bf16.mxu0 %v1105
  %2263 = vmatmul.mubr.bf16.gmra.mrb[0].mxu0 %v1104
  %v2264 = vpop.f32.mrb[0].mxu0
  %v2265 = vadd.f32 %v264, %v2264
  %v2266 = vpop.f32.mrb[0].mxu0
  %v2267 = vpop.f32.mrb[0].mxu0
  %v2268 = vadd.f32 %v264, %v2267
  %v2269 = vpop.f32.mrb[0].mxu0
  %2270 = vmatprep.mubr.bf16.mxu0 %v1107
  %2271 = vmatmul.mubr.bf16.gmra.mrb[0].mxu0 %v1106
  %v2272 = vpop.f32.mrb[0].mxu0
  %v2273 = vadd.f32 %v264, %v2272
  %v2274 = vpop.f32.mrb[0].mxu0
  %v2275 = vpop.f32.mrb[0].mxu0
  %v2276 = vadd.f32 %v264, %v2275
  %v2277 = vpop.f32.mrb[0].mxu0
  %2278 = vmatprep.mubr.bf16.mxu0 %v1109
  %2279 = vmatmul.mubr.bf16.gmra.mrb[0].mxu0 %v1108
  %v2280 = vpop.f32.mrb[0].mxu0
  %v2281 = vadd.f32 %v264, %v2280
  %v2282 = vpop.f32.mrb[0].mxu0
  %v2283 = vpop.f32.mrb[0].mxu0
  %v2284 = vadd.f32 %v264, %v2283
  %v2285 = vpop.f32.mrb[0].mxu0
  %2286 = vmatprep.mubr.bf16.mxu0 %v1111
  %2287 = vmatmul.mubr.bf16.gmra.mrb[0].mxu0 %v1110
  %v2288 = vpop.f32.mrb[0].mxu0
  %v2289 = vadd.f32 %v264, %v2288
  %v2290 = vpop.f32.mrb[0].mxu0
  %v2291 = vpop.f32.mrb[0].mxu0
  %v2292 = vadd.f32 %v264, %v2291
  %v2293 = vpop.f32.mrb[0].mxu0
  %2294 = vmatprep.mubr.bf16.mxu0 %v1113
  %2295 = vmatmul.mubr.bf16.gmra.mrb[0].mxu0 %v1112
  %v2296 = vpop.f32.mrb[0].mxu0
  %v2297 = vadd.f32 %v264, %v2296
  %v2298 = vpop.f32.mrb[0].mxu0
  %v2299 = vpop.f32.mrb[0].mxu0
  %v2300 = vadd.f32 %v264, %v2299
  %v2301 = vpop.f32.mrb[0].mxu0
  %2302 = vdwg.mxu0
  %v2303 = vmax.f32 %v1457, 0.0
  %v2304 = vmax.f32 %v1460, 0.0
  %v2305 = vmax.f32 %v1465, 0.0
  %v2306 = vmax.f32 %v1468, 0.0
  %v2307 = vmax.f32 %v1473, 0.0
  %v2308 = vmax.f32 %v1476, 0.0
  %v2309 = vmax.f32 %v1481, 0.0
  %v2310 = vmax.f32 %v1484, 0.0
  %v2311 = vmax.f32 %v1489, 0.0
  %v2312 = vmax.f32 %v1492, 0.0
  %v2313 = vmax.f32 %v1497, 0.0
  %v2314 = vmax.f32 %v1500, 0.0
  %v2315 = vmax.f32 %v1505, 0.0
  %v2316 = vmax.f32 %v1508, 0.0
  %v2317 = vmax.f32 %v1513, 0.0
  %v2318 = vmax.f32 %v1516, 0.0
  %v2319 = vmax.f32 %v1521, 0.0
  %v2320 = vmax.f32 %v1524, 0.0
  %v2321 = vmax.f32 %v1529, 0.0
  %v2322 = vmax.f32 %v1532, 0.0
  %v2323 = vmax.f32 %v1537, 0.0
  %v2324 = vmax.f32 %v1540, 0.0
  %v2325 = vmax.f32 %v1545, 0.0
  %v2326 = vmax.f32 %v1548, 0.0
  %v2327 = vmax.f32 %v1553, 0.0
  %v2328 = vmax.f32 %v1556, 0.0
  %v2329 = vmax.f32 %v1561, 0.0
  %v2330 = vmax.f32 %v1564, 0.0
  %v2331 = vmax.f32 %v1569, 0.0
  %v2332 = vmax.f32 %v1572, 0.0
  %v2333 = vmax.f32 %v1577, 0.0
  %v2334 = vmax.f32 %v1580, 0.0
  %v2335 = vmax.f32 %v1585, 0.0
  %v2336 = vmax.f32 %v1588, 0.0
  %v2337 = vmax.f32 %v1593, 0.0
  %v2338 = vmax.f32 %v1596, 0.0
  %v2339 = vmax.f32 %v1601, 0.0
  %v2340 = vmax.f32 %v1604, 0.0
  %v2341 = vmax.f32 %v1609, 0.0
  %v2342 = vmax.f32 %v1612, 0.0
  %v2343 = vmax.f32 %v1617, 0.0
  %v2344 = vmax.f32 %v1620, 0.0
  %v2345 = vmax.f32 %v1625, 0.0
  %v2346 = vmax.f32 %v1628, 0.0
  %v2347 = vmax.f32 %v1633, 0.0
  %v2348 = vmax.f32 %v1636, 0.0
  %v2349 = vmax.f32 %v1641, 0.0
  %v2350 = vmax.f32 %v1644, 0.0
  %v2351 = vmax.f32 %v1649, 0.0
  %v2352 = vmax.f32 %v1652, 0.0
  %v2353 = vmax.f32 %v1657, 0.0
  %v2354 = vmax.f32 %v1660, 0.0
  %v2355 = vmax.f32 %v1665, 0.0
  %v2356 = vmax.f32 %v1668, 0.0
  %v2357 = vmax.f32 %v1673, 0.0
  %v2358 = vmax.f32 %v1676, 0.0
  %v2359 = vmax.f32 %v1681, 0.0
  %v2360 = vmax.f32 %v1684, 0.0
  %v2361 = vmax.f32 %v1689, 0.0
  %v2362 = vmax.f32 %v1692, 0.0
  %v2363 = vmax.f32 %v1697, 0.0
  %v2364 = vmax.f32 %v1700, 0.0
  %v2365 = vmax.f32 %v1705, 0.0
  %v2366 = vmax.f32 %v1708, 0.0
  %v2367 = vmax.f32 %v1713, 0.0
  %v2368 = vmax.f32 %v1716, 0.0
  %v2369 = vmax.f32 %v1721, 0.0
  %v2370 = vmax.f32 %v1724, 0.0
  %v2371 = vmax.f32 %v1729, 0.0
  %v2372 = vmax.f32 %v1732, 0.0
  %v2373 = vmax.f32 %v1737, 0.0
  %v2374 = vmax.f32 %v1740, 0.0
  %v2375 = vmax.f32 %v1745, 0.0
  %v2376 = vmax.f32 %v1748, 0.0
  %v2377 = vmax.f32 %v1753, 0.0
  %v2378 = vmax.f32 %v1756, 0.0
  %v2379 = vmax.f32 %v1761, 0.0
  %v2380 = vmax.f32 %v1764, 0.0
  %v2381 = vmax.f32 %v1769, 0.0
  %v2382 = vmax.f32 %v1772, 0.0
  %v2383 = vmax.f32 %v1777, 0.0
  %v2384 = vmax.f32 %v1780, 0.0
  %v2385 = vmax.f32 %v1785, 0.0
  %v2386 = vmax.f32 %v1788, 0.0
  %v2387 = vmax.f32 %v1793, 0.0
  %v2388 = vmax.f32 %v1796, 0.0
  %v2389 = vmax.f32 %v1801, 0.0
  %v2390 = vmax.f32 %v1804, 0.0
  %v2391 = vmax.f32 %v1809, 0.0
  %v2392 = vmax.f32 %v1812, 0.0
  %v2393 = vmax.f32 %v1817, 0.0
  %v2394 = vmax.f32 %v1820, 0.0
  %v2395 = vmax.f32 %v1825, 0.0
  %v2396 = vmax.f32 %v1828, 0.0
  %v2397 = vmax.f32 %v1833, 0.0
  %v2398 = vmax.f32 %v1836, 0.0
  %v2399 = vmax.f32 %v1841, 0.0
  %v2400 = vmax.f32 %v1844, 0.0
  %v2401 = vmax.f32 %v1849, 0.0
  %v2402 = vmax.f32 %v1852, 0.0
  %v2403 = vmax.f32 %v1857, 0.0
  %v2404 = vmax.f32 %v1860, 0.0
  %v2405 = vmax.f32 %v1865, 0.0
  %v2406 = vmax.f32 %v1868, 0.0
  %v2407 = vmax.f32 %v1873, 0.0
  %v2408 = vmax.f32 %v1876, 0.0
  %v2409 = vmax.f32 %v1881, 0.0
  %v2410 = vmax.f32 %v1884, 0.0
  %v2411 = vmax.f32 %v1889, 0.0
  %v2412 = vmax.f32 %v1892, 0.0
  %v2413 = vmax.f32 %v1897, 0.0
  %v2414 = vmax.f32 %v1900, 0.0
  %v2415 = vmax.f32 %v1905, 0.0
  %v2416 = vmax.f32 %v1908, 0.0
  %v2417 = vmax.f32 %v1913, 0.0
  %v2418 = vmax.f32 %v1916, 0.0
  %v2419 = vmax.f32 %v1921, 0.0
  %v2420 = vmax.f32 %v1924, 0.0
  %v2421 = vmax.f32 %v1929, 0.0
  %v2422 = vmax.f32 %v1932, 0.0
  %v2423 = vmax.f32 %v1937, 0.0
  %v2424 = vmax.f32 %v1940, 0.0
  %v2425 = vmax.f32 %v1945, 0.0
  %v2426 = vmax.f32 %v1948, 0.0
  %v2427 = vmax.f32 %v1953, 0.0
  %v2428 = vmax.f32 %v1956, 0.0
  %v2429 = vmax.f32 %v1961, 0.0
  %v2430 = vmax.f32 %v1964, 0.0
  %v2431 = vmax.f32 %v1969, 0.0
  %v2432 = vmax.f32 %v1972, 0.0
  %v2433 = vmax.f32 %v1977, 0.0
  %v2434 = vmax.f32 %v1980, 0.0
  %v2435 = vmax.f32 %v1985, 0.0
  %v2436 = vmax.f32 %v1988, 0.0
  %v2437 = vmax.f32 %v1993, 0.0
  %v2438 = vmax.f32 %v1996, 0.0
  %v2439 = vmax.f32 %v2001, 0.0
  %v2440 = vmax.f32 %v2004, 0.0
  %v2441 = vmax.f32 %v2009, 0.0
  %v2442 = vmax.f32 %v2012, 0.0
  %v2443 = vmax.f32 %v2017, 0.0
  %v2444 = vmax.f32 %v2020, 0.0
  %v2445 = vmax.f32 %v2025, 0.0
  %v2446 = vmax.f32 %v2028, 0.0
  %v2447 = vmax.f32 %v2033, 0.0
  %v2448 = vmax.f32 %v2036, 0.0
  %v2449 = vmax.f32 %v2041, 0.0
  %v2450 = vmax.f32 %v2044, 0.0
  %v2451 = vmax.f32 %v2049, 0.0
  %v2452 = vmax.f32 %v2052, 0.0
  %v2453 = vmax.f32 %v2057, 0.0
  %v2454 = vmax.f32 %v2060, 0.0
  %v2455 = vmax.f32 %v2065, 0.0
  %v2456 = vmax.f32 %v2068, 0.0
  %v2457 = vmax.f32 %v2073, 0.0
  %v2458 = vmax.f32 %v2076, 0.0
  %v2459 = vmax.f32 %v2081, 0.0
  %v2460 = vmax.f32 %v2084, 0.0
  %v2461 = vmax.f32 %v2089, 0.0
  %v2462 = vmax.f32 %v2092, 0.0
  %v2463 = vmax.f32 %v2097, 0.0
  %v2464 = vmax.f32 %v2100, 0.0
  %v2465 = vmax.f32 %v2105, 0.0
  %v2466 = vmax.f32 %v2108, 0.0
  %v2467 = vmax.f32 %v2113, 0.0
  %v2468 = vmax.f32 %v2116, 0.0
  %v2469 = vmax.f32 %v2121, 0.0
  %v2470 = vmax.f32 %v2124, 0.0
  %v2471 = vmax.f32 %v2129, 0.0
  %v2472 = vmax.f32 %v2132, 0.0
  %v2473 = vmax.f32 %v2137, 0.0
  %v2474 = vmax.f32 %v2140, 0.0
  %v2475 = vmax.f32 %v2145, 0.0
  %v2476 = vmax.f32 %v2148, 0.0
  %v2477 = vmax.f32 %v2153, 0.0
  %v2478 = vmax.f32 %v2156, 0.0
  %v2479 = vmax.f32 %v2161, 0.0
  %v2480 = vmax.f32 %v2164, 0.0
  %v2481 = vmax.f32 %v2169, 0.0
  %v2482 = vmax.f32 %v2172, 0.0
  %v2483 = vmax.f32 %v2177, 0.0
  %v2484 = vmax.f32 %v2180, 0.0
  %v2485 = vmax.f32 %v2185, 0.0
  %v2486 = vmax.f32 %v2188, 0.0
  %v2487 = vmax.f32 %v2193, 0.0
  %v2488 = vmax.f32 %v2196, 0.0
  %v2489 = vmax.f32 %v2201, 0.0
  %v2490 = vmax.f32 %v2204, 0.0
  %v2491 = vmax.f32 %v2209, 0.0
  %v2492 = vmax.f32 %v2212, 0.0
  %v2493 = vmax.f32 %v2217, 0.0
  %v2494 = vmax.f32 %v2220, 0.0
  %v2495 = vmax.f32 %v2225, 0.0
  %v2496 = vmax.f32 %v2228, 0.0
  %v2497 = vmax.f32 %v2233, 0.0
  %v2498 = vmax.f32 %v2236, 0.0
  %v2499 = vmax.f32 %v2241, 0.0
  %v2500 = vmax.f32 %v2244, 0.0
  %v2501 = vmax.f32 %v2249, 0.0
  %v2502 = vmax.f32 %v2252, 0.0
  %v2503 = vmax.f32 %v2257, 0.0
  %v2504 = vmax.f32 %v2260, 0.0
  %v2505 = vmax.f32 %v2265, 0.0
  %v2506 = vmax.f32 %v2268, 0.0
  %v2507 = vmax.f32 %v2273, 0.0
  %v2508 = vmax.f32 %v2276, 0.0
  %v2509 = vmax.f32 %v2281, 0.0
  %v2510 = vmax.f32 %v2284, 0.0
  %v2511 = vmax.f32 %v2289, 0.0
  %v2512 = vmax.f32 %v2292, 0.0
  %v2513 = vmax.f32 %v2297, 0.0
  %v2514 = vmax.f32 %v2300, 0.0
  %v2515 = vpack.c.bf16 %v2304, %v2303
  %v2516 = vpack.c.bf16 %v2306, %v2305
  %v2517 = vpack.c.bf16 %v2308, %v2307
  %v2518 = vpack.c.bf16 %v2310, %v2309
  %v2519 = vpack.c.bf16 %v2312, %v2311
  %v2520 = vpack.c.bf16 %v2314, %v2313
  %v2521 = vpack.c.bf16 %v2316, %v2315
  %v2522 = vpack.c.bf16 %v2318, %v2317
  %v2523 = vpack.c.bf16 %v2320, %v2319
  %v2524 = vpack.c.bf16 %v2322, %v2321
  %v2525 = vpack.c.bf16 %v2324, %v2323
  %v2526 = vpack.c.bf16 %v2326, %v2325
  %v2527 = vpack.c.bf16 %v2328, %v2327
  %v2528 = vpack.c.bf16 %v2330, %v2329
  %v2529 = vpack.c.bf16 %v2332, %v2331
  %v2530 = vpack.c.bf16 %v2334, %v2333
  %v2531 = vpack.c.bf16 %v2336, %v2335
  %v2532 = vpack.c.bf16 %v2338, %v2337
  %v2533 = vpack.c.bf16 %v2340, %v2339
  %v2534 = vpack.c.bf16 %v2342, %v2341
  %v2535 = vpack.c.bf16 %v2344, %v2343
  %v2536 = vpack.c.bf16 %v2346, %v2345
  %v2537 = vpack.c.bf16 %v2348, %v2347
  %v2538 = vpack.c.bf16 %v2350, %v2349
  %v2539 = vpack.c.bf16 %v2352, %v2351
  %v2540 = vpack.c.bf16 %v2354, %v2353
  %v2541 = vpack.c.bf16 %v2356, %v2355
  %v2542 = vpack.c.bf16 %v2358, %v2357
  %v2543 = vpack.c.bf16 %v2360, %v2359
  %v2544 = vpack.c.bf16 %v2362, %v2361
  %v2545 = vpack.c.bf16 %v2364, %v2363
  %v2546 = vpack.c.bf16 %v2366, %v2365
  %v2547 = vpack.c.bf16 %v2368, %v2367
  %v2548 = vpack.c.bf16 %v2370, %v2369
  %v2549 = vpack.c.bf16 %v2372, %v2371
  %v2550 = vpack.c.bf16 %v2374, %v2373
  %v2551 = vpack.c.bf16 %v2376, %v2375
  %v2552 = vpack.c.bf16 %v2378, %v2377
  %v2553 = vpack.c.bf16 %v2380, %v2379
  %v2554 = vpack.c.bf16 %v2382, %v2381
  %v2555 = vpack.c.bf16 %v2384, %v2383
  %v2556 = vpack.c.bf16 %v2386, %v2385
  %v2557 = vpack.c.bf16 %v2388, %v2387
  %v2558 = vpack.c.bf16 %v2390, %v2389
  %v2559 = vpack.c.bf16 %v2392, %v2391
  %v2560 = vpack.c.bf16 %v2394, %v2393
  %v2561 = vpack.c.bf16 %v2396, %v2395
  %v2562 = vpack.c.bf16 %v2398, %v2397
  %v2563 = vpack.c.bf16 %v2400, %v2399
  %v2564 = vpack.c.bf16 %v2402, %v2401
  %v2565 = vpack.c.bf16 %v2404, %v2403
  %v2566 = vpack.c.bf16 %v2406, %v2405
  %v2567 = vpack.c.bf16 %v2408, %v2407
  %v2568 = vpack.c.bf16 %v2410, %v2409
  %v2569 = vpack.c.bf16 %v2412, %v2411
  %v2570 = vpack.c.bf16 %v2414, %v2413
  %v2571 = vpack.c.bf16 %v2416, %v2415
  %v2572 = vpack.c.bf16 %v2418, %v2417
  %v2573 = vpack.c.bf16 %v2420, %v2419
  %v2574 = vpack.c.bf16 %v2422, %v2421
  %v2575 = vpack.c.bf16 %v2424, %v2423
  %v2576 = vpack.c.bf16 %v2426, %v2425
  %v2577 = vpack.c.bf16 %v2428, %v2427
  %v2578 = vpack.c.bf16 %v2430, %v2429
  %v2579 = vpack.c.bf16 %v2432, %v2431
  %v2580 = vpack.c.bf16 %v2434, %v2433
  %v2581 = vpack.c.bf16 %v2436, %v2435
  %v2582 = vpack.c.bf16 %v2438, %v2437
  %v2583 = vpack.c.bf16 %v2440, %v2439
  %v2584 = vpack.c.bf16 %v2442, %v2441
  %v2585 = vpack.c.bf16 %v2444, %v2443
  %v2586 = vpack.c.bf16 %v2446, %v2445
  %v2587 = vpack.c.bf16 %v2448, %v2447
  %v2588 = vpack.c.bf16 %v2450, %v2449
  %v2589 = vpack.c.bf16 %v2452, %v2451
  %v2590 = vpack.c.bf16 %v2454, %v2453
  %v2591 = vpack.c.bf16 %v2456, %v2455
  %v2592 = vpack.c.bf16 %v2458, %v2457
  %v2593 = vpack.c.bf16 %v2460, %v2459
  %v2594 = vpack.c.bf16 %v2462, %v2461
  %v2595 = vpack.c.bf16 %v2464, %v2463
  %v2596 = vpack.c.bf16 %v2466, %v2465
  %v2597 = vpack.c.bf16 %v2468, %v2467
  %v2598 = vpack.c.bf16 %v2470, %v2469
  %v2599 = vpack.c.bf16 %v2472, %v2471
  %v2600 = vpack.c.bf16 %v2474, %v2473
  %v2601 = vpack.c.bf16 %v2476, %v2475
  %v2602 = vpack.c.bf16 %v2478, %v2477
  %v2603 = vpack.c.bf16 %v2480, %v2479
  %v2604 = vpack.c.bf16 %v2482, %v2481
  %v2605 = vpack.c.bf16 %v2484, %v2483
  %v2606 = vpack.c.bf16 %v2486, %v2485
  %v2607 = vpack.c.bf16 %v2488, %v2487
  %v2608 = vpack.c.bf16 %v2490, %v2489
  %v2609 = vpack.c.bf16 %v2492, %v2491
  %v2610 = vpack.c.bf16 %v2494, %v2493
  %v2611 = vpack.c.bf16 %v2496, %v2495
  %v2612 = vpack.c.bf16 %v2498, %v2497
  %v2613 = vpack.c.bf16 %v2500, %v2499
  %v2614 = vpack.c.bf16 %v2502, %v2501
  %v2615 = vpack.c.bf16 %v2504, %v2503
  %v2616 = vpack.c.bf16 %v2506, %v2505
  %v2617 = vpack.c.bf16 %v2508, %v2507
  %v2618 = vpack.c.bf16 %v2510, %v2509
  %v2619 = vpack.c.bf16 %v2512, %v2511
  %v2620 = vpack.c.bf16 %v2514, %v2513
  %v2727 = vunpack.c.l.b16 %v2515
  %v2728 = vunpack.c.h.b16 %v2515
  %v2729 = vunpack.c.l.b16 %v2516
  %v2730 = vunpack.c.h.b16 %v2516
  %v2731 = vunpack.c.l.b16 %v2517
  %v2732 = vunpack.c.h.b16 %v2517
  %v2733 = vunpack.c.l.b16 %v2518
  %v2734 = vunpack.c.h.b16 %v2518
  %v2735 = vunpack.c.l.b16 %v2519
  %v2736 = vunpack.c.h.b16 %v2519
  %v2737 = vunpack.c.l.b16 %v2520
  %v2738 = vunpack.c.h.b16 %v2520
  %v2739 = vunpack.c.l.b16 %v2521
  %v2740 = vunpack.c.h.b16 %v2521
  %v2741 = vunpack.c.l.b16 %v2522
  %v2742 = vunpack.c.h.b16 %v2522
  %v2743 = vunpack.c.l.b16 %v2523
  %v2744 = vunpack.c.h.b16 %v2523
  %v2745 = vunpack.c.l.b16 %v2524
  %v2746 = vunpack.c.h.b16 %v2524
  %v2747 = vunpack.c.l.b16 %v2525
  %v2748 = vunpack.c.h.b16 %v2525
  %v2749 = vunpack.c.l.b16 %v2526
  %v2750 = vunpack.c.h.b16 %v2526
  %v2751 = vunpack.c.l.b16 %v2527
  %v2752 = vunpack.c.h.b16 %v2527
  %v2753 = vunpack.c.l.b16 %v2528
  %v2754 = vunpack.c.h.b16 %v2528
  %v2755 = vunpack.c.l.b16 %v2529
  %v2756 = vunpack.c.h.b16 %v2529
  %v2757 = vunpack.c.l.b16 %v2530
  %v2758 = vunpack.c.h.b16 %v2530
  %v2759 = vunpack.c.l.b16 %v2531
  %v2760 = vunpack.c.h.b16 %v2531
  %v2761 = vunpack.c.l.b16 %v2532
  %v2762 = vunpack.c.h.b16 %v2532
  %v2763 = vunpack.c.l.b16 %v2533
  %v2764 = vunpack.c.h.b16 %v2533
  %v2765 = vunpack.c.l.b16 %v2534
  %v2766 = vunpack.c.h.b16 %v2534
  %v2767 = vunpack.c.l.b16 %v2535
  %v2768 = vunpack.c.h.b16 %v2535
  %v2769 = vunpack.c.l.b16 %v2536
  %v2770 = vunpack.c.h.b16 %v2536
  %v2771 = vunpack.c.l.b16 %v2537
  %v2772 = vunpack.c.h.b16 %v2537
  %v2773 = vunpack.c.l.b16 %v2538
  %v2774 = vunpack.c.h.b16 %v2538
  %v2775 = vunpack.c.l.b16 %v2539
  %v2776 = vunpack.c.h.b16 %v2539
  %v2777 = vunpack.c.l.b16 %v2540
  %v2778 = vunpack.c.h.b16 %v2540
  %v2779 = vunpack.c.l.b16 %v2541
  %v2780 = vunpack.c.h.b16 %v2541
  %v2781 = vunpack.c.l.b16 %v2542
  %v2782 = vunpack.c.h.b16 %v2542
  %v2783 = vunpack.c.l.b16 %v2543
  %v2784 = vunpack.c.h.b16 %v2543
  %v2785 = vunpack.c.l.b16 %v2544
  %v2786 = vunpack.c.h.b16 %v2544
  %v2787 = vunpack.c.l.b16 %v2545
  %v2788 = vunpack.c.h.b16 %v2545
  %v2789 = vunpack.c.l.b16 %v2546
  %v2790 = vunpack.c.h.b16 %v2546
  %v2791 = vunpack.c.l.b16 %v2547
  %v2792 = vunpack.c.h.b16 %v2547
  %v2793 = vunpack.c.l.b16 %v2548
  %v2794 = vunpack.c.h.b16 %v2548
  %v2795 = vunpack.c.l.b16 %v2549
  %v2796 = vunpack.c.h.b16 %v2549
  %v2797 = vunpack.c.l.b16 %v2550
  %v2798 = vunpack.c.h.b16 %v2550
  %v2799 = vunpack.c.l.b16 %v2551
  %v2800 = vunpack.c.h.b16 %v2551
  %v2801 = vunpack.c.l.b16 %v2552
  %v2802 = vunpack.c.h.b16 %v2552
  %v2803 = vunpack.c.l.b16 %v2553
  %v2804 = vunpack.c.h.b16 %v2553
  %v2805 = vunpack.c.l.b16 %v2554
  %v2806 = vunpack.c.h.b16 %v2554
  %v2807 = vunpack.c.l.b16 %v2555
  %v2808 = vunpack.c.h.b16 %v2555
  %v2809 = vunpack.c.l.b16 %v2556
  %v2810 = vunpack.c.h.b16 %v2556
  %v2811 = vunpack.c.l.b16 %v2557
  %v2812 = vunpack.c.h.b16 %v2557
  %v2813 = vunpack.c.l.b16 %v2558
  %v2814 = vunpack.c.h.b16 %v2558
  %v2815 = vunpack.c.l.b16 %v2559
  %v2816 = vunpack.c.h.b16 %v2559
  %v2817 = vunpack.c.l.b16 %v2560
  %v2818 = vunpack.c.h.b16 %v2560
  %v2819 = vunpack.c.l.b16 %v2561
  %v2820 = vunpack.c.h.b16 %v2561
  %v2821 = vunpack.c.l.b16 %v2562
  %v2822 = vunpack.c.h.b16 %v2562
  %v2823 = vunpack.c.l.b16 %v2563
  %v2824 = vunpack.c.h.b16 %v2563
  %v2825 = vunpack.c.l.b16 %v2564
  %v2826 = vunpack.c.h.b16 %v2564
  %v2827 = vunpack.c.l.b16 %v2565
  %v2828 = vunpack.c.h.b16 %v2565
  %v2829 = vunpack.c.l.b16 %v2566
  %v2830 = vunpack.c.h.b16 %v2566
  %v2831 = vunpack.c.l.b16 %v2567
  %v2832 = vunpack.c.h.b16 %v2567
  %v2833 = vunpack.c.l.b16 %v2568
  %v2834 = vunpack.c.h.b16 %v2568
  %v2835 = vunpack.c.l.b16 %v2569
  %v2836 = vunpack.c.h.b16 %v2569
  %v2837 = vunpack.c.l.b16 %v2570
  %v2838 = vunpack.c.h.b16 %v2570
  %v2839 = vunpack.c.l.b16 %v2571
  %v2840 = vunpack.c.h.b16 %v2571
  %v2841 = vunpack.c.l.b16 %v2572
  %v2842 = vunpack.c.h.b16 %v2572
  %v2843 = vunpack.c.l.b16 %v2573
  %v2844 = vunpack.c.h.b16 %v2573
  %v2845 = vunpack.c.l.b16 %v2574
  %v2846 = vunpack.c.h.b16 %v2574
  %v2847 = vunpack.c.l.b16 %v2575
  %v2848 = vunpack.c.h.b16 %v2575
  %v2849 = vunpack.c.l.b16 %v2576
  %v2850 = vunpack.c.h.b16 %v2576
  %v2851 = vunpack.c.l.b16 %v2577
  %v2852 = vunpack.c.h.b16 %v2577
  %v2853 = vunpack.c.l.b16 %v2578
  %v2854 = vunpack.c.h.b16 %v2578
  %v2855 = vunpack.c.l.b16 %v2579
  %v2856 = vunpack.c.h.b16 %v2579
  %v2857 = vunpack.c.l.b16 %v2580
  %v2858 = vunpack.c.h.b16 %v2580
  %v2859 = vunpack.c.l.b16 %v2581
  %v2860 = vunpack.c.h.b16 %v2581
  %v2861 = vunpack.c.l.b16 %v2582
  %v2862 = vunpack.c.h.b16 %v2582
  %v2863 = vunpack.c.l.b16 %v2583
  %v2864 = vunpack.c.h.b16 %v2583
  %v2865 = vunpack.c.l.b16 %v2584
  %v2866 = vunpack.c.h.b16 %v2584
  %v2867 = vunpack.c.l.b16 %v2585
  %v2868 = vunpack.c.h.b16 %v2585
  %v2869 = vunpack.c.l.b16 %v2586
  %v2870 = vunpack.c.h.b16 %v2586
  %v2871 = vunpack.c.l.b16 %v2587
  %v2872 = vunpack.c.h.b16 %v2587
  %v2873 = vunpack.c.l.b16 %v2588
  %v2874 = vunpack.c.h.b16 %v2588
  %v2875 = vunpack.c.l.b16 %v2589
  %v2876 = vunpack.c.h.b16 %v2589
  %v2877 = vunpack.c.l.b16 %v2590
  %v2878 = vunpack.c.h.b16 %v2590
  %v2879 = vunpack.c.l.b16 %v2591
  %v2880 = vunpack.c.h.b16 %v2591
  %v2881 = vunpack.c.l.b16 %v2592
  %v2882 = vunpack.c.h.b16 %v2592
  %v2883 = vunpack.c.l.b16 %v2593
  %v2884 = vunpack.c.h.b16 %v2593
  %v2885 = vunpack.c.l.b16 %v2594
  %v2886 = vunpack.c.h.b16 %v2594
  %v2887 = vunpack.c.l.b16 %v2595
  %v2888 = vunpack.c.h.b16 %v2595
  %v2889 = vunpack.c.l.b16 %v2596
  %v2890 = vunpack.c.h.b16 %v2596
  %v2891 = vunpack.c.l.b16 %v2597
  %v2892 = vunpack.c.h.b16 %v2597
  %v2893 = vunpack.c.l.b16 %v2598
  %v2894 = vunpack.c.h.b16 %v2598
  %v2895 = vunpack.c.l.b16 %v2599
  %v2896 = vunpack.c.h.b16 %v2599
  %v2897 = vunpack.c.l.b16 %v2600
  %v2898 = vunpack.c.h.b16 %v2600
  %v2899 = vunpack.c.l.b16 %v2601
  %v2900 = vunpack.c.h.b16 %v2601
  %v2901 = vunpack.c.l.b16 %v2602
  %v2902 = vunpack.c.h.b16 %v2602
  %v2903 = vunpack.c.l.b16 %v2603
  %v2904 = vunpack.c.h.b16 %v2603
  %v2905 = vunpack.c.l.b16 %v2604
  %v2906 = vunpack.c.h.b16 %v2604
  %v2907 = vunpack.c.l.b16 %v2605
  %v2908 = vunpack.c.h.b16 %v2605
  %v2909 = vunpack.c.l.b16 %v2606
  %v2910 = vunpack.c.h.b16 %v2606
  %v2911 = vunpack.c.l.b16 %v2607
  %v2912 = vunpack.c.h.b16 %v2607
  %v2913 = vunpack.c.l.b16 %v2608
  %v2914 = vunpack.c.h.b16 %v2608
  %v2915 = vunpack.c.l.b16 %v2609
  %v2916 = vunpack.c.h.b16 %v2609
  %v2917 = vunpack.c.l.b16 %v2610
  %v2918 = vunpack.c.h.b16 %v2610
  %v2919 = vunpack.c.l.b16 %v2611
  %v2920 = vunpack.c.h.b16 %v2611
  %v2921 = vunpack.c.l.b16 %v2612
  %v2922 = vunpack.c.h.b16 %v2612
  %v2923 = vunpack.c.l.b16 %v2613
  %v2924 = vunpack.c.h.b16 %v2613
  %v2925 = vunpack.c.l.b16 %v2614
  %v2926 = vunpack.c.h.b16 %v2614
  %v2927 = vunpack.c.l.b16 %v2615
  %v2928 = vunpack.c.h.b16 %v2615
  %v2929 = vunpack.c.l.b16 %v2616
  %v2930 = vunpack.c.h.b16 %v2616
  %v2931 = vunpack.c.l.b16 %v2617
  %v2932 = vunpack.c.h.b16 %v2617
  %v2933 = vunpack.c.l.b16 %v2618
  %v2934 = vunpack.c.h.b16 %v2618
  %v2935 = vunpack.c.l.b16 %v2619
  %v2936 = vunpack.c.h.b16 %v2619
  %v2937 = vunpack.c.l.b16 %v2620
  %v2938 = vunpack.c.h.b16 %v2620
  %v2939 = vpack.c.b16 %v2727, %v2727
  %v2940 = vpack.c.b16 %v2728, %v2728
  %v2941 = vpack.c.b16 %v2729, %v2729
  %v2942 = vpack.c.b16 %v2730, %v2730
  %v2943 = vpack.c.b16 %v2731, %v2731
  %v2944 = vpack.c.b16 %v2732, %v2732
  %v2945 = vpack.c.b16 %v2733, %v2733
  %v2946 = vpack.c.b16 %v2734, %v2734
  %v2947 = vpack.c.b16 %v2735, %v2735
  %v2948 = vpack.c.b16 %v2736, %v2736
  %v2949 = vpack.c.b16 %v2737, %v2737
  %v2950 = vpack.c.b16 %v2738, %v2738
  %v2951 = vpack.c.b16 %v2739, %v2739
  %v2952 = vpack.c.b16 %v2740, %v2740
  %v2953 = vpack.c.b16 %v2741, %v2741
  %v2954 = vpack.c.b16 %v2742, %v2742
  %v2955 = vpack.c.b16 %v2743, %v2743
  %v2956 = vpack.c.b16 %v2744, %v2744
  %v2957 = vpack.c.b16 %v2745, %v2745
  %v2958 = vpack.c.b16 %v2746, %v2746
  %v2959 = vpack.c.b16 %v2747, %v2747
  %v2960 = vpack.c.b16 %v2748, %v2748
  %v2961 = vpack.c.b16 %v2749, %v2749
  %v2962 = vpack.c.b16 %v2750, %v2750
  %v2963 = vpack.c.b16 %v2751, %v2751
  %v2964 = vpack.c.b16 %v2752, %v2752
  %v2965 = vpack.c.b16 %v2753, %v2753
  %v2966 = vpack.c.b16 %v2754, %v2754
  %v2967 = vpack.c.b16 %v2755, %v2755
  %v2968 = vpack.c.b16 %v2756, %v2756
  %v2969 = vpack.c.b16 %v2757, %v2757
  %v2970 = vpack.c.b16 %v2758, %v2758
  %v2971 = vpack.c.b16 %v2759, %v2759
  %v2972 = vpack.c.b16 %v2760, %v2760
  %v2973 = vpack.c.b16 %v2761, %v2761
  %v2974 = vpack.c.b16 %v2762, %v2762
  %v2975 = vpack.c.b16 %v2763, %v2763
  %v2976 = vpack.c.b16 %v2764, %v2764
  %v2977 = vpack.c.b16 %v2765, %v2765
  %v2978 = vpack.c.b16 %v2766, %v2766
  %v2979 = vpack.c.b16 %v2767, %v2767
  %v2980 = vpack.c.b16 %v2768, %v2768
  %v2981 = vpack.c.b16 %v2769, %v2769
  %v2982 = vpack.c.b16 %v2770, %v2770
  %v2983 = vpack.c.b16 %v2771, %v2771
  %v2984 = vpack.c.b16 %v2772, %v2772
  %v2985 = vpack.c.b16 %v2773, %v2773
  %v2986 = vpack.c.b16 %v2774, %v2774
  %v2987 = vpack.c.b16 %v2775, %v2775
  %v2988 = vpack.c.b16 %v2776, %v2776
  %v2989 = vpack.c.b16 %v2777, %v2777
  %v2990 = vpack.c.b16 %v2778, %v2778
  %v2991 = vpack.c.b16 %v2779, %v2779
  %v2992 = vpack.c.b16 %v2780, %v2780
  %v2993 = vpack.c.b16 %v2781, %v2781
  %v2994 = vpack.c.b16 %v2782, %v2782
  %v2995 = vpack.c.b16 %v2783, %v2783
  %v2996 = vpack.c.b16 %v2784, %v2784
  %v2997 = vpack.c.b16 %v2785, %v2785
  %v2998 = vpack.c.b16 %v2786, %v2786
  %v2999 = vpack.c.b16 %v2787, %v2787
  %v3000 = vpack.c.b16 %v2788, %v2788
  %v3001 = vpack.c.b16 %v2789, %v2789
  %v3002 = vpack.c.b16 %v2790, %v2790
  %v3003 = vpack.c.b16 %v2791, %v2791
  %v3004 = vpack.c.b16 %v2792, %v2792
  %v3005 = vpack.c.b16 %v2793, %v2793
  %v3006 = vpack.c.b16 %v2794, %v2794
  %v3007 = vpack.c.b16 %v2795, %v2795
  %v3008 = vpack.c.b16 %v2796, %v2796
  %v3009 = vpack.c.b16 %v2797, %v2797
  %v3010 = vpack.c.b16 %v2798, %v2798
  %v3011 = vpack.c.b16 %v2799, %v2799
  %v3012 = vpack.c.b16 %v2800, %v2800
  %v3013 = vpack.c.b16 %v2801, %v2801
  %v3014 = vpack.c.b16 %v2802, %v2802
  %v3015 = vpack.c.b16 %v2803, %v2803
  %v3016 = vpack.c.b16 %v2804, %v2804
  %v3017 = vpack.c.b16 %v2805, %v2805
  %v3018 = vpack.c.b16 %v2806, %v2806
  %v3019 = vpack.c.b16 %v2807, %v2807
  %v3020 = vpack.c.b16 %v2808, %v2808
  %v3021 = vpack.c.b16 %v2809, %v2809
  %v3022 = vpack.c.b16 %v2810, %v2810
  %v3023 = vpack.c.b16 %v2811, %v2811
  %v3024 = vpack.c.b16 %v2812, %v2812
  %v3025 = vpack.c.b16 %v2813, %v2813
  %v3026 = vpack.c.b16 %v2814, %v2814
  %v3027 = vpack.c.b16 %v2815, %v2815
  %v3028 = vpack.c.b16 %v2816, %v2816
  %v3029 = vpack.c.b16 %v2817, %v2817
  %v3030 = vpack.c.b16 %v2818, %v2818
  %v3031 = vpack.c.b16 %v2819, %v2819
  %v3032 = vpack.c.b16 %v2820, %v2820
  %v3033 = vpack.c.b16 %v2821, %v2821
  %v3034 = vpack.c.b16 %v2822, %v2822
  %v3035 = vpack.c.b16 %v2823, %v2823
  %v3036 = vpack.c.b16 %v2824, %v2824
  %v3037 = vpack.c.b16 %v2825, %v2825
  %v3038 = vpack.c.b16 %v2826, %v2826
  %v3039 = vpack.c.b16 %v2827, %v2827
  %v3040 = vpack.c.b16 %v2828, %v2828
  %v3041 = vpack.c.b16 %v2829, %v2829
  %v3042 = vpack.c.b16 %v2830, %v2830
  %v3043 = vpack.c.b16 %v2831, %v2831
  %v3044 = vpack.c.b16 %v2832, %v2832
  %v3045 = vpack.c.b16 %v2833, %v2833
  %v3046 = vpack.c.b16 %v2834, %v2834
  %v3047 = vpack.c.b16 %v2835, %v2835
  %v3048 = vpack.c.b16 %v2836, %v2836
  %v3049 = vpack.c.b16 %v2837, %v2837
  %v3050 = vpack.c.b16 %v2838, %v2838
  %v3051 = vpack.c.b16 %v2839, %v2839
  %v3052 = vpack.c.b16 %v2840, %v2840
  %v3053 = vpack.c.b16 %v2841, %v2841
  %v3054 = vpack.c.b16 %v2842, %v2842
  %v3055 = vpack.c.b16 %v2843, %v2843
  %v3056 = vpack.c.b16 %v2844, %v2844
  %v3057 = vpack.c.b16 %v2845, %v2845
  %v3058 = vpack.c.b16 %v2846, %v2846
  %v3059 = vpack.c.b16 %v2847, %v2847
  %v3060 = vpack.c.b16 %v2848, %v2848
  %v3061 = vpack.c.b16 %v2849, %v2849
  %v3062 = vpack.c.b16 %v2850, %v2850
  %v3063 = vpack.c.b16 %v2851, %v2851
  %v3064 = vpack.c.b16 %v2852, %v2852
  %v3065 = vpack.c.b16 %v2853, %v2853
  %v3066 = vpack.c.b16 %v2854, %v2854
  %v3067 = vpack.c.b16 %v2855, %v2855
  %v3068 = vpack.c.b16 %v2856, %v2856
  %v3069 = vpack.c.b16 %v2857, %v2857
  %v3070 = vpack.c.b16 %v2858, %v2858
  %v3071 = vpack.c.b16 %v2859, %v2859
  %v3072 = vpack.c.b16 %v2860, %v2860
  %v3073 = vpack.c.b16 %v2861, %v2861
  %v3074 = vpack.c.b16 %v2862, %v2862
  %v3075 = vpack.c.b16 %v2863, %v2863
  %v3076 = vpack.c.b16 %v2864, %v2864
  %v3077 = vpack.c.b16 %v2865, %v2865
  %v3078 = vpack.c.b16 %v2866, %v2866
  %v3079 = vpack.c.b16 %v2867, %v2867
  %v3080 = vpack.c.b16 %v2868, %v2868
  %v3081 = vpack.c.b16 %v2869, %v2869
  %v3082 = vpack.c.b16 %v2870, %v2870
  %v3083 = vpack.c.b16 %v2871, %v2871
  %v3084 = vpack.c.b16 %v2872, %v2872
  %v3085 = vpack.c.b16 %v2873, %v2873
  %v3086 = vpack.c.b16 %v2874, %v2874
  %v3087 = vpack.c.b16 %v2875, %v2875
  %v3088 = vpack.c.b16 %v2876, %v2876
  %v3089 = vpack.c.b16 %v2877, %v2877
  %v3090 = vpack.c.b16 %v2878, %v2878
  %v3091 = vpack.c.b16 %v2879, %v2879
  %v3092 = vpack.c.b16 %v2880, %v2880
  %v3093 = vpack.c.b16 %v2881, %v2881
  %v3094 = vpack.c.b16 %v2882, %v2882
  %v3095 = vpack.c.b16 %v2883, %v2883
  %v3096 = vpack.c.b16 %v2884, %v2884
  %v3097 = vpack.c.b16 %v2885, %v2885
  %v3098 = vpack.c.b16 %v2886, %v2886
  %v3099 = vpack.c.b16 %v2887, %v2887
  %v3100 = vpack.c.b16 %v2888, %v2888
  %v3101 = vpack.c.b16 %v2889, %v2889
  %v3102 = vpack.c.b16 %v2890, %v2890
  %v3103 = vpack.c.b16 %v2891, %v2891
  %v3104 = vpack.c.b16 %v2892, %v2892
  %v3105 = vpack.c.b16 %v2893, %v2893
  %v3106 = vpack.c.b16 %v2894, %v2894
  %v3107 = vpack.c.b16 %v2895, %v2895
  %v3108 = vpack.c.b16 %v2896, %v2896
  %v3109 = vpack.c.b16 %v2897, %v2897
  %v3110 = vpack.c.b16 %v2898, %v2898
  %v3111 = vpack.c.b16 %v2899, %v2899
  %v3112 = vpack.c.b16 %v2900, %v2900
  %v3113 = vpack.c.b16 %v2901, %v2901
  %v3114 = vpack.c.b16 %v2902, %v2902
  %v3115 = vpack.c.b16 %v2903, %v2903
  %v3116 = vpack.c.b16 %v2904, %v2904
  %v3117 = vpack.c.b16 %v2905, %v2905
  %v3118 = vpack.c.b16 %v2906, %v2906
  %v3119 = vpack.c.b16 %v2907, %v2907
  %v3120 = vpack.c.b16 %v2908, %v2908
  %v3121 = vpack.c.b16 %v2909, %v2909
  %v3122 = vpack.c.b16 %v2910, %v2910
  %v3123 = vpack.c.b16 %v2911, %v2911
  %v3124 = vpack.c.b16 %v2912, %v2912
  %v3125 = vpack.c.b16 %v2913, %v2913
  %v3126 = vpack.c.b16 %v2914, %v2914
  %v3127 = vpack.c.b16 %v2915, %v2915
  %v3128 = vpack.c.b16 %v2916, %v2916
  %v3129 = vpack.c.b16 %v2917, %v2917
  %v3130 = vpack.c.b16 %v2918, %v2918
  %v3131 = vpack.c.b16 %v2919, %v2919
  %v3132 = vpack.c.b16 %v2920, %v2920
  %v3133 = vpack.c.b16 %v2921, %v2921
  %v3134 = vpack.c.b16 %v2922, %v2922
  %v3135 = vpack.c.b16 %v2923, %v2923
  %v3136 = vpack.c.b16 %v2924, %v2924
  %v3137 = vpack.c.b16 %v2925, %v2925
  %v3138 = vpack.c.b16 %v2926, %v2926
  %v3139 = vpack.c.b16 %v2927, %v2927
  %v3140 = vpack.c.b16 %v2928, %v2928
  %v3141 = vpack.c.b16 %v2929, %v2929
  %v3142 = vpack.c.b16 %v2930, %v2930
  %v3143 = vpack.c.b16 %v2931, %v2931
  %v3144 = vpack.c.b16 %v2932, %v2932
  %v3145 = vpack.c.b16 %v2933, %v2933
  %v3146 = vpack.c.b16 %v2934, %v2934
  %v3147 = vpack.c.b16 %v2935, %v2935
  %v3148 = vpack.c.b16 %v2936, %v2936
  %v3149 = vpack.c.b16 %v2937, %v2937
  %v3150 = vpack.c.b16 %v2938, %v2938
  %3363 = vst [vmem:[%s3] sm:$0xf] %v2939
  %3364 = vst [vmem:[%s3 + $0x4] sm:$0xf] %v2940
  %3365 = vst [vmem:[%s3 + $0x8] sm:$0xf] %v2941
  %3366 = vst [vmem:[%s3 + $0xc] sm:$0xf] %v2942
  %3367 = vst [vmem:[%s3 + $0x10] sm:$0xf] %v2943
  %3368 = vst [vmem:[%s3 + $0x14] sm:$0xf] %v2944
  %3369 = vst [vmem:[%s3 + $0x18] sm:$0xf] %v2945
  %3370 = vst [vmem:[%s3 + $0x1c] sm:$0xf] %v2946
  %3371 = vst [vmem:[%s3 + $0x20] sm:$0xf] %v2947
  %3372 = vst [vmem:[%s3 + $0x24] sm:$0xf] %v2948
  %3373 = vst [vmem:[%s3 + $0x28] sm:$0xf] %v2949
  %3374 = vst [vmem:[%s3 + $0x2c] sm:$0xf] %v2950
  %3375 = vst [vmem:[%s3 + $0x30] sm:$0xf] %v2951
  %3376 = vst [vmem:[%s3 + $0x34] sm:$0xf] %v2952
  %3377 = vst [vmem:[%s3 + $0x38] sm:$0xf] %v2953
  %3378 = vst [vmem:[%s3 + $0x3c] sm:$0xf] %v2954
  %3379 = vst [vmem:[%s3 + $0x40] sm:$0xf] %v2955
  %3380 = vst [vmem:[%s3 + $0x44] sm:$0xf] %v2956
  %3381 = vst [vmem:[%s3 + $0x48] sm:$0xf] %v2957
  %3382 = vst [vmem:[%s3 + $0x4c] sm:$0xf] %v2958
  %3383 = vst [vmem:[%s3 + $0x50] sm:$0xf] %v2959
  %3384 = vst [vmem:[%s3 + $0x54] sm:$0xf] %v2960
  %3385 = vst [vmem:[%s3 + $0x58] sm:$0xf] %v2961
  %3386 = vst [vmem:[%s3 + $0x5c] sm:$0xf] %v2962
  %3387 = vst [vmem:[%s3 + $0x60] sm:$0xf] %v2963
  %3388 = vst [vmem:[%s3 + $0x64] sm:$0xf] %v2964
  %3389 = vst [vmem:[%s3 + $0x68] sm:$0xf] %v2965
  %3390 = vst [vmem:[%s3 + $0x6c] sm:$0xf] %v2966
  %3391 = vst [vmem:[%s3 + $0x70] sm:$0xf] %v2967
  %3392 = vst [vmem:[%s3 + $0x74] sm:$0xf] %v2968
  %3393 = vst [vmem:[%s3 + $0x78] sm:$0xf] %v2969
  %3394 = vst [vmem:[%s3 + $0x7c] sm:$0xf] %v2970
  %3395 = vst [vmem:[%s3 + $0x80] sm:$0xf] %v2971
  %3396 = vst [vmem:[%s3 + $0x84] sm:$0xf] %v2972
  %3397 = vst [vmem:[%s3 + $0x88] sm:$0xf] %v2973
  %3398 = vst [vmem:[%s3 + $0x8c] sm:$0xf] %v2974
  %3399 = vst [vmem:[%s3 + $0x90] sm:$0xf] %v2975
  %3400 = vst [vmem:[%s3 + $0x94] sm:$0xf] %v2976
  %3401 = vst [vmem:[%s3 + $0x98] sm:$0xf] %v2977
  %3402 = vst [vmem:[%s3 + $0x9c] sm:$0xf] %v2978
  %3403 = vst [vmem:[%s3 + $0xa0] sm:$0xf] %v2979
  %3404 = vst [vmem:[%s3 + $0xa4] sm:$0xf] %v2980
  %3405 = vst [vmem:[%s3 + $0xa8] sm:$0xf] %v2981
  %3406 = vst [vmem:[%s3 + $0xac] sm:$0xf] %v2982
  %3407 = vst [vmem:[%s3 + $0xb0] sm:$0xf] %v2983
  %3408 = vst [vmem:[%s3 + $0xb4] sm:$0xf] %v2984
  %3409 = vst [vmem:[%s3 + $0xb8] sm:$0xf] %v2985
  %3410 = vst [vmem:[%s3 + $0xbc] sm:$0xf] %v2986
  %3411 = vst [vmem:[%s3 + $0xc0] sm:$0xf] %v2987
  %3412 = vst [vmem:[%s3 + $0xc4] sm:$0xf] %v2988
  %3413 = vst [vmem:[%s3 + $0xc8] sm:$0xf] %v2989
  %3414 = vst [vmem:[%s3 + $0xcc] sm:$0xf] %v2990
  %3415 = vst [vmem:[%s3 + $0xd0] sm:$0xf] %v2991
  %3416 = vst [vmem:[%s3 + $0xd4] sm:$0xf] %v2992
  %3417 = vst [vmem:[%s3 + $0xd8] sm:$0xf] %v2993
  %3418 = vst [vmem:[%s3 + $0xdc] sm:$0xf] %v2994
  %3419 = vst [vmem:[%s3 + $0xe0] sm:$0xf] %v2995
  %3420 = vst [vmem:[%s3 + $0xe4] sm:$0xf] %v2996
  %3421 = vst [vmem:[%s3 + $0xe8] sm:$0xf] %v2997
  %3422 = vst [vmem:[%s3 + $0xec] sm:$0xf] %v2998
  %3423 = vst [vmem:[%s3 + $0xf0] sm:$0xf] %v2999
  %3424 = vst [vmem:[%s3 + $0xf4] sm:$0xf] %v3000
  %3425 = vst [vmem:[%s3 + $0xf8] sm:$0xf] %v3001
  %3426 = vst [vmem:[%s3 + $0xfc] sm:$0xf] %v3002
  %3427 = vst [vmem:[%s3 + $0x100] sm:$0xf] %v3003
  %3428 = vst [vmem:[%s3 + $0x104] sm:$0xf] %v3004
  %3429 = vst [vmem:[%s3 + $0x108] sm:$0xf] %v3005
  %3430 = vst [vmem:[%s3 + $0x10c] sm:$0xf] %v3006
  %3431 = vst [vmem:[%s3 + $0x110] sm:$0xf] %v3007
  %3432 = vst [vmem:[%s3 + $0x114] sm:$0xf] %v3008
  %3433 = vst [vmem:[%s3 + $0x118] sm:$0xf] %v3009
  %3434 = vst [vmem:[%s3 + $0x11c] sm:$0xf] %v3010
  %3435 = vst [vmem:[%s3 + $0x120] sm:$0xf] %v3011
  %3436 = vst [vmem:[%s3 + $0x124] sm:$0xf] %v3012
  %3437 = vst [vmem:[%s3 + $0x128] sm:$0xf] %v3013
  %3438 = vst [vmem:[%s3 + $0x12c] sm:$0xf] %v3014
  %3439 = vst [vmem:[%s3 + $0x130] sm:$0xf] %v3015
  %3440 = vst [vmem:[%s3 + $0x134] sm:$0xf] %v3016
  %3441 = vst [vmem:[%s3 + $0x138] sm:$0xf] %v3017
  %3442 = vst [vmem:[%s3 + $0x13c] sm:$0xf] %v3018
  %3443 = vst [vmem:[%s3 + $0x140] sm:$0xf] %v3019
  %3444 = vst [vmem:[%s3 + $0x144] sm:$0xf] %v3020
  %3445 = vst [vmem:[%s3 + $0x148] sm:$0xf] %v3021
  %3446 = vst [vmem:[%s3 + $0x14c] sm:$0xf] %v3022
  %3447 = vst [vmem:[%s3 + $0x150] sm:$0xf] %v3023
  %3448 = vst [vmem:[%s3 + $0x154] sm:$0xf] %v3024
  %3449 = vst [vmem:[%s3 + $0x158] sm:$0xf] %v3025
  %3450 = vst [vmem:[%s3 + $0x15c] sm:$0xf] %v3026
  %3451 = vst [vmem:[%s3 + $0x160] sm:$0xf] %v3027
  %3452 = vst [vmem:[%s3 + $0x164] sm:$0xf] %v3028
  %3453 = vst [vmem:[%s3 + $0x168] sm:$0xf] %v3029
  %3454 = vst [vmem:[%s3 + $0x16c] sm:$0xf] %v3030
  %3455 = vst [vmem:[%s3 + $0x170] sm:$0xf] %v3031
  %3456 = vst [vmem:[%s3 + $0x174] sm:$0xf] %v3032
  %3457 = vst [vmem:[%s3 + $0x178] sm:$0xf] %v3033
  %3458 = vst [vmem:[%s3 + $0x17c] sm:$0xf] %v3034
  %3459 = vst [vmem:[%s3 + $0x180] sm:$0xf] %v3035
  %3460 = vst [vmem:[%s3 + $0x184] sm:$0xf] %v3036
  %3461 = vst [vmem:[%s3 + $0x188] sm:$0xf] %v3037
  %3462 = vst [vmem:[%s3 + $0x18c] sm:$0xf] %v3038
  %3463 = vst [vmem:[%s3 + $0x190] sm:$0xf] %v3039
  %3464 = vst [vmem:[%s3 + $0x194] sm:$0xf] %v3040
  %3465 = vst [vmem:[%s3 + $0x198] sm:$0xf] %v3041
  %3466 = vst [vmem:[%s3 + $0x19c] sm:$0xf] %v3042
  %3467 = vst [vmem:[%s3 + $0x1a0] sm:$0xf] %v3043
  %3468 = vst [vmem:[%s3 + $0x1a4] sm:$0xf] %v3044
  %3469 = vst [vmem:[%s3 + $0x1a8] sm:$0xf] %v3045
  %3470 = vst [vmem:[%s3 + $0x1ac] sm:$0xf] %v3046
  %3471 = vst [vmem:[%s3 + $0x1b0] sm:$0xf] %v3047
  %3472 = vst [vmem:[%s3 + $0x1b4] sm:$0xf] %v3048
  %3473 = vst [vmem:[%s3 + $0x1b8] sm:$0xf] %v3049
  %3474 = vst [vmem:[%s3 + $0x1bc] sm:$0xf] %v3050
  %3475 = vst [vmem:[%s3 + $0x1c0] sm:$0xf] %v3051
  %3476 = vst [vmem:[%s3 + $0x1c4] sm:$0xf] %v3052
  %3477 = vst [vmem:[%s3 + $0x1c8] sm:$0xf] %v3053
  %3478 = vst [vmem:[%s3 + $0x1cc] sm:$0xf] %v3054
  %3479 = vst [vmem:[%s3 + $0x1d0] sm:$0xf] %v3055
  %3480 = vst [vmem:[%s3 + $0x1d4] sm:$0xf] %v3056
  %3481 = vst [vmem:[%s3 + $0x1d8] sm:$0xf] %v3057
  %3482 = vst [vmem:[%s3 + $0x1dc] sm:$0xf] %v3058
  %3483 = vst [vmem:[%s3 + $0x1e0] sm:$0xf] %v3059
  %3484 = vst [vmem:[%s3 + $0x1e4] sm:$0xf] %v3060
  %3485 = vst [vmem:[%s3 + $0x1e8] sm:$0xf] %v3061
  %3486 = vst [vmem:[%s3 + $0x1ec] sm:$0xf] %v3062
  %3487 = vst [vmem:[%s3 + $0x1f0] sm:$0xf] %v3063
  %3488 = vst [vmem:[%s3 + $0x1f4] sm:$0xf] %v3064
  %3489 = vst [vmem:[%s3 + $0x1f8] sm:$0xf] %v3065
  %3490 = vst [vmem:[%s3 + $0x1fc] sm:$0xf] %v3066
  %3491 = vst [vmem:[%s3 + $0x200] sm:$0xf] %v3067
  %3492 = vst [vmem:[%s3 + $0x204] sm:$0xf] %v3068
  %3493 = vst [vmem:[%s3 + $0x208] sm:$0xf] %v3069
  %3494 = vst [vmem:[%s3 + $0x20c] sm:$0xf] %v3070
  %3495 = vst [vmem:[%s3 + $0x210] sm:$0xf] %v3071
  %3496 = vst [vmem:[%s3 + $0x214] sm:$0xf] %v3072
  %3497 = vst [vmem:[%s3 + $0x218] sm:$0xf] %v3073
  %3498 = vst [vmem:[%s3 + $0x21c] sm:$0xf] %v3074
  %3499 = vst [vmem:[%s3 + $0x220] sm:$0xf] %v3075
  %3500 = vst [vmem:[%s3 + $0x224] sm:$0xf] %v3076
  %3501 = vst [vmem:[%s3 + $0x228] sm:$0xf] %v3077
  %3502 = vst [vmem:[%s3 + $0x22c] sm:$0xf] %v3078
  %3503 = vst [vmem:[%s3 + $0x230] sm:$0xf] %v3079
  %3504 = vst [vmem:[%s3 + $0x234] sm:$0xf] %v3080
  %3505 = vst [vmem:[%s3 + $0x238] sm:$0xf] %v3081
  %3506 = vst [vmem:[%s3 + $0x23c] sm:$0xf] %v3082
  %3507 = vst [vmem:[%s3 + $0x240] sm:$0xf] %v3083
  %3508 = vst [vmem:[%s3 + $0x244] sm:$0xf] %v3084
  %3509 = vst [vmem:[%s3 + $0x248] sm:$0xf] %v3085
  %3510 = vst [vmem:[%s3 + $0x24c] sm:$0xf] %v3086
  %3511 = vst [vmem:[%s3 + $0x250] sm:$0xf] %v3087
  %3512 = vst [vmem:[%s3 + $0x254] sm:$0xf] %v3088
  %3513 = vst [vmem:[%s3 + $0x258] sm:$0xf] %v3089
  %3514 = vst [vmem:[%s3 + $0x25c] sm:$0xf] %v3090
  %3515 = vst [vmem:[%s3 + $0x260] sm:$0xf] %v3091
  %3516 = vst [vmem:[%s3 + $0x264] sm:$0xf] %v3092
  %3517 = vst [vmem:[%s3 + $0x268] sm:$0xf] %v3093
  %3518 = vst [vmem:[%s3 + $0x26c] sm:$0xf] %v3094
  %3519 = vst [vmem:[%s3 + $0x270] sm:$0xf] %v3095
  %3520 = vst [vmem:[%s3 + $0x274] sm:$0xf] %v3096
  %3521 = vst [vmem:[%s3 + $0x278] sm:$0xf] %v3097
  %3522 = vst [vmem:[%s3 + $0x27c] sm:$0xf] %v3098
  %3523 = vst [vmem:[%s3 + $0x280] sm:$0xf] %v3099
  %3524 = vst [vmem:[%s3 + $0x284] sm:$0xf] %v3100
  %3525 = vst [vmem:[%s3 + $0x288] sm:$0xf] %v3101
  %3526 = vst [vmem:[%s3 + $0x28c] sm:$0xf] %v3102
  %3527 = vst [vmem:[%s3 + $0x290] sm:$0xf] %v3103
  %3528 = vst [vmem:[%s3 + $0x294] sm:$0xf] %v3104
  %3529 = vst [vmem:[%s3 + $0x298] sm:$0xf] %v3105
  %3530 = vst [vmem:[%s3 + $0x29c] sm:$0xf] %v3106
  %3531 = vst [vmem:[%s3 + $0x2a0] sm:$0xf] %v3107
  %3532 = vst [vmem:[%s3 + $0x2a4] sm:$0xf] %v3108
  %3533 = vst [vmem:[%s3 + $0x2a8] sm:$0xf] %v3109
  %3534 = vst [vmem:[%s3 + $0x2ac] sm:$0xf] %v3110
  %3535 = vst [vmem:[%s3 + $0x2b0] sm:$0xf] %v3111
  %3536 = vst [vmem:[%s3 + $0x2b4] sm:$0xf] %v3112
  %3537 = vst [vmem:[%s3 + $0x2b8] sm:$0xf] %v3113
  %3538 = vst [vmem:[%s3 + $0x2bc] sm:$0xf] %v3114
  %3539 = vst [vmem:[%s3 + $0x2c0] sm:$0xf] %v3115
  %3540 = vst [vmem:[%s3 + $0x2c4] sm:$0xf] %v3116
  %3541 = vst [vmem:[%s3 + $0x2c8] sm:$0xf] %v3117
  %3542 = vst [vmem:[%s3 + $0x2cc] sm:$0xf] %v3118
  %3543 = vst [vmem:[%s3 + $0x2d0] sm:$0xf] %v3119
  %3544 = vst [vmem:[%s3 + $0x2d4] sm:$0xf] %v3120
  %3545 = vst [vmem:[%s3 + $0x2d8] sm:$0xf] %v3121
  %3546 = vst [vmem:[%s3 + $0x2dc] sm:$0xf] %v3122
  %3547 = vst [vmem:[%s3 + $0x2e0] sm:$0xf] %v3123
  %3548 = vst [vmem:[%s3 + $0x2e4] sm:$0xf] %v3124
  %3549 = vst [vmem:[%s3 + $0x2e8] sm:$0xf] %v3125
  %3550 = vst [vmem:[%s3 + $0x2ec] sm:$0xf] %v3126
  %3551 = vst [vmem:[%s3 + $0x2f0] sm:$0xf] %v3127
  %3552 = vst [vmem:[%s3 + $0x2f4] sm:$0xf] %v3128
  %3553 = vst [vmem:[%s3 + $0x2f8] sm:$0xf] %v3129
  %3554 = vst [vmem:[%s3 + $0x2fc] sm:$0xf] %v3130
  %3555 = vst [vmem:[%s3 + $0x300] sm:$0xf] %v3131
  %3556 = vst [vmem:[%s3 + $0x304] sm:$0xf] %v3132
  %3557 = vst [vmem:[%s3 + $0x308] sm:$0xf] %v3133
  %3558 = vst [vmem:[%s3 + $0x30c] sm:$0xf] %v3134
  %3559 = vst [vmem:[%s3 + $0x310] sm:$0xf] %v3135
  %3560 = vst [vmem:[%s3 + $0x314] sm:$0xf] %v3136
  %3561 = vst [vmem:[%s3 + $0x318] sm:$0xf] %v3137
  %3562 = vst [vmem:[%s3 + $0x31c] sm:$0xf] %v3138
  %3563 = vst [vmem:[%s3 + $0x320] sm:$0xf] %v3139
  %3564 = vst [vmem:[%s3 + $0x324] sm:$0xf] %v3140
  %3565 = vst [vmem:[%s3 + $0x328] sm:$0xf] %v3141
  %3566 = vst [vmem:[%s3 + $0x32c] sm:$0xf] %v3142
  %3567 = vst [vmem:[%s3 + $0x330] sm:$0xf] %v3143
  %3568 = vst [vmem:[%s3 + $0x334] sm:$0xf] %v3144
  %3569 = vst [vmem:[%s3 + $0x338] sm:$0xf] %v3145
  %3570 = vst [vmem:[%s3 + $0x33c] sm:$0xf] %v3146
  %3571 = vst [vmem:[%s3 + $0x340] sm:$0xf] %v3147
  %3572 = vst [vmem:[%s3 + $0x344] sm:$0xf] %v3148
  %3573 = vst [vmem:[%s3 + $0x348] sm:$0xf] %v3149
  %3574 = vst [vmem:[%s3 + $0x34c] sm:$0xf] %v3150
  // Predicated region
  $region14: #{vanilla_cnn_q_forward.3} parent=0 // pred_check
    _
  $region15: #{vanilla_cnn_q_forward.3} parent=0 // pred_check_branch
    %3576 = sbr.rel (0) target = $region17
  $region16: #{vanilla_cnn_q_forward.3} parent=0 // pred_region
    _
  $region17: #{vanilla_cnn_q_forward.3} parent=0 // pred_fallthru
    _
  // Predicated region
  $region18: #{vanilla_cnn_q_forward.3} parent=0 // pred_check
    _
  $region19: #{vanilla_cnn_q_forward.3} parent=0 // pred_check_branch
    %3578 = sbr.rel (0) target = $region21
  $region20: #{vanilla_cnn_q_forward.3} parent=0 // pred_region
    _
  $region21: #{vanilla_cnn_q_forward.3} parent=0 // pred_fallthru
    _

// kernel: vanilla_cnn_q_forward.4
$region0: #{vanilla_cnn_q_forward.4}
  #allocation0 [shape = 'u32[]', space=smem, size = 0x4, offset = 0x4, fixed_abs, tag = 'smem constant byte address 0x4 - core index']
  #allocation1 [shape = 'u32[144,128]{1,0:T(1,128)}', space=vmem, size = 0x12000, scoped, tag = 'internal scratch']
  %s0 = inlined_call_operand.vmem [shape: bf16[352,2048], index: 0, kind: input, shape index: {}]
  %s1 = inlined_call_operand.vmem [shape: bf16[2048,128], index: 1, kind: input, shape index: {}]
  %s2 = inlined_call_operand.vmem [shape: f32[1,128], index: 2, kind: input, shape index: {}]
  %s3 = inlined_call_operand.vmem [shape: bf16[352,128], index: 3, kind: output, shape index: {}]
  %s4 = sld [smem:[#allocation0]]
  $region22: #{vanilla_cnn_q_forward.4} parent=0
    _
  %s6 = ssub.s32 1, %s4
  %s7 = scalar_select 0, %s6, %s4
  // Predicated region
  $region2: #{vanilla_cnn_q_forward.4} parent=0 // pred_check
    _
  $region3: #{vanilla_cnn_q_forward.4} parent=0 // pred_check_branch
    %9 = sbr.rel (0) target = $region5
  $region4: #{vanilla_cnn_q_forward.4} parent=0 // pred_region
    _
  $region5: #{vanilla_cnn_q_forward.4} parent=0 // pred_fallthru
    _
  // Predicated region
  $region6: #{vanilla_cnn_q_forward.4} parent=0 // pred_check
    _
  $region7: #{vanilla_cnn_q_forward.4} parent=0 // pred_check_branch
    %11 = sbr.rel (0) target = $region9
  $region8: #{vanilla_cnn_q_forward.4} parent=0 // pred_region
    _
  $region9: #{vanilla_cnn_q_forward.4} parent=0 // pred_fallthru
    _
  // Predicated region
  $region10: #{vanilla_cnn_q_forward.4} parent=0 // pred_check
    _
  $region11: #{vanilla_cnn_q_forward.4} parent=0 // pred_check_branch
    %13 = sbr.rel (0) target = $region13
  $region12: #{vanilla_cnn_q_forward.4} parent=0 // pred_region
    _
  $region13: #{vanilla_cnn_q_forward.4} parent=0 // pred_fallthru
    _
  %v15 = vld [vmem:[%s0] sm:$0xff]
  %v16 = vld [vmem:[%s0 + $0x8] sm:$0xff]
  %v17 = vld [vmem:[%s0 + $0x10] sm:$0xff]
  %v18 = vld [vmem:[%s0 + $0x18] sm:$0xff]
  %v19 = vld [vmem:[%s0 + $0x20] sm:$0xff]
  %v20 = vld [vmem:[%s0 + $0x28] sm:$0xff]
  %v21 = vld [vmem:[%s0 + $0x30] sm:$0xff]
  %v22 = vld [vmem:[%s0 + $0x38] sm:$0xff]
  %v23 = vld [vmem:[%s0 + $0x40] sm:$0xff]
  %v24 = vld [vmem:[%s0 + $0x48] sm:$0xff]
  %v25 = vld [vmem:[%s0 + $0x50] sm:$0xff]
  %v26 = vld [vmem:[%s0 + $0x58] sm:$0xff]
  %v27 = vld [vmem:[%s0 + $0x60] sm:$0xff]
  %v28 = vld [vmem:[%s0 + $0x68] sm:$0xff]
  %v29 = vld [vmem:[%s0 + $0x70] sm:$0xff]
  %v30 = vld [vmem:[%s0 + $0x78] sm:$0xff]
  %v31 = vld [vmem:[%s0 + $0x80] sm:$0xff]
  %v32 = vld [vmem:[%s0 + $0x88] sm:$0xff]
  %v33 = vld [vmem:[%s0 + $0x90] sm:$0xff]
  %v34 = vld [vmem:[%s0 + $0x98] sm:$0xff]
  %v35 = vld [vmem:[%s0 + $0xa0] sm:$0xff]
  %v36 = vld [vmem:[%s0 + $0xa8] sm:$0xff]
  %v37 = vld [vmem:[%s0 + $0xb0] sm:$0xff]
  %v38 = vld [vmem:[%s0 + $0xb8] sm:$0xff]
  %v39 = vld [vmem:[%s0 + $0xc0] sm:$0xff]
  %v40 = vld [vmem:[%s0 + $0xc8] sm:$0xff]
  %v41 = vld [vmem:[%s0 + $0xd0] sm:$0xff]
  %v42 = vld [vmem:[%s0 + $0xd8] sm:$0xff]
  %v43 = vld [vmem:[%s0 + $0xe0] sm:$0xff]
  %v44 = vld [vmem:[%s0 + $0xe8] sm:$0xff]
  %v45 = vld [vmem:[%s0 + $0xf0] sm:$0xff]
  %v46 = vld [vmem:[%s0 + $0xf8] sm:$0xff]
  %v47 = vld [vmem:[%s0 + $0x100] sm:$0xff]
  %v48 = vld [vmem:[%s0 + $0x108] sm:$0xff]
  %v49 = vld [vmem:[%s0 + $0x110] sm:$0xff]
  %v50 = vld [vmem:[%s0 + $0x118] sm:$0xff]
  %v51 = vld [vmem:[%s0 + $0x120] sm:$0xff]
  %v52 = vld [vmem:[%s0 + $0x128] sm:$0xff]
  %v53 = vld [vmem:[%s0 + $0x130] sm:$0xff]
  %v54 = vld [vmem:[%s0 + $0x138] sm:$0xff]
  %v55 = vld [vmem:[%s0 + $0x140] sm:$0xff]
  %v56 = vld [vmem:[%s0 + $0x148] sm:$0xff]
  %v57 = vld [vmem:[%s0 + $0x150] sm:$0xff]
  %v58 = vld [vmem:[%s0 + $0x158] sm:$0xff]
  %v59 = vld [vmem:[%s0 + $0x160] sm:$0xff]
  %v60 = vld [vmem:[%s0 + $0x168] sm:$0xff]
  %v61 = vld [vmem:[%s0 + $0x170] sm:$0xff]
  %v62 = vld [vmem:[%s0 + $0x178] sm:$0xff]
  %v63 = vld [vmem:[%s0 + $0x180] sm:$0xff]
  %v64 = vld [vmem:[%s0 + $0x188] sm:$0xff]
  %v65 = vld [vmem:[%s0 + $0x190] sm:$0xff]
  %v66 = vld [vmem:[%s0 + $0x198] sm:$0xff]
  %v67 = vld [vmem:[%s0 + $0x1a0] sm:$0xff]
  %v68 = vld [vmem:[%s0 + $0x1a8] sm:$0xff]
  %v69 = vld [vmem:[%s0 + $0x1b0] sm:$0xff]
  %v70 = vld [vmem:[%s0 + $0x1b8] sm:$0xff]
  %v71 = vld [vmem:[%s0 + $0x1c0] sm:$0xff]
  %v72 = vld [vmem:[%s0 + $0x1c8] sm:$0xff]
  %v73 = vld [vmem:[%s0 + $0x1d0] sm:$0xff]
  %v74 = vld [vmem:[%s0 + $0x1d8] sm:$0xff]
  %v75 = vld [vmem:[%s0 + $0x1e0] sm:$0xff]
  %v76 = vld [vmem:[%s0 + $0x1e8] sm:$0xff]
  %v77 = vld [vmem:[%s0 + $0x1f0] sm:$0xff]
  %v78 = vld [vmem:[%s0 + $0x1f8] sm:$0xff]
  %v79 = vld [vmem:[%s0 + $0x200] sm:$0xff]
  %v80 = vld [vmem:[%s0 + $0x208] sm:$0xff]
  %v81 = vld [vmem:[%s0 + $0x210] sm:$0xff]
  %v82 = vld [vmem:[%s0 + $0x218] sm:$0xff]
  %v83 = vld [vmem:[%s0 + $0x220] sm:$0xff]
  %v84 = vld [vmem:[%s0 + $0x228] sm:$0xff]
  %v85 = vld [vmem:[%s0 + $0x230] sm:$0xff]
  %v86 = vld [vmem:[%s0 + $0x238] sm:$0xff]
  %v87 = vld [vmem:[%s0 + $0x240] sm:$0xff]
  %v88 = vld [vmem:[%s0 + $0x248] sm:$0xff]
  %v89 = vld [vmem:[%s0 + $0x250] sm:$0xff]
  %v90 = vld [vmem:[%s0 + $0x258] sm:$0xff]
  %v91 = vld [vmem:[%s0 + $0x260] sm:$0xff]
  %v92 = vld [vmem:[%s0 + $0x268] sm:$0xff]
  %v93 = vld [vmem:[%s0 + $0x270] sm:$0xff]
  %v94 = vld [vmem:[%s0 + $0x278] sm:$0xff]
  %v95 = vld [vmem:[%s0 + $0x280] sm:$0xff]
  %v96 = vld [vmem:[%s0 + $0x288] sm:$0xff]
  %v97 = vld [vmem:[%s0 + $0x290] sm:$0xff]
  %v98 = vld [vmem:[%s0 + $0x298] sm:$0xff]
  %v99 = vld [vmem:[%s0 + $0x2a0] sm:$0xff]
  %v100 = vld [vmem:[%s0 + $0x2a8] sm:$0xff]
  %v101 = vld [vmem:[%s0 + $0x2b0] sm:$0xff]
  %v102 = vld [vmem:[%s0 + $0x2b8] sm:$0xff]
  %v103 = vld [vmem:[%s0 + $0x2c0] sm:$0xff]
  %v104 = vld [vmem:[%s0 + $0x2c8] sm:$0xff]
  %v105 = vld [vmem:[%s0 + $0x2d0] sm:$0xff]
  %v106 = vld [vmem:[%s0 + $0x2d8] sm:$0xff]
  %v107 = vld [vmem:[%s0 + $0x2e0] sm:$0xff]
  %v108 = vld [vmem:[%s0 + $0x2e8] sm:$0xff]
  %v109 = vld [vmem:[%s0 + $0x2f0] sm:$0xff]
  %v110 = vld [vmem:[%s0 + $0x2f8] sm:$0xff]
  %v111 = vld [vmem:[%s0 + $0x300] sm:$0xff]
  %v112 = vld [vmem:[%s0 + $0x308] sm:$0xff]
  %v113 = vld [vmem:[%s0 + $0x310] sm:$0xff]
  %v114 = vld [vmem:[%s0 + $0x318] sm:$0xff]
  %v115 = vld [vmem:[%s0 + $0x320] sm:$0xff]
  %v116 = vld [vmem:[%s0 + $0x328] sm:$0xff]
  %v117 = vld [vmem:[%s0 + $0x330] sm:$0xff]
  %v118 = vld [vmem:[%s0 + $0x338] sm:$0xff]
  %v119 = vld [vmem:[%s0 + $0x340] sm:$0xff]
  %v120 = vld [vmem:[%s0 + $0x348] sm:$0xff]
  %v121 = vld [vmem:[%s0 + $0x350] sm:$0xff]
  %v122 = vld [vmem:[%s0 + $0x358] sm:$0xff]
  %v123 = vld [vmem:[%s0 + $0x360] sm:$0xff]
  %v124 = vld [vmem:[%s0 + $0x368] sm:$0xff]
  %v125 = vld [vmem:[%s0 + $0x370] sm:$0xff]
  %v126 = vld [vmem:[%s0 + $0x378] sm:$0xff]
  %v127 = vld [vmem:[%s0 + $0x380] sm:$0xff]
  %v128 = vld [vmem:[%s0 + $0x388] sm:$0xff]
  %v129 = vld [vmem:[%s0 + $0x390] sm:$0xff]
  %v130 = vld [vmem:[%s0 + $0x398] sm:$0xff]
  %v131 = vld [vmem:[%s0 + $0x3a0] sm:$0xff]
  %v132 = vld [vmem:[%s0 + $0x3a8] sm:$0xff]
  %v133 = vld [vmem:[%s0 + $0x3b0] sm:$0xff]
  %v134 = vld [vmem:[%s0 + $0x3b8] sm:$0xff]
  %v135 = vld [vmem:[%s0 + $0x3c0] sm:$0xff]
  %v136 = vld [vmem:[%s0 + $0x3c8] sm:$0xff]
  %v137 = vld [vmem:[%s0 + $0x3d0] sm:$0xff]
  %v138 = vld [vmem:[%s0 + $0x3d8] sm:$0xff]
  %v139 = vld [vmem:[%s0 + $0x3e0] sm:$0xff]
  %v140 = vld [vmem:[%s0 + $0x3e8] sm:$0xff]
  %v141 = vld [vmem:[%s0 + $0x3f0] sm:$0xff]
  %v142 = vld [vmem:[%s0 + $0x3f8] sm:$0xff]
  %v143 = vld [vmem:[%s0 + $0x400] sm:$0xff]
  %v144 = vld [vmem:[%s0 + $0x408] sm:$0xff]
  %v145 = vld [vmem:[%s0 + $0x410] sm:$0xff]
  %v146 = vld [vmem:[%s0 + $0x418] sm:$0xff]
  %v147 = vld [vmem:[%s0 + $0x420] sm:$0xff]
  %v148 = vld [vmem:[%s0 + $0x428] sm:$0xff]
  %v149 = vld [vmem:[%s0 + $0x430] sm:$0xff]
  %v150 = vld [vmem:[%s0 + $0x438] sm:$0xff]
  %v151 = vld [vmem:[%s0 + $0x440] sm:$0xff]
  %v152 = vld [vmem:[%s0 + $0x448] sm:$0xff]
  %v153 = vld [vmem:[%s0 + $0x450] sm:$0xff]
  %v154 = vld [vmem:[%s0 + $0x458] sm:$0xff]
  %v155 = vld [vmem:[%s0 + $0x460] sm:$0xff]
  %v156 = vld [vmem:[%s0 + $0x468] sm:$0xff]
  %v157 = vld [vmem:[%s0 + $0x470] sm:$0xff]
  %v158 = vld [vmem:[%s0 + $0x478] sm:$0xff]
  %v159 = vld [vmem:[%s0 + $0x480] sm:$0xff]
  %v160 = vld [vmem:[%s0 + $0x488] sm:$0xff]
  %v161 = vld [vmem:[%s0 + $0x490] sm:$0xff]
  %v162 = vld [vmem:[%s0 + $0x498] sm:$0xff]
  %v163 = vld [vmem:[%s0 + $0x4a0] sm:$0xff]
  %v164 = vld [vmem:[%s0 + $0x4a8] sm:$0xff]
  %v165 = vld [vmem:[%s0 + $0x4b0] sm:$0xff]
  %v166 = vld [vmem:[%s0 + $0x4b8] sm:$0xff]
  %v167 = vld [vmem:[%s0 + $0x4c0] sm:$0xff]
  %v168 = vld [vmem:[%s0 + $0x4c8] sm:$0xff]
  %v169 = vld [vmem:[%s0 + $0x4d0] sm:$0xff]
  %v170 = vld [vmem:[%s0 + $0x4d8] sm:$0xff]
  %v171 = vld [vmem:[%s0 + $0x4e0] sm:$0xff]
  %v172 = vld [vmem:[%s0 + $0x4e8] sm:$0xff]
  %v173 = vld [vmem:[%s0 + $0x4f0] sm:$0xff]
  %v174 = vld [vmem:[%s0 + $0x4f8] sm:$0xff]
  %v175 = vld [vmem:[%s0 + $0x500] sm:$0xff]
  %v176 = vld [vmem:[%s0 + $0x508] sm:$0xff]
  %v177 = vld [vmem:[%s0 + $0x510] sm:$0xff]
  %v178 = vld [vmem:[%s0 + $0x518] sm:$0xff]
  %v179 = vld [vmem:[%s0 + $0x520] sm:$0xff]
  %v180 = vld [vmem:[%s0 + $0x528] sm:$0xff]
  %v181 = vld [vmem:[%s0 + $0x530] sm:$0xff]
  %v182 = vld [vmem:[%s0 + $0x538] sm:$0xff]
  %v183 = vld [vmem:[%s0 + $0x540] sm:$0xff]
  %v184 = vld [vmem:[%s0 + $0x548] sm:$0xff]
  %v185 = vld [vmem:[%s0 + $0x550] sm:$0xff]
  %v186 = vld [vmem:[%s0 + $0x558] sm:$0xff]
  %v187 = vld [vmem:[%s0 + $0x560] sm:$0xff]
  %v188 = vld [vmem:[%s0 + $0x568] sm:$0xff]
  %v189 = vld [vmem:[%s0 + $0x570] sm:$0xff]
  %v190 = vld [vmem:[%s0 + $0x578] sm:$0xff]
  %v191 = vld [vmem:[%s0 + $0x580] sm:$0xff]
  %v192 = vld [vmem:[%s0 + $0x588] sm:$0xff]
  %v193 = vld [vmem:[%s0 + $0x590] sm:$0xff]
  %v194 = vld [vmem:[%s0 + $0x598] sm:$0xff]
  %v195 = vld [vmem:[%s0 + $0x5a0] sm:$0xff]
  %v196 = vld [vmem:[%s0 + $0x5a8] sm:$0xff]
  %v197 = vld [vmem:[%s0 + $0x5b0] sm:$0xff]
  %v198 = vld [vmem:[%s0 + $0x5b8] sm:$0xff]
  %v199 = vld [vmem:[%s0 + $0x5c0] sm:$0xff]
  %v200 = vld [vmem:[%s0 + $0x5c8] sm:$0xff]
  %v201 = vld [vmem:[%s0 + $0x5d0] sm:$0xff]
  %v202 = vld [vmem:[%s0 + $0x5d8] sm:$0xff]
  %v203 = vld [vmem:[%s0 + $0x5e0] sm:$0xff]
  %v204 = vld [vmem:[%s0 + $0x5e8] sm:$0xff]
  %v205 = vld [vmem:[%s0 + $0x5f0] sm:$0xff]
  %v206 = vld [vmem:[%s0 + $0x5f8] sm:$0xff]
  %v207 = vld [vmem:[%s0 + $0x600] sm:$0xff]
  %v208 = vld [vmem:[%s0 + $0x608] sm:$0xff]
  %v209 = vld [vmem:[%s0 + $0x610] sm:$0xff]
  %v210 = vld [vmem:[%s0 + $0x618] sm:$0xff]
  %v211 = vld [vmem:[%s0 + $0x620] sm:$0xff]
  %v212 = vld [vmem:[%s0 + $0x628] sm:$0xff]
  %v213 = vld [vmem:[%s0 + $0x630] sm:$0xff]
  %v214 = vld [vmem:[%s0 + $0x638] sm:$0xff]
  %v215 = vld [vmem:[%s0 + $0x640] sm:$0xff]
  %v216 = vld [vmem:[%s0 + $0x648] sm:$0xff]
  %v217 = vld [vmem:[%s0 + $0x650] sm:$0xff]
  %v218 = vld [vmem:[%s0 + $0x658] sm:$0xff]
  %v219 = vld [vmem:[%s0 + $0x660] sm:$0xff]
  %v220 = vld [vmem:[%s0 + $0x668] sm:$0xff]
  %v221 = vld [vmem:[%s0 + $0x670] sm:$0xff]
  %v222 = vld [vmem:[%s0 + $0x678] sm:$0xff]
  %v223 = vld [vmem:[%s0 + $0x680] sm:$0xff]
  %v224 = vld [vmem:[%s0 + $0x688] sm:$0xff]
  %v225 = vld [vmem:[%s0 + $0x690] sm:$0xff]
  %v226 = vld [vmem:[%s0 + $0x698] sm:$0xff]
  %v227 = vld [vmem:[%s0 + $0x6a0] sm:$0xff]
  %v228 = vld [vmem:[%s0 + $0x6a8] sm:$0xff]
  %v229 = vld [vmem:[%s0 + $0x6b0] sm:$0xff]
  %v230 = vld [vmem:[%s0 + $0x6b8] sm:$0xff]
  %v231 = vld [vmem:[%s0 + $0x6c0] sm:$0xff]
  %v232 = vld [vmem:[%s0 + $0x6c8] sm:$0xff]
  %v233 = vld [vmem:[%s0 + $0x6d0] sm:$0xff]
  %v234 = vld [vmem:[%s0 + $0x6d8] sm:$0xff]
  %v235 = vld [vmem:[%s0 + $0x6e0] sm:$0xff]
  %v236 = vld [vmem:[%s0 + $0x6e8] sm:$0xff]
  %v237 = vld [vmem:[%s0 + $0x6f0] sm:$0xff]
  %v238 = vld [vmem:[%s0 + $0x6f8] sm:$0xff]
  %v239 = vld [vmem:[%s0 + $0x700] sm:$0xff]
  %v240 = vld [vmem:[%s0 + $0x708] sm:$0xff]
  %v241 = vld [vmem:[%s0 + $0x710] sm:$0xff]
  %v242 = vld [vmem:[%s0 + $0x718] sm:$0xff]
  %v243 = vld [vmem:[%s0 + $0x720] sm:$0xff]
  %v244 = vld [vmem:[%s0 + $0x728] sm:$0xff]
  %v245 = vld [vmem:[%s0 + $0x730] sm:$0xff]
  %v246 = vld [vmem:[%s0 + $0x738] sm:$0xff]
  %v247 = vld [vmem:[%s0 + $0x740] sm:$0xff]
  %v248 = vld [vmem:[%s0 + $0x748] sm:$0xff]
  %v249 = vld [vmem:[%s0 + $0x750] sm:$0xff]
  %v250 = vld [vmem:[%s0 + $0x758] sm:$0xff]
  %v251 = vld [vmem:[%s0 + $0x760] sm:$0xff]
  %v252 = vld [vmem:[%s0 + $0x768] sm:$0xff]
  %v253 = vld [vmem:[%s0 + $0x770] sm:$0xff]
  %v254 = vld [vmem:[%s0 + $0x778] sm:$0xff]
  %v255 = vld [vmem:[%s0 + $0x780] sm:$0xff]
  %v256 = vld [vmem:[%s0 + $0x788] sm:$0xff]
  %v257 = vld [vmem:[%s0 + $0x790] sm:$0xff]
  %v258 = vld [vmem:[%s0 + $0x798] sm:$0xff]
  %v259 = vld [vmem:[%s0 + $0x7a0] sm:$0xff]
  %v260 = vld [vmem:[%s0 + $0x7a8] sm:$0xff]
  %v261 = vld [vmem:[%s0 + $0x7b0] sm:$0xff]
  %v262 = vld [vmem:[%s0 + $0x7b8] sm:$0xff]
  %v263 = vld [vmem:[%s0 + $0x7c0] sm:$0xff]
  %v264 = vld [vmem:[%s0 + $0x7c8] sm:$0xff]
  %v265 = vld [vmem:[%s0 + $0x7d0] sm:$0xff]
  %v266 = vld [vmem:[%s0 + $0x7d8] sm:$0xff]
  %v267 = vld [vmem:[%s0 + $0x7e0] sm:$0xff]
  %v268 = vld [vmem:[%s0 + $0x7e8] sm:$0xff]
  %v269 = vld [vmem:[%s0 + $0x7f0] sm:$0xff]
  %v270 = vld [vmem:[%s0 + $0x7f8] sm:$0xff]
  %v271 = vld [vmem:[%s0 + $0x800] sm:$0xff]
  %v272 = vld [vmem:[%s0 + $0x808] sm:$0xff]
  %v273 = vld [vmem:[%s0 + $0x810] sm:$0xff]
  %v274 = vld [vmem:[%s0 + $0x818] sm:$0xff]
  %v275 = vld [vmem:[%s0 + $0x820] sm:$0xff]
  %v276 = vld [vmem:[%s0 + $0x828] sm:$0xff]
  %v277 = vld [vmem:[%s0 + $0x830] sm:$0xff]
  %v278 = vld [vmem:[%s0 + $0x838] sm:$0xff]
  %v279 = vld [vmem:[%s0 + $0x840] sm:$0xff]
  %v280 = vld [vmem:[%s0 + $0x848] sm:$0xff]
  %v281 = vld [vmem:[%s0 + $0x850] sm:$0xff]
  %v282 = vld [vmem:[%s0 + $0x858] sm:$0xff]
  %v283 = vld [vmem:[%s0 + $0x860] sm:$0xff]
  %v284 = vld [vmem:[%s0 + $0x868] sm:$0xff]
  %v285 = vld [vmem:[%s0 + $0x870] sm:$0xff]
  %v286 = vld [vmem:[%s0 + $0x878] sm:$0xff]
  %v287 = vld [vmem:[%s0 + $0x880] sm:$0xff]
  %v288 = vld [vmem:[%s0 + $0x888] sm:$0xff]
  %v289 = vld [vmem:[%s0 + $0x890] sm:$0xff]
  %v290 = vld [vmem:[%s0 + $0x898] sm:$0xff]
  %v291 = vld [vmem:[%s0 + $0x8a0] sm:$0xff]
  %v292 = vld [vmem:[%s0 + $0x8a8] sm:$0xff]
  %v293 = vld [vmem:[%s0 + $0x8b0] sm:$0xff]
  %v294 = vld [vmem:[%s0 + $0x8b8] sm:$0xff]
  %v295 = vld [vmem:[%s0 + $0x8c0] sm:$0xff]
  %v296 = vld [vmem:[%s0 + $0x8c8] sm:$0xff]
  %v297 = vld [vmem:[%s0 + $0x8d0] sm:$0xff]
  %v298 = vld [vmem:[%s0 + $0x8d8] sm:$0xff]
  %v299 = vld [vmem:[%s0 + $0x8e0] sm:$0xff]
  %v300 = vld [vmem:[%s0 + $0x8e8] sm:$0xff]
  %v301 = vld [vmem:[%s0 + $0x8f0] sm:$0xff]
  %v302 = vld [vmem:[%s0 + $0x8f8] sm:$0xff]
  %v303 = vld [vmem:[%s0 + $0x900] sm:$0xff]
  %v304 = vld [vmem:[%s0 + $0x908] sm:$0xff]
  %v305 = vld [vmem:[%s0 + $0x910] sm:$0xff]
  %v306 = vld [vmem:[%s0 + $0x918] sm:$0xff]
  %v307 = vld [vmem:[%s0 + $0x920] sm:$0xff]
  %v308 = vld [vmem:[%s0 + $0x928] sm:$0xff]
  %v309 = vld [vmem:[%s0 + $0x930] sm:$0xff]
  %v310 = vld [vmem:[%s0 + $0x938] sm:$0xff]
  %v311 = vld [vmem:[%s0 + $0x940] sm:$0xff]
  %v312 = vld [vmem:[%s0 + $0x948] sm:$0xff]
  %v313 = vld [vmem:[%s0 + $0x950] sm:$0xff]
  %v314 = vld [vmem:[%s0 + $0x958] sm:$0xff]
  %v315 = vld [vmem:[%s0 + $0x960] sm:$0xff]
  %v316 = vld [vmem:[%s0 + $0x968] sm:$0xff]
  %v317 = vld [vmem:[%s0 + $0x970] sm:$0xff]
  %v318 = vld [vmem:[%s0 + $0x978] sm:$0xff]
  %v319 = vld [vmem:[%s0 + $0x980] sm:$0xff]
  %v320 = vld [vmem:[%s0 + $0x988] sm:$0xff]
  %v321 = vld [vmem:[%s0 + $0x990] sm:$0xff]
  %v322 = vld [vmem:[%s0 + $0x998] sm:$0xff]
  %v323 = vld [vmem:[%s0 + $0x9a0] sm:$0xff]
  %v324 = vld [vmem:[%s0 + $0x9a8] sm:$0xff]
  %v325 = vld [vmem:[%s0 + $0x9b0] sm:$0xff]
  %v326 = vld [vmem:[%s0 + $0x9b8] sm:$0xff]
  %v327 = vld [vmem:[%s0 + $0x9c0] sm:$0xff]
  %v328 = vld [vmem:[%s0 + $0x9c8] sm:$0xff]
  %v329 = vld [vmem:[%s0 + $0x9d0] sm:$0xff]
  %v330 = vld [vmem:[%s0 + $0x9d8] sm:$0xff]
  %v331 = vld [vmem:[%s0 + $0x9e0] sm:$0xff]
  %v332 = vld [vmem:[%s0 + $0x9e8] sm:$0xff]
  %v333 = vld [vmem:[%s0 + $0x9f0] sm:$0xff]
  %v334 = vld [vmem:[%s0 + $0x9f8] sm:$0xff]
  %v335 = vld [vmem:[%s0 + $0xa00] sm:$0xff]
  %v336 = vld [vmem:[%s0 + $0xa08] sm:$0xff]
  %v337 = vld [vmem:[%s0 + $0xa10] sm:$0xff]
  %v338 = vld [vmem:[%s0 + $0xa18] sm:$0xff]
  %v339 = vld [vmem:[%s0 + $0xa20] sm:$0xff]
  %v340 = vld [vmem:[%s0 + $0xa28] sm:$0xff]
  %v341 = vld [vmem:[%s0 + $0xa30] sm:$0xff]
  %v342 = vld [vmem:[%s0 + $0xa38] sm:$0xff]
  %v343 = vld [vmem:[%s0 + $0xa40] sm:$0xff]
  %v344 = vld [vmem:[%s0 + $0xa48] sm:$0xff]
  %v345 = vld [vmem:[%s0 + $0xa50] sm:$0xff]
  %v346 = vld [vmem:[%s0 + $0xa58] sm:$0xff]
  %v347 = vld [vmem:[%s0 + $0xa60] sm:$0xff]
  %v348 = vld [vmem:[%s0 + $0xa68] sm:$0xff]
  %v349 = vld [vmem:[%s0 + $0xa70] sm:$0xff]
  %v350 = vld [vmem:[%s0 + $0xa78] sm:$0xff]
  %v351 = vld [vmem:[%s0 + $0xa80] sm:$0xff]
  %v352 = vld [vmem:[%s0 + $0xa88] sm:$0xff]
  %v353 = vld [vmem:[%s0 + $0xa90] sm:$0xff]
  %v354 = vld [vmem:[%s0 + $0xa98] sm:$0xff]
  %v355 = vld [vmem:[%s0 + $0xaa0] sm:$0xff]
  %v356 = vld [vmem:[%s0 + $0xaa8] sm:$0xff]
  %v357 = vld [vmem:[%s0 + $0xab0] sm:$0xff]
  %v358 = vld [vmem:[%s0 + $0xab8] sm:$0xff]
  %v359 = vld [vmem:[%s0 + $0xac0] sm:$0xff]
  %v360 = vld [vmem:[%s0 + $0xac8] sm:$0xff]
  %v361 = vld [vmem:[%s0 + $0xad0] sm:$0xff]
  %v362 = vld [vmem:[%s0 + $0xad8] sm:$0xff]
  %v363 = vld [vmem:[%s0 + $0xae0] sm:$0xff]
  %v364 = vld [vmem:[%s0 + $0xae8] sm:$0xff]
  %v365 = vld [vmem:[%s0 + $0xaf0] sm:$0xff]
  %v366 = vld [vmem:[%s0 + $0xaf8] sm:$0xff]
  %v367 = vld [vmem:[%s1] sm:$0xf]
  %v368 = vld [vmem:[%s1 + $0x4] sm:$0xf]
  %v369 = vld [vmem:[%s1 + $0x8] sm:$0xf]
  %v370 = vld [vmem:[%s1 + $0xc] sm:$0xf]
  %v371 = vld [vmem:[%s1 + $0x10] sm:$0xf]
  %v372 = vld [vmem:[%s1 + $0x14] sm:$0xf]
  %v373 = vld [vmem:[%s1 + $0x18] sm:$0xf]
  %v374 = vld [vmem:[%s1 + $0x1c] sm:$0xf]
  %v375 = vld [vmem:[%s1 + $0x20] sm:$0xf]
  %v376 = vld [vmem:[%s1 + $0x24] sm:$0xf]
  %v377 = vld [vmem:[%s1 + $0x28] sm:$0xf]
  %v378 = vld [vmem:[%s1 + $0x2c] sm:$0xf]
  %v379 = vld [vmem:[%s1 + $0x30] sm:$0xf]
  %v380 = vld [vmem:[%s1 + $0x34] sm:$0xf]
  %v381 = vld [vmem:[%s1 + $0x38] sm:$0xf]
  %v382 = vld [vmem:[%s1 + $0x3c] sm:$0xf]
  %v383 = vld [vmem:[%s1 + $0x40] sm:$0xf]
  %v384 = vld [vmem:[%s1 + $0x44] sm:$0xf]
  %v385 = vld [vmem:[%s1 + $0x48] sm:$0xf]
  %v386 = vld [vmem:[%s1 + $0x4c] sm:$0xf]
  %v387 = vld [vmem:[%s1 + $0x50] sm:$0xf]
  %v388 = vld [vmem:[%s1 + $0x54] sm:$0xf]
  %v389 = vld [vmem:[%s1 + $0x58] sm:$0xf]
  %v390 = vld [vmem:[%s1 + $0x5c] sm:$0xf]
  %v391 = vld [vmem:[%s1 + $0x60] sm:$0xf]
  %v392 = vld [vmem:[%s1 + $0x64] sm:$0xf]
  %v393 = vld [vmem:[%s1 + $0x68] sm:$0xf]
  %v394 = vld [vmem:[%s1 + $0x6c] sm:$0xf]
  %v395 = vld [vmem:[%s1 + $0x70] sm:$0xf]
  %v396 = vld [vmem:[%s1 + $0x74] sm:$0xf]
  %v397 = vld [vmem:[%s1 + $0x78] sm:$0xf]
  %v398 = vld [vmem:[%s1 + $0x7c] sm:$0xf]
  %v399 = vld [vmem:[%s1 + $0x80] sm:$0xf]
  %v400 = vld [vmem:[%s1 + $0x84] sm:$0xf]
  %v401 = vld [vmem:[%s1 + $0x88] sm:$0xf]
  %v402 = vld [vmem:[%s1 + $0x8c] sm:$0xf]
  %v403 = vld [vmem:[%s1 + $0x90] sm:$0xf]
  %v404 = vld [vmem:[%s1 + $0x94] sm:$0xf]
  %v405 = vld [vmem:[%s1 + $0x98] sm:$0xf]
  %v406 = vld [vmem:[%s1 + $0x9c] sm:$0xf]
  %v407 = vld [vmem:[%s1 + $0xa0] sm:$0xf]
  %v408 = vld [vmem:[%s1 + $0xa4] sm:$0xf]
  %v409 = vld [vmem:[%s1 + $0xa8] sm:$0xf]
  %v410 = vld [vmem:[%s1 + $0xac] sm:$0xf]
  %v411 = vld [vmem:[%s1 + $0xb0] sm:$0xf]
  %v412 = vld [vmem:[%s1 + $0xb4] sm:$0xf]
  %v413 = vld [vmem:[%s1 + $0xb8] sm:$0xf]
  %v414 = vld [vmem:[%s1 + $0xbc] sm:$0xf]
  %v415 = vld [vmem:[%s1 + $0xc0] sm:$0xf]
  %v416 = vld [vmem:[%s1 + $0xc4] sm:$0xf]
  %v417 = vld [vmem:[%s1 + $0xc8] sm:$0xf]
  %v418 = vld [vmem:[%s1 + $0xcc] sm:$0xf]
  %v419 = vld [vmem:[%s1 + $0xd0] sm:$0xf]
  %v420 = vld [vmem:[%s1 + $0xd4] sm:$0xf]
  %v421 = vld [vmem:[%s1 + $0xd8] sm:$0xf]
  %v422 = vld [vmem:[%s1 + $0xdc] sm:$0xf]
  %v423 = vld [vmem:[%s1 + $0xe0] sm:$0xf]
  %v424 = vld [vmem:[%s1 + $0xe4] sm:$0xf]
  %v425 = vld [vmem:[%s1 + $0xe8] sm:$0xf]
  %v426 = vld [vmem:[%s1 + $0xec] sm:$0xf]
  %v427 = vld [vmem:[%s1 + $0xf0] sm:$0xf]
  %v428 = vld [vmem:[%s1 + $0xf4] sm:$0xf]
  %v429 = vld [vmem:[%s1 + $0xf8] sm:$0xf]
  %v430 = vld [vmem:[%s1 + $0xfc] sm:$0xf]
  %v431 = vld [vmem:[%s1 + $0x100] sm:$0xf]
  %v432 = vld [vmem:[%s1 + $0x104] sm:$0xf]
  %v433 = vld [vmem:[%s1 + $0x108] sm:$0xf]
  %v434 = vld [vmem:[%s1 + $0x10c] sm:$0xf]
  %v435 = vld [vmem:[%s1 + $0x110] sm:$0xf]
  %v436 = vld [vmem:[%s1 + $0x114] sm:$0xf]
  %v437 = vld [vmem:[%s1 + $0x118] sm:$0xf]
  %v438 = vld [vmem:[%s1 + $0x11c] sm:$0xf]
  %v439 = vld [vmem:[%s1 + $0x120] sm:$0xf]
  %v440 = vld [vmem:[%s1 + $0x124] sm:$0xf]
  %v441 = vld [vmem:[%s1 + $0x128] sm:$0xf]
  %v442 = vld [vmem:[%s1 + $0x12c] sm:$0xf]
  %v443 = vld [vmem:[%s1 + $0x130] sm:$0xf]
  %v444 = vld [vmem:[%s1 + $0x134] sm:$0xf]
  %v445 = vld [vmem:[%s1 + $0x138] sm:$0xf]
  %v446 = vld [vmem:[%s1 + $0x13c] sm:$0xf]
  %v447 = vld [vmem:[%s1 + $0x140] sm:$0xf]
  %v448 = vld [vmem:[%s1 + $0x144] sm:$0xf]
  %v449 = vld [vmem:[%s1 + $0x148] sm:$0xf]
  %v450 = vld [vmem:[%s1 + $0x14c] sm:$0xf]
  %v451 = vld [vmem:[%s1 + $0x150] sm:$0xf]
  %v452 = vld [vmem:[%s1 + $0x154] sm:$0xf]
  %v453 = vld [vmem:[%s1 + $0x158] sm:$0xf]
  %v454 = vld [vmem:[%s1 + $0x15c] sm:$0xf]
  %v455 = vld [vmem:[%s1 + $0x160] sm:$0xf]
  %v456 = vld [vmem:[%s1 + $0x164] sm:$0xf]
  %v457 = vld [vmem:[%s1 + $0x168] sm:$0xf]
  %v458 = vld [vmem:[%s1 + $0x16c] sm:$0xf]
  %v459 = vld [vmem:[%s1 + $0x170] sm:$0xf]
  %v460 = vld [vmem:[%s1 + $0x174] sm:$0xf]
  %v461 = vld [vmem:[%s1 + $0x178] sm:$0xf]
  %v462 = vld [vmem:[%s1 + $0x17c] sm:$0xf]
  %v463 = vld [vmem:[%s1 + $0x180] sm:$0xf]
  %v464 = vld [vmem:[%s1 + $0x184] sm:$0xf]
  %v465 = vld [vmem:[%s1 + $0x188] sm:$0xf]
  %v466 = vld [vmem:[%s1 + $0x18c] sm:$0xf]
  %v467 = vld [vmem:[%s1 + $0x190] sm:$0xf]
  %v468 = vld [vmem:[%s1 + $0x194] sm:$0xf]
  %v469 = vld [vmem:[%s1 + $0x198] sm:$0xf]
  %v470 = vld [vmem:[%s1 + $0x19c] sm:$0xf]
  %v471 = vld [vmem:[%s1 + $0x1a0] sm:$0xf]
  %v472 = vld [vmem:[%s1 + $0x1a4] sm:$0xf]
  %v473 = vld [vmem:[%s1 + $0x1a8] sm:$0xf]
  %v474 = vld [vmem:[%s1 + $0x1ac] sm:$0xf]
  %v475 = vld [vmem:[%s1 + $0x1b0] sm:$0xf]
  %v476 = vld [vmem:[%s1 + $0x1b4] sm:$0xf]
  %v477 = vld [vmem:[%s1 + $0x1b8] sm:$0xf]
  %v478 = vld [vmem:[%s1 + $0x1bc] sm:$0xf]
  %v479 = vld [vmem:[%s1 + $0x1c0] sm:$0xf]
  %v480 = vld [vmem:[%s1 + $0x1c4] sm:$0xf]
  %v481 = vld [vmem:[%s1 + $0x1c8] sm:$0xf]
  %v482 = vld [vmem:[%s1 + $0x1cc] sm:$0xf]
  %v483 = vld [vmem:[%s1 + $0x1d0] sm:$0xf]
  %v484 = vld [vmem:[%s1 + $0x1d4] sm:$0xf]
  %v485 = vld [vmem:[%s1 + $0x1d8] sm:$0xf]
  %v486 = vld [vmem:[%s1 + $0x1dc] sm:$0xf]
  %v487 = vld [vmem:[%s1 + $0x1e0] sm:$0xf]
  %v488 = vld [vmem:[%s1 + $0x1e4] sm:$0xf]
  %v489 = vld [vmem:[%s1 + $0x1e8] sm:$0xf]
  %v490 = vld [vmem:[%s1 + $0x1ec] sm:$0xf]
  %v491 = vld [vmem:[%s1 + $0x1f0] sm:$0xf]
  %v492 = vld [vmem:[%s1 + $0x1f4] sm:$0xf]
  %v493 = vld [vmem:[%s1 + $0x1f8] sm:$0xf]
  %v494 = vld [vmem:[%s1 + $0x1fc] sm:$0xf]
  %v495 = vld [vmem:[%s1 + $0x200] sm:$0xf]
  %v496 = vld [vmem:[%s1 + $0x204] sm:$0xf]
  %v497 = vld [vmem:[%s1 + $0x208] sm:$0xf]
  %v498 = vld [vmem:[%s1 + $0x20c] sm:$0xf]
  %v499 = vld [vmem:[%s1 + $0x210] sm:$0xf]
  %v500 = vld [vmem:[%s1 + $0x214] sm:$0xf]
  %v501 = vld [vmem:[%s1 + $0x218] sm:$0xf]
  %v502 = vld [vmem:[%s1 + $0x21c] sm:$0xf]
  %v503 = vld [vmem:[%s1 + $0x220] sm:$0xf]
  %v504 = vld [vmem:[%s1 + $0x224] sm:$0xf]
  %v505 = vld [vmem:[%s1 + $0x228] sm:$0xf]
  %v506 = vld [vmem:[%s1 + $0x22c] sm:$0xf]
  %v507 = vld [vmem:[%s1 + $0x230] sm:$0xf]
  %v508 = vld [vmem:[%s1 + $0x234] sm:$0xf]
  %v509 = vld [vmem:[%s1 + $0x238] sm:$0xf]
  %v510 = vld [vmem:[%s1 + $0x23c] sm:$0xf]
  %v511 = vld [vmem:[%s1 + $0x240] sm:$0xf]
  %v512 = vld [vmem:[%s1 + $0x244] sm:$0xf]
  %v513 = vld [vmem:[%s1 + $0x248] sm:$0xf]
  %v514 = vld [vmem:[%s1 + $0x24c] sm:$0xf]
  %v515 = vld [vmem:[%s1 + $0x250] sm:$0xf]
  %v516 = vld [vmem:[%s1 + $0x254] sm:$0xf]
  %v517 = vld [vmem:[%s1 + $0x258] sm:$0xf]
  %v518 = vld [vmem:[%s1 + $0x25c] sm:$0xf]
  %v519 = vld [vmem:[%s1 + $0x260] sm:$0xf]
  %v520 = vld [vmem:[%s1 + $0x264] sm:$0xf]
  %v521 = vld [vmem:[%s1 + $0x268] sm:$0xf]
  %v522 = vld [vmem:[%s1 + $0x26c] sm:$0xf]
  %v523 = vld [vmem:[%s1 + $0x270] sm:$0xf]
  %v524 = vld [vmem:[%s1 + $0x274] sm:$0xf]
  %v525 = vld [vmem:[%s1 + $0x278] sm:$0xf]
  %v526 = vld [vmem:[%s1 + $0x27c] sm:$0xf]
  %v527 = vld [vmem:[%s1 + $0x280] sm:$0xf]
  %v528 = vld [vmem:[%s1 + $0x284] sm:$0xf]
  %v529 = vld [vmem:[%s1 + $0x288] sm:$0xf]
  %v530 = vld [vmem:[%s1 + $0x28c] sm:$0xf]
  %v531 = vld [vmem:[%s1 + $0x290] sm:$0xf]
  %v532 = vld [vmem:[%s1 + $0x294] sm:$0xf]
  %v533 = vld [vmem:[%s1 + $0x298] sm:$0xf]
  %v534 = vld [vmem:[%s1 + $0x29c] sm:$0xf]
  %v535 = vld [vmem:[%s1 + $0x2a0] sm:$0xf]
  %v536 = vld [vmem:[%s1 + $0x2a4] sm:$0xf]
  %v537 = vld [vmem:[%s1 + $0x2a8] sm:$0xf]
  %v538 = vld [vmem:[%s1 + $0x2ac] sm:$0xf]
  %v539 = vld [vmem:[%s1 + $0x2b0] sm:$0xf]
  %v540 = vld [vmem:[%s1 + $0x2b4] sm:$0xf]
  %v541 = vld [vmem:[%s1 + $0x2b8] sm:$0xf]
  %v542 = vld [vmem:[%s1 + $0x2bc] sm:$0xf]
  %v543 = vld [vmem:[%s1 + $0x2c0] sm:$0xf]
  %v544 = vld [vmem:[%s1 + $0x2c4] sm:$0xf]
  %v545 = vld [vmem:[%s1 + $0x2c8] sm:$0xf]
  %v546 = vld [vmem:[%s1 + $0x2cc] sm:$0xf]
  %v547 = vld [vmem:[%s1 + $0x2d0] sm:$0xf]
  %v548 = vld [vmem:[%s1 + $0x2d4] sm:$0xf]
  %v549 = vld [vmem:[%s1 + $0x2d8] sm:$0xf]
  %v550 = vld [vmem:[%s1 + $0x2dc] sm:$0xf]
  %v551 = vld [vmem:[%s1 + $0x2e0] sm:$0xf]
  %v552 = vld [vmem:[%s1 + $0x2e4] sm:$0xf]
  %v553 = vld [vmem:[%s1 + $0x2e8] sm:$0xf]
  %v554 = vld [vmem:[%s1 + $0x2ec] sm:$0xf]
  %v555 = vld [vmem:[%s1 + $0x2f0] sm:$0xf]
  %v556 = vld [vmem:[%s1 + $0x2f4] sm:$0xf]
  %v557 = vld [vmem:[%s1 + $0x2f8] sm:$0xf]
  %v558 = vld [vmem:[%s1 + $0x2fc] sm:$0xf]
  %v559 = vld [vmem:[%s1 + $0x300] sm:$0xf]
  %v560 = vld [vmem:[%s1 + $0x304] sm:$0xf]
  %v561 = vld [vmem:[%s1 + $0x308] sm:$0xf]
  %v562 = vld [vmem:[%s1 + $0x30c] sm:$0xf]
  %v563 = vld [vmem:[%s1 + $0x310] sm:$0xf]
  %v564 = vld [vmem:[%s1 + $0x314] sm:$0xf]
  %v565 = vld [vmem:[%s1 + $0x318] sm:$0xf]
  %v566 = vld [vmem:[%s1 + $0x31c] sm:$0xf]
  %v567 = vld [vmem:[%s1 + $0x320] sm:$0xf]
  %v568 = vld [vmem:[%s1 + $0x324] sm:$0xf]
  %v569 = vld [vmem:[%s1 + $0x328] sm:$0xf]
  %v570 = vld [vmem:[%s1 + $0x32c] sm:$0xf]
  %v571 = vld [vmem:[%s1 + $0x330] sm:$0xf]
  %v572 = vld [vmem:[%s1 + $0x334] sm:$0xf]
  %v573 = vld [vmem:[%s1 + $0x338] sm:$0xf]
  %v574 = vld [vmem:[%s1 + $0x33c] sm:$0xf]
  %v575 = vld [vmem:[%s1 + $0x340] sm:$0xf]
  %v576 = vld [vmem:[%s1 + $0x344] sm:$0xf]
  %v577 = vld [vmem:[%s1 + $0x348] sm:$0xf]
  %v578 = vld [vmem:[%s1 + $0x34c] sm:$0xf]
  %v579 = vld [vmem:[%s1 + $0x350] sm:$0xf]
  %v580 = vld [vmem:[%s1 + $0x354] sm:$0xf]
  %v581 = vld [vmem:[%s1 + $0x358] sm:$0xf]
  %v582 = vld [vmem:[%s1 + $0x35c] sm:$0xf]
  %v583 = vld [vmem:[%s1 + $0x360] sm:$0xf]
  %v584 = vld [vmem:[%s1 + $0x364] sm:$0xf]
  %v585 = vld [vmem:[%s1 + $0x368] sm:$0xf]
  %v586 = vld [vmem:[%s1 + $0x36c] sm:$0xf]
  %v587 = vld [vmem:[%s1 + $0x370] sm:$0xf]
  %v588 = vld [vmem:[%s1 + $0x374] sm:$0xf]
  %v589 = vld [vmem:[%s1 + $0x378] sm:$0xf]
  %v590 = vld [vmem:[%s1 + $0x37c] sm:$0xf]
  %v591 = vld [vmem:[%s1 + $0x380] sm:$0xf]
  %v592 = vld [vmem:[%s1 + $0x384] sm:$0xf]
  %v593 = vld [vmem:[%s1 + $0x388] sm:$0xf]
  %v594 = vld [vmem:[%s1 + $0x38c] sm:$0xf]
  %v595 = vld [vmem:[%s1 + $0x390] sm:$0xf]
  %v596 = vld [vmem:[%s1 + $0x394] sm:$0xf]
  %v597 = vld [vmem:[%s1 + $0x398] sm:$0xf]
  %v598 = vld [vmem:[%s1 + $0x39c] sm:$0xf]
  %v599 = vld [vmem:[%s1 + $0x3a0] sm:$0xf]
  %v600 = vld [vmem:[%s1 + $0x3a4] sm:$0xf]
  %v601 = vld [vmem:[%s1 + $0x3a8] sm:$0xf]
  %v602 = vld [vmem:[%s1 + $0x3ac] sm:$0xf]
  %v603 = vld [vmem:[%s1 + $0x3b0] sm:$0xf]
  %v604 = vld [vmem:[%s1 + $0x3b4] sm:$0xf]
  %v605 = vld [vmem:[%s1 + $0x3b8] sm:$0xf]
  %v606 = vld [vmem:[%s1 + $0x3bc] sm:$0xf]
  %v607 = vld [vmem:[%s1 + $0x3c0] sm:$0xf]
  %v608 = vld [vmem:[%s1 + $0x3c4] sm:$0xf]
  %v609 = vld [vmem:[%s1 + $0x3c8] sm:$0xf]
  %v610 = vld [vmem:[%s1 + $0x3cc] sm:$0xf]
  %v611 = vld [vmem:[%s1 + $0x3d0] sm:$0xf]
  %v612 = vld [vmem:[%s1 + $0x3d4] sm:$0xf]
  %v613 = vld [vmem:[%s1 + $0x3d8] sm:$0xf]
  %v614 = vld [vmem:[%s1 + $0x3dc] sm:$0xf]
  %v615 = vld [vmem:[%s1 + $0x3e0] sm:$0xf]
  %v616 = vld [vmem:[%s1 + $0x3e4] sm:$0xf]
  %v617 = vld [vmem:[%s1 + $0x3e8] sm:$0xf]
  %v618 = vld [vmem:[%s1 + $0x3ec] sm:$0xf]
  %v619 = vld [vmem:[%s1 + $0x3f0] sm:$0xf]
  %v620 = vld [vmem:[%s1 + $0x3f4] sm:$0xf]
  %v621 = vld [vmem:[%s1 + $0x3f8] sm:$0xf]
  %v622 = vld [vmem:[%s1 + $0x3fc] sm:$0xf]
  %v623 = vld [vmem:[%s2] sm:$0x1]
  %v625 = vlaneseq
  %v626 = vshrl.u32 %v625, 7
  %v627 = vsub.s32 0, %v626
  %v628 = vrot.slane %v623, %v627
  %v982 = vunpack.c.l.b16 %v15
  %v983 = vunpack.c.h.b16 %v15
  %v984 = vunpack.c.l.b16 %v16
  %v985 = vunpack.c.h.b16 %v16
  %v986 = vunpack.c.l.b16 %v17
  %v987 = vunpack.c.h.b16 %v17
  %v988 = vunpack.c.l.b16 %v18
  %v989 = vunpack.c.h.b16 %v18
  %v990 = vunpack.c.l.b16 %v19
  %v991 = vunpack.c.h.b16 %v19
  %v992 = vunpack.c.l.b16 %v20
  %v993 = vunpack.c.h.b16 %v20
  %v994 = vunpack.c.l.b16 %v21
  %v995 = vunpack.c.h.b16 %v21
  %v996 = vunpack.c.l.b16 %v22
  %v997 = vunpack.c.h.b16 %v22
  %v998 = vunpack.c.l.b16 %v23
  %v999 = vunpack.c.h.b16 %v23
  %v1000 = vunpack.c.l.b16 %v24
  %v1001 = vunpack.c.h.b16 %v24
  %v1002 = vunpack.c.l.b16 %v25
  %v1003 = vunpack.c.h.b16 %v25
  %v1004 = vunpack.c.l.b16 %v26
  %v1005 = vunpack.c.h.b16 %v26
  %v1006 = vunpack.c.l.b16 %v27
  %v1007 = vunpack.c.h.b16 %v27
  %v1008 = vunpack.c.l.b16 %v28
  %v1009 = vunpack.c.h.b16 %v28
  %v1010 = vunpack.c.l.b16 %v29
  %v1011 = vunpack.c.h.b16 %v29
  %v1012 = vunpack.c.l.b16 %v30
  %v1013 = vunpack.c.h.b16 %v30
  %v1014 = vunpack.c.l.b16 %v31
  %v1015 = vunpack.c.h.b16 %v31
  %v1016 = vunpack.c.l.b16 %v32
  %v1017 = vunpack.c.h.b16 %v32
  %v1018 = vunpack.c.l.b16 %v33
  %v1019 = vunpack.c.h.b16 %v33
  %v1020 = vunpack.c.l.b16 %v34
  %v1021 = vunpack.c.h.b16 %v34
  %v1022 = vunpack.c.l.b16 %v35
  %v1023 = vunpack.c.h.b16 %v35
  %v1024 = vunpack.c.l.b16 %v36
  %v1025 = vunpack.c.h.b16 %v36
  %v1026 = vunpack.c.l.b16 %v37
  %v1027 = vunpack.c.h.b16 %v37
  %v1028 = vunpack.c.l.b16 %v38
  %v1029 = vunpack.c.h.b16 %v38
  %v1030 = vunpack.c.l.b16 %v39
  %v1031 = vunpack.c.h.b16 %v39
  %v1032 = vunpack.c.l.b16 %v40
  %v1033 = vunpack.c.h.b16 %v40
  %v1034 = vunpack.c.l.b16 %v41
  %v1035 = vunpack.c.h.b16 %v41
  %v1036 = vunpack.c.l.b16 %v42
  %v1037 = vunpack.c.h.b16 %v42
  %v1038 = vunpack.c.l.b16 %v43
  %v1039 = vunpack.c.h.b16 %v43
  %v1040 = vunpack.c.l.b16 %v44
  %v1041 = vunpack.c.h.b16 %v44
  %v1042 = vunpack.c.l.b16 %v45
  %v1043 = vunpack.c.h.b16 %v45
  %v1044 = vunpack.c.l.b16 %v46
  %v1045 = vunpack.c.h.b16 %v46
  %v1046 = vunpack.c.l.b16 %v47
  %v1047 = vunpack.c.h.b16 %v47
  %v1048 = vunpack.c.l.b16 %v48
  %v1049 = vunpack.c.h.b16 %v48
  %v1050 = vunpack.c.l.b16 %v49
  %v1051 = vunpack.c.h.b16 %v49
  %v1052 = vunpack.c.l.b16 %v50
  %v1053 = vunpack.c.h.b16 %v50
  %v1054 = vunpack.c.l.b16 %v51
  %v1055 = vunpack.c.h.b16 %v51
  %v1056 = vunpack.c.l.b16 %v52
  %v1057 = vunpack.c.h.b16 %v52
  %v1058 = vunpack.c.l.b16 %v53
  %v1059 = vunpack.c.h.b16 %v53
  %v1060 = vunpack.c.l.b16 %v54
  %v1061 = vunpack.c.h.b16 %v54
  %v1062 = vunpack.c.l.b16 %v55
  %v1063 = vunpack.c.h.b16 %v55
  %v1064 = vunpack.c.l.b16 %v56
  %v1065 = vunpack.c.h.b16 %v56
  %v1066 = vunpack.c.l.b16 %v57
  %v1067 = vunpack.c.h.b16 %v57
  %v1068 = vunpack.c.l.b16 %v58
  %v1069 = vunpack.c.h.b16 %v58
  %v1070 = vunpack.c.l.b16 %v59
  %v1071 = vunpack.c.h.b16 %v59
  %v1072 = vunpack.c.l.b16 %v60
  %v1073 = vunpack.c.h.b16 %v60
  %v1074 = vunpack.c.l.b16 %v61
  %v1075 = vunpack.c.h.b16 %v61
  %v1076 = vunpack.c.l.b16 %v62
  %v1077 = vunpack.c.h.b16 %v62
  %v1078 = vunpack.c.l.b16 %v63
  %v1079 = vunpack.c.h.b16 %v63
  %v1080 = vunpack.c.l.b16 %v64
  %v1081 = vunpack.c.h.b16 %v64
  %v1082 = vunpack.c.l.b16 %v65
  %v1083 = vunpack.c.h.b16 %v65
  %v1084 = vunpack.c.l.b16 %v66
  %v1085 = vunpack.c.h.b16 %v66
  %v1086 = vunpack.c.l.b16 %v67
  %v1087 = vunpack.c.h.b16 %v67
  %v1088 = vunpack.c.l.b16 %v68
  %v1089 = vunpack.c.h.b16 %v68
  %v1090 = vunpack.c.l.b16 %v69
  %v1091 = vunpack.c.h.b16 %v69
  %v1092 = vunpack.c.l.b16 %v70
  %v1093 = vunpack.c.h.b16 %v70
  %v1094 = vunpack.c.l.b16 %v71
  %v1095 = vunpack.c.h.b16 %v71
  %v1096 = vunpack.c.l.b16 %v72
  %v1097 = vunpack.c.h.b16 %v72
  %v1098 = vunpack.c.l.b16 %v73
  %v1099 = vunpack.c.h.b16 %v73
  %v1100 = vunpack.c.l.b16 %v74
  %v1101 = vunpack.c.h.b16 %v74
  %v1102 = vunpack.c.l.b16 %v75
  %v1103 = vunpack.c.h.b16 %v75
  %v1104 = vunpack.c.l.b16 %v76
  %v1105 = vunpack.c.h.b16 %v76
  %v1106 = vunpack.c.l.b16 %v77
  %v1107 = vunpack.c.h.b16 %v77
  %v1108 = vunpack.c.l.b16 %v78
  %v1109 = vunpack.c.h.b16 %v78
  %v1110 = vunpack.c.l.b16 %v79
  %v1111 = vunpack.c.h.b16 %v79
  %v1112 = vunpack.c.l.b16 %v80
  %v1113 = vunpack.c.h.b16 %v80
  %v1114 = vunpack.c.l.b16 %v81
  %v1115 = vunpack.c.h.b16 %v81
  %v1116 = vunpack.c.l.b16 %v82
  %v1117 = vunpack.c.h.b16 %v82
  %v1118 = vunpack.c.l.b16 %v83
  %v1119 = vunpack.c.h.b16 %v83
  %v1120 = vunpack.c.l.b16 %v84
  %v1121 = vunpack.c.h.b16 %v84
  %v1122 = vunpack.c.l.b16 %v85
  %v1123 = vunpack.c.h.b16 %v85
  %v1124 = vunpack.c.l.b16 %v86
  %v1125 = vunpack.c.h.b16 %v86
  %v1126 = vunpack.c.l.b16 %v87
  %v1127 = vunpack.c.h.b16 %v87
  %v1128 = vunpack.c.l.b16 %v88
  %v1129 = vunpack.c.h.b16 %v88
  %v1130 = vunpack.c.l.b16 %v89
  %v1131 = vunpack.c.h.b16 %v89
  %v1132 = vunpack.c.l.b16 %v90
  %v1133 = vunpack.c.h.b16 %v90
  %v1134 = vunpack.c.l.b16 %v91
  %v1135 = vunpack.c.h.b16 %v91
  %v1136 = vunpack.c.l.b16 %v92
  %v1137 = vunpack.c.h.b16 %v92
  %v1138 = vunpack.c.l.b16 %v93
  %v1139 = vunpack.c.h.b16 %v93
  %v1140 = vunpack.c.l.b16 %v94
  %v1141 = vunpack.c.h.b16 %v94
  %v1142 = vunpack.c.l.b16 %v95
  %v1143 = vunpack.c.h.b16 %v95
  %v1144 = vunpack.c.l.b16 %v96
  %v1145 = vunpack.c.h.b16 %v96
  %v1146 = vunpack.c.l.b16 %v97
  %v1147 = vunpack.c.h.b16 %v97
  %v1148 = vunpack.c.l.b16 %v98
  %v1149 = vunpack.c.h.b16 %v98
  %v1150 = vunpack.c.l.b16 %v99
  %v1151 = vunpack.c.h.b16 %v99
  %v1152 = vunpack.c.l.b16 %v100
  %v1153 = vunpack.c.h.b16 %v100
  %v1154 = vunpack.c.l.b16 %v101
  %v1155 = vunpack.c.h.b16 %v101
  %v1156 = vunpack.c.l.b16 %v102
  %v1157 = vunpack.c.h.b16 %v102
  %v1158 = vunpack.c.l.b16 %v103
  %v1159 = vunpack.c.h.b16 %v103
  %v1160 = vunpack.c.l.b16 %v104
  %v1161 = vunpack.c.h.b16 %v104
  %v1162 = vunpack.c.l.b16 %v105
  %v1163 = vunpack.c.h.b16 %v105
  %v1164 = vunpack.c.l.b16 %v106
  %v1165 = vunpack.c.h.b16 %v106
  %v1166 = vunpack.c.l.b16 %v107
  %v1167 = vunpack.c.h.b16 %v107
  %v1168 = vunpack.c.l.b16 %v108
  %v1169 = vunpack.c.h.b16 %v108
  %v1170 = vunpack.c.l.b16 %v109
  %v1171 = vunpack.c.h.b16 %v109
  %v1172 = vunpack.c.l.b16 %v110
  %v1173 = vunpack.c.h.b16 %v110
  %v1174 = vunpack.c.l.b16 %v111
  %v1175 = vunpack.c.h.b16 %v111
  %v1176 = vunpack.c.l.b16 %v112
  %v1177 = vunpack.c.h.b16 %v112
  %v1178 = vunpack.c.l.b16 %v113
  %v1179 = vunpack.c.h.b16 %v113
  %v1180 = vunpack.c.l.b16 %v114
  %v1181 = vunpack.c.h.b16 %v114
  %v1182 = vunpack.c.l.b16 %v115
  %v1183 = vunpack.c.h.b16 %v115
  %v1184 = vunpack.c.l.b16 %v116
  %v1185 = vunpack.c.h.b16 %v116
  %v1186 = vunpack.c.l.b16 %v117
  %v1187 = vunpack.c.h.b16 %v117
  %v1188 = vunpack.c.l.b16 %v118
  %v1189 = vunpack.c.h.b16 %v118
  %v1190 = vunpack.c.l.b16 %v119
  %v1191 = vunpack.c.h.b16 %v119
  %v1192 = vunpack.c.l.b16 %v120
  %v1193 = vunpack.c.h.b16 %v120
  %v1194 = vunpack.c.l.b16 %v121
  %v1195 = vunpack.c.h.b16 %v121
  %v1196 = vunpack.c.l.b16 %v122
  %v1197 = vunpack.c.h.b16 %v122
  %v1198 = vunpack.c.l.b16 %v123
  %v1199 = vunpack.c.h.b16 %v123
  %v1200 = vunpack.c.l.b16 %v124
  %v1201 = vunpack.c.h.b16 %v124
  %v1202 = vunpack.c.l.b16 %v125
  %v1203 = vunpack.c.h.b16 %v125
  %v1204 = vunpack.c.l.b16 %v126
  %v1205 = vunpack.c.h.b16 %v126
  %v1206 = vunpack.c.l.b16 %v127
  %v1207 = vunpack.c.h.b16 %v127
  %v1208 = vunpack.c.l.b16 %v128
  %v1209 = vunpack.c.h.b16 %v128
  %v1210 = vunpack.c.l.b16 %v129
  %v1211 = vunpack.c.h.b16 %v129
  %v1212 = vunpack.c.l.b16 %v130
  %v1213 = vunpack.c.h.b16 %v130
  %v1214 = vunpack.c.l.b16 %v131
  %v1215 = vunpack.c.h.b16 %v131
  %v1216 = vunpack.c.l.b16 %v132
  %v1217 = vunpack.c.h.b16 %v132
  %v1218 = vunpack.c.l.b16 %v133
  %v1219 = vunpack.c.h.b16 %v133
  %v1220 = vunpack.c.l.b16 %v134
  %v1221 = vunpack.c.h.b16 %v134
  %v1222 = vunpack.c.l.b16 %v135
  %v1223 = vunpack.c.h.b16 %v135
  %v1224 = vunpack.c.l.b16 %v136
  %v1225 = vunpack.c.h.b16 %v136
  %v1226 = vunpack.c.l.b16 %v137
  %v1227 = vunpack.c.h.b16 %v137
  %v1228 = vunpack.c.l.b16 %v138
  %v1229 = vunpack.c.h.b16 %v138
  %v1230 = vunpack.c.l.b16 %v139
  %v1231 = vunpack.c.h.b16 %v139
  %v1232 = vunpack.c.l.b16 %v140
  %v1233 = vunpack.c.h.b16 %v140
  %v1234 = vunpack.c.l.b16 %v141
  %v1235 = vunpack.c.h.b16 %v141
  %v1236 = vunpack.c.l.b16 %v142
  %v1237 = vunpack.c.h.b16 %v142
  %v1238 = vunpack.c.l.b16 %v143
  %v1239 = vunpack.c.h.b16 %v143
  %v1240 = vunpack.c.l.b16 %v144
  %v1241 = vunpack.c.h.b16 %v144
  %v1242 = vunpack.c.l.b16 %v145
  %v1243 = vunpack.c.h.b16 %v145
  %v1244 = vunpack.c.l.b16 %v146
  %v1245 = vunpack.c.h.b16 %v146
  %v1246 = vunpack.c.l.b16 %v147
  %v1247 = vunpack.c.h.b16 %v147
  %v1248 = vunpack.c.l.b16 %v148
  %v1249 = vunpack.c.h.b16 %v148
  %v1250 = vunpack.c.l.b16 %v149
  %v1251 = vunpack.c.h.b16 %v149
  %v1252 = vunpack.c.l.b16 %v150
  %v1253 = vunpack.c.h.b16 %v150
  %v1254 = vunpack.c.l.b16 %v151
  %v1255 = vunpack.c.h.b16 %v151
  %v1256 = vunpack.c.l.b16 %v152
  %v1257 = vunpack.c.h.b16 %v152
  %v1258 = vunpack.c.l.b16 %v153
  %v1259 = vunpack.c.h.b16 %v153
  %v1260 = vunpack.c.l.b16 %v154
  %v1261 = vunpack.c.h.b16 %v154
  %v1262 = vunpack.c.l.b16 %v155
  %v1263 = vunpack.c.h.b16 %v155
  %v1264 = vunpack.c.l.b16 %v156
  %v1265 = vunpack.c.h.b16 %v156
  %v1266 = vunpack.c.l.b16 %v157
  %v1267 = vunpack.c.h.b16 %v157
  %v1268 = vunpack.c.l.b16 %v158
  %v1269 = vunpack.c.h.b16 %v158
  %v1270 = vunpack.c.l.b16 %v159
  %v1271 = vunpack.c.h.b16 %v159
  %v1272 = vunpack.c.l.b16 %v160
  %v1273 = vunpack.c.h.b16 %v160
  %v1274 = vunpack.c.l.b16 %v161
  %v1275 = vunpack.c.h.b16 %v161
  %v1276 = vunpack.c.l.b16 %v162
  %v1277 = vunpack.c.h.b16 %v162
  %v1278 = vunpack.c.l.b16 %v163
  %v1279 = vunpack.c.h.b16 %v163
  %v1280 = vunpack.c.l.b16 %v164
  %v1281 = vunpack.c.h.b16 %v164
  %v1282 = vunpack.c.l.b16 %v165
  %v1283 = vunpack.c.h.b16 %v165
  %v1284 = vunpack.c.l.b16 %v166
  %v1285 = vunpack.c.h.b16 %v166
  %v1286 = vunpack.c.l.b16 %v167
  %v1287 = vunpack.c.h.b16 %v167
  %v1288 = vunpack.c.l.b16 %v168
  %v1289 = vunpack.c.h.b16 %v168
  %v1290 = vunpack.c.l.b16 %v169
  %v1291 = vunpack.c.h.b16 %v169
  %v1292 = vunpack.c.l.b16 %v170
  %v1293 = vunpack.c.h.b16 %v170
  %v1294 = vunpack.c.l.b16 %v171
  %v1295 = vunpack.c.h.b16 %v171
  %v1296 = vunpack.c.l.b16 %v172
  %v1297 = vunpack.c.h.b16 %v172
  %v1298 = vunpack.c.l.b16 %v173
  %v1299 = vunpack.c.h.b16 %v173
  %v1300 = vunpack.c.l.b16 %v174
  %v1301 = vunpack.c.h.b16 %v174
  %v1302 = vunpack.c.l.b16 %v175
  %v1303 = vunpack.c.h.b16 %v175
  %v1304 = vunpack.c.l.b16 %v176
  %v1305 = vunpack.c.h.b16 %v176
  %v1306 = vunpack.c.l.b16 %v177
  %v1307 = vunpack.c.h.b16 %v177
  %v1308 = vunpack.c.l.b16 %v178
  %v1309 = vunpack.c.h.b16 %v178
  %v1310 = vunpack.c.l.b16 %v179
  %v1311 = vunpack.c.h.b16 %v179
  %v1312 = vunpack.c.l.b16 %v180
  %v1313 = vunpack.c.h.b16 %v180
  %v1314 = vunpack.c.l.b16 %v181
  %v1315 = vunpack.c.h.b16 %v181
  %v1316 = vunpack.c.l.b16 %v182
  %v1317 = vunpack.c.h.b16 %v182
  %v1318 = vunpack.c.l.b16 %v183
  %v1319 = vunpack.c.h.b16 %v183
  %v1320 = vunpack.c.l.b16 %v184
  %v1321 = vunpack.c.h.b16 %v184
  %v1322 = vunpack.c.l.b16 %v185
  %v1323 = vunpack.c.h.b16 %v185
  %v1324 = vunpack.c.l.b16 %v186
  %v1325 = vunpack.c.h.b16 %v186
  %v1326 = vunpack.c.l.b16 %v187
  %v1327 = vunpack.c.h.b16 %v187
  %v1328 = vunpack.c.l.b16 %v188
  %v1329 = vunpack.c.h.b16 %v188
  %v1330 = vunpack.c.l.b16 %v189
  %v1331 = vunpack.c.h.b16 %v189
  %v1332 = vunpack.c.l.b16 %v190
  %v1333 = vunpack.c.h.b16 %v190
  %v1334 = vunpack.c.l.b16 %v191
  %v1335 = vunpack.c.h.b16 %v191
  %v1336 = vunpack.c.l.b16 %v192
  %v1337 = vunpack.c.h.b16 %v192
  %v1338 = vunpack.c.l.b16 %v193
  %v1339 = vunpack.c.h.b16 %v193
  %v1340 = vunpack.c.l.b16 %v194
  %v1341 = vunpack.c.h.b16 %v194
  %v1342 = vunpack.c.l.b16 %v195
  %v1343 = vunpack.c.h.b16 %v195
  %v1344 = vunpack.c.l.b16 %v196
  %v1345 = vunpack.c.h.b16 %v196
  %v1346 = vunpack.c.l.b16 %v197
  %v1347 = vunpack.c.h.b16 %v197
  %v1348 = vunpack.c.l.b16 %v198
  %v1349 = vunpack.c.h.b16 %v198
  %v1350 = vunpack.c.l.b16 %v199
  %v1351 = vunpack.c.h.b16 %v199
  %v1352 = vunpack.c.l.b16 %v200
  %v1353 = vunpack.c.h.b16 %v200
  %v1354 = vunpack.c.l.b16 %v201
  %v1355 = vunpack.c.h.b16 %v201
  %v1356 = vunpack.c.l.b16 %v202
  %v1357 = vunpack.c.h.b16 %v202
  %v1358 = vunpack.c.l.b16 %v203
  %v1359 = vunpack.c.h.b16 %v203
  %v1360 = vunpack.c.l.b16 %v204
  %v1361 = vunpack.c.h.b16 %v204
  %v1362 = vunpack.c.l.b16 %v205
  %v1363 = vunpack.c.h.b16 %v205
  %v1364 = vunpack.c.l.b16 %v206
  %v1365 = vunpack.c.h.b16 %v206
  %v1366 = vunpack.c.l.b16 %v207
  %v1367 = vunpack.c.h.b16 %v207
  %v1368 = vunpack.c.l.b16 %v208
  %v1369 = vunpack.c.h.b16 %v208
  %v1370 = vunpack.c.l.b16 %v209
  %v1371 = vunpack.c.h.b16 %v209
  %v1372 = vunpack.c.l.b16 %v210
  %v1373 = vunpack.c.h.b16 %v210
  %v1374 = vunpack.c.l.b16 %v211
  %v1375 = vunpack.c.h.b16 %v211
  %v1376 = vunpack.c.l.b16 %v212
  %v1377 = vunpack.c.h.b16 %v212
  %v1378 = vunpack.c.l.b16 %v213
  %v1379 = vunpack.c.h.b16 %v213
  %v1380 = vunpack.c.l.b16 %v214
  %v1381 = vunpack.c.h.b16 %v214
  %v1382 = vunpack.c.l.b16 %v215
  %v1383 = vunpack.c.h.b16 %v215
  %v1384 = vunpack.c.l.b16 %v216
  %v1385 = vunpack.c.h.b16 %v216
  %v1386 = vunpack.c.l.b16 %v217
  %v1387 = vunpack.c.h.b16 %v217
  %v1388 = vunpack.c.l.b16 %v218
  %v1389 = vunpack.c.h.b16 %v218
  %v1390 = vunpack.c.l.b16 %v219
  %v1391 = vunpack.c.h.b16 %v219
  %v1392 = vunpack.c.l.b16 %v220
  %v1393 = vunpack.c.h.b16 %v220
  %v1394 = vunpack.c.l.b16 %v221
  %v1395 = vunpack.c.h.b16 %v221
  %v1396 = vunpack.c.l.b16 %v222
  %v1397 = vunpack.c.h.b16 %v222
  %v1398 = vunpack.c.l.b16 %v223
  %v1399 = vunpack.c.h.b16 %v223
  %v1400 = vunpack.c.l.b16 %v224
  %v1401 = vunpack.c.h.b16 %v224
  %v1402 = vunpack.c.l.b16 %v225
  %v1403 = vunpack.c.h.b16 %v225
  %v1404 = vunpack.c.l.b16 %v226
  %v1405 = vunpack.c.h.b16 %v226
  %v1406 = vunpack.c.l.b16 %v227
  %v1407 = vunpack.c.h.b16 %v227
  %v1408 = vunpack.c.l.b16 %v228
  %v1409 = vunpack.c.h.b16 %v228
  %v1410 = vunpack.c.l.b16 %v229
  %v1411 = vunpack.c.h.b16 %v229
  %v1412 = vunpack.c.l.b16 %v230
  %v1413 = vunpack.c.h.b16 %v230
  %v1414 = vunpack.c.l.b16 %v231
  %v1415 = vunpack.c.h.b16 %v231
  %v1416 = vunpack.c.l.b16 %v232
  %v1417 = vunpack.c.h.b16 %v232
  %v1418 = vunpack.c.l.b16 %v233
  %v1419 = vunpack.c.h.b16 %v233
  %v1420 = vunpack.c.l.b16 %v234
  %v1421 = vunpack.c.h.b16 %v234
  %v1422 = vunpack.c.l.b16 %v235
  %v1423 = vunpack.c.h.b16 %v235
  %v1424 = vunpack.c.l.b16 %v236
  %v1425 = vunpack.c.h.b16 %v236
  %v1426 = vunpack.c.l.b16 %v237
  %v1427 = vunpack.c.h.b16 %v237
  %v1428 = vunpack.c.l.b16 %v238
  %v1429 = vunpack.c.h.b16 %v238
  %v1430 = vunpack.c.l.b16 %v239
  %v1431 = vunpack.c.h.b16 %v239
  %v1432 = vunpack.c.l.b16 %v240
  %v1433 = vunpack.c.h.b16 %v240
  %v1434 = vunpack.c.l.b16 %v241
  %v1435 = vunpack.c.h.b16 %v241
  %v1436 = vunpack.c.l.b16 %v242
  %v1437 = vunpack.c.h.b16 %v242
  %v1438 = vunpack.c.l.b16 %v243
  %v1439 = vunpack.c.h.b16 %v243
  %v1440 = vunpack.c.l.b16 %v244
  %v1441 = vunpack.c.h.b16 %v244
  %v1442 = vunpack.c.l.b16 %v245
  %v1443 = vunpack.c.h.b16 %v245
  %v1444 = vunpack.c.l.b16 %v246
  %v1445 = vunpack.c.h.b16 %v246
  %v1446 = vunpack.c.l.b16 %v247
  %v1447 = vunpack.c.h.b16 %v247
  %v1448 = vunpack.c.l.b16 %v248
  %v1449 = vunpack.c.h.b16 %v248
  %v1450 = vunpack.c.l.b16 %v249
  %v1451 = vunpack.c.h.b16 %v249
  %v1452 = vunpack.c.l.b16 %v250
  %v1453 = vunpack.c.h.b16 %v250
  %v1454 = vunpack.c.l.b16 %v251
  %v1455 = vunpack.c.h.b16 %v251
  %v1456 = vunpack.c.l.b16 %v252
  %v1457 = vunpack.c.h.b16 %v252
  %v1458 = vunpack.c.l.b16 %v253
  %v1459 = vunpack.c.h.b16 %v253
  %v1460 = vunpack.c.l.b16 %v254
  %v1461 = vunpack.c.h.b16 %v254
  %v1462 = vunpack.c.l.b16 %v255
  %v1463 = vunpack.c.h.b16 %v255
  %v1464 = vunpack.c.l.b16 %v256
  %v1465 = vunpack.c.h.b16 %v256
  %v1466 = vunpack.c.l.b16 %v257
  %v1467 = vunpack.c.h.b16 %v257
  %v1468 = vunpack.c.l.b16 %v258
  %v1469 = vunpack.c.h.b16 %v258
  %v1470 = vunpack.c.l.b16 %v259
  %v1471 = vunpack.c.h.b16 %v259
  %v1472 = vunpack.c.l.b16 %v260
  %v1473 = vunpack.c.h.b16 %v260
  %v1474 = vunpack.c.l.b16 %v261
  %v1475 = vunpack.c.h.b16 %v261
  %v1476 = vunpack.c.l.b16 %v262
  %v1477 = vunpack.c.h.b16 %v262
  %v1478 = vunpack.c.l.b16 %v263
  %v1479 = vunpack.c.h.b16 %v263
  %v1480 = vunpack.c.l.b16 %v264
  %v1481 = vunpack.c.h.b16 %v264
  %v1482 = vunpack.c.l.b16 %v265
  %v1483 = vunpack.c.h.b16 %v265
  %v1484 = vunpack.c.l.b16 %v266
  %v1485 = vunpack.c.h.b16 %v266
  %v1486 = vunpack.c.l.b16 %v267
  %v1487 = vunpack.c.h.b16 %v267
  %v1488 = vunpack.c.l.b16 %v268
  %v1489 = vunpack.c.h.b16 %v268
  %v1490 = vunpack.c.l.b16 %v269
  %v1491 = vunpack.c.h.b16 %v269
  %v1492 = vunpack.c.l.b16 %v270
  %v1493 = vunpack.c.h.b16 %v270
  %v1494 = vunpack.c.l.b16 %v271
  %v1495 = vunpack.c.h.b16 %v271
  %v1496 = vunpack.c.l.b16 %v272
  %v1497 = vunpack.c.h.b16 %v272
  %v1498 = vunpack.c.l.b16 %v273
  %v1499 = vunpack.c.h.b16 %v273
  %v1500 = vunpack.c.l.b16 %v274
  %v1501 = vunpack.c.h.b16 %v274
  %v1502 = vunpack.c.l.b16 %v275
  %v1503 = vunpack.c.h.b16 %v275
  %v1504 = vunpack.c.l.b16 %v276
  %v1505 = vunpack.c.h.b16 %v276
  %v1506 = vunpack.c.l.b16 %v277
  %v1507 = vunpack.c.h.b16 %v277
  %v1508 = vunpack.c.l.b16 %v278
  %v1509 = vunpack.c.h.b16 %v278
  %v1510 = vunpack.c.l.b16 %v279
  %v1511 = vunpack.c.h.b16 %v279
  %v1512 = vunpack.c.l.b16 %v280
  %v1513 = vunpack.c.h.b16 %v280
  %v1514 = vunpack.c.l.b16 %v281
  %v1515 = vunpack.c.h.b16 %v281
  %v1516 = vunpack.c.l.b16 %v282
  %v1517 = vunpack.c.h.b16 %v282
  %v1518 = vunpack.c.l.b16 %v283
  %v1519 = vunpack.c.h.b16 %v283
  %v1520 = vunpack.c.l.b16 %v284
  %v1521 = vunpack.c.h.b16 %v284
  %v1522 = vunpack.c.l.b16 %v285
  %v1523 = vunpack.c.h.b16 %v285
  %v1524 = vunpack.c.l.b16 %v286
  %v1525 = vunpack.c.h.b16 %v286
  %v1526 = vunpack.c.l.b16 %v287
  %v1527 = vunpack.c.h.b16 %v287
  %v1528 = vunpack.c.l.b16 %v288
  %v1529 = vunpack.c.h.b16 %v288
  %v1530 = vunpack.c.l.b16 %v289
  %v1531 = vunpack.c.h.b16 %v289
  %v1532 = vunpack.c.l.b16 %v290
  %v1533 = vunpack.c.h.b16 %v290
  %v1534 = vunpack.c.l.b16 %v291
  %v1535 = vunpack.c.h.b16 %v291
  %v1536 = vunpack.c.l.b16 %v292
  %v1537 = vunpack.c.h.b16 %v292
  %v1538 = vunpack.c.l.b16 %v293
  %v1539 = vunpack.c.h.b16 %v293
  %v1540 = vunpack.c.l.b16 %v294
  %v1541 = vunpack.c.h.b16 %v294
  %v1542 = vunpack.c.l.b16 %v295
  %v1543 = vunpack.c.h.b16 %v295
  %v1544 = vunpack.c.l.b16 %v296
  %v1545 = vunpack.c.h.b16 %v296
  %v1546 = vunpack.c.l.b16 %v297
  %v1547 = vunpack.c.h.b16 %v297
  %v1548 = vunpack.c.l.b16 %v298
  %v1549 = vunpack.c.h.b16 %v298
  %v1550 = vunpack.c.l.b16 %v299
  %v1551 = vunpack.c.h.b16 %v299
  %v1552 = vunpack.c.l.b16 %v300
  %v1553 = vunpack.c.h.b16 %v300
  %v1554 = vunpack.c.l.b16 %v301
  %v1555 = vunpack.c.h.b16 %v301
  %v1556 = vunpack.c.l.b16 %v302
  %v1557 = vunpack.c.h.b16 %v302
  %v1558 = vunpack.c.l.b16 %v303
  %v1559 = vunpack.c.h.b16 %v303
  %v1560 = vunpack.c.l.b16 %v304
  %v1561 = vunpack.c.h.b16 %v304
  %v1562 = vunpack.c.l.b16 %v305
  %v1563 = vunpack.c.h.b16 %v305
  %v1564 = vunpack.c.l.b16 %v306
  %v1565 = vunpack.c.h.b16 %v306
  %v1566 = vunpack.c.l.b16 %v307
  %v1567 = vunpack.c.h.b16 %v307
  %v1568 = vunpack.c.l.b16 %v308
  %v1569 = vunpack.c.h.b16 %v308
  %v1570 = vunpack.c.l.b16 %v309
  %v1571 = vunpack.c.h.b16 %v309
  %v1572 = vunpack.c.l.b16 %v310
  %v1573 = vunpack.c.h.b16 %v310
  %v1574 = vunpack.c.l.b16 %v311
  %v1575 = vunpack.c.h.b16 %v311
  %v1576 = vunpack.c.l.b16 %v312
  %v1577 = vunpack.c.h.b16 %v312
  %v1578 = vunpack.c.l.b16 %v313
  %v1579 = vunpack.c.h.b16 %v313
  %v1580 = vunpack.c.l.b16 %v314
  %v1581 = vunpack.c.h.b16 %v314
  %v1582 = vunpack.c.l.b16 %v315
  %v1583 = vunpack.c.h.b16 %v315
  %v1584 = vunpack.c.l.b16 %v316
  %v1585 = vunpack.c.h.b16 %v316
  %v1586 = vunpack.c.l.b16 %v317
  %v1587 = vunpack.c.h.b16 %v317
  %v1588 = vunpack.c.l.b16 %v318
  %v1589 = vunpack.c.h.b16 %v318
  %v1590 = vunpack.c.l.b16 %v319
  %v1591 = vunpack.c.h.b16 %v319
  %v1592 = vunpack.c.l.b16 %v320
  %v1593 = vunpack.c.h.b16 %v320
  %v1594 = vunpack.c.l.b16 %v321
  %v1595 = vunpack.c.h.b16 %v321
  %v1596 = vunpack.c.l.b16 %v322
  %v1597 = vunpack.c.h.b16 %v322
  %v1598 = vunpack.c.l.b16 %v323
  %v1599 = vunpack.c.h.b16 %v323
  %v1600 = vunpack.c.l.b16 %v324
  %v1601 = vunpack.c.h.b16 %v324
  %v1602 = vunpack.c.l.b16 %v325
  %v1603 = vunpack.c.h.b16 %v325
  %v1604 = vunpack.c.l.b16 %v326
  %v1605 = vunpack.c.h.b16 %v326
  %v1606 = vunpack.c.l.b16 %v327
  %v1607 = vunpack.c.h.b16 %v327
  %v1608 = vunpack.c.l.b16 %v328
  %v1609 = vunpack.c.h.b16 %v328
  %v1610 = vunpack.c.l.b16 %v329
  %v1611 = vunpack.c.h.b16 %v329
  %v1612 = vunpack.c.l.b16 %v330
  %v1613 = vunpack.c.h.b16 %v330
  %v1614 = vunpack.c.l.b16 %v331
  %v1615 = vunpack.c.h.b16 %v331
  %v1616 = vunpack.c.l.b16 %v332
  %v1617 = vunpack.c.h.b16 %v332
  %v1618 = vunpack.c.l.b16 %v333
  %v1619 = vunpack.c.h.b16 %v333
  %v1620 = vunpack.c.l.b16 %v334
  %v1621 = vunpack.c.h.b16 %v334
  %v1622 = vunpack.c.l.b16 %v335
  %v1623 = vunpack.c.h.b16 %v335
  %v1624 = vunpack.c.l.b16 %v336
  %v1625 = vunpack.c.h.b16 %v336
  %v1626 = vunpack.c.l.b16 %v337
  %v1627 = vunpack.c.h.b16 %v337
  %v1628 = vunpack.c.l.b16 %v338
  %v1629 = vunpack.c.h.b16 %v338
  %v1630 = vunpack.c.l.b16 %v339
  %v1631 = vunpack.c.h.b16 %v339
  %v1632 = vunpack.c.l.b16 %v340
  %v1633 = vunpack.c.h.b16 %v340
  %v1634 = vunpack.c.l.b16 %v341
  %v1635 = vunpack.c.h.b16 %v341
  %v1636 = vunpack.c.l.b16 %v342
  %v1637 = vunpack.c.h.b16 %v342
  %v1638 = vunpack.c.l.b16 %v343
  %v1639 = vunpack.c.h.b16 %v343
  %v1640 = vunpack.c.l.b16 %v344
  %v1641 = vunpack.c.h.b16 %v344
  %v1642 = vunpack.c.l.b16 %v345
  %v1643 = vunpack.c.h.b16 %v345
  %v1644 = vunpack.c.l.b16 %v346
  %v1645 = vunpack.c.h.b16 %v346
  %v1646 = vunpack.c.l.b16 %v347
  %v1647 = vunpack.c.h.b16 %v347
  %v1648 = vunpack.c.l.b16 %v348
  %v1649 = vunpack.c.h.b16 %v348
  %v1650 = vunpack.c.l.b16 %v349
  %v1651 = vunpack.c.h.b16 %v349
  %v1652 = vunpack.c.l.b16 %v350
  %v1653 = vunpack.c.h.b16 %v350
  %v1654 = vunpack.c.l.b16 %v351
  %v1655 = vunpack.c.h.b16 %v351
  %v1656 = vunpack.c.l.b16 %v352
  %v1657 = vunpack.c.h.b16 %v352
  %v1658 = vunpack.c.l.b16 %v353
  %v1659 = vunpack.c.h.b16 %v353
  %v1660 = vunpack.c.l.b16 %v354
  %v1661 = vunpack.c.h.b16 %v354
  %v1662 = vunpack.c.l.b16 %v355
  %v1663 = vunpack.c.h.b16 %v355
  %v1664 = vunpack.c.l.b16 %v356
  %v1665 = vunpack.c.h.b16 %v356
  %v1666 = vunpack.c.l.b16 %v357
  %v1667 = vunpack.c.h.b16 %v357
  %v1668 = vunpack.c.l.b16 %v358
  %v1669 = vunpack.c.h.b16 %v358
  %v1670 = vunpack.c.l.b16 %v359
  %v1671 = vunpack.c.h.b16 %v359
  %v1672 = vunpack.c.l.b16 %v360
  %v1673 = vunpack.c.h.b16 %v360
  %v1674 = vunpack.c.l.b16 %v361
  %v1675 = vunpack.c.h.b16 %v361
  %v1676 = vunpack.c.l.b16 %v362
  %v1677 = vunpack.c.h.b16 %v362
  %v1678 = vunpack.c.l.b16 %v363
  %v1679 = vunpack.c.h.b16 %v363
  %v1680 = vunpack.c.l.b16 %v364
  %v1681 = vunpack.c.h.b16 %v364
  %v1682 = vunpack.c.l.b16 %v365
  %v1683 = vunpack.c.h.b16 %v365
  %v1684 = vunpack.c.l.b16 %v366
  %v1685 = vunpack.c.h.b16 %v366
  %v1686 = vpack.c.b16 %v998, %v982
  %v1687 = vpack.c.b16 %v999, %v983
  %v1688 = vpack.c.b16 %v1000, %v984
  %v1689 = vpack.c.b16 %v1001, %v985
  %v1690 = vpack.c.b16 %v1002, %v986
  %v1691 = vpack.c.b16 %v1003, %v987
  %v1692 = vpack.c.b16 %v1004, %v988
  %v1693 = vpack.c.b16 %v1005, %v989
  %v1694 = vpack.c.b16 %v1006, %v990
  %v1695 = vpack.c.b16 %v1007, %v991
  %v1696 = vpack.c.b16 %v1008, %v992
  %v1697 = vpack.c.b16 %v1009, %v993
  %v1698 = vpack.c.b16 %v1010, %v994
  %v1699 = vpack.c.b16 %v1011, %v995
  %v1700 = vpack.c.b16 %v1012, %v996
  %v1701 = vpack.c.b16 %v1013, %v997
  %v1702 = vpack.c.b16 %v1030, %v1014
  %v1703 = vpack.c.b16 %v1031, %v1015
  %v1704 = vpack.c.b16 %v1032, %v1016
  %v1705 = vpack.c.b16 %v1033, %v1017
  %v1706 = vpack.c.b16 %v1034, %v1018
  %v1707 = vpack.c.b16 %v1035, %v1019
  %v1708 = vpack.c.b16 %v1036, %v1020
  %v1709 = vpack.c.b16 %v1037, %v1021
  %v1710 = vpack.c.b16 %v1038, %v1022
  %v1711 = vpack.c.b16 %v1039, %v1023
  %v1712 = vpack.c.b16 %v1040, %v1024
  %v1713 = vpack.c.b16 %v1041, %v1025
  %v1714 = vpack.c.b16 %v1042, %v1026
  %v1715 = vpack.c.b16 %v1043, %v1027
  %v1716 = vpack.c.b16 %v1044, %v1028
  %v1717 = vpack.c.b16 %v1045, %v1029
  %v1718 = vpack.c.b16 %v1062, %v1046
  %v1719 = vpack.c.b16 %v1063, %v1047
  %v1720 = vpack.c.b16 %v1064, %v1048
  %v1721 = vpack.c.b16 %v1065, %v1049
  %v1722 = vpack.c.b16 %v1066, %v1050
  %v1723 = vpack.c.b16 %v1067, %v1051
  %v1724 = vpack.c.b16 %v1068, %v1052
  %v1725 = vpack.c.b16 %v1069, %v1053
  %v1726 = vpack.c.b16 %v1070, %v1054
  %v1727 = vpack.c.b16 %v1071, %v1055
  %v1728 = vpack.c.b16 %v1072, %v1056
  %v1729 = vpack.c.b16 %v1073, %v1057
  %v1730 = vpack.c.b16 %v1074, %v1058
  %v1731 = vpack.c.b16 %v1075, %v1059
  %v1732 = vpack.c.b16 %v1076, %v1060
  %v1733 = vpack.c.b16 %v1077, %v1061
  %v1734 = vpack.c.b16 %v1094, %v1078
  %v1735 = vpack.c.b16 %v1095, %v1079
  %v1736 = vpack.c.b16 %v1096, %v1080
  %v1737 = vpack.c.b16 %v1097, %v1081
  %v1738 = vpack.c.b16 %v1098, %v1082
  %v1739 = vpack.c.b16 %v1099, %v1083
  %v1740 = vpack.c.b16 %v1100, %v1084
  %v1741 = vpack.c.b16 %v1101, %v1085
  %v1742 = vpack.c.b16 %v1102, %v1086
  %v1743 = vpack.c.b16 %v1103, %v1087
  %v1744 = vpack.c.b16 %v1104, %v1088
  %v1745 = vpack.c.b16 %v1105, %v1089
  %v1746 = vpack.c.b16 %v1106, %v1090
  %v1747 = vpack.c.b16 %v1107, %v1091
  %v1748 = vpack.c.b16 %v1108, %v1092
  %v1749 = vpack.c.b16 %v1109, %v1093
  %v1750 = vpack.c.b16 %v1126, %v1110
  %v1751 = vpack.c.b16 %v1127, %v1111
  %v1752 = vpack.c.b16 %v1128, %v1112
  %v1753 = vpack.c.b16 %v1129, %v1113
  %v1754 = vpack.c.b16 %v1130, %v1114
  %v1755 = vpack.c.b16 %v1131, %v1115
  %v1756 = vpack.c.b16 %v1132, %v1116
  %v1757 = vpack.c.b16 %v1133, %v1117
  %v1758 = vpack.c.b16 %v1134, %v1118
  %v1759 = vpack.c.b16 %v1135, %v1119
  %v1760 = vpack.c.b16 %v1136, %v1120
  %v1761 = vpack.c.b16 %v1137, %v1121
  %v1762 = vpack.c.b16 %v1138, %v1122
  %v1763 = vpack.c.b16 %v1139, %v1123
  %v1764 = vpack.c.b16 %v1140, %v1124
  %v1765 = vpack.c.b16 %v1141, %v1125
  %v1766 = vpack.c.b16 %v1158, %v1142
  %v1767 = vpack.c.b16 %v1159, %v1143
  %v1768 = vpack.c.b16 %v1160, %v1144
  %v1769 = vpack.c.b16 %v1161, %v1145
  %v1770 = vpack.c.b16 %v1162, %v1146
  %v1771 = vpack.c.b16 %v1163, %v1147
  %v1772 = vpack.c.b16 %v1164, %v1148
  %v1773 = vpack.c.b16 %v1165, %v1149
  %v1774 = vpack.c.b16 %v1166, %v1150
  %v1775 = vpack.c.b16 %v1167, %v1151
  %v1776 = vpack.c.b16 %v1168, %v1152
  %v1777 = vpack.c.b16 %v1169, %v1153
  %v1778 = vpack.c.b16 %v1170, %v1154
  %v1779 = vpack.c.b16 %v1171, %v1155
  %v1780 = vpack.c.b16 %v1172, %v1156
  %v1781 = vpack.c.b16 %v1173, %v1157
  %v1782 = vpack.c.b16 %v1190, %v1174
  %v1783 = vpack.c.b16 %v1191, %v1175
  %v1784 = vpack.c.b16 %v1192, %v1176
  %v1785 = vpack.c.b16 %v1193, %v1177
  %v1786 = vpack.c.b16 %v1194, %v1178
  %v1787 = vpack.c.b16 %v1195, %v1179
  %v1788 = vpack.c.b16 %v1196, %v1180
  %v1789 = vpack.c.b16 %v1197, %v1181
  %v1790 = vpack.c.b16 %v1198, %v1182
  %v1791 = vpack.c.b16 %v1199, %v1183
  %v1792 = vpack.c.b16 %v1200, %v1184
  %v1793 = vpack.c.b16 %v1201, %v1185
  %v1794 = vpack.c.b16 %v1202, %v1186
  %v1795 = vpack.c.b16 %v1203, %v1187
  %v1796 = vpack.c.b16 %v1204, %v1188
  %v1797 = vpack.c.b16 %v1205, %v1189
  %v1798 = vpack.c.b16 %v1222, %v1206
  %v1799 = vpack.c.b16 %v1223, %v1207
  %v1800 = vpack.c.b16 %v1224, %v1208
  %v1801 = vpack.c.b16 %v1225, %v1209
  %v1802 = vpack.c.b16 %v1226, %v1210
  %v1803 = vpack.c.b16 %v1227, %v1211
  %v1804 = vpack.c.b16 %v1228, %v1212
  %v1805 = vpack.c.b16 %v1229, %v1213
  %v1806 = vpack.c.b16 %v1230, %v1214
  %v1807 = vpack.c.b16 %v1231, %v1215
  %v1808 = vpack.c.b16 %v1232, %v1216
  %v1809 = vpack.c.b16 %v1233, %v1217
  %v1810 = vpack.c.b16 %v1234, %v1218
  %v1811 = vpack.c.b16 %v1235, %v1219
  %v1812 = vpack.c.b16 %v1236, %v1220
  %v1813 = vpack.c.b16 %v1237, %v1221
  %v1814 = vpack.c.b16 %v1254, %v1238
  %v1815 = vpack.c.b16 %v1255, %v1239
  %v1816 = vpack.c.b16 %v1256, %v1240
  %v1817 = vpack.c.b16 %v1257, %v1241
  %v1818 = vpack.c.b16 %v1258, %v1242
  %v1819 = vpack.c.b16 %v1259, %v1243
  %v1820 = vpack.c.b16 %v1260, %v1244
  %v1821 = vpack.c.b16 %v1261, %v1245
  %v1822 = vpack.c.b16 %v1262, %v1246
  %v1823 = vpack.c.b16 %v1263, %v1247
  %v1824 = vpack.c.b16 %v1264, %v1248
  %v1825 = vpack.c.b16 %v1265, %v1249
  %v1826 = vpack.c.b16 %v1266, %v1250
  %v1827 = vpack.c.b16 %v1267, %v1251
  %v1828 = vpack.c.b16 %v1268, %v1252
  %v1829 = vpack.c.b16 %v1269, %v1253
  %v1830 = vpack.c.b16 %v1286, %v1270
  %v1831 = vpack.c.b16 %v1287, %v1271
  %v1832 = vpack.c.b16 %v1288, %v1272
  %v1833 = vpack.c.b16 %v1289, %v1273
  %v1834 = vpack.c.b16 %v1290, %v1274
  %v1835 = vpack.c.b16 %v1291, %v1275
  %v1836 = vpack.c.b16 %v1292, %v1276
  %v1837 = vpack.c.b16 %v1293, %v1277
  %v1838 = vpack.c.b16 %v1294, %v1278
  %v1839 = vpack.c.b16 %v1295, %v1279
  %v1840 = vpack.c.b16 %v1296, %v1280
  %v1841 = vpack.c.b16 %v1297, %v1281
  %v1842 = vpack.c.b16 %v1298, %v1282
  %v1843 = vpack.c.b16 %v1299, %v1283
  %v1844 = vpack.c.b16 %v1300, %v1284
  %v1845 = vpack.c.b16 %v1301, %v1285
  %v1846 = vpack.c.b16 %v1318, %v1302
  %v1847 = vpack.c.b16 %v1319, %v1303
  %v1848 = vpack.c.b16 %v1320, %v1304
  %v1849 = vpack.c.b16 %v1321, %v1305
  %v1850 = vpack.c.b16 %v1322, %v1306
  %v1851 = vpack.c.b16 %v1323, %v1307
  %v1852 = vpack.c.b16 %v1324, %v1308
  %v1853 = vpack.c.b16 %v1325, %v1309
  %v1854 = vpack.c.b16 %v1326, %v1310
  %v1855 = vpack.c.b16 %v1327, %v1311
  %v1856 = vpack.c.b16 %v1328, %v1312
  %v1857 = vpack.c.b16 %v1329, %v1313
  %v1858 = vpack.c.b16 %v1330, %v1314
  %v1859 = vpack.c.b16 %v1331, %v1315
  %v1860 = vpack.c.b16 %v1332, %v1316
  %v1861 = vpack.c.b16 %v1333, %v1317
  %v1862 = vpack.c.b16 %v1350, %v1334
  %v1863 = vpack.c.b16 %v1351, %v1335
  %v1864 = vpack.c.b16 %v1352, %v1336
  %v1865 = vpack.c.b16 %v1353, %v1337
  %v1866 = vpack.c.b16 %v1354, %v1338
  %v1867 = vpack.c.b16 %v1355, %v1339
  %v1868 = vpack.c.b16 %v1356, %v1340
  %v1869 = vpack.c.b16 %v1357, %v1341
  %v1870 = vpack.c.b16 %v1358, %v1342
  %v1871 = vpack.c.b16 %v1359, %v1343
  %v1872 = vpack.c.b16 %v1360, %v1344
  %v1873 = vpack.c.b16 %v1361, %v1345
  %v1874 = vpack.c.b16 %v1362, %v1346
  %v1875 = vpack.c.b16 %v1363, %v1347
  %v1876 = vpack.c.b16 %v1364, %v1348
  %v1877 = vpack.c.b16 %v1365, %v1349
  %v1878 = vpack.c.b16 %v1382, %v1366
  %v1879 = vpack.c.b16 %v1383, %v1367
  %v1880 = vpack.c.b16 %v1384, %v1368
  %v1881 = vpack.c.b16 %v1385, %v1369
  %v1882 = vpack.c.b16 %v1386, %v1370
  %v1883 = vpack.c.b16 %v1387, %v1371
  %v1884 = vpack.c.b16 %v1388, %v1372
  %v1885 = vpack.c.b16 %v1389, %v1373
  %v1886 = vpack.c.b16 %v1390, %v1374
  %v1887 = vpack.c.b16 %v1391, %v1375
  %v1888 = vpack.c.b16 %v1392, %v1376
  %v1889 = vpack.c.b16 %v1393, %v1377
  %v1890 = vpack.c.b16 %v1394, %v1378
  %v1891 = vpack.c.b16 %v1395, %v1379
  %v1892 = vpack.c.b16 %v1396, %v1380
  %v1893 = vpack.c.b16 %v1397, %v1381
  %v1894 = vpack.c.b16 %v1414, %v1398
  %v1895 = vpack.c.b16 %v1415, %v1399
  %v1896 = vpack.c.b16 %v1416, %v1400
  %v1897 = vpack.c.b16 %v1417, %v1401
  %v1898 = vpack.c.b16 %v1418, %v1402
  %v1899 = vpack.c.b16 %v1419, %v1403
  %v1900 = vpack.c.b16 %v1420, %v1404
  %v1901 = vpack.c.b16 %v1421, %v1405
  %v1902 = vpack.c.b16 %v1422, %v1406
  %v1903 = vpack.c.b16 %v1423, %v1407
  %v1904 = vpack.c.b16 %v1424, %v1408
  %v1905 = vpack.c.b16 %v1425, %v1409
  %v1906 = vpack.c.b16 %v1426, %v1410
  %v1907 = vpack.c.b16 %v1427, %v1411
  %v1908 = vpack.c.b16 %v1428, %v1412
  %v1909 = vpack.c.b16 %v1429, %v1413
  %v1910 = vpack.c.b16 %v1446, %v1430
  %v1911 = vpack.c.b16 %v1447, %v1431
  %v1912 = vpack.c.b16 %v1448, %v1432
  %v1913 = vpack.c.b16 %v1449, %v1433
  %v1914 = vpack.c.b16 %v1450, %v1434
  %v1915 = vpack.c.b16 %v1451, %v1435
  %v1916 = vpack.c.b16 %v1452, %v1436
  %v1917 = vpack.c.b16 %v1453, %v1437
  %v1918 = vpack.c.b16 %v1454, %v1438
  %v1919 = vpack.c.b16 %v1455, %v1439
  %v1920 = vpack.c.b16 %v1456, %v1440
  %v1921 = vpack.c.b16 %v1457, %v1441
  %v1922 = vpack.c.b16 %v1458, %v1442
  %v1923 = vpack.c.b16 %v1459, %v1443
  %v1924 = vpack.c.b16 %v1460, %v1444
  %v1925 = vpack.c.b16 %v1461, %v1445
  %v1926 = vpack.c.b16 %v1478, %v1462
  %v1927 = vpack.c.b16 %v1479, %v1463
  %v1928 = vpack.c.b16 %v1480, %v1464
  %v1929 = vpack.c.b16 %v1481, %v1465
  %v1930 = vpack.c.b16 %v1482, %v1466
  %v1931 = vpack.c.b16 %v1483, %v1467
  %v1932 = vpack.c.b16 %v1484, %v1468
  %v1933 = vpack.c.b16 %v1485, %v1469
  %v1934 = vpack.c.b16 %v1486, %v1470
  %v1935 = vpack.c.b16 %v1487, %v1471
  %v1936 = vpack.c.b16 %v1488, %v1472
  %v1937 = vpack.c.b16 %v1489, %v1473
  %v1938 = vpack.c.b16 %v1490, %v1474
  %v1939 = vpack.c.b16 %v1491, %v1475
  %v1940 = vpack.c.b16 %v1492, %v1476
  %v1941 = vpack.c.b16 %v1493, %v1477
  %v1942 = vpack.c.b16 %v1510, %v1494
  %v1943 = vpack.c.b16 %v1511, %v1495
  %v1944 = vpack.c.b16 %v1512, %v1496
  %v1945 = vpack.c.b16 %v1513, %v1497
  %v1946 = vpack.c.b16 %v1514, %v1498
  %v1947 = vpack.c.b16 %v1515, %v1499
  %v1948 = vpack.c.b16 %v1516, %v1500
  %v1949 = vpack.c.b16 %v1517, %v1501
  %v1950 = vpack.c.b16 %v1518, %v1502
  %v1951 = vpack.c.b16 %v1519, %v1503
  %v1952 = vpack.c.b16 %v1520, %v1504
  %v1953 = vpack.c.b16 %v1521, %v1505
  %v1954 = vpack.c.b16 %v1522, %v1506
  %v1955 = vpack.c.b16 %v1523, %v1507
  %v1956 = vpack.c.b16 %v1524, %v1508
  %v1957 = vpack.c.b16 %v1525, %v1509
  %v1958 = vpack.c.b16 %v1542, %v1526
  %v1959 = vpack.c.b16 %v1543, %v1527
  %v1960 = vpack.c.b16 %v1544, %v1528
  %v1961 = vpack.c.b16 %v1545, %v1529
  %v1962 = vpack.c.b16 %v1546, %v1530
  %v1963 = vpack.c.b16 %v1547, %v1531
  %v1964 = vpack.c.b16 %v1548, %v1532
  %v1965 = vpack.c.b16 %v1549, %v1533
  %v1966 = vpack.c.b16 %v1550, %v1534
  %v1967 = vpack.c.b16 %v1551, %v1535
  %v1968 = vpack.c.b16 %v1552, %v1536
  %v1969 = vpack.c.b16 %v1553, %v1537
  %v1970 = vpack.c.b16 %v1554, %v1538
  %v1971 = vpack.c.b16 %v1555, %v1539
  %v1972 = vpack.c.b16 %v1556, %v1540
  %v1973 = vpack.c.b16 %v1557, %v1541
  %v1974 = vpack.c.b16 %v1574, %v1558
  %v1975 = vpack.c.b16 %v1575, %v1559
  %v1976 = vpack.c.b16 %v1576, %v1560
  %v1977 = vpack.c.b16 %v1577, %v1561
  %v1978 = vpack.c.b16 %v1578, %v1562
  %v1979 = vpack.c.b16 %v1579, %v1563
  %v1980 = vpack.c.b16 %v1580, %v1564
  %v1981 = vpack.c.b16 %v1581, %v1565
  %v1982 = vpack.c.b16 %v1582, %v1566
  %v1983 = vpack.c.b16 %v1583, %v1567
  %v1984 = vpack.c.b16 %v1584, %v1568
  %v1985 = vpack.c.b16 %v1585, %v1569
  %v1986 = vpack.c.b16 %v1586, %v1570
  %v1987 = vpack.c.b16 %v1587, %v1571
  %v1988 = vpack.c.b16 %v1588, %v1572
  %v1989 = vpack.c.b16 %v1589, %v1573
  %v1990 = vpack.c.b16 %v1606, %v1590
  %v1991 = vpack.c.b16 %v1607, %v1591
  %v1992 = vpack.c.b16 %v1608, %v1592
  %v1993 = vpack.c.b16 %v1609, %v1593
  %v1994 = vpack.c.b16 %v1610, %v1594
  %v1995 = vpack.c.b16 %v1611, %v1595
  %v1996 = vpack.c.b16 %v1612, %v1596
  %v1997 = vpack.c.b16 %v1613, %v1597
  %v1998 = vpack.c.b16 %v1614, %v1598
  %v1999 = vpack.c.b16 %v1615, %v1599
  %v2000 = vpack.c.b16 %v1616, %v1600
  %v2001 = vpack.c.b16 %v1617, %v1601
  %v2002 = vpack.c.b16 %v1618, %v1602
  %v2003 = vpack.c.b16 %v1619, %v1603
  %v2004 = vpack.c.b16 %v1620, %v1604
  %v2005 = vpack.c.b16 %v1621, %v1605
  %v2006 = vpack.c.b16 %v1638, %v1622
  %v2007 = vpack.c.b16 %v1639, %v1623
  %v2008 = vpack.c.b16 %v1640, %v1624
  %v2009 = vpack.c.b16 %v1641, %v1625
  %v2010 = vpack.c.b16 %v1642, %v1626
  %v2011 = vpack.c.b16 %v1643, %v1627
  %v2012 = vpack.c.b16 %v1644, %v1628
  %v2013 = vpack.c.b16 %v1645, %v1629
  %v2014 = vpack.c.b16 %v1646, %v1630
  %v2015 = vpack.c.b16 %v1647, %v1631
  %v2016 = vpack.c.b16 %v1648, %v1632
  %v2017 = vpack.c.b16 %v1649, %v1633
  %v2018 = vpack.c.b16 %v1650, %v1634
  %v2019 = vpack.c.b16 %v1651, %v1635
  %v2020 = vpack.c.b16 %v1652, %v1636
  %v2021 = vpack.c.b16 %v1653, %v1637
  %v2022 = vpack.c.b16 %v1670, %v1654
  %v2023 = vpack.c.b16 %v1671, %v1655
  %v2024 = vpack.c.b16 %v1672, %v1656
  %v2025 = vpack.c.b16 %v1673, %v1657
  %v2026 = vpack.c.b16 %v1674, %v1658
  %v2027 = vpack.c.b16 %v1675, %v1659
  %v2028 = vpack.c.b16 %v1676, %v1660
  %v2029 = vpack.c.b16 %v1677, %v1661
  %v2030 = vpack.c.b16 %v1678, %v1662
  %v2031 = vpack.c.b16 %v1679, %v1663
  %v2032 = vpack.c.b16 %v1680, %v1664
  %v2033 = vpack.c.b16 %v1681, %v1665
  %v2034 = vpack.c.b16 %v1682, %v1666
  %v2035 = vpack.c.b16 %v1683, %v1667
  %v2036 = vpack.c.b16 %v1684, %v1668
  %v2037 = vpack.c.b16 %v1685, %v1669
  %v2646 = vunpack.c.l.b16 %v367
  %v2647 = vunpack.c.l.b16 %v368
  %v2648 = vunpack.c.l.b16 %v369
  %v2649 = vunpack.c.l.b16 %v370
  %v2650 = vunpack.c.l.b16 %v371
  %v2651 = vunpack.c.l.b16 %v372
  %v2652 = vunpack.c.l.b16 %v373
  %v2653 = vunpack.c.l.b16 %v374
  %v2654 = vunpack.c.l.b16 %v375
  %v2655 = vunpack.c.l.b16 %v376
  %v2656 = vunpack.c.l.b16 %v377
  %v2657 = vunpack.c.l.b16 %v378
  %v2658 = vunpack.c.l.b16 %v379
  %v2659 = vunpack.c.l.b16 %v380
  %v2660 = vunpack.c.l.b16 %v381
  %v2661 = vunpack.c.l.b16 %v382
  %v2662 = vunpack.c.l.b16 %v383
  %v2663 = vunpack.c.l.b16 %v384
  %v2664 = vunpack.c.l.b16 %v385
  %v2665 = vunpack.c.l.b16 %v386
  %v2666 = vunpack.c.l.b16 %v387
  %v2667 = vunpack.c.l.b16 %v388
  %v2668 = vunpack.c.l.b16 %v389
  %v2669 = vunpack.c.l.b16 %v390
  %v2670 = vunpack.c.l.b16 %v391
  %v2671 = vunpack.c.l.b16 %v392
  %v2672 = vunpack.c.l.b16 %v393
  %v2673 = vunpack.c.l.b16 %v394
  %v2674 = vunpack.c.l.b16 %v395
  %v2675 = vunpack.c.l.b16 %v396
  %v2676 = vunpack.c.l.b16 %v397
  %v2677 = vunpack.c.l.b16 %v398
  %v2678 = vunpack.c.l.b16 %v399
  %v2679 = vunpack.c.l.b16 %v400
  %v2680 = vunpack.c.l.b16 %v401
  %v2681 = vunpack.c.l.b16 %v402
  %v2682 = vunpack.c.l.b16 %v403
  %v2683 = vunpack.c.l.b16 %v404
  %v2684 = vunpack.c.l.b16 %v405
  %v2685 = vunpack.c.l.b16 %v406
  %v2686 = vunpack.c.l.b16 %v407
  %v2687 = vunpack.c.l.b16 %v408
  %v2688 = vunpack.c.l.b16 %v409
  %v2689 = vunpack.c.l.b16 %v410
  %v2690 = vunpack.c.l.b16 %v411
  %v2691 = vunpack.c.l.b16 %v412
  %v2692 = vunpack.c.l.b16 %v413
  %v2693 = vunpack.c.l.b16 %v414
  %v2694 = vunpack.c.l.b16 %v415
  %v2695 = vunpack.c.l.b16 %v416
  %v2696 = vunpack.c.l.b16 %v417
  %v2697 = vunpack.c.l.b16 %v418
  %v2698 = vunpack.c.l.b16 %v419
  %v2699 = vunpack.c.l.b16 %v420
  %v2700 = vunpack.c.l.b16 %v421
  %v2701 = vunpack.c.l.b16 %v422
  %v2702 = vunpack.c.l.b16 %v423
  %v2703 = vunpack.c.l.b16 %v424
  %v2704 = vunpack.c.l.b16 %v425
  %v2705 = vunpack.c.l.b16 %v426
  %v2706 = vunpack.c.l.b16 %v427
  %v2707 = vunpack.c.l.b16 %v428
  %v2708 = vunpack.c.l.b16 %v429
  %v2709 = vunpack.c.l.b16 %v430
  %v2710 = vunpack.c.l.b16 %v431
  %v2711 = vunpack.c.l.b16 %v432
  %v2712 = vunpack.c.l.b16 %v433
  %v2713 = vunpack.c.l.b16 %v434
  %v2714 = vunpack.c.l.b16 %v435
  %v2715 = vunpack.c.l.b16 %v436
  %v2716 = vunpack.c.l.b16 %v437
  %v2717 = vunpack.c.l.b16 %v438
  %v2718 = vunpack.c.l.b16 %v439
  %v2719 = vunpack.c.l.b16 %v440
  %v2720 = vunpack.c.l.b16 %v441
  %v2721 = vunpack.c.l.b16 %v442
  %v2722 = vunpack.c.l.b16 %v443
  %v2723 = vunpack.c.l.b16 %v444
  %v2724 = vunpack.c.l.b16 %v445
  %v2725 = vunpack.c.l.b16 %v446
  %v2726 = vunpack.c.l.b16 %v447
  %v2727 = vunpack.c.l.b16 %v448
  %v2728 = vunpack.c.l.b16 %v449
  %v2729 = vunpack.c.l.b16 %v450
  %v2730 = vunpack.c.l.b16 %v451
  %v2731 = vunpack.c.l.b16 %v452
  %v2732 = vunpack.c.l.b16 %v453
  %v2733 = vunpack.c.l.b16 %v454
  %v2734 = vunpack.c.l.b16 %v455
  %v2735 = vunpack.c.l.b16 %v456
  %v2736 = vunpack.c.l.b16 %v457
  %v2737 = vunpack.c.l.b16 %v458
  %v2738 = vunpack.c.l.b16 %v459
  %v2739 = vunpack.c.l.b16 %v460
  %v2740 = vunpack.c.l.b16 %v461
  %v2741 = vunpack.c.l.b16 %v462
  %v2742 = vunpack.c.l.b16 %v463
  %v2743 = vunpack.c.l.b16 %v464
  %v2744 = vunpack.c.l.b16 %v465
  %v2745 = vunpack.c.l.b16 %v466
  %v2746 = vunpack.c.l.b16 %v467
  %v2747 = vunpack.c.l.b16 %v468
  %v2748 = vunpack.c.l.b16 %v469
  %v2749 = vunpack.c.l.b16 %v470
  %v2750 = vunpack.c.l.b16 %v471
  %v2751 = vunpack.c.l.b16 %v472
  %v2752 = vunpack.c.l.b16 %v473
  %v2753 = vunpack.c.l.b16 %v474
  %v2754 = vunpack.c.l.b16 %v475
  %v2755 = vunpack.c.l.b16 %v476
  %v2756 = vunpack.c.l.b16 %v477
  %v2757 = vunpack.c.l.b16 %v478
  %v2758 = vunpack.c.l.b16 %v479
  %v2759 = vunpack.c.l.b16 %v480
  %v2760 = vunpack.c.l.b16 %v481
  %v2761 = vunpack.c.l.b16 %v482
  %v2762 = vunpack.c.l.b16 %v483
  %v2763 = vunpack.c.l.b16 %v484
  %v2764 = vunpack.c.l.b16 %v485
  %v2765 = vunpack.c.l.b16 %v486
  %v2766 = vunpack.c.l.b16 %v487
  %v2767 = vunpack.c.l.b16 %v488
  %v2768 = vunpack.c.l.b16 %v489
  %v2769 = vunpack.c.l.b16 %v490
  %v2770 = vunpack.c.l.b16 %v491
  %v2771 = vunpack.c.l.b16 %v492
  %v2772 = vunpack.c.l.b16 %v493
  %v2773 = vunpack.c.l.b16 %v494
  %v2774 = vunpack.c.l.b16 %v495
  %v2775 = vunpack.c.l.b16 %v496
  %v2776 = vunpack.c.l.b16 %v497
  %v2777 = vunpack.c.l.b16 %v498
  %v2778 = vunpack.c.l.b16 %v499
  %v2779 = vunpack.c.l.b16 %v500
  %v2780 = vunpack.c.l.b16 %v501
  %v2781 = vunpack.c.l.b16 %v502
  %v2782 = vunpack.c.l.b16 %v503
  %v2783 = vunpack.c.l.b16 %v504
  %v2784 = vunpack.c.l.b16 %v505
  %v2785 = vunpack.c.l.b16 %v506
  %v2786 = vunpack.c.l.b16 %v507
  %v2787 = vunpack.c.l.b16 %v508
  %v2788 = vunpack.c.l.b16 %v509
  %v2789 = vunpack.c.l.b16 %v510
  %v2790 = vunpack.c.l.b16 %v511
  %v2791 = vunpack.c.l.b16 %v512
  %v2792 = vunpack.c.l.b16 %v513
  %v2793 = vunpack.c.l.b16 %v514
  %v2794 = vunpack.c.l.b16 %v515
  %v2795 = vunpack.c.l.b16 %v516
  %v2796 = vunpack.c.l.b16 %v517
  %v2797 = vunpack.c.l.b16 %v518
  %v2798 = vunpack.c.l.b16 %v519
  %v2799 = vunpack.c.l.b16 %v520
  %v2800 = vunpack.c.l.b16 %v521
  %v2801 = vunpack.c.l.b16 %v522
  %v2802 = vunpack.c.l.b16 %v523
  %v2803 = vunpack.c.l.b16 %v524
  %v2804 = vunpack.c.l.b16 %v525
  %v2805 = vunpack.c.l.b16 %v526
  %v2806 = vunpack.c.l.b16 %v527
  %v2807 = vunpack.c.l.b16 %v528
  %v2808 = vunpack.c.l.b16 %v529
  %v2809 = vunpack.c.l.b16 %v530
  %v2810 = vunpack.c.l.b16 %v531
  %v2811 = vunpack.c.l.b16 %v532
  %v2812 = vunpack.c.l.b16 %v533
  %v2813 = vunpack.c.l.b16 %v534
  %v2814 = vunpack.c.l.b16 %v535
  %v2815 = vunpack.c.l.b16 %v536
  %v2816 = vunpack.c.l.b16 %v537
  %v2817 = vunpack.c.l.b16 %v538
  %v2818 = vunpack.c.l.b16 %v539
  %v2819 = vunpack.c.l.b16 %v540
  %v2820 = vunpack.c.l.b16 %v541
  %v2821 = vunpack.c.l.b16 %v542
  %v2822 = vunpack.c.l.b16 %v543
  %v2823 = vunpack.c.l.b16 %v544
  %v2824 = vunpack.c.l.b16 %v545
  %v2825 = vunpack.c.l.b16 %v546
  %v2826 = vunpack.c.l.b16 %v547
  %v2827 = vunpack.c.l.b16 %v548
  %v2828 = vunpack.c.l.b16 %v549
  %v2829 = vunpack.c.l.b16 %v550
  %v2830 = vunpack.c.l.b16 %v551
  %v2831 = vunpack.c.l.b16 %v552
  %v2832 = vunpack.c.l.b16 %v553
  %v2833 = vunpack.c.l.b16 %v554
  %v2834 = vunpack.c.l.b16 %v555
  %v2835 = vunpack.c.l.b16 %v556
  %v2836 = vunpack.c.l.b16 %v557
  %v2837 = vunpack.c.l.b16 %v558
  %v2838 = vunpack.c.l.b16 %v559
  %v2839 = vunpack.c.l.b16 %v560
  %v2840 = vunpack.c.l.b16 %v561
  %v2841 = vunpack.c.l.b16 %v562
  %v2842 = vunpack.c.l.b16 %v563
  %v2843 = vunpack.c.l.b16 %v564
  %v2844 = vunpack.c.l.b16 %v565
  %v2845 = vunpack.c.l.b16 %v566
  %v2846 = vunpack.c.l.b16 %v567
  %v2847 = vunpack.c.l.b16 %v568
  %v2848 = vunpack.c.l.b16 %v569
  %v2849 = vunpack.c.l.b16 %v570
  %v2850 = vunpack.c.l.b16 %v571
  %v2851 = vunpack.c.l.b16 %v572
  %v2852 = vunpack.c.l.b16 %v573
  %v2853 = vunpack.c.l.b16 %v574
  %v2854 = vunpack.c.l.b16 %v575
  %v2855 = vunpack.c.l.b16 %v576
  %v2856 = vunpack.c.l.b16 %v577
  %v2857 = vunpack.c.l.b16 %v578
  %v2858 = vunpack.c.l.b16 %v579
  %v2859 = vunpack.c.l.b16 %v580
  %v2860 = vunpack.c.l.b16 %v581
  %v2861 = vunpack.c.l.b16 %v582
  %v2862 = vunpack.c.l.b16 %v583
  %v2863 = vunpack.c.l.b16 %v584
  %v2864 = vunpack.c.l.b16 %v585
  %v2865 = vunpack.c.l.b16 %v586
  %v2866 = vunpack.c.l.b16 %v587
  %v2867 = vunpack.c.l.b16 %v588
  %v2868 = vunpack.c.l.b16 %v589
  %v2869 = vunpack.c.l.b16 %v590
  %v2870 = vunpack.c.l.b16 %v591
  %v2871 = vunpack.c.l.b16 %v592
  %v2872 = vunpack.c.l.b16 %v593
  %v2873 = vunpack.c.l.b16 %v594
  %v2874 = vunpack.c.l.b16 %v595
  %v2875 = vunpack.c.l.b16 %v596
  %v2876 = vunpack.c.l.b16 %v597
  %v2877 = vunpack.c.l.b16 %v598
  %v2878 = vunpack.c.l.b16 %v599
  %v2879 = vunpack.c.l.b16 %v600
  %v2880 = vunpack.c.l.b16 %v601
  %v2881 = vunpack.c.l.b16 %v602
  %v2882 = vunpack.c.l.b16 %v603
  %v2883 = vunpack.c.l.b16 %v604
  %v2884 = vunpack.c.l.b16 %v605
  %v2885 = vunpack.c.l.b16 %v606
  %v2886 = vunpack.c.l.b16 %v607
  %v2887 = vunpack.c.l.b16 %v608
  %v2888 = vunpack.c.l.b16 %v609
  %v2889 = vunpack.c.l.b16 %v610
  %v2890 = vunpack.c.l.b16 %v611
  %v2891 = vunpack.c.l.b16 %v612
  %v2892 = vunpack.c.l.b16 %v613
  %v2893 = vunpack.c.l.b16 %v614
  %v2894 = vunpack.c.l.b16 %v615
  %v2895 = vunpack.c.l.b16 %v616
  %v2896 = vunpack.c.l.b16 %v617
  %v2897 = vunpack.c.l.b16 %v618
  %v2898 = vunpack.c.l.b16 %v619
  %v2899 = vunpack.c.l.b16 %v620
  %v2900 = vunpack.c.l.b16 %v621
  %v2901 = vunpack.c.l.b16 %v622
  %v2902 = vpack.c.b16 %v2647, %v2646
  %v2903 = vpack.c.b16 %v2649, %v2648
  %v2904 = vpack.c.b16 %v2651, %v2650
  %v2905 = vpack.c.b16 %v2653, %v2652
  %v2906 = vpack.c.b16 %v2655, %v2654
  %v2907 = vpack.c.b16 %v2657, %v2656
  %v2908 = vpack.c.b16 %v2659, %v2658
  %v2909 = vpack.c.b16 %v2661, %v2660
  %v2910 = vpack.c.b16 %v2663, %v2662
  %v2911 = vpack.c.b16 %v2665, %v2664
  %v2912 = vpack.c.b16 %v2667, %v2666
  %v2913 = vpack.c.b16 %v2669, %v2668
  %v2914 = vpack.c.b16 %v2671, %v2670
  %v2915 = vpack.c.b16 %v2673, %v2672
  %v2916 = vpack.c.b16 %v2675, %v2674
  %v2917 = vpack.c.b16 %v2677, %v2676
  %v2918 = vpack.c.b16 %v2679, %v2678
  %v2919 = vpack.c.b16 %v2681, %v2680
  %v2920 = vpack.c.b16 %v2683, %v2682
  %v2921 = vpack.c.b16 %v2685, %v2684
  %v2922 = vpack.c.b16 %v2687, %v2686
  %v2923 = vpack.c.b16 %v2689, %v2688
  %v2924 = vpack.c.b16 %v2691, %v2690
  %v2925 = vpack.c.b16 %v2693, %v2692
  %v2926 = vpack.c.b16 %v2695, %v2694
  %v2927 = vpack.c.b16 %v2697, %v2696
  %v2928 = vpack.c.b16 %v2699, %v2698
  %v2929 = vpack.c.b16 %v2701, %v2700
  %v2930 = vpack.c.b16 %v2703, %v2702
  %v2931 = vpack.c.b16 %v2705, %v2704
  %v2932 = vpack.c.b16 %v2707, %v2706
  %v2933 = vpack.c.b16 %v2709, %v2708
  %v2934 = vpack.c.b16 %v2711, %v2710
  %v2935 = vpack.c.b16 %v2713, %v2712
  %v2936 = vpack.c.b16 %v2715, %v2714
  %v2937 = vpack.c.b16 %v2717, %v2716
  %v2938 = vpack.c.b16 %v2719, %v2718
  %v2939 = vpack.c.b16 %v2721, %v2720
  %v2940 = vpack.c.b16 %v2723, %v2722
  %v2941 = vpack.c.b16 %v2725, %v2724
  %v2942 = vpack.c.b16 %v2727, %v2726
  %v2943 = vpack.c.b16 %v2729, %v2728
  %v2944 = vpack.c.b16 %v2731, %v2730
  %v2945 = vpack.c.b16 %v2733, %v2732
  %v2946 = vpack.c.b16 %v2735, %v2734
  %v2947 = vpack.c.b16 %v2737, %v2736
  %v2948 = vpack.c.b16 %v2739, %v2738
  %v2949 = vpack.c.b16 %v2741, %v2740
  %v2950 = vpack.c.b16 %v2743, %v2742
  %v2951 = vpack.c.b16 %v2745, %v2744
  %v2952 = vpack.c.b16 %v2747, %v2746
  %v2953 = vpack.c.b16 %v2749, %v2748
  %v2954 = vpack.c.b16 %v2751, %v2750
  %v2955 = vpack.c.b16 %v2753, %v2752
  %v2956 = vpack.c.b16 %v2755, %v2754
  %v2957 = vpack.c.b16 %v2757, %v2756
  %v2958 = vpack.c.b16 %v2759, %v2758
  %v2959 = vpack.c.b16 %v2761, %v2760
  %v2960 = vpack.c.b16 %v2763, %v2762
  %v2961 = vpack.c.b16 %v2765, %v2764
  %v2962 = vpack.c.b16 %v2767, %v2766
  %v2963 = vpack.c.b16 %v2769, %v2768
  %v2964 = vpack.c.b16 %v2771, %v2770
  %v2965 = vpack.c.b16 %v2773, %v2772
  %v2966 = vpack.c.b16 %v2775, %v2774
  %v2967 = vpack.c.b16 %v2777, %v2776
  %v2968 = vpack.c.b16 %v2779, %v2778
  %v2969 = vpack.c.b16 %v2781, %v2780
  %v2970 = vpack.c.b16 %v2783, %v2782
  %v2971 = vpack.c.b16 %v2785, %v2784
  %v2972 = vpack.c.b16 %v2787, %v2786
  %v2973 = vpack.c.b16 %v2789, %v2788
  %v2974 = vpack.c.b16 %v2791, %v2790
  %v2975 = vpack.c.b16 %v2793, %v2792
  %v2976 = vpack.c.b16 %v2795, %v2794
  %v2977 = vpack.c.b16 %v2797, %v2796
  %v2978 = vpack.c.b16 %v2799, %v2798
  %v2979 = vpack.c.b16 %v2801, %v2800
  %v2980 = vpack.c.b16 %v2803, %v2802
  %v2981 = vpack.c.b16 %v2805, %v2804
  %v2982 = vpack.c.b16 %v2807, %v2806
  %v2983 = vpack.c.b16 %v2809, %v2808
  %v2984 = vpack.c.b16 %v2811, %v2810
  %v2985 = vpack.c.b16 %v2813, %v2812
  %v2986 = vpack.c.b16 %v2815, %v2814
  %v2987 = vpack.c.b16 %v2817, %v2816
  %v2988 = vpack.c.b16 %v2819, %v2818
  %v2989 = vpack.c.b16 %v2821, %v2820
  %v2990 = vpack.c.b16 %v2823, %v2822
  %v2991 = vpack.c.b16 %v2825, %v2824
  %v2992 = vpack.c.b16 %v2827, %v2826
  %v2993 = vpack.c.b16 %v2829, %v2828
  %v2994 = vpack.c.b16 %v2831, %v2830
  %v2995 = vpack.c.b16 %v2833, %v2832
  %v2996 = vpack.c.b16 %v2835, %v2834
  %v2997 = vpack.c.b16 %v2837, %v2836
  %v2998 = vpack.c.b16 %v2839, %v2838
  %v2999 = vpack.c.b16 %v2841, %v2840
  %v3000 = vpack.c.b16 %v2843, %v2842
  %v3001 = vpack.c.b16 %v2845, %v2844
  %v3002 = vpack.c.b16 %v2847, %v2846
  %v3003 = vpack.c.b16 %v2849, %v2848
  %v3004 = vpack.c.b16 %v2851, %v2850
  %v3005 = vpack.c.b16 %v2853, %v2852
  %v3006 = vpack.c.b16 %v2855, %v2854
  %v3007 = vpack.c.b16 %v2857, %v2856
  %v3008 = vpack.c.b16 %v2859, %v2858
  %v3009 = vpack.c.b16 %v2861, %v2860
  %v3010 = vpack.c.b16 %v2863, %v2862
  %v3011 = vpack.c.b16 %v2865, %v2864
  %v3012 = vpack.c.b16 %v2867, %v2866
  %v3013 = vpack.c.b16 %v2869, %v2868
  %v3014 = vpack.c.b16 %v2871, %v2870
  %v3015 = vpack.c.b16 %v2873, %v2872
  %v3016 = vpack.c.b16 %v2875, %v2874
  %v3017 = vpack.c.b16 %v2877, %v2876
  %v3018 = vpack.c.b16 %v2879, %v2878
  %v3019 = vpack.c.b16 %v2881, %v2880
  %v3020 = vpack.c.b16 %v2883, %v2882
  %v3021 = vpack.c.b16 %v2885, %v2884
  %v3022 = vpack.c.b16 %v2887, %v2886
  %v3023 = vpack.c.b16 %v2889, %v2888
  %v3024 = vpack.c.b16 %v2891, %v2890
  %v3025 = vpack.c.b16 %v2893, %v2892
  %v3026 = vpack.c.b16 %v2895, %v2894
  %v3027 = vpack.c.b16 %v2897, %v2896
  %v3028 = vpack.c.b16 %v2899, %v2898
  %v3029 = vpack.c.b16 %v2901, %v2900
  %3158 = vmatprep.subr.bf16.mxu0 0
  %3159 = vmatpush1.bf16.msra.mxu0 %v2902
  %3160 = vmatprep.subr.bf16.mxu0 0
  %3161 = vmatpush1.bf16.msra.mxu0 %v2903
  %3162 = vmatprep.subr.bf16.mxu0 0
  %3163 = vmatpush1.bf16.msra.mxu0 %v2904
  %3164 = vmatprep.subr.bf16.mxu0 0
  %3165 = vmatpush1.bf16.msra.mxu0 %v2905
  %3166 = vmatprep.subr.bf16.mxu0 0
  %3167 = vmatpush1.bf16.msra.mxu0 %v2906
  %3168 = vmatprep.subr.bf16.mxu0 0
  %3169 = vmatpush1.bf16.msra.mxu0 %v2907
  %3170 = vmatprep.subr.bf16.mxu0 0
  %3171 = vmatpush1.bf16.msra.mxu0 %v2908
  %3172 = vmatprep.subr.bf16.mxu0 0
  %3173 = vmatpush1.bf16.msra.mxu0 %v2909
  %3174 = vmatprep.subr.bf16.mxu0 0
  %3175 = vmatpush1.bf16.msra.mxu0 %v2910
  %3176 = vmatprep.subr.bf16.mxu0 0
  %3177 = vmatpush1.bf16.msra.mxu0 %v2911
  %3178 = vmatprep.subr.bf16.mxu0 0
  %3179 = vmatpush1.bf16.msra.mxu0 %v2912
  %3180 = vmatprep.subr.bf16.mxu0 0
  %3181 = vmatpush1.bf16.msra.mxu0 %v2913
  %3182 = vmatprep.subr.bf16.mxu0 0
  %3183 = vmatpush1.bf16.msra.mxu0 %v2914
  %3184 = vmatprep.subr.bf16.mxu0 0
  %3185 = vmatpush1.bf16.msra.mxu0 %v2915
  %3186 = vmatprep.subr.bf16.mxu0 0
  %3187 = vmatpush1.bf16.msra.mxu0 %v2916
  %3188 = vmatprep.subr.bf16.mxu0 0
  %3189 = vmatpush1.bf16.msra.mxu0 %v2917
  %3190 = vmatprep.mubr.bf16.mxu0 %v1687
  %3191 = vmatmul.mubr.bf16.gmra.mrb[0].mxu0 %v1686
  %v3192 = vpop.f32.mrb[0].mxu0
  %v3193 = vadd.f32 %v628, %v3192
  %v3194 = vpop.f32.mrb[0].mxu0
  %v3195 = vpop.f32.mrb[0].mxu0
  %v3196 = vadd.f32 %v628, %v3195
  %v3197 = vpop.f32.mrb[0].mxu0
  %3198 = vmatprep.mubr.bf16.mxu0 %v1703
  %3199 = vmatmul.mubr.bf16.gmra.mrb[0].mxu0 %v1702
  %v3200 = vpop.f32.mrb[0].mxu0
  %v3201 = vadd.f32 %v628, %v3200
  %v3202 = vpop.f32.mrb[0].mxu0
  %v3203 = vpop.f32.mrb[0].mxu0
  %v3204 = vadd.f32 %v628, %v3203
  %v3205 = vpop.f32.mrb[0].mxu0
  %3206 = vmatprep.mubr.bf16.mxu0 %v1719
  %3207 = vmatmul.mubr.bf16.gmra.mrb[0].mxu0 %v1718
  %v3208 = vpop.f32.mrb[0].mxu0
  %v3209 = vadd.f32 %v628, %v3208
  %v3210 = vpop.f32.mrb[0].mxu0
  %v3211 = vpop.f32.mrb[0].mxu0
  %v3212 = vadd.f32 %v628, %v3211
  %v3213 = vpop.f32.mrb[0].mxu0
  %3214 = vmatprep.mubr.bf16.mxu0 %v1735
  %3215 = vmatmul.mubr.bf16.gmra.mrb[0].mxu0 %v1734
  %v3216 = vpop.f32.mrb[0].mxu0
  %v3217 = vadd.f32 %v628, %v3216
  %v3218 = vpop.f32.mrb[0].mxu0
  %v3219 = vpop.f32.mrb[0].mxu0
  %v3220 = vadd.f32 %v628, %v3219
  %v3221 = vpop.f32.mrb[0].mxu0
  %3222 = vmatprep.mubr.bf16.mxu0 %v1751
  %3223 = vmatmul.mubr.bf16.gmra.mrb[0].mxu0 %v1750
  %v3224 = vpop.f32.mrb[0].mxu0
  %v3225 = vadd.f32 %v628, %v3224
  %v3226 = vpop.f32.mrb[0].mxu0
  %v3227 = vpop.f32.mrb[0].mxu0
  %v3228 = vadd.f32 %v628, %v3227
  %v3229 = vpop.f32.mrb[0].mxu0
  %3230 = vmatprep.mubr.bf16.mxu0 %v1767
  %3231 = vmatmul.mubr.bf16.gmra.mrb[0].mxu0 %v1766
  %v3232 = vpop.f32.mrb[0].mxu0
  %v3233 = vadd.f32 %v628, %v3232
  %v3234 = vpop.f32.mrb[0].mxu0
  %v3235 = vpop.f32.mrb[0].mxu0
  %v3236 = vadd.f32 %v628, %v3235
  %v3237 = vpop.f32.mrb[0].mxu0
  %3238 = vmatprep.mubr.bf16.mxu0 %v1783
  %3239 = vmatmul.mubr.bf16.gmra.mrb[0].mxu0 %v1782
  %v3240 = vpop.f32.mrb[0].mxu0
  %v3241 = vadd.f32 %v628, %v3240
  %v3242 = vpop.f32.mrb[0].mxu0
  %v3243 = vpop.f32.mrb[0].mxu0
  %v3244 = vadd.f32 %v628, %v3243
  %v3245 = vpop.f32.mrb[0].mxu0
  %3246 = vmatprep.mubr.bf16.mxu0 %v1799
  %3247 = vmatmul.mubr.bf16.gmra.mrb[0].mxu0 %v1798
  %v3248 = vpop.f32.mrb[0].mxu0
  %v3249 = vadd.f32 %v628, %v3248
  %v3250 = vpop.f32.mrb[0].mxu0
  %v3251 = vpop.f32.mrb[0].mxu0
  %v3252 = vadd.f32 %v628, %v3251
  %v3253 = vpop.f32.mrb[0].mxu0
  %3254 = vmatprep.mubr.bf16.mxu0 %v1815
  %3255 = vmatmul.mubr.bf16.gmra.mrb[0].mxu0 %v1814
  %v3256 = vpop.f32.mrb[0].mxu0
  %v3257 = vadd.f32 %v628, %v3256
  %v3258 = vpop.f32.mrb[0].mxu0
  %v3259 = vpop.f32.mrb[0].mxu0
  %v3260 = vadd.f32 %v628, %v3259
  %v3261 = vpop.f32.mrb[0].mxu0
  %3262 = vmatprep.mubr.bf16.mxu0 %v1831
  %3263 = vmatmul.mubr.bf16.gmra.mrb[0].mxu0 %v1830
  %v3264 = vpop.f32.mrb[0].mxu0
  %v3265 = vadd.f32 %v628, %v3264
  %v3266 = vpop.f32.mrb[0].mxu0
  %v3267 = vpop.f32.mrb[0].mxu0
  %v3268 = vadd.f32 %v628, %v3267
  %v3269 = vpop.f32.mrb[0].mxu0
  %3270 = vmatprep.mubr.bf16.mxu0 %v1847
  %3271 = vmatmul.mubr.bf16.gmra.mrb[0].mxu0 %v1846
  %v3272 = vpop.f32.mrb[0].mxu0
  %v3273 = vadd.f32 %v628, %v3272
  %v3274 = vpop.f32.mrb[0].mxu0
  %v3275 = vpop.f32.mrb[0].mxu0
  %v3276 = vadd.f32 %v628, %v3275
  %v3277 = vpop.f32.mrb[0].mxu0
  %3278 = vmatprep.mubr.bf16.mxu0 %v1863
  %3279 = vmatmul.mubr.bf16.gmra.mrb[0].mxu0 %v1862
  %v3280 = vpop.f32.mrb[0].mxu0
  %v3281 = vadd.f32 %v628, %v3280
  %v3282 = vpop.f32.mrb[0].mxu0
  %v3283 = vpop.f32.mrb[0].mxu0
  %v3284 = vadd.f32 %v628, %v3283
  %v3285 = vpop.f32.mrb[0].mxu0
  %3286 = vmatprep.mubr.bf16.mxu0 %v1879
  %3287 = vmatmul.mubr.bf16.gmra.mrb[0].mxu0 %v1878
  %v3288 = vpop.f32.mrb[0].mxu0
  %v3289 = vadd.f32 %v628, %v3288
  %v3290 = vpop.f32.mrb[0].mxu0
  %v3291 = vpop.f32.mrb[0].mxu0
  %v3292 = vadd.f32 %v628, %v3291
  %v3293 = vpop.f32.mrb[0].mxu0
  %3294 = vmatprep.mubr.bf16.mxu0 %v1895
  %3295 = vmatmul.mubr.bf16.gmra.mrb[0].mxu0 %v1894
  %v3296 = vpop.f32.mrb[0].mxu0
  %v3297 = vadd.f32 %v628, %v3296
  %v3298 = vpop.f32.mrb[0].mxu0
  %v3299 = vpop.f32.mrb[0].mxu0
  %v3300 = vadd.f32 %v628, %v3299
  %v3301 = vpop.f32.mrb[0].mxu0
  %3302 = vmatprep.mubr.bf16.mxu0 %v1911
  %3303 = vmatmul.mubr.bf16.gmra.mrb[0].mxu0 %v1910
  %v3304 = vpop.f32.mrb[0].mxu0
  %v3305 = vadd.f32 %v628, %v3304
  %v3306 = vpop.f32.mrb[0].mxu0
  %v3307 = vpop.f32.mrb[0].mxu0
  %v3308 = vadd.f32 %v628, %v3307
  %v3309 = vpop.f32.mrb[0].mxu0
  %3310 = vmatprep.mubr.bf16.mxu0 %v1927
  %3311 = vmatmul.mubr.bf16.gmra.mrb[0].mxu0 %v1926
  %v3312 = vpop.f32.mrb[0].mxu0
  %v3313 = vadd.f32 %v628, %v3312
  %v3314 = vpop.f32.mrb[0].mxu0
  %v3315 = vpop.f32.mrb[0].mxu0
  %v3316 = vadd.f32 %v628, %v3315
  %v3317 = vpop.f32.mrb[0].mxu0
  %3318 = vmatprep.mubr.bf16.mxu0 %v1943
  %3319 = vmatmul.mubr.bf16.gmra.mrb[0].mxu0 %v1942
  %v3320 = vpop.f32.mrb[0].mxu0
  %v3321 = vadd.f32 %v628, %v3320
  %v3322 = vpop.f32.mrb[0].mxu0
  %v3323 = vpop.f32.mrb[0].mxu0
  %v3324 = vadd.f32 %v628, %v3323
  %v3325 = vpop.f32.mrb[0].mxu0
  %3326 = vmatprep.mubr.bf16.mxu0 %v1959
  %3327 = vmatmul.mubr.bf16.gmra.mrb[0].mxu0 %v1958
  %v3328 = vpop.f32.mrb[0].mxu0
  %v3329 = vadd.f32 %v628, %v3328
  %v3330 = vpop.f32.mrb[0].mxu0
  %v3331 = vpop.f32.mrb[0].mxu0
  %v3332 = vadd.f32 %v628, %v3331
  %v3333 = vpop.f32.mrb[0].mxu0
  %3334 = vmatprep.mubr.bf16.mxu0 %v1975
  %3335 = vmatmul.mubr.bf16.gmra.mrb[0].mxu0 %v1974
  %v3336 = vpop.f32.mrb[0].mxu0
  %v3337 = vadd.f32 %v628, %v3336
  %v3338 = vpop.f32.mrb[0].mxu0
  %v3339 = vpop.f32.mrb[0].mxu0
  %v3340 = vadd.f32 %v628, %v3339
  %v3341 = vpop.f32.mrb[0].mxu0
  %3342 = vmatprep.mubr.bf16.mxu0 %v1991
  %3343 = vmatmul.mubr.bf16.gmra.mrb[0].mxu0 %v1990
  %v3344 = vpop.f32.mrb[0].mxu0
  %v3345 = vadd.f32 %v628, %v3344
  %v3346 = vpop.f32.mrb[0].mxu0
  %v3347 = vpop.f32.mrb[0].mxu0
  %v3348 = vadd.f32 %v628, %v3347
  %v3349 = vpop.f32.mrb[0].mxu0
  %3350 = vmatprep.mubr.bf16.mxu0 %v2007
  %3351 = vmatmul.mubr.bf16.gmra.mrb[0].mxu0 %v2006
  %v3352 = vpop.f32.mrb[0].mxu0
  %v3353 = vadd.f32 %v628, %v3352
  %v3354 = vpop.f32.mrb[0].mxu0
  %v3355 = vpop.f32.mrb[0].mxu0
  %v3356 = vadd.f32 %v628, %v3355
  %v3357 = vpop.f32.mrb[0].mxu0
  %3358 = vmatprep.mubr.bf16.mxu0 %v2023
  %3359 = vmatmul.mubr.bf16.gmra.mrb[0].mxu0 %v2022
  %v3360 = vpop.f32.mrb[0].mxu0
  %v3361 = vadd.f32 %v628, %v3360
  %v3362 = vpop.f32.mrb[0].mxu0
  %v3363 = vpop.f32.mrb[0].mxu0
  %v3364 = vadd.f32 %v628, %v3363
  %v3365 = vpop.f32.mrb[0].mxu0
  %3366 = vdwg.mxu0
  %3367 = vmatprep.subr.bf16.mxu0 0
  %3368 = vmatpush1.bf16.msra.mxu0 %v2918
  %3369 = vmatprep.subr.bf16.mxu0 0
  %3370 = vmatpush1.bf16.msra.mxu0 %v2919
  %3371 = vmatprep.subr.bf16.mxu0 0
  %3372 = vmatpush1.bf16.msra.mxu0 %v2920
  %3373 = vmatprep.subr.bf16.mxu0 0
  %3374 = vmatpush1.bf16.msra.mxu0 %v2921
  %3375 = vmatprep.subr.bf16.mxu0 0
  %3376 = vmatpush1.bf16.msra.mxu0 %v2922
  %3377 = vmatprep.subr.bf16.mxu0 0
  %3378 = vmatpush1.bf16.msra.mxu0 %v2923
  %3379 = vmatprep.subr.bf16.mxu0 0
  %3380 = vmatpush1.bf16.msra.mxu0 %v2924
  %3381 = vmatprep.subr.bf16.mxu0 0
  %3382 = vmatpush1.bf16.msra.mxu0 %v2925
  %3383 = vmatprep.subr.bf16.mxu0 0
  %3384 = vmatpush1.bf16.msra.mxu0 %v2926
  %3385 = vmatprep.subr.bf16.mxu0 0
  %3386 = vmatpush1.bf16.msra.mxu0 %v2927
  %3387 = vmatprep.subr.bf16.mxu0 0
  %3388 = vmatpush1.bf16.msra.mxu0 %v2928
  %3389 = vmatprep.subr.bf16.mxu0 0
  %3390 = vmatpush1.bf16.msra.mxu0 %v2929
  %3391 = vmatprep.subr.bf16.mxu0 0
  %3392 = vmatpush1.bf16.msra.mxu0 %v2930
  %3393 = vmatprep.subr.bf16.mxu0 0
  %3394 = vmatpush1.bf16.msra.mxu0 %v2931
  %3395 = vmatprep.subr.bf16.mxu0 0
  %3396 = vmatpush1.bf16.msra.mxu0 %v2932
  %3397 = vmatprep.subr.bf16.mxu0 0
  %3398 = vmatpush1.bf16.msra.mxu0 %v2933
  %3399 = vmatprep.mubr.bf16.mxu0 %v1689
  %3400 = vmatmul.mubr.bf16.gmra.mrb[0].mxu0 %v1688
  %v3401 = vpop.f32.mrb[0].mxu0
  %v3402 = vadd.f32 %v3193, %v3401
  %v3403 = vpop.f32.mrb[0].mxu0
  %v3404 = vpop.f32.mrb[0].mxu0
  %v3405 = vadd.f32 %v3196, %v3404
  %v3406 = vpop.f32.mrb[0].mxu0
  %3407 = vmatprep.mubr.bf16.mxu0 %v1705
  %3408 = vmatmul.mubr.bf16.gmra.mrb[0].mxu0 %v1704
  %v3409 = vpop.f32.mrb[0].mxu0
  %v3410 = vadd.f32 %v3201, %v3409
  %v3411 = vpop.f32.mrb[0].mxu0
  %v3412 = vpop.f32.mrb[0].mxu0
  %v3413 = vadd.f32 %v3204, %v3412
  %v3414 = vpop.f32.mrb[0].mxu0
  %3415 = vmatprep.mubr.bf16.mxu0 %v1721
  %3416 = vmatmul.mubr.bf16.gmra.mrb[0].mxu0 %v1720
  %v3417 = vpop.f32.mrb[0].mxu0
  %v3418 = vadd.f32 %v3209, %v3417
  %v3419 = vpop.f32.mrb[0].mxu0
  %v3420 = vpop.f32.mrb[0].mxu0
  %v3421 = vadd.f32 %v3212, %v3420
  %v3422 = vpop.f32.mrb[0].mxu0
  %3423 = vmatprep.mubr.bf16.mxu0 %v1737
  %3424 = vmatmul.mubr.bf16.gmra.mrb[0].mxu0 %v1736
  %v3425 = vpop.f32.mrb[0].mxu0
  %v3426 = vadd.f32 %v3217, %v3425
  %v3427 = vpop.f32.mrb[0].mxu0
  %v3428 = vpop.f32.mrb[0].mxu0
  %v3429 = vadd.f32 %v3220, %v3428
  %v3430 = vpop.f32.mrb[0].mxu0
  %3431 = vmatprep.mubr.bf16.mxu0 %v1753
  %3432 = vmatmul.mubr.bf16.gmra.mrb[0].mxu0 %v1752
  %v3433 = vpop.f32.mrb[0].mxu0
  %v3434 = vadd.f32 %v3225, %v3433
  %v3435 = vpop.f32.mrb[0].mxu0
  %v3436 = vpop.f32.mrb[0].mxu0
  %v3437 = vadd.f32 %v3228, %v3436
  %v3438 = vpop.f32.mrb[0].mxu0
  %3439 = vmatprep.mubr.bf16.mxu0 %v1769
  %3440 = vmatmul.mubr.bf16.gmra.mrb[0].mxu0 %v1768
  %v3441 = vpop.f32.mrb[0].mxu0
  %v3442 = vadd.f32 %v3233, %v3441
  %v3443 = vpop.f32.mrb[0].mxu0
  %v3444 = vpop.f32.mrb[0].mxu0
  %v3445 = vadd.f32 %v3236, %v3444
  %v3446 = vpop.f32.mrb[0].mxu0
  %3447 = vmatprep.mubr.bf16.mxu0 %v1785
  %3448 = vmatmul.mubr.bf16.gmra.mrb[0].mxu0 %v1784
  %v3449 = vpop.f32.mrb[0].mxu0
  %v3450 = vadd.f32 %v3241, %v3449
  %v3451 = vpop.f32.mrb[0].mxu0
  %v3452 = vpop.f32.mrb[0].mxu0
  %v3453 = vadd.f32 %v3244, %v3452
  %v3454 = vpop.f32.mrb[0].mxu0
  %3455 = vmatprep.mubr.bf16.mxu0 %v1801
  %3456 = vmatmul.mubr.bf16.gmra.mrb[0].mxu0 %v1800
  %v3457 = vpop.f32.mrb[0].mxu0
  %v3458 = vadd.f32 %v3249, %v3457
  %v3459 = vpop.f32.mrb[0].mxu0
  %v3460 = vpop.f32.mrb[0].mxu0
  %v3461 = vadd.f32 %v3252, %v3460
  %v3462 = vpop.f32.mrb[0].mxu0
  %3463 = vmatprep.mubr.bf16.mxu0 %v1817
  %3464 = vmatmul.mubr.bf16.gmra.mrb[0].mxu0 %v1816
  %v3465 = vpop.f32.mrb[0].mxu0
  %v3466 = vadd.f32 %v3257, %v3465
  %v3467 = vpop.f32.mrb[0].mxu0
  %v3468 = vpop.f32.mrb[0].mxu0
  %v3469 = vadd.f32 %v3260, %v3468
  %v3470 = vpop.f32.mrb[0].mxu0
  %3471 = vmatprep.mubr.bf16.mxu0 %v1833
  %3472 = vmatmul.mubr.bf16.gmra.mrb[0].mxu0 %v1832
  %v3473 = vpop.f32.mrb[0].mxu0
  %v3474 = vadd.f32 %v3265, %v3473
  %v3475 = vpop.f32.mrb[0].mxu0
  %v3476 = vpop.f32.mrb[0].mxu0
  %v3477 = vadd.f32 %v3268, %v3476
  %v3478 = vpop.f32.mrb[0].mxu0
  %3479 = vmatprep.mubr.bf16.mxu0 %v1849
  %3480 = vmatmul.mubr.bf16.gmra.mrb[0].mxu0 %v1848
  %v3481 = vpop.f32.mrb[0].mxu0
  %v3482 = vadd.f32 %v3273, %v3481
  %v3483 = vpop.f32.mrb[0].mxu0
  %v3484 = vpop.f32.mrb[0].mxu0
  %v3485 = vadd.f32 %v3276, %v3484
  %v3486 = vpop.f32.mrb[0].mxu0
  %3487 = vmatprep.mubr.bf16.mxu0 %v1865
  %3488 = vmatmul.mubr.bf16.gmra.mrb[0].mxu0 %v1864
  %v3489 = vpop.f32.mrb[0].mxu0
  %v3490 = vadd.f32 %v3281, %v3489
  %v3491 = vpop.f32.mrb[0].mxu0
  %v3492 = vpop.f32.mrb[0].mxu0
  %v3493 = vadd.f32 %v3284, %v3492
  %v3494 = vpop.f32.mrb[0].mxu0
  %3495 = vmatprep.mubr.bf16.mxu0 %v1881
  %3496 = vmatmul.mubr.bf16.gmra.mrb[0].mxu0 %v1880
  %v3497 = vpop.f32.mrb[0].mxu0
  %v3498 = vadd.f32 %v3289, %v3497
  %v3499 = vpop.f32.mrb[0].mxu0
  %v3500 = vpop.f32.mrb[0].mxu0
  %v3501 = vadd.f32 %v3292, %v3500
  %v3502 = vpop.f32.mrb[0].mxu0
  %3503 = vmatprep.mubr.bf16.mxu0 %v1897
  %3504 = vmatmul.mubr.bf16.gmra.mrb[0].mxu0 %v1896
  %v3505 = vpop.f32.mrb[0].mxu0
  %v3506 = vadd.f32 %v3297, %v3505
  %v3507 = vpop.f32.mrb[0].mxu0
  %v3508 = vpop.f32.mrb[0].mxu0
  %v3509 = vadd.f32 %v3300, %v3508
  %v3510 = vpop.f32.mrb[0].mxu0
  %3511 = vmatprep.mubr.bf16.mxu0 %v1913
  %3512 = vmatmul.mubr.bf16.gmra.mrb[0].mxu0 %v1912
  %v3513 = vpop.f32.mrb[0].mxu0
  %v3514 = vadd.f32 %v3305, %v3513
  %v3515 = vpop.f32.mrb[0].mxu0
  %v3516 = vpop.f32.mrb[0].mxu0
  %v3517 = vadd.f32 %v3308, %v3516
  %v3518 = vpop.f32.mrb[0].mxu0
  %3519 = vmatprep.mubr.bf16.mxu0 %v1929
  %3520 = vmatmul.mubr.bf16.gmra.mrb[0].mxu0 %v1928
  %v3521 = vpop.f32.mrb[0].mxu0
  %v3522 = vadd.f32 %v3313, %v3521
  %v3523 = vpop.f32.mrb[0].mxu0
  %v3524 = vpop.f32.mrb[0].mxu0
  %v3525 = vadd.f32 %v3316, %v3524
  %v3526 = vpop.f32.mrb[0].mxu0
  %3527 = vmatprep.mubr.bf16.mxu0 %v1945
  %3528 = vmatmul.mubr.bf16.gmra.mrb[0].mxu0 %v1944
  %v3529 = vpop.f32.mrb[0].mxu0
  %v3530 = vadd.f32 %v3321, %v3529
  %v3531 = vpop.f32.mrb[0].mxu0
  %v3532 = vpop.f32.mrb[0].mxu0
  %v3533 = vadd.f32 %v3324, %v3532
  %v3534 = vpop.f32.mrb[0].mxu0
  %3535 = vmatprep.mubr.bf16.mxu0 %v1961
  %3536 = vmatmul.mubr.bf16.gmra.mrb[0].mxu0 %v1960
  %v3537 = vpop.f32.mrb[0].mxu0
  %v3538 = vadd.f32 %v3329, %v3537
  %v3539 = vpop.f32.mrb[0].mxu0
  %v3540 = vpop.f32.mrb[0].mxu0
  %v3541 = vadd.f32 %v3332, %v3540
  %v3542 = vpop.f32.mrb[0].mxu0
  %3543 = vmatprep.mubr.bf16.mxu0 %v1977
  %3544 = vmatmul.mubr.bf16.gmra.mrb[0].mxu0 %v1976
  %v3545 = vpop.f32.mrb[0].mxu0
  %v3546 = vadd.f32 %v3337, %v3545
  %v3547 = vpop.f32.mrb[0].mxu0
  %v3548 = vpop.f32.mrb[0].mxu0
  %v3549 = vadd.f32 %v3340, %v3548
  %v3550 = vpop.f32.mrb[0].mxu0
  %3551 = vmatprep.mubr.bf16.mxu0 %v1993
  %3552 = vmatmul.mubr.bf16.gmra.mrb[0].mxu0 %v1992
  %v3553 = vpop.f32.mrb[0].mxu0
  %v3554 = vadd.f32 %v3345, %v3553
  %v3555 = vpop.f32.mrb[0].mxu0
  %v3556 = vpop.f32.mrb[0].mxu0
  %v3557 = vadd.f32 %v3348, %v3556
  %v3558 = vpop.f32.mrb[0].mxu0
  %3559 = vmatprep.mubr.bf16.mxu0 %v2009
  %3560 = vmatmul.mubr.bf16.gmra.mrb[0].mxu0 %v2008
  %v3561 = vpop.f32.mrb[0].mxu0
  %v3562 = vadd.f32 %v3353, %v3561
  %v3563 = vpop.f32.mrb[0].mxu0
  %v3564 = vpop.f32.mrb[0].mxu0
  %v3565 = vadd.f32 %v3356, %v3564
  %v3566 = vpop.f32.mrb[0].mxu0
  %3567 = vmatprep.mubr.bf16.mxu0 %v2025
  %3568 = vmatmul.mubr.bf16.gmra.mrb[0].mxu0 %v2024
  %v3569 = vpop.f32.mrb[0].mxu0
  %v3570 = vadd.f32 %v3361, %v3569
  %v3571 = vpop.f32.mrb[0].mxu0
  %v3572 = vpop.f32.mrb[0].mxu0
  %v3573 = vadd.f32 %v3364, %v3572
  %v3574 = vpop.f32.mrb[0].mxu0
  %3575 = vdwg.mxu0
  %3576 = vmatprep.subr.bf16.mxu0 0
  %3577 = vmatpush1.bf16.msra.mxu0 %v2934
  %3578 = vmatprep.subr.bf16.mxu0 0
  %3579 = vmatpush1.bf16.msra.mxu0 %v2935
  %3580 = vmatprep.subr.bf16.mxu0 0
  %3581 = vmatpush1.bf16.msra.mxu0 %v2936
  %3582 = vmatprep.subr.bf16.mxu0 0
  %3583 = vmatpush1.bf16.msra.mxu0 %v2937
  %3584 = vmatprep.subr.bf16.mxu0 0
  %3585 = vmatpush1.bf16.msra.mxu0 %v2938
  %3586 = vmatprep.subr.bf16.mxu0 0
  %3587 = vmatpush1.bf16.msra.mxu0 %v2939
  %3588 = vmatprep.subr.bf16.mxu0 0
  %3589 = vmatpush1.bf16.msra.mxu0 %v2940
  %3590 = vmatprep.subr.bf16.mxu0 0
  %3591 = vmatpush1.bf16.msra.mxu0 %v2941
  %3592 = vmatprep.subr.bf16.mxu0 0
  %3593 = vmatpush1.bf16.msra.mxu0 %v2942
  %3594 = vmatprep.subr.bf16.mxu0 0
  %3595 = vmatpush1.bf16.msra.mxu0 %v2943
  %3596 = vmatprep.subr.bf16.mxu0 0
  %3597 = vmatpush1.bf16.msra.mxu0 %v2944
  %3598 = vmatprep.subr.bf16.mxu0 0
  %3599 = vmatpush1.bf16.msra.mxu0 %v2945
  %3600 = vmatprep.subr.bf16.mxu0 0
  %3601 = vmatpush1.bf16.msra.mxu0 %v2946
  %3602 = vmatprep.subr.bf16.mxu0 0
  %3603 = vmatpush1.bf16.msra.mxu0 %v2947
  %3604 = vmatprep.subr.bf16.mxu0 0
  %3605 = vmatpush1.bf16.msra.mxu0 %v2948
  %3606 = vmatprep.subr.bf16.mxu0 0
  %3607 = vmatpush1.bf16.msra.mxu0 %v2949
  %3608 = vmatprep.mubr.bf16.mxu0 %v1691
  %3609 = vmatmul.mubr.bf16.gmra.mrb[0].mxu0 %v1690
  %v3610 = vpop.f32.mrb[0].mxu0
  %v3611 = vadd.f32 %v3402, %v3610
  %v3612 = vpop.f32.mrb[0].mxu0
  %v3613 = vpop.f32.mrb[0].mxu0
  %v3614 = vadd.f32 %v3405, %v3613
  %v3615 = vpop.f32.mrb[0].mxu0
  %3616 = vmatprep.mubr.bf16.mxu0 %v1707
  %3617 = vmatmul.mubr.bf16.gmra.mrb[0].mxu0 %v1706
  %v3618 = vpop.f32.mrb[0].mxu0
  %v3619 = vadd.f32 %v3410, %v3618
  %v3620 = vpop.f32.mrb[0].mxu0
  %v3621 = vpop.f32.mrb[0].mxu0
  %v3622 = vadd.f32 %v3413, %v3621
  %v3623 = vpop.f32.mrb[0].mxu0
  %3624 = vmatprep.mubr.bf16.mxu0 %v1723
  %3625 = vmatmul.mubr.bf16.gmra.mrb[0].mxu0 %v1722
  %v3626 = vpop.f32.mrb[0].mxu0
  %v3627 = vadd.f32 %v3418, %v3626
  %v3628 = vpop.f32.mrb[0].mxu0
  %v3629 = vpop.f32.mrb[0].mxu0
  %v3630 = vadd.f32 %v3421, %v3629
  %v3631 = vpop.f32.mrb[0].mxu0
  %3632 = vmatprep.mubr.bf16.mxu0 %v1739
  %3633 = vmatmul.mubr.bf16.gmra.mrb[0].mxu0 %v1738
  %v3634 = vpop.f32.mrb[0].mxu0
  %v3635 = vadd.f32 %v3426, %v3634
  %v3636 = vpop.f32.mrb[0].mxu0
  %v3637 = vpop.f32.mrb[0].mxu0
  %v3638 = vadd.f32 %v3429, %v3637
  %v3639 = vpop.f32.mrb[0].mxu0
  %3640 = vmatprep.mubr.bf16.mxu0 %v1755
  %3641 = vmatmul.mubr.bf16.gmra.mrb[0].mxu0 %v1754
  %v3642 = vpop.f32.mrb[0].mxu0
  %v3643 = vadd.f32 %v3434, %v3642
  %v3644 = vpop.f32.mrb[0].mxu0
  %v3645 = vpop.f32.mrb[0].mxu0
  %v3646 = vadd.f32 %v3437, %v3645
  %v3647 = vpop.f32.mrb[0].mxu0
  %3648 = vmatprep.mubr.bf16.mxu0 %v1771
  %3649 = vmatmul.mubr.bf16.gmra.mrb[0].mxu0 %v1770
  %v3650 = vpop.f32.mrb[0].mxu0
  %v3651 = vadd.f32 %v3442, %v3650
  %v3652 = vpop.f32.mrb[0].mxu0
  %v3653 = vpop.f32.mrb[0].mxu0
  %v3654 = vadd.f32 %v3445, %v3653
  %v3655 = vpop.f32.mrb[0].mxu0
  %3656 = vmatprep.mubr.bf16.mxu0 %v1787
  %3657 = vmatmul.mubr.bf16.gmra.mrb[0].mxu0 %v1786
  %v3658 = vpop.f32.mrb[0].mxu0
  %v3659 = vadd.f32 %v3450, %v3658
  %v3660 = vpop.f32.mrb[0].mxu0
  %v3661 = vpop.f32.mrb[0].mxu0
  %v3662 = vadd.f32 %v3453, %v3661
  %v3663 = vpop.f32.mrb[0].mxu0
  %3664 = vmatprep.mubr.bf16.mxu0 %v1803
  %3665 = vmatmul.mubr.bf16.gmra.mrb[0].mxu0 %v1802
  %v3666 = vpop.f32.mrb[0].mxu0
  %v3667 = vadd.f32 %v3458, %v3666
  %v3668 = vpop.f32.mrb[0].mxu0
  %v3669 = vpop.f32.mrb[0].mxu0
  %v3670 = vadd.f32 %v3461, %v3669
  %v3671 = vpop.f32.mrb[0].mxu0
  %3672 = vmatprep.mubr.bf16.mxu0 %v1819
  %3673 = vmatmul.mubr.bf16.gmra.mrb[0].mxu0 %v1818
  %v3674 = vpop.f32.mrb[0].mxu0
  %v3675 = vadd.f32 %v3466, %v3674
  %v3676 = vpop.f32.mrb[0].mxu0
  %v3677 = vpop.f32.mrb[0].mxu0
  %v3678 = vadd.f32 %v3469, %v3677
  %v3679 = vpop.f32.mrb[0].mxu0
  %3680 = vmatprep.mubr.bf16.mxu0 %v1835
  %3681 = vmatmul.mubr.bf16.gmra.mrb[0].mxu0 %v1834
  %v3682 = vpop.f32.mrb[0].mxu0
  %v3683 = vadd.f32 %v3474, %v3682
  %v3684 = vpop.f32.mrb[0].mxu0
  %v3685 = vpop.f32.mrb[0].mxu0
  %v3686 = vadd.f32 %v3477, %v3685
  %v3687 = vpop.f32.mrb[0].mxu0
  %3688 = vmatprep.mubr.bf16.mxu0 %v1851
  %3689 = vmatmul.mubr.bf16.gmra.mrb[0].mxu0 %v1850
  %v3690 = vpop.f32.mrb[0].mxu0
  %v3691 = vadd.f32 %v3482, %v3690
  %v3692 = vpop.f32.mrb[0].mxu0
  %v3693 = vpop.f32.mrb[0].mxu0
  %v3694 = vadd.f32 %v3485, %v3693
  %v3695 = vpop.f32.mrb[0].mxu0
  %3696 = vmatprep.mubr.bf16.mxu0 %v1867
  %3697 = vmatmul.mubr.bf16.gmra.mrb[0].mxu0 %v1866
  %v3698 = vpop.f32.mrb[0].mxu0
  %v3699 = vadd.f32 %v3490, %v3698
  %v3700 = vpop.f32.mrb[0].mxu0
  %v3701 = vpop.f32.mrb[0].mxu0
  %v3702 = vadd.f32 %v3493, %v3701
  %v3703 = vpop.f32.mrb[0].mxu0
  %3704 = vmatprep.mubr.bf16.mxu0 %v1883
  %3705 = vmatmul.mubr.bf16.gmra.mrb[0].mxu0 %v1882
  %v3706 = vpop.f32.mrb[0].mxu0
  %v3707 = vadd.f32 %v3498, %v3706
  %v3708 = vpop.f32.mrb[0].mxu0
  %v3709 = vpop.f32.mrb[0].mxu0
  %v3710 = vadd.f32 %v3501, %v3709
  %v3711 = vpop.f32.mrb[0].mxu0
  %3712 = vmatprep.mubr.bf16.mxu0 %v1899
  %3713 = vmatmul.mubr.bf16.gmra.mrb[0].mxu0 %v1898
  %v3714 = vpop.f32.mrb[0].mxu0
  %v3715 = vadd.f32 %v3506, %v3714
  %v3716 = vpop.f32.mrb[0].mxu0
  %v3717 = vpop.f32.mrb[0].mxu0
  %v3718 = vadd.f32 %v3509, %v3717
  %v3719 = vpop.f32.mrb[0].mxu0
  %3720 = vmatprep.mubr.bf16.mxu0 %v1915
  %3721 = vmatmul.mubr.bf16.gmra.mrb[0].mxu0 %v1914
  %v3722 = vpop.f32.mrb[0].mxu0
  %v3723 = vadd.f32 %v3514, %v3722
  %v3724 = vpop.f32.mrb[0].mxu0
  %v3725 = vpop.f32.mrb[0].mxu0
  %v3726 = vadd.f32 %v3517, %v3725
  %v3727 = vpop.f32.mrb[0].mxu0
  %3728 = vmatprep.mubr.bf16.mxu0 %v1931
  %3729 = vmatmul.mubr.bf16.gmra.mrb[0].mxu0 %v1930
  %v3730 = vpop.f32.mrb[0].mxu0
  %v3731 = vadd.f32 %v3522, %v3730
  %v3732 = vpop.f32.mrb[0].mxu0
  %v3733 = vpop.f32.mrb[0].mxu0
  %v3734 = vadd.f32 %v3525, %v3733
  %v3735 = vpop.f32.mrb[0].mxu0
  %3736 = vmatprep.mubr.bf16.mxu0 %v1947
  %3737 = vmatmul.mubr.bf16.gmra.mrb[0].mxu0 %v1946
  %v3738 = vpop.f32.mrb[0].mxu0
  %v3739 = vadd.f32 %v3530, %v3738
  %v3740 = vpop.f32.mrb[0].mxu0
  %v3741 = vpop.f32.mrb[0].mxu0
  %v3742 = vadd.f32 %v3533, %v3741
  %v3743 = vpop.f32.mrb[0].mxu0
  %3744 = vmatprep.mubr.bf16.mxu0 %v1963
  %3745 = vmatmul.mubr.bf16.gmra.mrb[0].mxu0 %v1962
  %v3746 = vpop.f32.mrb[0].mxu0
  %v3747 = vadd.f32 %v3538, %v3746
  %v3748 = vpop.f32.mrb[0].mxu0
  %v3749 = vpop.f32.mrb[0].mxu0
  %v3750 = vadd.f32 %v3541, %v3749
  %v3751 = vpop.f32.mrb[0].mxu0
  %3752 = vmatprep.mubr.bf16.mxu0 %v1979
  %3753 = vmatmul.mubr.bf16.gmra.mrb[0].mxu0 %v1978
  %v3754 = vpop.f32.mrb[0].mxu0
  %v3755 = vadd.f32 %v3546, %v3754
  %v3756 = vpop.f32.mrb[0].mxu0
  %v3757 = vpop.f32.mrb[0].mxu0
  %v3758 = vadd.f32 %v3549, %v3757
  %v3759 = vpop.f32.mrb[0].mxu0
  %3760 = vmatprep.mubr.bf16.mxu0 %v1995
  %3761 = vmatmul.mubr.bf16.gmra.mrb[0].mxu0 %v1994
  %v3762 = vpop.f32.mrb[0].mxu0
  %v3763 = vadd.f32 %v3554, %v3762
  %v3764 = vpop.f32.mrb[0].mxu0
  %v3765 = vpop.f32.mrb[0].mxu0
  %v3766 = vadd.f32 %v3557, %v3765
  %v3767 = vpop.f32.mrb[0].mxu0
  %3768 = vmatprep.mubr.bf16.mxu0 %v2011
  %3769 = vmatmul.mubr.bf16.gmra.mrb[0].mxu0 %v2010
  %v3770 = vpop.f32.mrb[0].mxu0
  %v3771 = vadd.f32 %v3562, %v3770
  %v3772 = vpop.f32.mrb[0].mxu0
  %v3773 = vpop.f32.mrb[0].mxu0
  %v3774 = vadd.f32 %v3565, %v3773
  %v3775 = vpop.f32.mrb[0].mxu0
  %3776 = vmatprep.mubr.bf16.mxu0 %v2027
  %3777 = vmatmul.mubr.bf16.gmra.mrb[0].mxu0 %v2026
  %v3778 = vpop.f32.mrb[0].mxu0
  %v3779 = vadd.f32 %v3570, %v3778
  %v3780 = vpop.f32.mrb[0].mxu0
  %v3781 = vpop.f32.mrb[0].mxu0
  %v3782 = vadd.f32 %v3573, %v3781
  %v3783 = vpop.f32.mrb[0].mxu0
  %3784 = vdwg.mxu0
  %3785 = vmatprep.subr.bf16.mxu0 0
  %3786 = vmatpush1.bf16.msra.mxu0 %v2950
  %3787 = vmatprep.subr.bf16.mxu0 0
  %3788 = vmatpush1.bf16.msra.mxu0 %v2951
  %3789 = vmatprep.subr.bf16.mxu0 0
  %3790 = vmatpush1.bf16.msra.mxu0 %v2952
  %3791 = vmatprep.subr.bf16.mxu0 0
  %3792 = vmatpush1.bf16.msra.mxu0 %v2953
  %3793 = vmatprep.subr.bf16.mxu0 0
  %3794 = vmatpush1.bf16.msra.mxu0 %v2954
  %3795 = vmatprep.subr.bf16.mxu0 0
  %3796 = vmatpush1.bf16.msra.mxu0 %v2955
  %3797 = vmatprep.subr.bf16.mxu0 0
  %3798 = vmatpush1.bf16.msra.mxu0 %v2956
  %3799 = vmatprep.subr.bf16.mxu0 0
  %3800 = vmatpush1.bf16.msra.mxu0 %v2957
  %3801 = vmatprep.subr.bf16.mxu0 0
  %3802 = vmatpush1.bf16.msra.mxu0 %v2958
  %3803 = vmatprep.subr.bf16.mxu0 0
  %3804 = vmatpush1.bf16.msra.mxu0 %v2959
  %3805 = vmatprep.subr.bf16.mxu0 0
  %3806 = vmatpush1.bf16.msra.mxu0 %v2960
  %3807 = vmatprep.subr.bf16.mxu0 0
  %3808 = vmatpush1.bf16.msra.mxu0 %v2961
  %3809 = vmatprep.subr.bf16.mxu0 0
  %3810 = vmatpush1.bf16.msra.mxu0 %v2962
  %3811 = vmatprep.subr.bf16.mxu0 0
  %3812 = vmatpush1.bf16.msra.mxu0 %v2963
  %3813 = vmatprep.subr.bf16.mxu0 0
  %3814 = vmatpush1.bf16.msra.mxu0 %v2964
  %3815 = vmatprep.subr.bf16.mxu0 0
  %3816 = vmatpush1.bf16.msra.mxu0 %v2965
  %3817 = vmatprep.mubr.bf16.mxu0 %v1693
  %3818 = vmatmul.mubr.bf16.gmra.mrb[0].mxu0 %v1692
  %v3819 = vpop.f32.mrb[0].mxu0
  %v3820 = vadd.f32 %v3611, %v3819
  %v3821 = vpop.f32.mrb[0].mxu0
  %v3822 = vpop.f32.mrb[0].mxu0
  %v3823 = vadd.f32 %v3614, %v3822
  %v3824 = vpop.f32.mrb[0].mxu0
  %3825 = vmatprep.mubr.bf16.mxu0 %v1709
  %3826 = vmatmul.mubr.bf16.gmra.mrb[0].mxu0 %v1708
  %v3827 = vpop.f32.mrb[0].mxu0
  %v3828 = vadd.f32 %v3619, %v3827
  %v3829 = vpop.f32.mrb[0].mxu0
  %v3830 = vpop.f32.mrb[0].mxu0
  %v3831 = vadd.f32 %v3622, %v3830
  %v3832 = vpop.f32.mrb[0].mxu0
  %3833 = vmatprep.mubr.bf16.mxu0 %v1725
  %3834 = vmatmul.mubr.bf16.gmra.mrb[0].mxu0 %v1724
  %v3835 = vpop.f32.mrb[0].mxu0
  %v3836 = vadd.f32 %v3627, %v3835
  %v3837 = vpop.f32.mrb[0].mxu0
  %v3838 = vpop.f32.mrb[0].mxu0
  %v3839 = vadd.f32 %v3630, %v3838
  %v3840 = vpop.f32.mrb[0].mxu0
  %3841 = vmatprep.mubr.bf16.mxu0 %v1741
  %3842 = vmatmul.mubr.bf16.gmra.mrb[0].mxu0 %v1740
  %v3843 = vpop.f32.mrb[0].mxu0
  %v3844 = vadd.f32 %v3635, %v3843
  %v3845 = vpop.f32.mrb[0].mxu0
  %v3846 = vpop.f32.mrb[0].mxu0
  %v3847 = vadd.f32 %v3638, %v3846
  %v3848 = vpop.f32.mrb[0].mxu0
  %3849 = vmatprep.mubr.bf16.mxu0 %v1757
  %3850 = vmatmul.mubr.bf16.gmra.mrb[0].mxu0 %v1756
  %v3851 = vpop.f32.mrb[0].mxu0
  %v3852 = vadd.f32 %v3643, %v3851
  %v3853 = vpop.f32.mrb[0].mxu0
  %v3854 = vpop.f32.mrb[0].mxu0
  %v3855 = vadd.f32 %v3646, %v3854
  %v3856 = vpop.f32.mrb[0].mxu0
  %3857 = vmatprep.mubr.bf16.mxu0 %v1773
  %3858 = vmatmul.mubr.bf16.gmra.mrb[0].mxu0 %v1772
  %v3859 = vpop.f32.mrb[0].mxu0
  %v3860 = vadd.f32 %v3651, %v3859
  %v3861 = vpop.f32.mrb[0].mxu0
  %v3862 = vpop.f32.mrb[0].mxu0
  %v3863 = vadd.f32 %v3654, %v3862
  %v3864 = vpop.f32.mrb[0].mxu0
  %3865 = vmatprep.mubr.bf16.mxu0 %v1789
  %3866 = vmatmul.mubr.bf16.gmra.mrb[0].mxu0 %v1788
  %v3867 = vpop.f32.mrb[0].mxu0
  %v3868 = vadd.f32 %v3659, %v3867
  %v3869 = vpop.f32.mrb[0].mxu0
  %v3870 = vpop.f32.mrb[0].mxu0
  %v3871 = vadd.f32 %v3662, %v3870
  %v3872 = vpop.f32.mrb[0].mxu0
  %3873 = vmatprep.mubr.bf16.mxu0 %v1805
  %3874 = vmatmul.mubr.bf16.gmra.mrb[0].mxu0 %v1804
  %v3875 = vpop.f32.mrb[0].mxu0
  %v3876 = vadd.f32 %v3667, %v3875
  %v3877 = vpop.f32.mrb[0].mxu0
  %v3878 = vpop.f32.mrb[0].mxu0
  %v3879 = vadd.f32 %v3670, %v3878
  %v3880 = vpop.f32.mrb[0].mxu0
  %3881 = vmatprep.mubr.bf16.mxu0 %v1821
  %3882 = vmatmul.mubr.bf16.gmra.mrb[0].mxu0 %v1820
  %v3883 = vpop.f32.mrb[0].mxu0
  %v3884 = vadd.f32 %v3675, %v3883
  %v3885 = vpop.f32.mrb[0].mxu0
  %v3886 = vpop.f32.mrb[0].mxu0
  %v3887 = vadd.f32 %v3678, %v3886
  %v3888 = vpop.f32.mrb[0].mxu0
  %3889 = vmatprep.mubr.bf16.mxu0 %v1837
  %3890 = vmatmul.mubr.bf16.gmra.mrb[0].mxu0 %v1836
  %v3891 = vpop.f32.mrb[0].mxu0
  %v3892 = vadd.f32 %v3683, %v3891
  %v3893 = vpop.f32.mrb[0].mxu0
  %v3894 = vpop.f32.mrb[0].mxu0
  %v3895 = vadd.f32 %v3686, %v3894
  %v3896 = vpop.f32.mrb[0].mxu0
  %3897 = vmatprep.mubr.bf16.mxu0 %v1853
  %3898 = vmatmul.mubr.bf16.gmra.mrb[0].mxu0 %v1852
  %v3899 = vpop.f32.mrb[0].mxu0
  %v3900 = vadd.f32 %v3691, %v3899
  %v3901 = vpop.f32.mrb[0].mxu0
  %v3902 = vpop.f32.mrb[0].mxu0
  %v3903 = vadd.f32 %v3694, %v3902
  %v3904 = vpop.f32.mrb[0].mxu0
  %3905 = vmatprep.mubr.bf16.mxu0 %v1869
  %3906 = vmatmul.mubr.bf16.gmra.mrb[0].mxu0 %v1868
  %v3907 = vpop.f32.mrb[0].mxu0
  %v3908 = vadd.f32 %v3699, %v3907
  %v3909 = vpop.f32.mrb[0].mxu0
  %v3910 = vpop.f32.mrb[0].mxu0
  %v3911 = vadd.f32 %v3702, %v3910
  %v3912 = vpop.f32.mrb[0].mxu0
  %3913 = vmatprep.mubr.bf16.mxu0 %v1885
  %3914 = vmatmul.mubr.bf16.gmra.mrb[0].mxu0 %v1884
  %v3915 = vpop.f32.mrb[0].mxu0
  %v3916 = vadd.f32 %v3707, %v3915
  %v3917 = vpop.f32.mrb[0].mxu0
  %v3918 = vpop.f32.mrb[0].mxu0
  %v3919 = vadd.f32 %v3710, %v3918
  %v3920 = vpop.f32.mrb[0].mxu0
  %3921 = vmatprep.mubr.bf16.mxu0 %v1901
  %3922 = vmatmul.mubr.bf16.gmra.mrb[0].mxu0 %v1900
  %v3923 = vpop.f32.mrb[0].mxu0
  %v3924 = vadd.f32 %v3715, %v3923
  %v3925 = vpop.f32.mrb[0].mxu0
  %v3926 = vpop.f32.mrb[0].mxu0
  %v3927 = vadd.f32 %v3718, %v3926
  %v3928 = vpop.f32.mrb[0].mxu0
  %3929 = vmatprep.mubr.bf16.mxu0 %v1917
  %3930 = vmatmul.mubr.bf16.gmra.mrb[0].mxu0 %v1916
  %v3931 = vpop.f32.mrb[0].mxu0
  %v3932 = vadd.f32 %v3723, %v3931
  %v3933 = vpop.f32.mrb[0].mxu0
  %v3934 = vpop.f32.mrb[0].mxu0
  %v3935 = vadd.f32 %v3726, %v3934
  %v3936 = vpop.f32.mrb[0].mxu0
  %3937 = vmatprep.mubr.bf16.mxu0 %v1933
  %3938 = vmatmul.mubr.bf16.gmra.mrb[0].mxu0 %v1932
  %v3939 = vpop.f32.mrb[0].mxu0
  %v3940 = vadd.f32 %v3731, %v3939
  %v3941 = vpop.f32.mrb[0].mxu0
  %v3942 = vpop.f32.mrb[0].mxu0
  %v3943 = vadd.f32 %v3734, %v3942
  %v3944 = vpop.f32.mrb[0].mxu0
  %3945 = vmatprep.mubr.bf16.mxu0 %v1949
  %3946 = vmatmul.mubr.bf16.gmra.mrb[0].mxu0 %v1948
  %v3947 = vpop.f32.mrb[0].mxu0
  %v3948 = vadd.f32 %v3739, %v3947
  %v3949 = vpop.f32.mrb[0].mxu0
  %v3950 = vpop.f32.mrb[0].mxu0
  %v3951 = vadd.f32 %v3742, %v3950
  %v3952 = vpop.f32.mrb[0].mxu0
  %3953 = vmatprep.mubr.bf16.mxu0 %v1965
  %3954 = vmatmul.mubr.bf16.gmra.mrb[0].mxu0 %v1964
  %v3955 = vpop.f32.mrb[0].mxu0
  %v3956 = vadd.f32 %v3747, %v3955
  %v3957 = vpop.f32.mrb[0].mxu0
  %v3958 = vpop.f32.mrb[0].mxu0
  %v3959 = vadd.f32 %v3750, %v3958
  %v3960 = vpop.f32.mrb[0].mxu0
  %3961 = vmatprep.mubr.bf16.mxu0 %v1981
  %3962 = vmatmul.mubr.bf16.gmra.mrb[0].mxu0 %v1980
  %v3963 = vpop.f32.mrb[0].mxu0
  %v3964 = vadd.f32 %v3755, %v3963
  %v3965 = vpop.f32.mrb[0].mxu0
  %v3966 = vpop.f32.mrb[0].mxu0
  %v3967 = vadd.f32 %v3758, %v3966
  %v3968 = vpop.f32.mrb[0].mxu0
  %3969 = vmatprep.mubr.bf16.mxu0 %v1997
  %3970 = vmatmul.mubr.bf16.gmra.mrb[0].mxu0 %v1996
  %v3971 = vpop.f32.mrb[0].mxu0
  %v3972 = vadd.f32 %v3763, %v3971
  %v3973 = vpop.f32.mrb[0].mxu0
  %v3974 = vpop.f32.mrb[0].mxu0
  %v3975 = vadd.f32 %v3766, %v3974
  %v3976 = vpop.f32.mrb[0].mxu0
  %3977 = vmatprep.mubr.bf16.mxu0 %v2013
  %3978 = vmatmul.mubr.bf16.gmra.mrb[0].mxu0 %v2012
  %v3979 = vpop.f32.mrb[0].mxu0
  %v3980 = vadd.f32 %v3771, %v3979
  %v3981 = vpop.f32.mrb[0].mxu0
  %v3982 = vpop.f32.mrb[0].mxu0
  %v3983 = vadd.f32 %v3774, %v3982
  %v3984 = vpop.f32.mrb[0].mxu0
  %3985 = vmatprep.mubr.bf16.mxu0 %v2029
  %3986 = vmatmul.mubr.bf16.gmra.mrb[0].mxu0 %v2028
  %v3987 = vpop.f32.mrb[0].mxu0
  %v3988 = vadd.f32 %v3779, %v3987
  %v3989 = vpop.f32.mrb[0].mxu0
  %v3990 = vpop.f32.mrb[0].mxu0
  %v3991 = vadd.f32 %v3782, %v3990
  %v3992 = vpop.f32.mrb[0].mxu0
  %3993 = vdwg.mxu0
  %3994 = vmatprep.subr.bf16.mxu0 0
  %3995 = vmatpush1.bf16.msra.mxu0 %v2966
  %3996 = vmatprep.subr.bf16.mxu0 0
  %3997 = vmatpush1.bf16.msra.mxu0 %v2967
  %3998 = vmatprep.subr.bf16.mxu0 0
  %3999 = vmatpush1.bf16.msra.mxu0 %v2968
  %4000 = vmatprep.subr.bf16.mxu0 0
  %4001 = vmatpush1.bf16.msra.mxu0 %v2969
  %4002 = vmatprep.subr.bf16.mxu0 0
  %4003 = vmatpush1.bf16.msra.mxu0 %v2970
  %4004 = vmatprep.subr.bf16.mxu0 0
  %4005 = vmatpush1.bf16.msra.mxu0 %v2971
  %4006 = vmatprep.subr.bf16.mxu0 0
  %4007 = vmatpush1.bf16.msra.mxu0 %v2972
  %4008 = vmatprep.subr.bf16.mxu0 0
  %4009 = vmatpush1.bf16.msra.mxu0 %v2973
  %4010 = vmatprep.subr.bf16.mxu0 0
  %4011 = vmatpush1.bf16.msra.mxu0 %v2974
  %4012 = vmatprep.subr.bf16.mxu0 0
  %4013 = vmatpush1.bf16.msra.mxu0 %v2975
  %4014 = vmatprep.subr.bf16.mxu0 0
  %4015 = vmatpush1.bf16.msra.mxu0 %v2976
  %4016 = vmatprep.subr.bf16.mxu0 0
  %4017 = vmatpush1.bf16.msra.mxu0 %v2977
  %4018 = vmatprep.subr.bf16.mxu0 0
  %4019 = vmatpush1.bf16.msra.mxu0 %v2978
  %4020 = vmatprep.subr.bf16.mxu0 0
  %4021 = vmatpush1.bf16.msra.mxu0 %v2979
  %4022 = vmatprep.subr.bf16.mxu0 0
  %4023 = vmatpush1.bf16.msra.mxu0 %v2980
  %4024 = vmatprep.subr.bf16.mxu0 0
  %4025 = vmatpush1.bf16.msra.mxu0 %v2981
  %4026 = vmatprep.mubr.bf16.mxu0 %v1695
  %4027 = vmatmul.mubr.bf16.gmra.mrb[0].mxu0 %v1694
  %v4028 = vpop.f32.mrb[0].mxu0
  %v4029 = vadd.f32 %v3820, %v4028
  %v4030 = vpop.f32.mrb[0].mxu0
  %v4031 = vpop.f32.mrb[0].mxu0
  %v4032 = vadd.f32 %v3823, %v4031
  %v4033 = vpop.f32.mrb[0].mxu0
  %4034 = vmatprep.mubr.bf16.mxu0 %v1711
  %4035 = vmatmul.mubr.bf16.gmra.mrb[0].mxu0 %v1710
  %v4036 = vpop.f32.mrb[0].mxu0
  %v4037 = vadd.f32 %v3828, %v4036
  %v4038 = vpop.f32.mrb[0].mxu0
  %v4039 = vpop.f32.mrb[0].mxu0
  %v4040 = vadd.f32 %v3831, %v4039
  %v4041 = vpop.f32.mrb[0].mxu0
  %4042 = vmatprep.mubr.bf16.mxu0 %v1727
  %4043 = vmatmul.mubr.bf16.gmra.mrb[0].mxu0 %v1726
  %v4044 = vpop.f32.mrb[0].mxu0
  %v4045 = vadd.f32 %v3836, %v4044
  %v4046 = vpop.f32.mrb[0].mxu0
  %v4047 = vpop.f32.mrb[0].mxu0
  %v4048 = vadd.f32 %v3839, %v4047
  %v4049 = vpop.f32.mrb[0].mxu0
  %4050 = vmatprep.mubr.bf16.mxu0 %v1743
  %4051 = vmatmul.mubr.bf16.gmra.mrb[0].mxu0 %v1742
  %v4052 = vpop.f32.mrb[0].mxu0
  %v4053 = vadd.f32 %v3844, %v4052
  %v4054 = vpop.f32.mrb[0].mxu0
  %v4055 = vpop.f32.mrb[0].mxu0
  %v4056 = vadd.f32 %v3847, %v4055
  %v4057 = vpop.f32.mrb[0].mxu0
  %4058 = vmatprep.mubr.bf16.mxu0 %v1759
  %4059 = vmatmul.mubr.bf16.gmra.mrb[0].mxu0 %v1758
  %v4060 = vpop.f32.mrb[0].mxu0
  %v4061 = vadd.f32 %v3852, %v4060
  %v4062 = vpop.f32.mrb[0].mxu0
  %v4063 = vpop.f32.mrb[0].mxu0
  %v4064 = vadd.f32 %v3855, %v4063
  %v4065 = vpop.f32.mrb[0].mxu0
  %4066 = vmatprep.mubr.bf16.mxu0 %v1775
  %4067 = vmatmul.mubr.bf16.gmra.mrb[0].mxu0 %v1774
  %v4068 = vpop.f32.mrb[0].mxu0
  %v4069 = vadd.f32 %v3860, %v4068
  %v4070 = vpop.f32.mrb[0].mxu0
  %v4071 = vpop.f32.mrb[0].mxu0
  %v4072 = vadd.f32 %v3863, %v4071
  %v4073 = vpop.f32.mrb[0].mxu0
  %4074 = vmatprep.mubr.bf16.mxu0 %v1791
  %4075 = vmatmul.mubr.bf16.gmra.mrb[0].mxu0 %v1790
  %v4076 = vpop.f32.mrb[0].mxu0
  %v4077 = vadd.f32 %v3868, %v4076
  %v4078 = vpop.f32.mrb[0].mxu0
  %v4079 = vpop.f32.mrb[0].mxu0
  %v4080 = vadd.f32 %v3871, %v4079
  %v4081 = vpop.f32.mrb[0].mxu0
  %4082 = vmatprep.mubr.bf16.mxu0 %v1807
  %4083 = vmatmul.mubr.bf16.gmra.mrb[0].mxu0 %v1806
  %v4084 = vpop.f32.mrb[0].mxu0
  %v4085 = vadd.f32 %v3876, %v4084
  %v4086 = vpop.f32.mrb[0].mxu0
  %v4087 = vpop.f32.mrb[0].mxu0
  %v4088 = vadd.f32 %v3879, %v4087
  %v4089 = vpop.f32.mrb[0].mxu0
  %4090 = vmatprep.mubr.bf16.mxu0 %v1823
  %4091 = vmatmul.mubr.bf16.gmra.mrb[0].mxu0 %v1822
  %v4092 = vpop.f32.mrb[0].mxu0
  %v4093 = vadd.f32 %v3884, %v4092
  %v4094 = vpop.f32.mrb[0].mxu0
  %v4095 = vpop.f32.mrb[0].mxu0
  %v4096 = vadd.f32 %v3887, %v4095
  %v4097 = vpop.f32.mrb[0].mxu0
  %4098 = vmatprep.mubr.bf16.mxu0 %v1839
  %4099 = vmatmul.mubr.bf16.gmra.mrb[0].mxu0 %v1838
  %v4100 = vpop.f32.mrb[0].mxu0
  %v4101 = vadd.f32 %v3892, %v4100
  %v4102 = vpop.f32.mrb[0].mxu0
  %v4103 = vpop.f32.mrb[0].mxu0
  %v4104 = vadd.f32 %v3895, %v4103
  %v4105 = vpop.f32.mrb[0].mxu0
  %4106 = vmatprep.mubr.bf16.mxu0 %v1855
  %4107 = vmatmul.mubr.bf16.gmra.mrb[0].mxu0 %v1854
  %v4108 = vpop.f32.mrb[0].mxu0
  %v4109 = vadd.f32 %v3900, %v4108
  %v4110 = vpop.f32.mrb[0].mxu0
  %v4111 = vpop.f32.mrb[0].mxu0
  %v4112 = vadd.f32 %v3903, %v4111
  %v4113 = vpop.f32.mrb[0].mxu0
  %4114 = vmatprep.mubr.bf16.mxu0 %v1871
  %4115 = vmatmul.mubr.bf16.gmra.mrb[0].mxu0 %v1870
  %v4116 = vpop.f32.mrb[0].mxu0
  %v4117 = vadd.f32 %v3908, %v4116
  %v4118 = vpop.f32.mrb[0].mxu0
  %v4119 = vpop.f32.mrb[0].mxu0
  %v4120 = vadd.f32 %v3911, %v4119
  %v4121 = vpop.f32.mrb[0].mxu0
  %4122 = vmatprep.mubr.bf16.mxu0 %v1887
  %4123 = vmatmul.mubr.bf16.gmra.mrb[0].mxu0 %v1886
  %v4124 = vpop.f32.mrb[0].mxu0
  %v4125 = vadd.f32 %v3916, %v4124
  %v4126 = vpop.f32.mrb[0].mxu0
  %v4127 = vpop.f32.mrb[0].mxu0
  %v4128 = vadd.f32 %v3919, %v4127
  %v4129 = vpop.f32.mrb[0].mxu0
  %4130 = vmatprep.mubr.bf16.mxu0 %v1903
  %4131 = vmatmul.mubr.bf16.gmra.mrb[0].mxu0 %v1902
  %v4132 = vpop.f32.mrb[0].mxu0
  %v4133 = vadd.f32 %v3924, %v4132
  %v4134 = vpop.f32.mrb[0].mxu0
  %v4135 = vpop.f32.mrb[0].mxu0
  %v4136 = vadd.f32 %v3927, %v4135
  %v4137 = vpop.f32.mrb[0].mxu0
  %4138 = vmatprep.mubr.bf16.mxu0 %v1919
  %4139 = vmatmul.mubr.bf16.gmra.mrb[0].mxu0 %v1918
  %v4140 = vpop.f32.mrb[0].mxu0
  %v4141 = vadd.f32 %v3932, %v4140
  %v4142 = vpop.f32.mrb[0].mxu0
  %v4143 = vpop.f32.mrb[0].mxu0
  %v4144 = vadd.f32 %v3935, %v4143
  %v4145 = vpop.f32.mrb[0].mxu0
  %4146 = vmatprep.mubr.bf16.mxu0 %v1935
  %4147 = vmatmul.mubr.bf16.gmra.mrb[0].mxu0 %v1934
  %v4148 = vpop.f32.mrb[0].mxu0
  %v4149 = vadd.f32 %v3940, %v4148
  %v4150 = vpop.f32.mrb[0].mxu0
  %v4151 = vpop.f32.mrb[0].mxu0
  %v4152 = vadd.f32 %v3943, %v4151
  %v4153 = vpop.f32.mrb[0].mxu0
  %4154 = vmatprep.mubr.bf16.mxu0 %v1951
  %4155 = vmatmul.mubr.bf16.gmra.mrb[0].mxu0 %v1950
  %v4156 = vpop.f32.mrb[0].mxu0
  %v4157 = vadd.f32 %v3948, %v4156
  %v4158 = vpop.f32.mrb[0].mxu0
  %v4159 = vpop.f32.mrb[0].mxu0
  %v4160 = vadd.f32 %v3951, %v4159
  %v4161 = vpop.f32.mrb[0].mxu0
  %4162 = vmatprep.mubr.bf16.mxu0 %v1967
  %4163 = vmatmul.mubr.bf16.gmra.mrb[0].mxu0 %v1966
  %v4164 = vpop.f32.mrb[0].mxu0
  %v4165 = vadd.f32 %v3956, %v4164
  %v4166 = vpop.f32.mrb[0].mxu0
  %v4167 = vpop.f32.mrb[0].mxu0
  %v4168 = vadd.f32 %v3959, %v4167
  %v4169 = vpop.f32.mrb[0].mxu0
  %4170 = vmatprep.mubr.bf16.mxu0 %v1983
  %4171 = vmatmul.mubr.bf16.gmra.mrb[0].mxu0 %v1982
  %v4172 = vpop.f32.mrb[0].mxu0
  %v4173 = vadd.f32 %v3964, %v4172
  %v4174 = vpop.f32.mrb[0].mxu0
  %v4175 = vpop.f32.mrb[0].mxu0
  %v4176 = vadd.f32 %v3967, %v4175
  %v4177 = vpop.f32.mrb[0].mxu0
  %4178 = vmatprep.mubr.bf16.mxu0 %v1999
  %4179 = vmatmul.mubr.bf16.gmra.mrb[0].mxu0 %v1998
  %v4180 = vpop.f32.mrb[0].mxu0
  %v4181 = vadd.f32 %v3972, %v4180
  %v4182 = vpop.f32.mrb[0].mxu0
  %v4183 = vpop.f32.mrb[0].mxu0
  %v4184 = vadd.f32 %v3975, %v4183
  %v4185 = vpop.f32.mrb[0].mxu0
  %4186 = vmatprep.mubr.bf16.mxu0 %v2015
  %4187 = vmatmul.mubr.bf16.gmra.mrb[0].mxu0 %v2014
  %v4188 = vpop.f32.mrb[0].mxu0
  %v4189 = vadd.f32 %v3980, %v4188
  %v4190 = vpop.f32.mrb[0].mxu0
  %v4191 = vpop.f32.mrb[0].mxu0
  %v4192 = vadd.f32 %v3983, %v4191
  %v4193 = vpop.f32.mrb[0].mxu0
  %4194 = vmatprep.mubr.bf16.mxu0 %v2031
  %4195 = vmatmul.mubr.bf16.gmra.mrb[0].mxu0 %v2030
  %v4196 = vpop.f32.mrb[0].mxu0
  %v4197 = vadd.f32 %v3988, %v4196
  %v4198 = vpop.f32.mrb[0].mxu0
  %v4199 = vpop.f32.mrb[0].mxu0
  %v4200 = vadd.f32 %v3991, %v4199
  %v4201 = vpop.f32.mrb[0].mxu0
  %4202 = vdwg.mxu0
  %4203 = vmatprep.subr.bf16.mxu0 0
  %4204 = vmatpush1.bf16.msra.mxu0 %v2982
  %4205 = vmatprep.subr.bf16.mxu0 0
  %4206 = vmatpush1.bf16.msra.mxu0 %v2983
  %4207 = vmatprep.subr.bf16.mxu0 0
  %4208 = vmatpush1.bf16.msra.mxu0 %v2984
  %4209 = vmatprep.subr.bf16.mxu0 0
  %4210 = vmatpush1.bf16.msra.mxu0 %v2985
  %4211 = vmatprep.subr.bf16.mxu0 0
  %4212 = vmatpush1.bf16.msra.mxu0 %v2986
  %4213 = vmatprep.subr.bf16.mxu0 0
  %4214 = vmatpush1.bf16.msra.mxu0 %v2987
  %4215 = vmatprep.subr.bf16.mxu0 0
  %4216 = vmatpush1.bf16.msra.mxu0 %v2988
  %4217 = vmatprep.subr.bf16.mxu0 0
  %4218 = vmatpush1.bf16.msra.mxu0 %v2989
  %4219 = vmatprep.subr.bf16.mxu0 0
  %4220 = vmatpush1.bf16.msra.mxu0 %v2990
  %4221 = vmatprep.subr.bf16.mxu0 0
  %4222 = vmatpush1.bf16.msra.mxu0 %v2991
  %4223 = vmatprep.subr.bf16.mxu0 0
  %4224 = vmatpush1.bf16.msra.mxu0 %v2992
  %4225 = vmatprep.subr.bf16.mxu0 0
  %4226 = vmatpush1.bf16.msra.mxu0 %v2993
  %4227 = vmatprep.subr.bf16.mxu0 0
  %4228 = vmatpush1.bf16.msra.mxu0 %v2994
  %4229 = vmatprep.subr.bf16.mxu0 0
  %4230 = vmatpush1.bf16.msra.mxu0 %v2995
  %4231 = vmatprep.subr.bf16.mxu0 0
  %4232 = vmatpush1.bf16.msra.mxu0 %v2996
  %4233 = vmatprep.subr.bf16.mxu0 0
  %4234 = vmatpush1.bf16.msra.mxu0 %v2997
  %4235 = vmatprep.mubr.bf16.mxu0 %v1697
  %4236 = vmatmul.mubr.bf16.gmra.mrb[0].mxu0 %v1696
  %v4237 = vpop.f32.mrb[0].mxu0
  %v4238 = vadd.f32 %v4029, %v4237
  %v4239 = vpop.f32.mrb[0].mxu0
  %v4240 = vpop.f32.mrb[0].mxu0
  %v4241 = vadd.f32 %v4032, %v4240
  %v4242 = vpop.f32.mrb[0].mxu0
  %4243 = vmatprep.mubr.bf16.mxu0 %v1713
  %4244 = vmatmul.mubr.bf16.gmra.mrb[0].mxu0 %v1712
  %v4245 = vpop.f32.mrb[0].mxu0
  %v4246 = vadd.f32 %v4037, %v4245
  %v4247 = vpop.f32.mrb[0].mxu0
  %v4248 = vpop.f32.mrb[0].mxu0
  %v4249 = vadd.f32 %v4040, %v4248
  %v4250 = vpop.f32.mrb[0].mxu0
  %4251 = vmatprep.mubr.bf16.mxu0 %v1729
  %4252 = vmatmul.mubr.bf16.gmra.mrb[0].mxu0 %v1728
  %v4253 = vpop.f32.mrb[0].mxu0
  %v4254 = vadd.f32 %v4045, %v4253
  %v4255 = vpop.f32.mrb[0].mxu0
  %v4256 = vpop.f32.mrb[0].mxu0
  %v4257 = vadd.f32 %v4048, %v4256
  %v4258 = vpop.f32.mrb[0].mxu0
  %4259 = vmatprep.mubr.bf16.mxu0 %v1745
  %4260 = vmatmul.mubr.bf16.gmra.mrb[0].mxu0 %v1744
  %v4261 = vpop.f32.mrb[0].mxu0
  %v4262 = vadd.f32 %v4053, %v4261
  %v4263 = vpop.f32.mrb[0].mxu0
  %v4264 = vpop.f32.mrb[0].mxu0
  %v4265 = vadd.f32 %v4056, %v4264
  %v4266 = vpop.f32.mrb[0].mxu0
  %4267 = vmatprep.mubr.bf16.mxu0 %v1761
  %4268 = vmatmul.mubr.bf16.gmra.mrb[0].mxu0 %v1760
  %v4269 = vpop.f32.mrb[0].mxu0
  %v4270 = vadd.f32 %v4061, %v4269
  %v4271 = vpop.f32.mrb[0].mxu0
  %v4272 = vpop.f32.mrb[0].mxu0
  %v4273 = vadd.f32 %v4064, %v4272
  %v4274 = vpop.f32.mrb[0].mxu0
  %4275 = vmatprep.mubr.bf16.mxu0 %v1777
  %4276 = vmatmul.mubr.bf16.gmra.mrb[0].mxu0 %v1776
  %v4277 = vpop.f32.mrb[0].mxu0
  %v4278 = vadd.f32 %v4069, %v4277
  %v4279 = vpop.f32.mrb[0].mxu0
  %v4280 = vpop.f32.mrb[0].mxu0
  %v4281 = vadd.f32 %v4072, %v4280
  %v4282 = vpop.f32.mrb[0].mxu0
  %4283 = vmatprep.mubr.bf16.mxu0 %v1793
  %4284 = vmatmul.mubr.bf16.gmra.mrb[0].mxu0 %v1792
  %v4285 = vpop.f32.mrb[0].mxu0
  %v4286 = vadd.f32 %v4077, %v4285
  %v4287 = vpop.f32.mrb[0].mxu0
  %v4288 = vpop.f32.mrb[0].mxu0
  %v4289 = vadd.f32 %v4080, %v4288
  %v4290 = vpop.f32.mrb[0].mxu0
  %4291 = vmatprep.mubr.bf16.mxu0 %v1809
  %4292 = vmatmul.mubr.bf16.gmra.mrb[0].mxu0 %v1808
  %v4293 = vpop.f32.mrb[0].mxu0
  %v4294 = vadd.f32 %v4085, %v4293
  %v4295 = vpop.f32.mrb[0].mxu0
  %v4296 = vpop.f32.mrb[0].mxu0
  %v4297 = vadd.f32 %v4088, %v4296
  %v4298 = vpop.f32.mrb[0].mxu0
  %4299 = vmatprep.mubr.bf16.mxu0 %v1825
  %4300 = vmatmul.mubr.bf16.gmra.mrb[0].mxu0 %v1824
  %v4301 = vpop.f32.mrb[0].mxu0
  %v4302 = vadd.f32 %v4093, %v4301
  %v4303 = vpop.f32.mrb[0].mxu0
  %v4304 = vpop.f32.mrb[0].mxu0
  %v4305 = vadd.f32 %v4096, %v4304
  %v4306 = vpop.f32.mrb[0].mxu0
  %4307 = vmatprep.mubr.bf16.mxu0 %v1841
  %4308 = vmatmul.mubr.bf16.gmra.mrb[0].mxu0 %v1840
  %v4309 = vpop.f32.mrb[0].mxu0
  %v4310 = vadd.f32 %v4101, %v4309
  %v4311 = vpop.f32.mrb[0].mxu0
  %v4312 = vpop.f32.mrb[0].mxu0
  %v4313 = vadd.f32 %v4104, %v4312
  %v4314 = vpop.f32.mrb[0].mxu0
  %4315 = vmatprep.mubr.bf16.mxu0 %v1857
  %4316 = vmatmul.mubr.bf16.gmra.mrb[0].mxu0 %v1856
  %v4317 = vpop.f32.mrb[0].mxu0
  %v4318 = vadd.f32 %v4109, %v4317
  %v4319 = vpop.f32.mrb[0].mxu0
  %v4320 = vpop.f32.mrb[0].mxu0
  %v4321 = vadd.f32 %v4112, %v4320
  %v4322 = vpop.f32.mrb[0].mxu0
  %4323 = vmatprep.mubr.bf16.mxu0 %v1873
  %4324 = vmatmul.mubr.bf16.gmra.mrb[0].mxu0 %v1872
  %v4325 = vpop.f32.mrb[0].mxu0
  %v4326 = vadd.f32 %v4117, %v4325
  %v4327 = vpop.f32.mrb[0].mxu0
  %v4328 = vpop.f32.mrb[0].mxu0
  %v4329 = vadd.f32 %v4120, %v4328
  %v4330 = vpop.f32.mrb[0].mxu0
  %4331 = vmatprep.mubr.bf16.mxu0 %v1889
  %4332 = vmatmul.mubr.bf16.gmra.mrb[0].mxu0 %v1888
  %v4333 = vpop.f32.mrb[0].mxu0
  %v4334 = vadd.f32 %v4125, %v4333
  %v4335 = vpop.f32.mrb[0].mxu0
  %v4336 = vpop.f32.mrb[0].mxu0
  %v4337 = vadd.f32 %v4128, %v4336
  %v4338 = vpop.f32.mrb[0].mxu0
  %4339 = vmatprep.mubr.bf16.mxu0 %v1905
  %4340 = vmatmul.mubr.bf16.gmra.mrb[0].mxu0 %v1904
  %v4341 = vpop.f32.mrb[0].mxu0
  %v4342 = vadd.f32 %v4133, %v4341
  %v4343 = vpop.f32.mrb[0].mxu0
  %v4344 = vpop.f32.mrb[0].mxu0
  %v4345 = vadd.f32 %v4136, %v4344
  %v4346 = vpop.f32.mrb[0].mxu0
  %4347 = vmatprep.mubr.bf16.mxu0 %v1921
  %4348 = vmatmul.mubr.bf16.gmra.mrb[0].mxu0 %v1920
  %v4349 = vpop.f32.mrb[0].mxu0
  %v4350 = vadd.f32 %v4141, %v4349
  %v4351 = vpop.f32.mrb[0].mxu0
  %v4352 = vpop.f32.mrb[0].mxu0
  %v4353 = vadd.f32 %v4144, %v4352
  %v4354 = vpop.f32.mrb[0].mxu0
  %4355 = vmatprep.mubr.bf16.mxu0 %v1937
  %4356 = vmatmul.mubr.bf16.gmra.mrb[0].mxu0 %v1936
  %v4357 = vpop.f32.mrb[0].mxu0
  %v4358 = vadd.f32 %v4149, %v4357
  %v4359 = vpop.f32.mrb[0].mxu0
  %v4360 = vpop.f32.mrb[0].mxu0
  %v4361 = vadd.f32 %v4152, %v4360
  %v4362 = vpop.f32.mrb[0].mxu0
  %4363 = vmatprep.mubr.bf16.mxu0 %v1953
  %4364 = vmatmul.mubr.bf16.gmra.mrb[0].mxu0 %v1952
  %v4365 = vpop.f32.mrb[0].mxu0
  %v4366 = vadd.f32 %v4157, %v4365
  %v4367 = vpop.f32.mrb[0].mxu0
  %v4368 = vpop.f32.mrb[0].mxu0
  %v4369 = vadd.f32 %v4160, %v4368
  %v4370 = vpop.f32.mrb[0].mxu0
  %4371 = vmatprep.mubr.bf16.mxu0 %v1969
  %4372 = vmatmul.mubr.bf16.gmra.mrb[0].mxu0 %v1968
  %v4373 = vpop.f32.mrb[0].mxu0
  %v4374 = vadd.f32 %v4165, %v4373
  %v4375 = vpop.f32.mrb[0].mxu0
  %v4376 = vpop.f32.mrb[0].mxu0
  %v4377 = vadd.f32 %v4168, %v4376
  %v4378 = vpop.f32.mrb[0].mxu0
  %4379 = vmatprep.mubr.bf16.mxu0 %v1985
  %4380 = vmatmul.mubr.bf16.gmra.mrb[0].mxu0 %v1984
  %v4381 = vpop.f32.mrb[0].mxu0
  %v4382 = vadd.f32 %v4173, %v4381
  %v4383 = vpop.f32.mrb[0].mxu0
  %v4384 = vpop.f32.mrb[0].mxu0
  %v4385 = vadd.f32 %v4176, %v4384
  %v4386 = vpop.f32.mrb[0].mxu0
  %4387 = vmatprep.mubr.bf16.mxu0 %v2001
  %4388 = vmatmul.mubr.bf16.gmra.mrb[0].mxu0 %v2000
  %v4389 = vpop.f32.mrb[0].mxu0
  %v4390 = vadd.f32 %v4181, %v4389
  %v4391 = vpop.f32.mrb[0].mxu0
  %v4392 = vpop.f32.mrb[0].mxu0
  %v4393 = vadd.f32 %v4184, %v4392
  %v4394 = vpop.f32.mrb[0].mxu0
  %4395 = vmatprep.mubr.bf16.mxu0 %v2017
  %4396 = vmatmul.mubr.bf16.gmra.mrb[0].mxu0 %v2016
  %v4397 = vpop.f32.mrb[0].mxu0
  %v4398 = vadd.f32 %v4189, %v4397
  %v4399 = vpop.f32.mrb[0].mxu0
  %v4400 = vpop.f32.mrb[0].mxu0
  %v4401 = vadd.f32 %v4192, %v4400
  %v4402 = vpop.f32.mrb[0].mxu0
  %4403 = vmatprep.mubr.bf16.mxu0 %v2033
  %4404 = vmatmul.mubr.bf16.gmra.mrb[0].mxu0 %v2032
  %v4405 = vpop.f32.mrb[0].mxu0
  %v4406 = vadd.f32 %v4197, %v4405
  %v4407 = vpop.f32.mrb[0].mxu0
  %v4408 = vpop.f32.mrb[0].mxu0
  %v4409 = vadd.f32 %v4200, %v4408
  %v4410 = vpop.f32.mrb[0].mxu0
  %4411 = vdwg.mxu0
  %4412 = vmatprep.subr.bf16.mxu0 0
  %4413 = vmatpush1.bf16.msra.mxu0 %v2998
  %4414 = vmatprep.subr.bf16.mxu0 0
  %4415 = vmatpush1.bf16.msra.mxu0 %v2999
  %4416 = vmatprep.subr.bf16.mxu0 0
  %4417 = vmatpush1.bf16.msra.mxu0 %v3000
  %4418 = vmatprep.subr.bf16.mxu0 0
  %4419 = vmatpush1.bf16.msra.mxu0 %v3001
  %4420 = vmatprep.subr.bf16.mxu0 0
  %4421 = vmatpush1.bf16.msra.mxu0 %v3002
  %4422 = vmatprep.subr.bf16.mxu0 0
  %4423 = vmatpush1.bf16.msra.mxu0 %v3003
  %4424 = vmatprep.subr.bf16.mxu0 0
  %4425 = vmatpush1.bf16.msra.mxu0 %v3004
  %4426 = vmatprep.subr.bf16.mxu0 0
  %4427 = vmatpush1.bf16.msra.mxu0 %v3005
  %4428 = vmatprep.subr.bf16.mxu0 0
  %4429 = vmatpush1.bf16.msra.mxu0 %v3006
  %4430 = vmatprep.subr.bf16.mxu0 0
  %4431 = vmatpush1.bf16.msra.mxu0 %v3007
  %4432 = vmatprep.subr.bf16.mxu0 0
  %4433 = vmatpush1.bf16.msra.mxu0 %v3008
  %4434 = vmatprep.subr.bf16.mxu0 0
  %4435 = vmatpush1.bf16.msra.mxu0 %v3009
  %4436 = vmatprep.subr.bf16.mxu0 0
  %4437 = vmatpush1.bf16.msra.mxu0 %v3010
  %4438 = vmatprep.subr.bf16.mxu0 0
  %4439 = vmatpush1.bf16.msra.mxu0 %v3011
  %4440 = vmatprep.subr.bf16.mxu0 0
  %4441 = vmatpush1.bf16.msra.mxu0 %v3012
  %4442 = vmatprep.subr.bf16.mxu0 0
  %4443 = vmatpush1.bf16.msra.mxu0 %v3013
  %4444 = vmatprep.mubr.bf16.mxu0 %v1699
  %4445 = vmatmul.mubr.bf16.gmra.mrb[0].mxu0 %v1698
  %v4446 = vpop.f32.mrb[0].mxu0
  %v4447 = vadd.f32 %v4238, %v4446
  %v4448 = vpop.f32.mrb[0].mxu0
  %v4449 = vpop.f32.mrb[0].mxu0
  %v4450 = vadd.f32 %v4241, %v4449
  %v4451 = vpop.f32.mrb[0].mxu0
  %4452 = vmatprep.mubr.bf16.mxu0 %v1715
  %4453 = vmatmul.mubr.bf16.gmra.mrb[0].mxu0 %v1714
  %v4454 = vpop.f32.mrb[0].mxu0
  %v4455 = vadd.f32 %v4246, %v4454
  %v4456 = vpop.f32.mrb[0].mxu0
  %v4457 = vpop.f32.mrb[0].mxu0
  %v4458 = vadd.f32 %v4249, %v4457
  %v4459 = vpop.f32.mrb[0].mxu0
  %4460 = vmatprep.mubr.bf16.mxu0 %v1731
  %4461 = vmatmul.mubr.bf16.gmra.mrb[0].mxu0 %v1730
  %v4462 = vpop.f32.mrb[0].mxu0
  %v4463 = vadd.f32 %v4254, %v4462
  %v4464 = vpop.f32.mrb[0].mxu0
  %v4465 = vpop.f32.mrb[0].mxu0
  %v4466 = vadd.f32 %v4257, %v4465
  %v4467 = vpop.f32.mrb[0].mxu0
  %4468 = vmatprep.mubr.bf16.mxu0 %v1747
  %4469 = vmatmul.mubr.bf16.gmra.mrb[0].mxu0 %v1746
  %v4470 = vpop.f32.mrb[0].mxu0
  %v4471 = vadd.f32 %v4262, %v4470
  %v4472 = vpop.f32.mrb[0].mxu0
  %v4473 = vpop.f32.mrb[0].mxu0
  %v4474 = vadd.f32 %v4265, %v4473
  %v4475 = vpop.f32.mrb[0].mxu0
  %4476 = vmatprep.mubr.bf16.mxu0 %v1763
  %4477 = vmatmul.mubr.bf16.gmra.mrb[0].mxu0 %v1762
  %v4478 = vpop.f32.mrb[0].mxu0
  %v4479 = vadd.f32 %v4270, %v4478
  %v4480 = vpop.f32.mrb[0].mxu0
  %v4481 = vpop.f32.mrb[0].mxu0
  %v4482 = vadd.f32 %v4273, %v4481
  %v4483 = vpop.f32.mrb[0].mxu0
  %4484 = vmatprep.mubr.bf16.mxu0 %v1779
  %4485 = vmatmul.mubr.bf16.gmra.mrb[0].mxu0 %v1778
  %v4486 = vpop.f32.mrb[0].mxu0
  %v4487 = vadd.f32 %v4278, %v4486
  %v4488 = vpop.f32.mrb[0].mxu0
  %v4489 = vpop.f32.mrb[0].mxu0
  %v4490 = vadd.f32 %v4281, %v4489
  %v4491 = vpop.f32.mrb[0].mxu0
  %4492 = vmatprep.mubr.bf16.mxu0 %v1795
  %4493 = vmatmul.mubr.bf16.gmra.mrb[0].mxu0 %v1794
  %v4494 = vpop.f32.mrb[0].mxu0
  %v4495 = vadd.f32 %v4286, %v4494
  %v4496 = vpop.f32.mrb[0].mxu0
  %v4497 = vpop.f32.mrb[0].mxu0
  %v4498 = vadd.f32 %v4289, %v4497
  %v4499 = vpop.f32.mrb[0].mxu0
  %4500 = vmatprep.mubr.bf16.mxu0 %v1811
  %4501 = vmatmul.mubr.bf16.gmra.mrb[0].mxu0 %v1810
  %v4502 = vpop.f32.mrb[0].mxu0
  %v4503 = vadd.f32 %v4294, %v4502
  %v4504 = vpop.f32.mrb[0].mxu0
  %v4505 = vpop.f32.mrb[0].mxu0
  %v4506 = vadd.f32 %v4297, %v4505
  %v4507 = vpop.f32.mrb[0].mxu0
  %4508 = vmatprep.mubr.bf16.mxu0 %v1827
  %4509 = vmatmul.mubr.bf16.gmra.mrb[0].mxu0 %v1826
  %v4510 = vpop.f32.mrb[0].mxu0
  %v4511 = vadd.f32 %v4302, %v4510
  %v4512 = vpop.f32.mrb[0].mxu0
  %v4513 = vpop.f32.mrb[0].mxu0
  %v4514 = vadd.f32 %v4305, %v4513
  %v4515 = vpop.f32.mrb[0].mxu0
  %4516 = vmatprep.mubr.bf16.mxu0 %v1843
  %4517 = vmatmul.mubr.bf16.gmra.mrb[0].mxu0 %v1842
  %v4518 = vpop.f32.mrb[0].mxu0
  %v4519 = vadd.f32 %v4310, %v4518
  %v4520 = vpop.f32.mrb[0].mxu0
  %v4521 = vpop.f32.mrb[0].mxu0
  %v4522 = vadd.f32 %v4313, %v4521
  %v4523 = vpop.f32.mrb[0].mxu0
  %4524 = vmatprep.mubr.bf16.mxu0 %v1859
  %4525 = vmatmul.mubr.bf16.gmra.mrb[0].mxu0 %v1858
  %v4526 = vpop.f32.mrb[0].mxu0
  %v4527 = vadd.f32 %v4318, %v4526
  %v4528 = vpop.f32.mrb[0].mxu0
  %v4529 = vpop.f32.mrb[0].mxu0
  %v4530 = vadd.f32 %v4321, %v4529
  %v4531 = vpop.f32.mrb[0].mxu0
  %4532 = vmatprep.mubr.bf16.mxu0 %v1875
  %4533 = vmatmul.mubr.bf16.gmra.mrb[0].mxu0 %v1874
  %v4534 = vpop.f32.mrb[0].mxu0
  %v4535 = vadd.f32 %v4326, %v4534
  %v4536 = vpop.f32.mrb[0].mxu0
  %v4537 = vpop.f32.mrb[0].mxu0
  %v4538 = vadd.f32 %v4329, %v4537
  %v4539 = vpop.f32.mrb[0].mxu0
  %4540 = vmatprep.mubr.bf16.mxu0 %v1891
  %4541 = vmatmul.mubr.bf16.gmra.mrb[0].mxu0 %v1890
  %v4542 = vpop.f32.mrb[0].mxu0
  %v4543 = vadd.f32 %v4334, %v4542
  %v4544 = vpop.f32.mrb[0].mxu0
  %v4545 = vpop.f32.mrb[0].mxu0
  %v4546 = vadd.f32 %v4337, %v4545
  %v4547 = vpop.f32.mrb[0].mxu0
  %4548 = vmatprep.mubr.bf16.mxu0 %v1907
  %4549 = vmatmul.mubr.bf16.gmra.mrb[0].mxu0 %v1906
  %v4550 = vpop.f32.mrb[0].mxu0
  %v4551 = vadd.f32 %v4342, %v4550
  %v4552 = vpop.f32.mrb[0].mxu0
  %v4553 = vpop.f32.mrb[0].mxu0
  %v4554 = vadd.f32 %v4345, %v4553
  %v4555 = vpop.f32.mrb[0].mxu0
  %4556 = vmatprep.mubr.bf16.mxu0 %v1923
  %4557 = vmatmul.mubr.bf16.gmra.mrb[0].mxu0 %v1922
  %v4558 = vpop.f32.mrb[0].mxu0
  %v4559 = vadd.f32 %v4350, %v4558
  %v4560 = vpop.f32.mrb[0].mxu0
  %v4561 = vpop.f32.mrb[0].mxu0
  %v4562 = vadd.f32 %v4353, %v4561
  %v4563 = vpop.f32.mrb[0].mxu0
  %4564 = vmatprep.mubr.bf16.mxu0 %v1939
  %4565 = vmatmul.mubr.bf16.gmra.mrb[0].mxu0 %v1938
  %v4566 = vpop.f32.mrb[0].mxu0
  %v4567 = vadd.f32 %v4358, %v4566
  %v4568 = vpop.f32.mrb[0].mxu0
  %v4569 = vpop.f32.mrb[0].mxu0
  %v4570 = vadd.f32 %v4361, %v4569
  %v4571 = vpop.f32.mrb[0].mxu0
  %4572 = vmatprep.mubr.bf16.mxu0 %v1955
  %4573 = vmatmul.mubr.bf16.gmra.mrb[0].mxu0 %v1954
  %v4574 = vpop.f32.mrb[0].mxu0
  %v4575 = vadd.f32 %v4366, %v4574
  %v4576 = vpop.f32.mrb[0].mxu0
  %v4577 = vpop.f32.mrb[0].mxu0
  %v4578 = vadd.f32 %v4369, %v4577
  %v4579 = vpop.f32.mrb[0].mxu0
  %4580 = vmatprep.mubr.bf16.mxu0 %v1971
  %4581 = vmatmul.mubr.bf16.gmra.mrb[0].mxu0 %v1970
  %v4582 = vpop.f32.mrb[0].mxu0
  %v4583 = vadd.f32 %v4374, %v4582
  %v4584 = vpop.f32.mrb[0].mxu0
  %v4585 = vpop.f32.mrb[0].mxu0
  %v4586 = vadd.f32 %v4377, %v4585
  %v4587 = vpop.f32.mrb[0].mxu0
  %4588 = vmatprep.mubr.bf16.mxu0 %v1987
  %4589 = vmatmul.mubr.bf16.gmra.mrb[0].mxu0 %v1986
  %v4590 = vpop.f32.mrb[0].mxu0
  %v4591 = vadd.f32 %v4382, %v4590
  %v4592 = vpop.f32.mrb[0].mxu0
  %v4593 = vpop.f32.mrb[0].mxu0
  %v4594 = vadd.f32 %v4385, %v4593
  %v4595 = vpop.f32.mrb[0].mxu0
  %4596 = vmatprep.mubr.bf16.mxu0 %v2003
  %4597 = vmatmul.mubr.bf16.gmra.mrb[0].mxu0 %v2002
  %v4598 = vpop.f32.mrb[0].mxu0
  %v4599 = vadd.f32 %v4390, %v4598
  %v4600 = vpop.f32.mrb[0].mxu0
  %v4601 = vpop.f32.mrb[0].mxu0
  %v4602 = vadd.f32 %v4393, %v4601
  %v4603 = vpop.f32.mrb[0].mxu0
  %4604 = vmatprep.mubr.bf16.mxu0 %v2019
  %4605 = vmatmul.mubr.bf16.gmra.mrb[0].mxu0 %v2018
  %v4606 = vpop.f32.mrb[0].mxu0
  %v4607 = vadd.f32 %v4398, %v4606
  %v4608 = vpop.f32.mrb[0].mxu0
  %v4609 = vpop.f32.mrb[0].mxu0
  %v4610 = vadd.f32 %v4401, %v4609
  %v4611 = vpop.f32.mrb[0].mxu0
  %4612 = vmatprep.mubr.bf16.mxu0 %v2035
  %4613 = vmatmul.mubr.bf16.gmra.mrb[0].mxu0 %v2034
  %v4614 = vpop.f32.mrb[0].mxu0
  %v4615 = vadd.f32 %v4406, %v4614
  %v4616 = vpop.f32.mrb[0].mxu0
  %v4617 = vpop.f32.mrb[0].mxu0
  %v4618 = vadd.f32 %v4409, %v4617
  %v4619 = vpop.f32.mrb[0].mxu0
  %4620 = vdwg.mxu0
  %4621 = vmatprep.subr.bf16.mxu0 0
  %4622 = vmatpush1.bf16.msra.mxu0 %v3014
  %4623 = vmatprep.subr.bf16.mxu0 0
  %4624 = vmatpush1.bf16.msra.mxu0 %v3015
  %4625 = vmatprep.subr.bf16.mxu0 0
  %4626 = vmatpush1.bf16.msra.mxu0 %v3016
  %4627 = vmatprep.subr.bf16.mxu0 0
  %4628 = vmatpush1.bf16.msra.mxu0 %v3017
  %4629 = vmatprep.subr.bf16.mxu0 0
  %4630 = vmatpush1.bf16.msra.mxu0 %v3018
  %4631 = vmatprep.subr.bf16.mxu0 0
  %4632 = vmatpush1.bf16.msra.mxu0 %v3019
  %4633 = vmatprep.subr.bf16.mxu0 0
  %4634 = vmatpush1.bf16.msra.mxu0 %v3020
  %4635 = vmatprep.subr.bf16.mxu0 0
  %4636 = vmatpush1.bf16.msra.mxu0 %v3021
  %4637 = vmatprep.subr.bf16.mxu0 0
  %4638 = vmatpush1.bf16.msra.mxu0 %v3022
  %4639 = vmatprep.subr.bf16.mxu0 0
  %4640 = vmatpush1.bf16.msra.mxu0 %v3023
  %4641 = vmatprep.subr.bf16.mxu0 0
  %4642 = vmatpush1.bf16.msra.mxu0 %v3024
  %4643 = vmatprep.subr.bf16.mxu0 0
  %4644 = vmatpush1.bf16.msra.mxu0 %v3025
  %4645 = vmatprep.subr.bf16.mxu0 0
  %4646 = vmatpush1.bf16.msra.mxu0 %v3026
  %4647 = vmatprep.subr.bf16.mxu0 0
  %4648 = vmatpush1.bf16.msra.mxu0 %v3027
  %4649 = vmatprep.subr.bf16.mxu0 0
  %4650 = vmatpush1.bf16.msra.mxu0 %v3028
  %4651 = vmatprep.subr.bf16.mxu0 0
  %4652 = vmatpush1.bf16.msra.mxu0 %v3029
  %4653 = vmatprep.mubr.bf16.mxu0 %v1701
  %4654 = vmatmul.mubr.bf16.gmra.mrb[0].mxu0 %v1700
  %v4655 = vpop.f32.mrb[0].mxu0
  %v4656 = vadd.f32 %v4447, %v4655
  %v4657 = vpop.f32.mrb[0].mxu0
  %v4658 = vpop.f32.mrb[0].mxu0
  %v4659 = vadd.f32 %v4450, %v4658
  %v4660 = vpop.f32.mrb[0].mxu0
  %4661 = vmatprep.mubr.bf16.mxu0 %v1717
  %4662 = vmatmul.mubr.bf16.gmra.mrb[0].mxu0 %v1716
  %v4663 = vpop.f32.mrb[0].mxu0
  %v4664 = vadd.f32 %v4455, %v4663
  %v4665 = vpop.f32.mrb[0].mxu0
  %v4666 = vpop.f32.mrb[0].mxu0
  %v4667 = vadd.f32 %v4458, %v4666
  %v4668 = vpop.f32.mrb[0].mxu0
  %4669 = vmatprep.mubr.bf16.mxu0 %v1733
  %4670 = vmatmul.mubr.bf16.gmra.mrb[0].mxu0 %v1732
  %v4671 = vpop.f32.mrb[0].mxu0
  %v4672 = vadd.f32 %v4463, %v4671
  %v4673 = vpop.f32.mrb[0].mxu0
  %v4674 = vpop.f32.mrb[0].mxu0
  %v4675 = vadd.f32 %v4466, %v4674
  %v4676 = vpop.f32.mrb[0].mxu0
  %4677 = vmatprep.mubr.bf16.mxu0 %v1749
  %4678 = vmatmul.mubr.bf16.gmra.mrb[0].mxu0 %v1748
  %v4679 = vpop.f32.mrb[0].mxu0
  %v4680 = vadd.f32 %v4471, %v4679
  %v4681 = vpop.f32.mrb[0].mxu0
  %v4682 = vpop.f32.mrb[0].mxu0
  %v4683 = vadd.f32 %v4474, %v4682
  %v4684 = vpop.f32.mrb[0].mxu0
  %4685 = vmatprep.mubr.bf16.mxu0 %v1765
  %4686 = vmatmul.mubr.bf16.gmra.mrb[0].mxu0 %v1764
  %v4687 = vpop.f32.mrb[0].mxu0
  %v4688 = vadd.f32 %v4479, %v4687
  %v4689 = vpop.f32.mrb[0].mxu0
  %v4690 = vpop.f32.mrb[0].mxu0
  %v4691 = vadd.f32 %v4482, %v4690
  %v4692 = vpop.f32.mrb[0].mxu0
  %4693 = vmatprep.mubr.bf16.mxu0 %v1781
  %4694 = vmatmul.mubr.bf16.gmra.mrb[0].mxu0 %v1780
  %v4695 = vpop.f32.mrb[0].mxu0
  %v4696 = vadd.f32 %v4487, %v4695
  %v4697 = vpop.f32.mrb[0].mxu0
  %v4698 = vpop.f32.mrb[0].mxu0
  %v4699 = vadd.f32 %v4490, %v4698
  %v4700 = vpop.f32.mrb[0].mxu0
  %4701 = vmatprep.mubr.bf16.mxu0 %v1797
  %4702 = vmatmul.mubr.bf16.gmra.mrb[0].mxu0 %v1796
  %v4703 = vpop.f32.mrb[0].mxu0
  %v4704 = vadd.f32 %v4495, %v4703
  %v4705 = vpop.f32.mrb[0].mxu0
  %v4706 = vpop.f32.mrb[0].mxu0
  %v4707 = vadd.f32 %v4498, %v4706
  %v4708 = vpop.f32.mrb[0].mxu0
  %4709 = vmatprep.mubr.bf16.mxu0 %v1813
  %4710 = vmatmul.mubr.bf16.gmra.mrb[0].mxu0 %v1812
  %v4711 = vpop.f32.mrb[0].mxu0
  %v4712 = vadd.f32 %v4503, %v4711
  %v4713 = vpop.f32.mrb[0].mxu0
  %v4714 = vpop.f32.mrb[0].mxu0
  %v4715 = vadd.f32 %v4506, %v4714
  %v4716 = vpop.f32.mrb[0].mxu0
  %4717 = vmatprep.mubr.bf16.mxu0 %v1829
  %4718 = vmatmul.mubr.bf16.gmra.mrb[0].mxu0 %v1828
  %v4719 = vpop.f32.mrb[0].mxu0
  %v4720 = vadd.f32 %v4511, %v4719
  %v4721 = vpop.f32.mrb[0].mxu0
  %v4722 = vpop.f32.mrb[0].mxu0
  %v4723 = vadd.f32 %v4514, %v4722
  %v4724 = vpop.f32.mrb[0].mxu0
  %4725 = vmatprep.mubr.bf16.mxu0 %v1845
  %4726 = vmatmul.mubr.bf16.gmra.mrb[0].mxu0 %v1844
  %v4727 = vpop.f32.mrb[0].mxu0
  %v4728 = vadd.f32 %v4519, %v4727
  %v4729 = vpop.f32.mrb[0].mxu0
  %v4730 = vpop.f32.mrb[0].mxu0
  %v4731 = vadd.f32 %v4522, %v4730
  %v4732 = vpop.f32.mrb[0].mxu0
  %4733 = vmatprep.mubr.bf16.mxu0 %v1861
  %4734 = vmatmul.mubr.bf16.gmra.mrb[0].mxu0 %v1860
  %v4735 = vpop.f32.mrb[0].mxu0
  %v4736 = vadd.f32 %v4527, %v4735
  %v4737 = vpop.f32.mrb[0].mxu0
  %v4738 = vpop.f32.mrb[0].mxu0
  %v4739 = vadd.f32 %v4530, %v4738
  %v4740 = vpop.f32.mrb[0].mxu0
  %4741 = vmatprep.mubr.bf16.mxu0 %v1877
  %4742 = vmatmul.mubr.bf16.gmra.mrb[0].mxu0 %v1876
  %v4743 = vpop.f32.mrb[0].mxu0
  %v4744 = vadd.f32 %v4535, %v4743
  %v4745 = vpop.f32.mrb[0].mxu0
  %v4746 = vpop.f32.mrb[0].mxu0
  %v4747 = vadd.f32 %v4538, %v4746
  %v4748 = vpop.f32.mrb[0].mxu0
  %4749 = vmatprep.mubr.bf16.mxu0 %v1893
  %4750 = vmatmul.mubr.bf16.gmra.mrb[0].mxu0 %v1892
  %v4751 = vpop.f32.mrb[0].mxu0
  %v4752 = vadd.f32 %v4543, %v4751
  %v4753 = vpop.f32.mrb[0].mxu0
  %v4754 = vpop.f32.mrb[0].mxu0
  %v4755 = vadd.f32 %v4546, %v4754
  %v4756 = vpop.f32.mrb[0].mxu0
  %4757 = vmatprep.mubr.bf16.mxu0 %v1909
  %4758 = vmatmul.mubr.bf16.gmra.mrb[0].mxu0 %v1908
  %v4759 = vpop.f32.mrb[0].mxu0
  %v4760 = vadd.f32 %v4551, %v4759
  %v4761 = vpop.f32.mrb[0].mxu0
  %v4762 = vpop.f32.mrb[0].mxu0
  %v4763 = vadd.f32 %v4554, %v4762
  %v4764 = vpop.f32.mrb[0].mxu0
  %4765 = vmatprep.mubr.bf16.mxu0 %v1925
  %4766 = vmatmul.mubr.bf16.gmra.mrb[0].mxu0 %v1924
  %v4767 = vpop.f32.mrb[0].mxu0
  %v4768 = vadd.f32 %v4559, %v4767
  %v4769 = vpop.f32.mrb[0].mxu0
  %v4770 = vpop.f32.mrb[0].mxu0
  %v4771 = vadd.f32 %v4562, %v4770
  %v4772 = vpop.f32.mrb[0].mxu0
  %4773 = vmatprep.mubr.bf16.mxu0 %v1941
  %4774 = vmatmul.mubr.bf16.gmra.mrb[0].mxu0 %v1940
  %v4775 = vpop.f32.mrb[0].mxu0
  %v4776 = vadd.f32 %v4567, %v4775
  %v4777 = vpop.f32.mrb[0].mxu0
  %v4778 = vpop.f32.mrb[0].mxu0
  %v4779 = vadd.f32 %v4570, %v4778
  %v4780 = vpop.f32.mrb[0].mxu0
  %4781 = vmatprep.mubr.bf16.mxu0 %v1957
  %4782 = vmatmul.mubr.bf16.gmra.mrb[0].mxu0 %v1956
  %v4783 = vpop.f32.mrb[0].mxu0
  %v4784 = vadd.f32 %v4575, %v4783
  %v4785 = vpop.f32.mrb[0].mxu0
  %v4786 = vpop.f32.mrb[0].mxu0
  %v4787 = vadd.f32 %v4578, %v4786
  %v4788 = vpop.f32.mrb[0].mxu0
  %4789 = vmatprep.mubr.bf16.mxu0 %v1973
  %4790 = vmatmul.mubr.bf16.gmra.mrb[0].mxu0 %v1972
  %v4791 = vpop.f32.mrb[0].mxu0
  %v4792 = vadd.f32 %v4583, %v4791
  %v4793 = vpop.f32.mrb[0].mxu0
  %v4794 = vpop.f32.mrb[0].mxu0
  %v4795 = vadd.f32 %v4586, %v4794
  %v4796 = vpop.f32.mrb[0].mxu0
  %4797 = vmatprep.mubr.bf16.mxu0 %v1989
  %4798 = vmatmul.mubr.bf16.gmra.mrb[0].mxu0 %v1988
  %v4799 = vpop.f32.mrb[0].mxu0
  %v4800 = vadd.f32 %v4591, %v4799
  %v4801 = vpop.f32.mrb[0].mxu0
  %v4802 = vpop.f32.mrb[0].mxu0
  %v4803 = vadd.f32 %v4594, %v4802
  %v4804 = vpop.f32.mrb[0].mxu0
  %4805 = vmatprep.mubr.bf16.mxu0 %v2005
  %4806 = vmatmul.mubr.bf16.gmra.mrb[0].mxu0 %v2004
  %v4807 = vpop.f32.mrb[0].mxu0
  %v4808 = vadd.f32 %v4599, %v4807
  %v4809 = vpop.f32.mrb[0].mxu0
  %v4810 = vpop.f32.mrb[0].mxu0
  %v4811 = vadd.f32 %v4602, %v4810
  %v4812 = vpop.f32.mrb[0].mxu0
  %4813 = vmatprep.mubr.bf16.mxu0 %v2021
  %4814 = vmatmul.mubr.bf16.gmra.mrb[0].mxu0 %v2020
  %v4815 = vpop.f32.mrb[0].mxu0
  %v4816 = vadd.f32 %v4607, %v4815
  %v4817 = vpop.f32.mrb[0].mxu0
  %v4818 = vpop.f32.mrb[0].mxu0
  %v4819 = vadd.f32 %v4610, %v4818
  %v4820 = vpop.f32.mrb[0].mxu0
  %4821 = vmatprep.mubr.bf16.mxu0 %v2037
  %4822 = vmatmul.mubr.bf16.gmra.mrb[0].mxu0 %v2036
  %v4823 = vpop.f32.mrb[0].mxu0
  %v4824 = vadd.f32 %v4615, %v4823
  %v4825 = vpop.f32.mrb[0].mxu0
  %v4826 = vpop.f32.mrb[0].mxu0
  %v4827 = vadd.f32 %v4618, %v4826
  %v4828 = vpop.f32.mrb[0].mxu0
  %4829 = vdwg.mxu0
  %v4830 = vmax.f32 %v4656, 0.0
  %v4831 = vmax.f32 %v4659, 0.0
  %v4832 = vmax.f32 %v4664, 0.0
  %v4833 = vmax.f32 %v4667, 0.0
  %v4834 = vmax.f32 %v4672, 0.0
  %v4835 = vmax.f32 %v4675, 0.0
  %v4836 = vmax.f32 %v4680, 0.0
  %v4837 = vmax.f32 %v4683, 0.0
  %v4838 = vmax.f32 %v4688, 0.0
  %v4839 = vmax.f32 %v4691, 0.0
  %v4840 = vmax.f32 %v4696, 0.0
  %v4841 = vmax.f32 %v4699, 0.0
  %v4842 = vmax.f32 %v4704, 0.0
  %v4843 = vmax.f32 %v4707, 0.0
  %v4844 = vmax.f32 %v4712, 0.0
  %v4845 = vmax.f32 %v4715, 0.0
  %v4846 = vmax.f32 %v4720, 0.0
  %v4847 = vmax.f32 %v4723, 0.0
  %v4848 = vmax.f32 %v4728, 0.0
  %v4849 = vmax.f32 %v4731, 0.0
  %v4850 = vmax.f32 %v4736, 0.0
  %v4851 = vmax.f32 %v4739, 0.0
  %v4852 = vmax.f32 %v4744, 0.0
  %v4853 = vmax.f32 %v4747, 0.0
  %v4854 = vmax.f32 %v4752, 0.0
  %v4855 = vmax.f32 %v4755, 0.0
  %v4856 = vmax.f32 %v4760, 0.0
  %v4857 = vmax.f32 %v4763, 0.0
  %v4858 = vmax.f32 %v4768, 0.0
  %v4859 = vmax.f32 %v4771, 0.0
  %v4860 = vmax.f32 %v4776, 0.0
  %v4861 = vmax.f32 %v4779, 0.0
  %v4862 = vmax.f32 %v4784, 0.0
  %v4863 = vmax.f32 %v4787, 0.0
  %v4864 = vmax.f32 %v4792, 0.0
  %v4865 = vmax.f32 %v4795, 0.0
  %v4866 = vmax.f32 %v4800, 0.0
  %v4867 = vmax.f32 %v4803, 0.0
  %v4868 = vmax.f32 %v4808, 0.0
  %v4869 = vmax.f32 %v4811, 0.0
  %v4870 = vmax.f32 %v4816, 0.0
  %v4871 = vmax.f32 %v4819, 0.0
  %v4872 = vmax.f32 %v4824, 0.0
  %v4873 = vmax.f32 %v4827, 0.0
  %v4874 = vpack.c.bf16 %v4831, %v4830
  %v4875 = vpack.c.bf16 %v4833, %v4832
  %v4876 = vpack.c.bf16 %v4835, %v4834
  %v4877 = vpack.c.bf16 %v4837, %v4836
  %v4878 = vpack.c.bf16 %v4839, %v4838
  %v4879 = vpack.c.bf16 %v4841, %v4840
  %v4880 = vpack.c.bf16 %v4843, %v4842
  %v4881 = vpack.c.bf16 %v4845, %v4844
  %v4882 = vpack.c.bf16 %v4847, %v4846
  %v4883 = vpack.c.bf16 %v4849, %v4848
  %v4884 = vpack.c.bf16 %v4851, %v4850
  %v4885 = vpack.c.bf16 %v4853, %v4852
  %v4886 = vpack.c.bf16 %v4855, %v4854
  %v4887 = vpack.c.bf16 %v4857, %v4856
  %v4888 = vpack.c.bf16 %v4859, %v4858
  %v4889 = vpack.c.bf16 %v4861, %v4860
  %v4890 = vpack.c.bf16 %v4863, %v4862
  %v4891 = vpack.c.bf16 %v4865, %v4864
  %v4892 = vpack.c.bf16 %v4867, %v4866
  %v4893 = vpack.c.bf16 %v4869, %v4868
  %v4894 = vpack.c.bf16 %v4871, %v4870
  %v4895 = vpack.c.bf16 %v4873, %v4872
  %v4918 = vunpack.c.l.b16 %v4874
  %v4919 = vunpack.c.h.b16 %v4874
  %v4920 = vunpack.c.l.b16 %v4875
  %v4921 = vunpack.c.h.b16 %v4875
  %v4922 = vunpack.c.l.b16 %v4876
  %v4923 = vunpack.c.h.b16 %v4876
  %v4924 = vunpack.c.l.b16 %v4877
  %v4925 = vunpack.c.h.b16 %v4877
  %v4926 = vunpack.c.l.b16 %v4878
  %v4927 = vunpack.c.h.b16 %v4878
  %v4928 = vunpack.c.l.b16 %v4879
  %v4929 = vunpack.c.h.b16 %v4879
  %v4930 = vunpack.c.l.b16 %v4880
  %v4931 = vunpack.c.h.b16 %v4880
  %v4932 = vunpack.c.l.b16 %v4881
  %v4933 = vunpack.c.h.b16 %v4881
  %v4934 = vunpack.c.l.b16 %v4882
  %v4935 = vunpack.c.h.b16 %v4882
  %v4936 = vunpack.c.l.b16 %v4883
  %v4937 = vunpack.c.h.b16 %v4883
  %v4938 = vunpack.c.l.b16 %v4884
  %v4939 = vunpack.c.h.b16 %v4884
  %v4940 = vunpack.c.l.b16 %v4885
  %v4941 = vunpack.c.h.b16 %v4885
  %v4942 = vunpack.c.l.b16 %v4886
  %v4943 = vunpack.c.h.b16 %v4886
  %v4944 = vunpack.c.l.b16 %v4887
  %v4945 = vunpack.c.h.b16 %v4887
  %v4946 = vunpack.c.l.b16 %v4888
  %v4947 = vunpack.c.h.b16 %v4888
  %v4948 = vunpack.c.l.b16 %v4889
  %v4949 = vunpack.c.h.b16 %v4889
  %v4950 = vunpack.c.l.b16 %v4890
  %v4951 = vunpack.c.h.b16 %v4890
  %v4952 = vunpack.c.l.b16 %v4891
  %v4953 = vunpack.c.h.b16 %v4891
  %v4954 = vunpack.c.l.b16 %v4892
  %v4955 = vunpack.c.h.b16 %v4892
  %v4956 = vunpack.c.l.b16 %v4893
  %v4957 = vunpack.c.h.b16 %v4893
  %v4958 = vunpack.c.l.b16 %v4894
  %v4959 = vunpack.c.h.b16 %v4894
  %v4960 = vunpack.c.l.b16 %v4895
  %v4961 = vunpack.c.h.b16 %v4895
  %v4962 = vpack.c.b16 %v4918, %v4918
  %v4963 = vpack.c.b16 %v4919, %v4919
  %v4964 = vpack.c.b16 %v4920, %v4920
  %v4965 = vpack.c.b16 %v4921, %v4921
  %v4966 = vpack.c.b16 %v4922, %v4922
  %v4967 = vpack.c.b16 %v4923, %v4923
  %v4968 = vpack.c.b16 %v4924, %v4924
  %v4969 = vpack.c.b16 %v4925, %v4925
  %v4970 = vpack.c.b16 %v4926, %v4926
  %v4971 = vpack.c.b16 %v4927, %v4927
  %v4972 = vpack.c.b16 %v4928, %v4928
  %v4973 = vpack.c.b16 %v4929, %v4929
  %v4974 = vpack.c.b16 %v4930, %v4930
  %v4975 = vpack.c.b16 %v4931, %v4931
  %v4976 = vpack.c.b16 %v4932, %v4932
  %v4977 = vpack.c.b16 %v4933, %v4933
  %v4978 = vpack.c.b16 %v4934, %v4934
  %v4979 = vpack.c.b16 %v4935, %v4935
  %v4980 = vpack.c.b16 %v4936, %v4936
  %v4981 = vpack.c.b16 %v4937, %v4937
  %v4982 = vpack.c.b16 %v4938, %v4938
  %v4983 = vpack.c.b16 %v4939, %v4939
  %v4984 = vpack.c.b16 %v4940, %v4940
  %v4985 = vpack.c.b16 %v4941, %v4941
  %v4986 = vpack.c.b16 %v4942, %v4942
  %v4987 = vpack.c.b16 %v4943, %v4943
  %v4988 = vpack.c.b16 %v4944, %v4944
  %v4989 = vpack.c.b16 %v4945, %v4945
  %v4990 = vpack.c.b16 %v4946, %v4946
  %v4991 = vpack.c.b16 %v4947, %v4947
  %v4992 = vpack.c.b16 %v4948, %v4948
  %v4993 = vpack.c.b16 %v4949, %v4949
  %v4994 = vpack.c.b16 %v4950, %v4950
  %v4995 = vpack.c.b16 %v4951, %v4951
  %v4996 = vpack.c.b16 %v4952, %v4952
  %v4997 = vpack.c.b16 %v4953, %v4953
  %v4998 = vpack.c.b16 %v4954, %v4954
  %v4999 = vpack.c.b16 %v4955, %v4955
  %v5000 = vpack.c.b16 %v4956, %v4956
  %v5001 = vpack.c.b16 %v4957, %v4957
  %v5002 = vpack.c.b16 %v4958, %v4958
  %v5003 = vpack.c.b16 %v4959, %v4959
  %v5004 = vpack.c.b16 %v4960, %v4960
  %v5005 = vpack.c.b16 %v4961, %v4961
  %5050 = vst [vmem:[%s3] sm:$0xf] %v4962
  %5051 = vst [vmem:[%s3 + $0x4] sm:$0xf] %v4963
  %5052 = vst [vmem:[%s3 + $0x8] sm:$0xf] %v4964
  %5053 = vst [vmem:[%s3 + $0xc] sm:$0xf] %v4965
  %5054 = vst [vmem:[%s3 + $0x10] sm:$0xf] %v4966
  %5055 = vst [vmem:[%s3 + $0x14] sm:$0xf] %v4967
  %5056 = vst [vmem:[%s3 + $0x18] sm:$0xf] %v4968
  %5057 = vst [vmem:[%s3 + $0x1c] sm:$0xf] %v4969
  %5058 = vst [vmem:[%s3 + $0x20] sm:$0xf] %v4970
  %5059 = vst [vmem:[%s3 + $0x24] sm:$0xf] %v4971
  %5060 = vst [vmem:[%s3 + $0x28] sm:$0xf] %v4972
  %5061 = vst [vmem:[%s3 + $0x2c] sm:$0xf] %v4973
  %5062 = vst [vmem:[%s3 + $0x30] sm:$0xf] %v4974
  %5063 = vst [vmem:[%s3 + $0x34] sm:$0xf] %v4975
  %5064 = vst [vmem:[%s3 + $0x38] sm:$0xf] %v4976
  %5065 = vst [vmem:[%s3 + $0x3c] sm:$0xf] %v4977
  %5066 = vst [vmem:[%s3 + $0x40] sm:$0xf] %v4978
  %5067 = vst [vmem:[%s3 + $0x44] sm:$0xf] %v4979
  %5068 = vst [vmem:[%s3 + $0x48] sm:$0xf] %v4980
  %5069 = vst [vmem:[%s3 + $0x4c] sm:$0xf] %v4981
  %5070 = vst [vmem:[%s3 + $0x50] sm:$0xf] %v4982
  %5071 = vst [vmem:[%s3 + $0x54] sm:$0xf] %v4983
  %5072 = vst [vmem:[%s3 + $0x58] sm:$0xf] %v4984
  %5073 = vst [vmem:[%s3 + $0x5c] sm:$0xf] %v4985
  %5074 = vst [vmem:[%s3 + $0x60] sm:$0xf] %v4986
  %5075 = vst [vmem:[%s3 + $0x64] sm:$0xf] %v4987
  %5076 = vst [vmem:[%s3 + $0x68] sm:$0xf] %v4988
  %5077 = vst [vmem:[%s3 + $0x6c] sm:$0xf] %v4989
  %5078 = vst [vmem:[%s3 + $0x70] sm:$0xf] %v4990
  %5079 = vst [vmem:[%s3 + $0x74] sm:$0xf] %v4991
  %5080 = vst [vmem:[%s3 + $0x78] sm:$0xf] %v4992
  %5081 = vst [vmem:[%s3 + $0x7c] sm:$0xf] %v4993
  %5082 = vst [vmem:[%s3 + $0x80] sm:$0xf] %v4994
  %5083 = vst [vmem:[%s3 + $0x84] sm:$0xf] %v4995
  %5084 = vst [vmem:[%s3 + $0x88] sm:$0xf] %v4996
  %5085 = vst [vmem:[%s3 + $0x8c] sm:$0xf] %v4997
  %5086 = vst [vmem:[%s3 + $0x90] sm:$0xf] %v4998
  %5087 = vst [vmem:[%s3 + $0x94] sm:$0xf] %v4999
  %5088 = vst [vmem:[%s3 + $0x98] sm:$0xf] %v5000
  %5089 = vst [vmem:[%s3 + $0x9c] sm:$0xf] %v5001
  %5090 = vst [vmem:[%s3 + $0xa0] sm:$0xf] %v5002
  %5091 = vst [vmem:[%s3 + $0xa4] sm:$0xf] %v5003
  %5092 = vst [vmem:[%s3 + $0xa8] sm:$0xf] %v5004
  %5093 = vst [vmem:[%s3 + $0xac] sm:$0xf] %v5005
  // Predicated region
  $region14: #{vanilla_cnn_q_forward.4} parent=0 // pred_check
    _
  $region15: #{vanilla_cnn_q_forward.4} parent=0 // pred_check_branch
    %5095 = sbr.rel (0) target = $region17
  $region16: #{vanilla_cnn_q_forward.4} parent=0 // pred_region
    _
  $region17: #{vanilla_cnn_q_forward.4} parent=0 // pred_fallthru
    _
  // Predicated region
  $region18: #{vanilla_cnn_q_forward.4} parent=0 // pred_check
    _
  $region19: #{vanilla_cnn_q_forward.4} parent=0 // pred_check_branch
    %5097 = sbr.rel (0) target = $region21
  $region20: #{vanilla_cnn_q_forward.4} parent=0 // pred_region
    _
  $region21: #{vanilla_cnn_q_forward.4} parent=0 // pred_fallthru
    _

// kernel: vanilla_cnn_q_forward.5
$region0: #{vanilla_cnn_q_forward.5}
  #allocation0 [shape = 'u32[]', space=smem, size = 0x4, offset = 0x4, fixed_abs, tag = 'smem constant byte address 0x4 - core index']
  #allocation1 [shape = 'u32[144,128]{1,0:T(1,128)}', space=vmem, size = 0x12000, scoped, tag = 'internal scratch']
  %s0 = inlined_call_operand.vmem [shape: bf16[1,128,2048], index: 0, kind: input, shape index: {}]
  %s1 = inlined_call_operand.vmem [shape: bf16[1,8,128], index: 1, kind: input, shape index: {}]
  %s2 = inlined_call_operand.vmem [shape: bf16[2048,128], index: 2, kind: input, shape index: {}]
  %s3 = inlined_call_operand.vmem [shape: f32[1,128], index: 3, kind: input, shape index: {}]
  %s4 = inlined_call_operand.vmem [shape: bf16[2048,128], index: 4, kind: input, shape index: {}]
  %s5 = inlined_call_operand.vmem [shape: f32[1,128], index: 5, kind: input, shape index: {}]
  %s6 = inlined_call_operand.vmem [shape: bf16[128,256], index: 6, kind: input, shape index: {}]
  %s7 = inlined_call_operand.vmem [shape: bf16[128,256], index: 7, kind: input, shape index: {}]
  %s8 = inlined_call_operand.vmem [shape: f32[1,256], index: 8, kind: input, shape index: {}]
  %s9 = inlined_call_operand.vmem [shape: bf16[256,256], index: 9, kind: input, shape index: {}]
  %s10 = inlined_call_operand.vmem [shape: f32[1,256], index: 10, kind: input, shape index: {}]
  %s11 = inlined_call_operand.vmem [shape: f32[1,256], index: 11, kind: input, shape index: {}]
  %s12 = inlined_call_operand.vmem [shape: f32[1,128], index: 12, kind: input, shape index: {}]
  %s13 = inlined_call_operand.vmem [shape: f32[1,8,128], index: 13, kind: output, shape index: {}]
  %s14 = sld [smem:[#allocation0]]
  $region62: #{vanilla_cnn_q_forward.5} parent=0
    _
  %s16 = ssub.s32 1, %s14
  %s17 = scalar_select 0, %s16, %s14
  // Predicated region
  $region2: #{vanilla_cnn_q_forward.5} parent=0 // pred_check
    _
  $region3: #{vanilla_cnn_q_forward.5} parent=0 // pred_check_branch
    %19 = sbr.rel (0) target = $region5
  $region4: #{vanilla_cnn_q_forward.5} parent=0 // pred_region
    _
  $region5: #{vanilla_cnn_q_forward.5} parent=0 // pred_fallthru
    _
  // Predicated region
  $region6: #{vanilla_cnn_q_forward.5} parent=0 // pred_check
    _
  $region7: #{vanilla_cnn_q_forward.5} parent=0 // pred_check_branch
    %21 = sbr.rel (0) target = $region9
  $region8: #{vanilla_cnn_q_forward.5} parent=0 // pred_region
    _
  $region9: #{vanilla_cnn_q_forward.5} parent=0 // pred_fallthru
    _
  // Predicated region
  $region10: #{vanilla_cnn_q_forward.5} parent=0 // pred_check
    _
  $region11: #{vanilla_cnn_q_forward.5} parent=0 // pred_check_branch
    %23 = sbr.rel (0) target = $region13
  $region12: #{vanilla_cnn_q_forward.5} parent=0 // pred_region
    _
  $region13: #{vanilla_cnn_q_forward.5} parent=0 // pred_fallthru
    _
  // Predicated region
  $region14: #{vanilla_cnn_q_forward.5} parent=0 // pred_check
    _
  $region15: #{vanilla_cnn_q_forward.5} parent=0 // pred_check_branch
    %25 = sbr.rel (0) target = $region17
  $region16: #{vanilla_cnn_q_forward.5} parent=0 // pred_region
    _
  $region17: #{vanilla_cnn_q_forward.5} parent=0 // pred_fallthru
    _
  // Predicated region
  $region18: #{vanilla_cnn_q_forward.5} parent=0 // pred_check
    _
  $region19: #{vanilla_cnn_q_forward.5} parent=0 // pred_check_branch
    %27 = sbr.rel (0) target = $region21
  $region20: #{vanilla_cnn_q_forward.5} parent=0 // pred_region
    _
  $region21: #{vanilla_cnn_q_forward.5} parent=0 // pred_fallthru
    _
  // Predicated region
  $region22: #{vanilla_cnn_q_forward.5} parent=0 // pred_check
    _
  $region23: #{vanilla_cnn_q_forward.5} parent=0 // pred_check_branch
    %29 = sbr.rel (0) target = $region25
  $region24: #{vanilla_cnn_q_forward.5} parent=0 // pred_region
    _
  $region25: #{vanilla_cnn_q_forward.5} parent=0 // pred_fallthru
    _
  // Predicated region
  $region26: #{vanilla_cnn_q_forward.5} parent=0 // pred_check
    _
  $region27: #{vanilla_cnn_q_forward.5} parent=0 // pred_check_branch
    %31 = sbr.rel (0) target = $region29
  $region28: #{vanilla_cnn_q_forward.5} parent=0 // pred_region
    _
  $region29: #{vanilla_cnn_q_forward.5} parent=0 // pred_fallthru
    _
  // Predicated region
  $region30: #{vanilla_cnn_q_forward.5} parent=0 // pred_check
    _
  $region31: #{vanilla_cnn_q_forward.5} parent=0 // pred_check_branch
    %33 = sbr.rel (0) target = $region33
  $region32: #{vanilla_cnn_q_forward.5} parent=0 // pred_region
    _
  $region33: #{vanilla_cnn_q_forward.5} parent=0 // pred_fallthru
    _
  // Predicated region
  $region34: #{vanilla_cnn_q_forward.5} parent=0 // pred_check
    _
  $region35: #{vanilla_cnn_q_forward.5} parent=0 // pred_check_branch
    %35 = sbr.rel (0) target = $region37
  $region36: #{vanilla_cnn_q_forward.5} parent=0 // pred_region
    _
  $region37: #{vanilla_cnn_q_forward.5} parent=0 // pred_fallthru
    _
  // Predicated region
  $region38: #{vanilla_cnn_q_forward.5} parent=0 // pred_check
    _
  $region39: #{vanilla_cnn_q_forward.5} parent=0 // pred_check_branch
    %37 = sbr.rel (0) target = $region41
  $region40: #{vanilla_cnn_q_forward.5} parent=0 // pred_region
    _
  $region41: #{vanilla_cnn_q_forward.5} parent=0 // pred_fallthru
    _
  // Predicated region
  $region42: #{vanilla_cnn_q_forward.5} parent=0 // pred_check
    _
  $region43: #{vanilla_cnn_q_forward.5} parent=0 // pred_check_branch
    %39 = sbr.rel (0) target = $region45
  $region44: #{vanilla_cnn_q_forward.5} parent=0 // pred_region
    _
  $region45: #{vanilla_cnn_q_forward.5} parent=0 // pred_fallthru
    _
  // Predicated region
  $region46: #{vanilla_cnn_q_forward.5} parent=0 // pred_check
    _
  $region47: #{vanilla_cnn_q_forward.5} parent=0 // pred_check_branch
    %41 = sbr.rel (0) target = $region49
  $region48: #{vanilla_cnn_q_forward.5} parent=0 // pred_region
    _
  $region49: #{vanilla_cnn_q_forward.5} parent=0 // pred_fallthru
    _
  // Predicated region
  $region50: #{vanilla_cnn_q_forward.5} parent=0 // pred_check
    _
  $region51: #{vanilla_cnn_q_forward.5} parent=0 // pred_check_branch
    %43 = sbr.rel (0) target = $region53
  $region52: #{vanilla_cnn_q_forward.5} parent=0 // pred_region
    _
  $region53: #{vanilla_cnn_q_forward.5} parent=0 // pred_fallthru
    _
  %v45 = vld [vmem:[%s0] sm:$0xff]
  %v46 = vld [vmem:[%s0 + $0x8] sm:$0xff]
  %v47 = vld [vmem:[%s0 + $0x10] sm:$0xff]
  %v48 = vld [vmem:[%s0 + $0x18] sm:$0xff]
  %v49 = vld [vmem:[%s0 + $0x20] sm:$0xff]
  %v50 = vld [vmem:[%s0 + $0x28] sm:$0xff]
  %v51 = vld [vmem:[%s0 + $0x30] sm:$0xff]
  %v52 = vld [vmem:[%s0 + $0x38] sm:$0xff]
  %v53 = vld [vmem:[%s0 + $0x40] sm:$0xff]
  %v54 = vld [vmem:[%s0 + $0x48] sm:$0xff]
  %v55 = vld [vmem:[%s0 + $0x50] sm:$0xff]
  %v56 = vld [vmem:[%s0 + $0x58] sm:$0xff]
  %v57 = vld [vmem:[%s0 + $0x60] sm:$0xff]
  %v58 = vld [vmem:[%s0 + $0x68] sm:$0xff]
  %v59 = vld [vmem:[%s0 + $0x70] sm:$0xff]
  %v60 = vld [vmem:[%s0 + $0x78] sm:$0xff]
  %v61 = vld [vmem:[%s0 + $0x80] sm:$0xff]
  %v62 = vld [vmem:[%s0 + $0x88] sm:$0xff]
  %v63 = vld [vmem:[%s0 + $0x90] sm:$0xff]
  %v64 = vld [vmem:[%s0 + $0x98] sm:$0xff]
  %v65 = vld [vmem:[%s0 + $0xa0] sm:$0xff]
  %v66 = vld [vmem:[%s0 + $0xa8] sm:$0xff]
  %v67 = vld [vmem:[%s0 + $0xb0] sm:$0xff]
  %v68 = vld [vmem:[%s0 + $0xb8] sm:$0xff]
  %v69 = vld [vmem:[%s0 + $0xc0] sm:$0xff]
  %v70 = vld [vmem:[%s0 + $0xc8] sm:$0xff]
  %v71 = vld [vmem:[%s0 + $0xd0] sm:$0xff]
  %v72 = vld [vmem:[%s0 + $0xd8] sm:$0xff]
  %v73 = vld [vmem:[%s0 + $0xe0] sm:$0xff]
  %v74 = vld [vmem:[%s0 + $0xe8] sm:$0xff]
  %v75 = vld [vmem:[%s0 + $0xf0] sm:$0xff]
  %v76 = vld [vmem:[%s0 + $0xf8] sm:$0xff]
  %v77 = vld [vmem:[%s0 + $0x100] sm:$0xff]
  %v78 = vld [vmem:[%s0 + $0x108] sm:$0xff]
  %v79 = vld [vmem:[%s0 + $0x110] sm:$0xff]
  %v80 = vld [vmem:[%s0 + $0x118] sm:$0xff]
  %v81 = vld [vmem:[%s0 + $0x120] sm:$0xff]
  %v82 = vld [vmem:[%s0 + $0x128] sm:$0xff]
  %v83 = vld [vmem:[%s0 + $0x130] sm:$0xff]
  %v84 = vld [vmem:[%s0 + $0x138] sm:$0xff]
  %v85 = vld [vmem:[%s0 + $0x140] sm:$0xff]
  %v86 = vld [vmem:[%s0 + $0x148] sm:$0xff]
  %v87 = vld [vmem:[%s0 + $0x150] sm:$0xff]
  %v88 = vld [vmem:[%s0 + $0x158] sm:$0xff]
  %v89 = vld [vmem:[%s0 + $0x160] sm:$0xff]
  %v90 = vld [vmem:[%s0 + $0x168] sm:$0xff]
  %v91 = vld [vmem:[%s0 + $0x170] sm:$0xff]
  %v92 = vld [vmem:[%s0 + $0x178] sm:$0xff]
  %v93 = vld [vmem:[%s0 + $0x180] sm:$0xff]
  %v94 = vld [vmem:[%s0 + $0x188] sm:$0xff]
  %v95 = vld [vmem:[%s0 + $0x190] sm:$0xff]
  %v96 = vld [vmem:[%s0 + $0x198] sm:$0xff]
  %v97 = vld [vmem:[%s0 + $0x1a0] sm:$0xff]
  %v98 = vld [vmem:[%s0 + $0x1a8] sm:$0xff]
  %v99 = vld [vmem:[%s0 + $0x1b0] sm:$0xff]
  %v100 = vld [vmem:[%s0 + $0x1b8] sm:$0xff]
  %v101 = vld [vmem:[%s0 + $0x1c0] sm:$0xff]
  %v102 = vld [vmem:[%s0 + $0x1c8] sm:$0xff]
  %v103 = vld [vmem:[%s0 + $0x1d0] sm:$0xff]
  %v104 = vld [vmem:[%s0 + $0x1d8] sm:$0xff]
  %v105 = vld [vmem:[%s0 + $0x1e0] sm:$0xff]
  %v106 = vld [vmem:[%s0 + $0x1e8] sm:$0xff]
  %v107 = vld [vmem:[%s0 + $0x1f0] sm:$0xff]
  %v108 = vld [vmem:[%s0 + $0x1f8] sm:$0xff]
  %v109 = vld [vmem:[%s0 + $0x200] sm:$0xff]
  %v110 = vld [vmem:[%s0 + $0x208] sm:$0xff]
  %v111 = vld [vmem:[%s0 + $0x210] sm:$0xff]
  %v112 = vld [vmem:[%s0 + $0x218] sm:$0xff]
  %v113 = vld [vmem:[%s0 + $0x220] sm:$0xff]
  %v114 = vld [vmem:[%s0 + $0x228] sm:$0xff]
  %v115 = vld [vmem:[%s0 + $0x230] sm:$0xff]
  %v116 = vld [vmem:[%s0 + $0x238] sm:$0xff]
  %v117 = vld [vmem:[%s0 + $0x240] sm:$0xff]
  %v118 = vld [vmem:[%s0 + $0x248] sm:$0xff]
  %v119 = vld [vmem:[%s0 + $0x250] sm:$0xff]
  %v120 = vld [vmem:[%s0 + $0x258] sm:$0xff]
  %v121 = vld [vmem:[%s0 + $0x260] sm:$0xff]
  %v122 = vld [vmem:[%s0 + $0x268] sm:$0xff]
  %v123 = vld [vmem:[%s0 + $0x270] sm:$0xff]
  %v124 = vld [vmem:[%s0 + $0x278] sm:$0xff]
  %v125 = vld [vmem:[%s0 + $0x280] sm:$0xff]
  %v126 = vld [vmem:[%s0 + $0x288] sm:$0xff]
  %v127 = vld [vmem:[%s0 + $0x290] sm:$0xff]
  %v128 = vld [vmem:[%s0 + $0x298] sm:$0xff]
  %v129 = vld [vmem:[%s0 + $0x2a0] sm:$0xff]
  %v130 = vld [vmem:[%s0 + $0x2a8] sm:$0xff]
  %v131 = vld [vmem:[%s0 + $0x2b0] sm:$0xff]
  %v132 = vld [vmem:[%s0 + $0x2b8] sm:$0xff]
  %v133 = vld [vmem:[%s0 + $0x2c0] sm:$0xff]
  %v134 = vld [vmem:[%s0 + $0x2c8] sm:$0xff]
  %v135 = vld [vmem:[%s0 + $0x2d0] sm:$0xff]
  %v136 = vld [vmem:[%s0 + $0x2d8] sm:$0xff]
  %v137 = vld [vmem:[%s0 + $0x2e0] sm:$0xff]
  %v138 = vld [vmem:[%s0 + $0x2e8] sm:$0xff]
  %v139 = vld [vmem:[%s0 + $0x2f0] sm:$0xff]
  %v140 = vld [vmem:[%s0 + $0x2f8] sm:$0xff]
  %v141 = vld [vmem:[%s0 + $0x300] sm:$0xff]
  %v142 = vld [vmem:[%s0 + $0x308] sm:$0xff]
  %v143 = vld [vmem:[%s0 + $0x310] sm:$0xff]
  %v144 = vld [vmem:[%s0 + $0x318] sm:$0xff]
  %v145 = vld [vmem:[%s0 + $0x320] sm:$0xff]
  %v146 = vld [vmem:[%s0 + $0x328] sm:$0xff]
  %v147 = vld [vmem:[%s0 + $0x330] sm:$0xff]
  %v148 = vld [vmem:[%s0 + $0x338] sm:$0xff]
  %v149 = vld [vmem:[%s0 + $0x340] sm:$0xff]
  %v150 = vld [vmem:[%s0 + $0x348] sm:$0xff]
  %v151 = vld [vmem:[%s0 + $0x350] sm:$0xff]
  %v152 = vld [vmem:[%s0 + $0x358] sm:$0xff]
  %v153 = vld [vmem:[%s0 + $0x360] sm:$0xff]
  %v154 = vld [vmem:[%s0 + $0x368] sm:$0xff]
  %v155 = vld [vmem:[%s0 + $0x370] sm:$0xff]
  %v156 = vld [vmem:[%s0 + $0x378] sm:$0xff]
  %v157 = vld [vmem:[%s0 + $0x380] sm:$0xff]
  %v158 = vld [vmem:[%s0 + $0x388] sm:$0xff]
  %v159 = vld [vmem:[%s0 + $0x390] sm:$0xff]
  %v160 = vld [vmem:[%s0 + $0x398] sm:$0xff]
  %v161 = vld [vmem:[%s0 + $0x3a0] sm:$0xff]
  %v162 = vld [vmem:[%s0 + $0x3a8] sm:$0xff]
  %v163 = vld [vmem:[%s0 + $0x3b0] sm:$0xff]
  %v164 = vld [vmem:[%s0 + $0x3b8] sm:$0xff]
  %v165 = vld [vmem:[%s0 + $0x3c0] sm:$0xff]
  %v166 = vld [vmem:[%s0 + $0x3c8] sm:$0xff]
  %v167 = vld [vmem:[%s0 + $0x3d0] sm:$0xff]
  %v168 = vld [vmem:[%s0 + $0x3d8] sm:$0xff]
  %v169 = vld [vmem:[%s0 + $0x3e0] sm:$0xff]
  %v170 = vld [vmem:[%s0 + $0x3e8] sm:$0xff]
  %v171 = vld [vmem:[%s0 + $0x3f0] sm:$0xff]
  %v172 = vld [vmem:[%s0 + $0x3f8] sm:$0xff]
  %v173 = vld [vmem:[%s2] sm:$0xf]
  %v174 = vld [vmem:[%s2 + $0x4] sm:$0xf]
  %v175 = vld [vmem:[%s2 + $0x8] sm:$0xf]
  %v176 = vld [vmem:[%s2 + $0xc] sm:$0xf]
  %v177 = vld [vmem:[%s2 + $0x10] sm:$0xf]
  %v178 = vld [vmem:[%s2 + $0x14] sm:$0xf]
  %v179 = vld [vmem:[%s2 + $0x18] sm:$0xf]
  %v180 = vld [vmem:[%s2 + $0x1c] sm:$0xf]
  %v181 = vld [vmem:[%s2 + $0x20] sm:$0xf]
  %v182 = vld [vmem:[%s2 + $0x24] sm:$0xf]
  %v183 = vld [vmem:[%s2 + $0x28] sm:$0xf]
  %v184 = vld [vmem:[%s2 + $0x2c] sm:$0xf]
  %v185 = vld [vmem:[%s2 + $0x30] sm:$0xf]
  %v186 = vld [vmem:[%s2 + $0x34] sm:$0xf]
  %v187 = vld [vmem:[%s2 + $0x38] sm:$0xf]
  %v188 = vld [vmem:[%s2 + $0x3c] sm:$0xf]
  %v189 = vld [vmem:[%s2 + $0x40] sm:$0xf]
  %v190 = vld [vmem:[%s2 + $0x44] sm:$0xf]
  %v191 = vld [vmem:[%s2 + $0x48] sm:$0xf]
  %v192 = vld [vmem:[%s2 + $0x4c] sm:$0xf]
  %v193 = vld [vmem:[%s2 + $0x50] sm:$0xf]
  %v194 = vld [vmem:[%s2 + $0x54] sm:$0xf]
  %v195 = vld [vmem:[%s2 + $0x58] sm:$0xf]
  %v196 = vld [vmem:[%s2 + $0x5c] sm:$0xf]
  %v197 = vld [vmem:[%s2 + $0x60] sm:$0xf]
  %v198 = vld [vmem:[%s2 + $0x64] sm:$0xf]
  %v199 = vld [vmem:[%s2 + $0x68] sm:$0xf]
  %v200 = vld [vmem:[%s2 + $0x6c] sm:$0xf]
  %v201 = vld [vmem:[%s2 + $0x70] sm:$0xf]
  %v202 = vld [vmem:[%s2 + $0x74] sm:$0xf]
  %v203 = vld [vmem:[%s2 + $0x78] sm:$0xf]
  %v204 = vld [vmem:[%s2 + $0x7c] sm:$0xf]
  %v205 = vld [vmem:[%s2 + $0x80] sm:$0xf]
  %v206 = vld [vmem:[%s2 + $0x84] sm:$0xf]
  %v207 = vld [vmem:[%s2 + $0x88] sm:$0xf]
  %v208 = vld [vmem:[%s2 + $0x8c] sm:$0xf]
  %v209 = vld [vmem:[%s2 + $0x90] sm:$0xf]
  %v210 = vld [vmem:[%s2 + $0x94] sm:$0xf]
  %v211 = vld [vmem:[%s2 + $0x98] sm:$0xf]
  %v212 = vld [vmem:[%s2 + $0x9c] sm:$0xf]
  %v213 = vld [vmem:[%s2 + $0xa0] sm:$0xf]
  %v214 = vld [vmem:[%s2 + $0xa4] sm:$0xf]
  %v215 = vld [vmem:[%s2 + $0xa8] sm:$0xf]
  %v216 = vld [vmem:[%s2 + $0xac] sm:$0xf]
  %v217 = vld [vmem:[%s2 + $0xb0] sm:$0xf]
  %v218 = vld [vmem:[%s2 + $0xb4] sm:$0xf]
  %v219 = vld [vmem:[%s2 + $0xb8] sm:$0xf]
  %v220 = vld [vmem:[%s2 + $0xbc] sm:$0xf]
  %v221 = vld [vmem:[%s2 + $0xc0] sm:$0xf]
  %v222 = vld [vmem:[%s2 + $0xc4] sm:$0xf]
  %v223 = vld [vmem:[%s2 + $0xc8] sm:$0xf]
  %v224 = vld [vmem:[%s2 + $0xcc] sm:$0xf]
  %v225 = vld [vmem:[%s2 + $0xd0] sm:$0xf]
  %v226 = vld [vmem:[%s2 + $0xd4] sm:$0xf]
  %v227 = vld [vmem:[%s2 + $0xd8] sm:$0xf]
  %v228 = vld [vmem:[%s2 + $0xdc] sm:$0xf]
  %v229 = vld [vmem:[%s2 + $0xe0] sm:$0xf]
  %v230 = vld [vmem:[%s2 + $0xe4] sm:$0xf]
  %v231 = vld [vmem:[%s2 + $0xe8] sm:$0xf]
  %v232 = vld [vmem:[%s2 + $0xec] sm:$0xf]
  %v233 = vld [vmem:[%s2 + $0xf0] sm:$0xf]
  %v234 = vld [vmem:[%s2 + $0xf4] sm:$0xf]
  %v235 = vld [vmem:[%s2 + $0xf8] sm:$0xf]
  %v236 = vld [vmem:[%s2 + $0xfc] sm:$0xf]
  %v237 = vld [vmem:[%s2 + $0x100] sm:$0xf]
  %v238 = vld [vmem:[%s2 + $0x104] sm:$0xf]
  %v239 = vld [vmem:[%s2 + $0x108] sm:$0xf]
  %v240 = vld [vmem:[%s2 + $0x10c] sm:$0xf]
  %v241 = vld [vmem:[%s2 + $0x110] sm:$0xf]
  %v242 = vld [vmem:[%s2 + $0x114] sm:$0xf]
  %v243 = vld [vmem:[%s2 + $0x118] sm:$0xf]
  %v244 = vld [vmem:[%s2 + $0x11c] sm:$0xf]
  %v245 = vld [vmem:[%s2 + $0x120] sm:$0xf]
  %v246 = vld [vmem:[%s2 + $0x124] sm:$0xf]
  %v247 = vld [vmem:[%s2 + $0x128] sm:$0xf]
  %v248 = vld [vmem:[%s2 + $0x12c] sm:$0xf]
  %v249 = vld [vmem:[%s2 + $0x130] sm:$0xf]
  %v250 = vld [vmem:[%s2 + $0x134] sm:$0xf]
  %v251 = vld [vmem:[%s2 + $0x138] sm:$0xf]
  %v252 = vld [vmem:[%s2 + $0x13c] sm:$0xf]
  %v253 = vld [vmem:[%s2 + $0x140] sm:$0xf]
  %v254 = vld [vmem:[%s2 + $0x144] sm:$0xf]
  %v255 = vld [vmem:[%s2 + $0x148] sm:$0xf]
  %v256 = vld [vmem:[%s2 + $0x14c] sm:$0xf]
  %v257 = vld [vmem:[%s2 + $0x150] sm:$0xf]
  %v258 = vld [vmem:[%s2 + $0x154] sm:$0xf]
  %v259 = vld [vmem:[%s2 + $0x158] sm:$0xf]
  %v260 = vld [vmem:[%s2 + $0x15c] sm:$0xf]
  %v261 = vld [vmem:[%s2 + $0x160] sm:$0xf]
  %v262 = vld [vmem:[%s2 + $0x164] sm:$0xf]
  %v263 = vld [vmem:[%s2 + $0x168] sm:$0xf]
  %v264 = vld [vmem:[%s2 + $0x16c] sm:$0xf]
  %v265 = vld [vmem:[%s2 + $0x170] sm:$0xf]
  %v266 = vld [vmem:[%s2 + $0x174] sm:$0xf]
  %v267 = vld [vmem:[%s2 + $0x178] sm:$0xf]
  %v268 = vld [vmem:[%s2 + $0x17c] sm:$0xf]
  %v269 = vld [vmem:[%s2 + $0x180] sm:$0xf]
  %v270 = vld [vmem:[%s2 + $0x184] sm:$0xf]
  %v271 = vld [vmem:[%s2 + $0x188] sm:$0xf]
  %v272 = vld [vmem:[%s2 + $0x18c] sm:$0xf]
  %v273 = vld [vmem:[%s2 + $0x190] sm:$0xf]
  %v274 = vld [vmem:[%s2 + $0x194] sm:$0xf]
  %v275 = vld [vmem:[%s2 + $0x198] sm:$0xf]
  %v276 = vld [vmem:[%s2 + $0x19c] sm:$0xf]
  %v277 = vld [vmem:[%s2 + $0x1a0] sm:$0xf]
  %v278 = vld [vmem:[%s2 + $0x1a4] sm:$0xf]
  %v279 = vld [vmem:[%s2 + $0x1a8] sm:$0xf]
  %v280 = vld [vmem:[%s2 + $0x1ac] sm:$0xf]
  %v281 = vld [vmem:[%s2 + $0x1b0] sm:$0xf]
  %v282 = vld [vmem:[%s2 + $0x1b4] sm:$0xf]
  %v283 = vld [vmem:[%s2 + $0x1b8] sm:$0xf]
  %v284 = vld [vmem:[%s2 + $0x1bc] sm:$0xf]
  %v285 = vld [vmem:[%s2 + $0x1c0] sm:$0xf]
  %v286 = vld [vmem:[%s2 + $0x1c4] sm:$0xf]
  %v287 = vld [vmem:[%s2 + $0x1c8] sm:$0xf]
  %v288 = vld [vmem:[%s2 + $0x1cc] sm:$0xf]
  %v289 = vld [vmem:[%s2 + $0x1d0] sm:$0xf]
  %v290 = vld [vmem:[%s2 + $0x1d4] sm:$0xf]
  %v291 = vld [vmem:[%s2 + $0x1d8] sm:$0xf]
  %v292 = vld [vmem:[%s2 + $0x1dc] sm:$0xf]
  %v293 = vld [vmem:[%s2 + $0x1e0] sm:$0xf]
  %v294 = vld [vmem:[%s2 + $0x1e4] sm:$0xf]
  %v295 = vld [vmem:[%s2 + $0x1e8] sm:$0xf]
  %v296 = vld [vmem:[%s2 + $0x1ec] sm:$0xf]
  %v297 = vld [vmem:[%s2 + $0x1f0] sm:$0xf]
  %v298 = vld [vmem:[%s2 + $0x1f4] sm:$0xf]
  %v299 = vld [vmem:[%s2 + $0x1f8] sm:$0xf]
  %v300 = vld [vmem:[%s2 + $0x1fc] sm:$0xf]
  %v301 = vld [vmem:[%s2 + $0x200] sm:$0xf]
  %v302 = vld [vmem:[%s2 + $0x204] sm:$0xf]
  %v303 = vld [vmem:[%s2 + $0x208] sm:$0xf]
  %v304 = vld [vmem:[%s2 + $0x20c] sm:$0xf]
  %v305 = vld [vmem:[%s2 + $0x210] sm:$0xf]
  %v306 = vld [vmem:[%s2 + $0x214] sm:$0xf]
  %v307 = vld [vmem:[%s2 + $0x218] sm:$0xf]
  %v308 = vld [vmem:[%s2 + $0x21c] sm:$0xf]
  %v309 = vld [vmem:[%s2 + $0x220] sm:$0xf]
  %v310 = vld [vmem:[%s2 + $0x224] sm:$0xf]
  %v311 = vld [vmem:[%s2 + $0x228] sm:$0xf]
  %v312 = vld [vmem:[%s2 + $0x22c] sm:$0xf]
  %v313 = vld [vmem:[%s2 + $0x230] sm:$0xf]
  %v314 = vld [vmem:[%s2 + $0x234] sm:$0xf]
  %v315 = vld [vmem:[%s2 + $0x238] sm:$0xf]
  %v316 = vld [vmem:[%s2 + $0x23c] sm:$0xf]
  %v317 = vld [vmem:[%s2 + $0x240] sm:$0xf]
  %v318 = vld [vmem:[%s2 + $0x244] sm:$0xf]
  %v319 = vld [vmem:[%s2 + $0x248] sm:$0xf]
  %v320 = vld [vmem:[%s2 + $0x24c] sm:$0xf]
  %v321 = vld [vmem:[%s2 + $0x250] sm:$0xf]
  %v322 = vld [vmem:[%s2 + $0x254] sm:$0xf]
  %v323 = vld [vmem:[%s2 + $0x258] sm:$0xf]
  %v324 = vld [vmem:[%s2 + $0x25c] sm:$0xf]
  %v325 = vld [vmem:[%s2 + $0x260] sm:$0xf]
  %v326 = vld [vmem:[%s2 + $0x264] sm:$0xf]
  %v327 = vld [vmem:[%s2 + $0x268] sm:$0xf]
  %v328 = vld [vmem:[%s2 + $0x26c] sm:$0xf]
  %v329 = vld [vmem:[%s2 + $0x270] sm:$0xf]
  %v330 = vld [vmem:[%s2 + $0x274] sm:$0xf]
  %v331 = vld [vmem:[%s2 + $0x278] sm:$0xf]
  %v332 = vld [vmem:[%s2 + $0x27c] sm:$0xf]
  %v333 = vld [vmem:[%s2 + $0x280] sm:$0xf]
  %v334 = vld [vmem:[%s2 + $0x284] sm:$0xf]
  %v335 = vld [vmem:[%s2 + $0x288] sm:$0xf]
  %v336 = vld [vmem:[%s2 + $0x28c] sm:$0xf]
  %v337 = vld [vmem:[%s2 + $0x290] sm:$0xf]
  %v338 = vld [vmem:[%s2 + $0x294] sm:$0xf]
  %v339 = vld [vmem:[%s2 + $0x298] sm:$0xf]
  %v340 = vld [vmem:[%s2 + $0x29c] sm:$0xf]
  %v341 = vld [vmem:[%s2 + $0x2a0] sm:$0xf]
  %v342 = vld [vmem:[%s2 + $0x2a4] sm:$0xf]
  %v343 = vld [vmem:[%s2 + $0x2a8] sm:$0xf]
  %v344 = vld [vmem:[%s2 + $0x2ac] sm:$0xf]
  %v345 = vld [vmem:[%s2 + $0x2b0] sm:$0xf]
  %v346 = vld [vmem:[%s2 + $0x2b4] sm:$0xf]
  %v347 = vld [vmem:[%s2 + $0x2b8] sm:$0xf]
  %v348 = vld [vmem:[%s2 + $0x2bc] sm:$0xf]
  %v349 = vld [vmem:[%s2 + $0x2c0] sm:$0xf]
  %v350 = vld [vmem:[%s2 + $0x2c4] sm:$0xf]
  %v351 = vld [vmem:[%s2 + $0x2c8] sm:$0xf]
  %v352 = vld [vmem:[%s2 + $0x2cc] sm:$0xf]
  %v353 = vld [vmem:[%s2 + $0x2d0] sm:$0xf]
  %v354 = vld [vmem:[%s2 + $0x2d4] sm:$0xf]
  %v355 = vld [vmem:[%s2 + $0x2d8] sm:$0xf]
  %v356 = vld [vmem:[%s2 + $0x2dc] sm:$0xf]
  %v357 = vld [vmem:[%s2 + $0x2e0] sm:$0xf]
  %v358 = vld [vmem:[%s2 + $0x2e4] sm:$0xf]
  %v359 = vld [vmem:[%s2 + $0x2e8] sm:$0xf]
  %v360 = vld [vmem:[%s2 + $0x2ec] sm:$0xf]
  %v361 = vld [vmem:[%s2 + $0x2f0] sm:$0xf]
  %v362 = vld [vmem:[%s2 + $0x2f4] sm:$0xf]
  %v363 = vld [vmem:[%s2 + $0x2f8] sm:$0xf]
  %v364 = vld [vmem:[%s2 + $0x2fc] sm:$0xf]
  %v365 = vld [vmem:[%s2 + $0x300] sm:$0xf]
  %v366 = vld [vmem:[%s2 + $0x304] sm:$0xf]
  %v367 = vld [vmem:[%s2 + $0x308] sm:$0xf]
  %v368 = vld [vmem:[%s2 + $0x30c] sm:$0xf]
  %v369 = vld [vmem:[%s2 + $0x310] sm:$0xf]
  %v370 = vld [vmem:[%s2 + $0x314] sm:$0xf]
  %v371 = vld [vmem:[%s2 + $0x318] sm:$0xf]
  %v372 = vld [vmem:[%s2 + $0x31c] sm:$0xf]
  %v373 = vld [vmem:[%s2 + $0x320] sm:$0xf]
  %v374 = vld [vmem:[%s2 + $0x324] sm:$0xf]
  %v375 = vld [vmem:[%s2 + $0x328] sm:$0xf]
  %v376 = vld [vmem:[%s2 + $0x32c] sm:$0xf]
  %v377 = vld [vmem:[%s2 + $0x330] sm:$0xf]
  %v378 = vld [vmem:[%s2 + $0x334] sm:$0xf]
  %v379 = vld [vmem:[%s2 + $0x338] sm:$0xf]
  %v380 = vld [vmem:[%s2 + $0x33c] sm:$0xf]
  %v381 = vld [vmem:[%s2 + $0x340] sm:$0xf]
  %v382 = vld [vmem:[%s2 + $0x344] sm:$0xf]
  %v383 = vld [vmem:[%s2 + $0x348] sm:$0xf]
  %v384 = vld [vmem:[%s2 + $0x34c] sm:$0xf]
  %v385 = vld [vmem:[%s2 + $0x350] sm:$0xf]
  %v386 = vld [vmem:[%s2 + $0x354] sm:$0xf]
  %v387 = vld [vmem:[%s2 + $0x358] sm:$0xf]
  %v388 = vld [vmem:[%s2 + $0x35c] sm:$0xf]
  %v389 = vld [vmem:[%s2 + $0x360] sm:$0xf]
  %v390 = vld [vmem:[%s2 + $0x364] sm:$0xf]
  %v391 = vld [vmem:[%s2 + $0x368] sm:$0xf]
  %v392 = vld [vmem:[%s2 + $0x36c] sm:$0xf]
  %v393 = vld [vmem:[%s2 + $0x370] sm:$0xf]
  %v394 = vld [vmem:[%s2 + $0x374] sm:$0xf]
  %v395 = vld [vmem:[%s2 + $0x378] sm:$0xf]
  %v396 = vld [vmem:[%s2 + $0x37c] sm:$0xf]
  %v397 = vld [vmem:[%s2 + $0x380] sm:$0xf]
  %v398 = vld [vmem:[%s2 + $0x384] sm:$0xf]
  %v399 = vld [vmem:[%s2 + $0x388] sm:$0xf]
  %v400 = vld [vmem:[%s2 + $0x38c] sm:$0xf]
  %v401 = vld [vmem:[%s2 + $0x390] sm:$0xf]
  %v402 = vld [vmem:[%s2 + $0x394] sm:$0xf]
  %v403 = vld [vmem:[%s2 + $0x398] sm:$0xf]
  %v404 = vld [vmem:[%s2 + $0x39c] sm:$0xf]
  %v405 = vld [vmem:[%s2 + $0x3a0] sm:$0xf]
  %v406 = vld [vmem:[%s2 + $0x3a4] sm:$0xf]
  %v407 = vld [vmem:[%s2 + $0x3a8] sm:$0xf]
  %v408 = vld [vmem:[%s2 + $0x3ac] sm:$0xf]
  %v409 = vld [vmem:[%s2 + $0x3b0] sm:$0xf]
  %v410 = vld [vmem:[%s2 + $0x3b4] sm:$0xf]
  %v411 = vld [vmem:[%s2 + $0x3b8] sm:$0xf]
  %v412 = vld [vmem:[%s2 + $0x3bc] sm:$0xf]
  %v413 = vld [vmem:[%s2 + $0x3c0] sm:$0xf]
  %v414 = vld [vmem:[%s2 + $0x3c4] sm:$0xf]
  %v415 = vld [vmem:[%s2 + $0x3c8] sm:$0xf]
  %v416 = vld [vmem:[%s2 + $0x3cc] sm:$0xf]
  %v417 = vld [vmem:[%s2 + $0x3d0] sm:$0xf]
  %v418 = vld [vmem:[%s2 + $0x3d4] sm:$0xf]
  %v419 = vld [vmem:[%s2 + $0x3d8] sm:$0xf]
  %v420 = vld [vmem:[%s2 + $0x3dc] sm:$0xf]
  %v421 = vld [vmem:[%s2 + $0x3e0] sm:$0xf]
  %v422 = vld [vmem:[%s2 + $0x3e4] sm:$0xf]
  %v423 = vld [vmem:[%s2 + $0x3e8] sm:$0xf]
  %v424 = vld [vmem:[%s2 + $0x3ec] sm:$0xf]
  %v425 = vld [vmem:[%s2 + $0x3f0] sm:$0xf]
  %v426 = vld [vmem:[%s2 + $0x3f4] sm:$0xf]
  %v427 = vld [vmem:[%s2 + $0x3f8] sm:$0xf]
  %v428 = vld [vmem:[%s2 + $0x3fc] sm:$0xf]
  %v429 = vld [vmem:[%s3] sm:$0x1]
  %v431 = vlaneseq
  %v432 = vshrl.u32 %v431, 7
  %v433 = vsub.s32 0, %v432
  %v434 = vrot.slane %v429, %v433
  %v564 = vunpack.c.l.b16 %v45
  %v565 = vunpack.c.h.b16 %v45
  %v566 = vunpack.c.l.b16 %v46
  %v567 = vunpack.c.h.b16 %v46
  %v568 = vunpack.c.l.b16 %v47
  %v569 = vunpack.c.h.b16 %v47
  %v570 = vunpack.c.l.b16 %v48
  %v571 = vunpack.c.h.b16 %v48
  %v572 = vunpack.c.l.b16 %v49
  %v573 = vunpack.c.h.b16 %v49
  %v574 = vunpack.c.l.b16 %v50
  %v575 = vunpack.c.h.b16 %v50
  %v576 = vunpack.c.l.b16 %v51
  %v577 = vunpack.c.h.b16 %v51
  %v578 = vunpack.c.l.b16 %v52
  %v579 = vunpack.c.h.b16 %v52
  %v580 = vunpack.c.l.b16 %v53
  %v581 = vunpack.c.h.b16 %v53
  %v582 = vunpack.c.l.b16 %v54
  %v583 = vunpack.c.h.b16 %v54
  %v584 = vunpack.c.l.b16 %v55
  %v585 = vunpack.c.h.b16 %v55
  %v586 = vunpack.c.l.b16 %v56
  %v587 = vunpack.c.h.b16 %v56
  %v588 = vunpack.c.l.b16 %v57
  %v589 = vunpack.c.h.b16 %v57
  %v590 = vunpack.c.l.b16 %v58
  %v591 = vunpack.c.h.b16 %v58
  %v592 = vunpack.c.l.b16 %v59
  %v593 = vunpack.c.h.b16 %v59
  %v594 = vunpack.c.l.b16 %v60
  %v595 = vunpack.c.h.b16 %v60
  %v596 = vunpack.c.l.b16 %v61
  %v597 = vunpack.c.h.b16 %v61
  %v598 = vunpack.c.l.b16 %v62
  %v599 = vunpack.c.h.b16 %v62
  %v600 = vunpack.c.l.b16 %v63
  %v601 = vunpack.c.h.b16 %v63
  %v602 = vunpack.c.l.b16 %v64
  %v603 = vunpack.c.h.b16 %v64
  %v604 = vunpack.c.l.b16 %v65
  %v605 = vunpack.c.h.b16 %v65
  %v606 = vunpack.c.l.b16 %v66
  %v607 = vunpack.c.h.b16 %v66
  %v608 = vunpack.c.l.b16 %v67
  %v609 = vunpack.c.h.b16 %v67
  %v610 = vunpack.c.l.b16 %v68
  %v611 = vunpack.c.h.b16 %v68
  %v612 = vunpack.c.l.b16 %v69
  %v613 = vunpack.c.h.b16 %v69
  %v614 = vunpack.c.l.b16 %v70
  %v615 = vunpack.c.h.b16 %v70
  %v616 = vunpack.c.l.b16 %v71
  %v617 = vunpack.c.h.b16 %v71
  %v618 = vunpack.c.l.b16 %v72
  %v619 = vunpack.c.h.b16 %v72
  %v620 = vunpack.c.l.b16 %v73
  %v621 = vunpack.c.h.b16 %v73
  %v622 = vunpack.c.l.b16 %v74
  %v623 = vunpack.c.h.b16 %v74
  %v624 = vunpack.c.l.b16 %v75
  %v625 = vunpack.c.h.b16 %v75
  %v626 = vunpack.c.l.b16 %v76
  %v627 = vunpack.c.h.b16 %v76
  %v628 = vunpack.c.l.b16 %v77
  %v629 = vunpack.c.h.b16 %v77
  %v630 = vunpack.c.l.b16 %v78
  %v631 = vunpack.c.h.b16 %v78
  %v632 = vunpack.c.l.b16 %v79
  %v633 = vunpack.c.h.b16 %v79
  %v634 = vunpack.c.l.b16 %v80
  %v635 = vunpack.c.h.b16 %v80
  %v636 = vunpack.c.l.b16 %v81
  %v637 = vunpack.c.h.b16 %v81
  %v638 = vunpack.c.l.b16 %v82
  %v639 = vunpack.c.h.b16 %v82
  %v640 = vunpack.c.l.b16 %v83
  %v641 = vunpack.c.h.b16 %v83
  %v642 = vunpack.c.l.b16 %v84
  %v643 = vunpack.c.h.b16 %v84
  %v644 = vunpack.c.l.b16 %v85
  %v645 = vunpack.c.h.b16 %v85
  %v646 = vunpack.c.l.b16 %v86
  %v647 = vunpack.c.h.b16 %v86
  %v648 = vunpack.c.l.b16 %v87
  %v649 = vunpack.c.h.b16 %v87
  %v650 = vunpack.c.l.b16 %v88
  %v651 = vunpack.c.h.b16 %v88
  %v652 = vunpack.c.l.b16 %v89
  %v653 = vunpack.c.h.b16 %v89
  %v654 = vunpack.c.l.b16 %v90
  %v655 = vunpack.c.h.b16 %v90
  %v656 = vunpack.c.l.b16 %v91
  %v657 = vunpack.c.h.b16 %v91
  %v658 = vunpack.c.l.b16 %v92
  %v659 = vunpack.c.h.b16 %v92
  %v660 = vunpack.c.l.b16 %v93
  %v661 = vunpack.c.h.b16 %v93
  %v662 = vunpack.c.l.b16 %v94
  %v663 = vunpack.c.h.b16 %v94
  %v664 = vunpack.c.l.b16 %v95
  %v665 = vunpack.c.h.b16 %v95
  %v666 = vunpack.c.l.b16 %v96
  %v667 = vunpack.c.h.b16 %v96
  %v668 = vunpack.c.l.b16 %v97
  %v669 = vunpack.c.h.b16 %v97
  %v670 = vunpack.c.l.b16 %v98
  %v671 = vunpack.c.h.b16 %v98
  %v672 = vunpack.c.l.b16 %v99
  %v673 = vunpack.c.h.b16 %v99
  %v674 = vunpack.c.l.b16 %v100
  %v675 = vunpack.c.h.b16 %v100
  %v676 = vunpack.c.l.b16 %v101
  %v677 = vunpack.c.h.b16 %v101
  %v678 = vunpack.c.l.b16 %v102
  %v679 = vunpack.c.h.b16 %v102
  %v680 = vunpack.c.l.b16 %v103
  %v681 = vunpack.c.h.b16 %v103
  %v682 = vunpack.c.l.b16 %v104
  %v683 = vunpack.c.h.b16 %v104
  %v684 = vunpack.c.l.b16 %v105
  %v685 = vunpack.c.h.b16 %v105
  %v686 = vunpack.c.l.b16 %v106
  %v687 = vunpack.c.h.b16 %v106
  %v688 = vunpack.c.l.b16 %v107
  %v689 = vunpack.c.h.b16 %v107
  %v690 = vunpack.c.l.b16 %v108
  %v691 = vunpack.c.h.b16 %v108
  %v692 = vunpack.c.l.b16 %v109
  %v693 = vunpack.c.h.b16 %v109
  %v694 = vunpack.c.l.b16 %v110
  %v695 = vunpack.c.h.b16 %v110
  %v696 = vunpack.c.l.b16 %v111
  %v697 = vunpack.c.h.b16 %v111
  %v698 = vunpack.c.l.b16 %v112
  %v699 = vunpack.c.h.b16 %v112
  %v700 = vunpack.c.l.b16 %v113
  %v701 = vunpack.c.h.b16 %v113
  %v702 = vunpack.c.l.b16 %v114
  %v703 = vunpack.c.h.b16 %v114
  %v704 = vunpack.c.l.b16 %v115
  %v705 = vunpack.c.h.b16 %v115
  %v706 = vunpack.c.l.b16 %v116
  %v707 = vunpack.c.h.b16 %v116
  %v708 = vunpack.c.l.b16 %v117
  %v709 = vunpack.c.h.b16 %v117
  %v710 = vunpack.c.l.b16 %v118
  %v711 = vunpack.c.h.b16 %v118
  %v712 = vunpack.c.l.b16 %v119
  %v713 = vunpack.c.h.b16 %v119
  %v714 = vunpack.c.l.b16 %v120
  %v715 = vunpack.c.h.b16 %v120
  %v716 = vunpack.c.l.b16 %v121
  %v717 = vunpack.c.h.b16 %v121
  %v718 = vunpack.c.l.b16 %v122
  %v719 = vunpack.c.h.b16 %v122
  %v720 = vunpack.c.l.b16 %v123
  %v721 = vunpack.c.h.b16 %v123
  %v722 = vunpack.c.l.b16 %v124
  %v723 = vunpack.c.h.b16 %v124
  %v724 = vunpack.c.l.b16 %v125
  %v725 = vunpack.c.h.b16 %v125
  %v726 = vunpack.c.l.b16 %v126
  %v727 = vunpack.c.h.b16 %v126
  %v728 = vunpack.c.l.b16 %v127
  %v729 = vunpack.c.h.b16 %v127
  %v730 = vunpack.c.l.b16 %v128
  %v731 = vunpack.c.h.b16 %v128
  %v732 = vunpack.c.l.b16 %v129
  %v733 = vunpack.c.h.b16 %v129
  %v734 = vunpack.c.l.b16 %v130
  %v735 = vunpack.c.h.b16 %v130
  %v736 = vunpack.c.l.b16 %v131
  %v737 = vunpack.c.h.b16 %v131
  %v738 = vunpack.c.l.b16 %v132
  %v739 = vunpack.c.h.b16 %v132
  %v740 = vunpack.c.l.b16 %v133
  %v741 = vunpack.c.h.b16 %v133
  %v742 = vunpack.c.l.b16 %v134
  %v743 = vunpack.c.h.b16 %v134
  %v744 = vunpack.c.l.b16 %v135
  %v745 = vunpack.c.h.b16 %v135
  %v746 = vunpack.c.l.b16 %v136
  %v747 = vunpack.c.h.b16 %v136
  %v748 = vunpack.c.l.b16 %v137
  %v749 = vunpack.c.h.b16 %v137
  %v750 = vunpack.c.l.b16 %v138
  %v751 = vunpack.c.h.b16 %v138
  %v752 = vunpack.c.l.b16 %v139
  %v753 = vunpack.c.h.b16 %v139
  %v754 = vunpack.c.l.b16 %v140
  %v755 = vunpack.c.h.b16 %v140
  %v756 = vunpack.c.l.b16 %v141
  %v757 = vunpack.c.h.b16 %v141
  %v758 = vunpack.c.l.b16 %v142
  %v759 = vunpack.c.h.b16 %v142
  %v760 = vunpack.c.l.b16 %v143
  %v761 = vunpack.c.h.b16 %v143
  %v762 = vunpack.c.l.b16 %v144
  %v763 = vunpack.c.h.b16 %v144
  %v764 = vunpack.c.l.b16 %v145
  %v765 = vunpack.c.h.b16 %v145
  %v766 = vunpack.c.l.b16 %v146
  %v767 = vunpack.c.h.b16 %v146
  %v768 = vunpack.c.l.b16 %v147
  %v769 = vunpack.c.h.b16 %v147
  %v770 = vunpack.c.l.b16 %v148
  %v771 = vunpack.c.h.b16 %v148
  %v772 = vunpack.c.l.b16 %v149
  %v773 = vunpack.c.h.b16 %v149
  %v774 = vunpack.c.l.b16 %v150
  %v775 = vunpack.c.h.b16 %v150
  %v776 = vunpack.c.l.b16 %v151
  %v777 = vunpack.c.h.b16 %v151
  %v778 = vunpack.c.l.b16 %v152
  %v779 = vunpack.c.h.b16 %v152
  %v780 = vunpack.c.l.b16 %v153
  %v781 = vunpack.c.h.b16 %v153
  %v782 = vunpack.c.l.b16 %v154
  %v783 = vunpack.c.h.b16 %v154
  %v784 = vunpack.c.l.b16 %v155
  %v785 = vunpack.c.h.b16 %v155
  %v786 = vunpack.c.l.b16 %v156
  %v787 = vunpack.c.h.b16 %v156
  %v788 = vunpack.c.l.b16 %v157
  %v789 = vunpack.c.h.b16 %v157
  %v790 = vunpack.c.l.b16 %v158
  %v791 = vunpack.c.h.b16 %v158
  %v792 = vunpack.c.l.b16 %v159
  %v793 = vunpack.c.h.b16 %v159
  %v794 = vunpack.c.l.b16 %v160
  %v795 = vunpack.c.h.b16 %v160
  %v796 = vunpack.c.l.b16 %v161
  %v797 = vunpack.c.h.b16 %v161
  %v798 = vunpack.c.l.b16 %v162
  %v799 = vunpack.c.h.b16 %v162
  %v800 = vunpack.c.l.b16 %v163
  %v801 = vunpack.c.h.b16 %v163
  %v802 = vunpack.c.l.b16 %v164
  %v803 = vunpack.c.h.b16 %v164
  %v804 = vunpack.c.l.b16 %v165
  %v805 = vunpack.c.h.b16 %v165
  %v806 = vunpack.c.l.b16 %v166
  %v807 = vunpack.c.h.b16 %v166
  %v808 = vunpack.c.l.b16 %v167
  %v809 = vunpack.c.h.b16 %v167
  %v810 = vunpack.c.l.b16 %v168
  %v811 = vunpack.c.h.b16 %v168
  %v812 = vunpack.c.l.b16 %v169
  %v813 = vunpack.c.h.b16 %v169
  %v814 = vunpack.c.l.b16 %v170
  %v815 = vunpack.c.h.b16 %v170
  %v816 = vunpack.c.l.b16 %v171
  %v817 = vunpack.c.h.b16 %v171
  %v818 = vunpack.c.l.b16 %v172
  %v819 = vunpack.c.h.b16 %v172
  %v820 = vpack.c.b16 %v580, %v564
  %v821 = vpack.c.b16 %v581, %v565
  %v822 = vpack.c.b16 %v582, %v566
  %v823 = vpack.c.b16 %v583, %v567
  %v824 = vpack.c.b16 %v584, %v568
  %v825 = vpack.c.b16 %v585, %v569
  %v826 = vpack.c.b16 %v586, %v570
  %v827 = vpack.c.b16 %v587, %v571
  %v828 = vpack.c.b16 %v588, %v572
  %v829 = vpack.c.b16 %v589, %v573
  %v830 = vpack.c.b16 %v590, %v574
  %v831 = vpack.c.b16 %v591, %v575
  %v832 = vpack.c.b16 %v592, %v576
  %v833 = vpack.c.b16 %v593, %v577
  %v834 = vpack.c.b16 %v594, %v578
  %v835 = vpack.c.b16 %v595, %v579
  %v836 = vpack.c.b16 %v612, %v596
  %v837 = vpack.c.b16 %v613, %v597
  %v838 = vpack.c.b16 %v614, %v598
  %v839 = vpack.c.b16 %v615, %v599
  %v840 = vpack.c.b16 %v616, %v600
  %v841 = vpack.c.b16 %v617, %v601
  %v842 = vpack.c.b16 %v618, %v602
  %v843 = vpack.c.b16 %v619, %v603
  %v844 = vpack.c.b16 %v620, %v604
  %v845 = vpack.c.b16 %v621, %v605
  %v846 = vpack.c.b16 %v622, %v606
  %v847 = vpack.c.b16 %v623, %v607
  %v848 = vpack.c.b16 %v624, %v608
  %v849 = vpack.c.b16 %v625, %v609
  %v850 = vpack.c.b16 %v626, %v610
  %v851 = vpack.c.b16 %v627, %v611
  %v852 = vpack.c.b16 %v644, %v628
  %v853 = vpack.c.b16 %v645, %v629
  %v854 = vpack.c.b16 %v646, %v630
  %v855 = vpack.c.b16 %v647, %v631
  %v856 = vpack.c.b16 %v648, %v632
  %v857 = vpack.c.b16 %v649, %v633
  %v858 = vpack.c.b16 %v650, %v634
  %v859 = vpack.c.b16 %v651, %v635
  %v860 = vpack.c.b16 %v652, %v636
  %v861 = vpack.c.b16 %v653, %v637
  %v862 = vpack.c.b16 %v654, %v638
  %v863 = vpack.c.b16 %v655, %v639
  %v864 = vpack.c.b16 %v656, %v640
  %v865 = vpack.c.b16 %v657, %v641
  %v866 = vpack.c.b16 %v658, %v642
  %v867 = vpack.c.b16 %v659, %v643
  %v868 = vpack.c.b16 %v676, %v660
  %v869 = vpack.c.b16 %v677, %v661
  %v870 = vpack.c.b16 %v678, %v662
  %v871 = vpack.c.b16 %v679, %v663
  %v872 = vpack.c.b16 %v680, %v664
  %v873 = vpack.c.b16 %v681, %v665
  %v874 = vpack.c.b16 %v682, %v666
  %v875 = vpack.c.b16 %v683, %v667
  %v876 = vpack.c.b16 %v684, %v668
  %v877 = vpack.c.b16 %v685, %v669
  %v878 = vpack.c.b16 %v686, %v670
  %v879 = vpack.c.b16 %v687, %v671
  %v880 = vpack.c.b16 %v688, %v672
  %v881 = vpack.c.b16 %v689, %v673
  %v882 = vpack.c.b16 %v690, %v674
  %v883 = vpack.c.b16 %v691, %v675
  %v884 = vpack.c.b16 %v708, %v692
  %v885 = vpack.c.b16 %v709, %v693
  %v886 = vpack.c.b16 %v710, %v694
  %v887 = vpack.c.b16 %v711, %v695
  %v888 = vpack.c.b16 %v712, %v696
  %v889 = vpack.c.b16 %v713, %v697
  %v890 = vpack.c.b16 %v714, %v698
  %v891 = vpack.c.b16 %v715, %v699
  %v892 = vpack.c.b16 %v716, %v700
  %v893 = vpack.c.b16 %v717, %v701
  %v894 = vpack.c.b16 %v718, %v702
  %v895 = vpack.c.b16 %v719, %v703
  %v896 = vpack.c.b16 %v720, %v704
  %v897 = vpack.c.b16 %v721, %v705
  %v898 = vpack.c.b16 %v722, %v706
  %v899 = vpack.c.b16 %v723, %v707
  %v900 = vpack.c.b16 %v740, %v724
  %v901 = vpack.c.b16 %v741, %v725
  %v902 = vpack.c.b16 %v742, %v726
  %v903 = vpack.c.b16 %v743, %v727
  %v904 = vpack.c.b16 %v744, %v728
  %v905 = vpack.c.b16 %v745, %v729
  %v906 = vpack.c.b16 %v746, %v730
  %v907 = vpack.c.b16 %v747, %v731
  %v908 = vpack.c.b16 %v748, %v732
  %v909 = vpack.c.b16 %v749, %v733
  %v910 = vpack.c.b16 %v750, %v734
  %v911 = vpack.c.b16 %v751, %v735
  %v912 = vpack.c.b16 %v752, %v736
  %v913 = vpack.c.b16 %v753, %v737
  %v914 = vpack.c.b16 %v754, %v738
  %v915 = vpack.c.b16 %v755, %v739
  %v916 = vpack.c.b16 %v772, %v756
  %v917 = vpack.c.b16 %v773, %v757
  %v918 = vpack.c.b16 %v774, %v758
  %v919 = vpack.c.b16 %v775, %v759
  %v920 = vpack.c.b16 %v776, %v760
  %v921 = vpack.c.b16 %v777, %v761
  %v922 = vpack.c.b16 %v778, %v762
  %v923 = vpack.c.b16 %v779, %v763
  %v924 = vpack.c.b16 %v780, %v764
  %v925 = vpack.c.b16 %v781, %v765
  %v926 = vpack.c.b16 %v782, %v766
  %v927 = vpack.c.b16 %v783, %v767
  %v928 = vpack.c.b16 %v784, %v768
  %v929 = vpack.c.b16 %v785, %v769
  %v930 = vpack.c.b16 %v786, %v770
  %v931 = vpack.c.b16 %v787, %v771
  %v932 = vpack.c.b16 %v804, %v788
  %v933 = vpack.c.b16 %v805, %v789
  %v934 = vpack.c.b16 %v806, %v790
  %v935 = vpack.c.b16 %v807, %v791
  %v936 = vpack.c.b16 %v808, %v792
  %v937 = vpack.c.b16 %v809, %v793
  %v938 = vpack.c.b16 %v810, %v794
  %v939 = vpack.c.b16 %v811, %v795
  %v940 = vpack.c.b16 %v812, %v796
  %v941 = vpack.c.b16 %v813, %v797
  %v942 = vpack.c.b16 %v814, %v798
  %v943 = vpack.c.b16 %v815, %v799
  %v944 = vpack.c.b16 %v816, %v800
  %v945 = vpack.c.b16 %v817, %v801
  %v946 = vpack.c.b16 %v818, %v802
  %v947 = vpack.c.b16 %v819, %v803
  %v1332 = vunpack.c.l.b16 %v173
  %v1333 = vunpack.c.l.b16 %v174
  %v1334 = vunpack.c.l.b16 %v175
  %v1335 = vunpack.c.l.b16 %v176
  %v1336 = vunpack.c.l.b16 %v177
  %v1337 = vunpack.c.l.b16 %v178
  %v1338 = vunpack.c.l.b16 %v179
  %v1339 = vunpack.c.l.b16 %v180
  %v1340 = vunpack.c.l.b16 %v181
  %v1341 = vunpack.c.l.b16 %v182
  %v1342 = vunpack.c.l.b16 %v183
  %v1343 = vunpack.c.l.b16 %v184
  %v1344 = vunpack.c.l.b16 %v185
  %v1345 = vunpack.c.l.b16 %v186
  %v1346 = vunpack.c.l.b16 %v187
  %v1347 = vunpack.c.l.b16 %v188
  %v1348 = vunpack.c.l.b16 %v189
  %v1349 = vunpack.c.l.b16 %v190
  %v1350 = vunpack.c.l.b16 %v191
  %v1351 = vunpack.c.l.b16 %v192
  %v1352 = vunpack.c.l.b16 %v193
  %v1353 = vunpack.c.l.b16 %v194
  %v1354 = vunpack.c.l.b16 %v195
  %v1355 = vunpack.c.l.b16 %v196
  %v1356 = vunpack.c.l.b16 %v197
  %v1357 = vunpack.c.l.b16 %v198
  %v1358 = vunpack.c.l.b16 %v199
  %v1359 = vunpack.c.l.b16 %v200
  %v1360 = vunpack.c.l.b16 %v201
  %v1361 = vunpack.c.l.b16 %v202
  %v1362 = vunpack.c.l.b16 %v203
  %v1363 = vunpack.c.l.b16 %v204
  %v1364 = vunpack.c.l.b16 %v205
  %v1365 = vunpack.c.l.b16 %v206
  %v1366 = vunpack.c.l.b16 %v207
  %v1367 = vunpack.c.l.b16 %v208
  %v1368 = vunpack.c.l.b16 %v209
  %v1369 = vunpack.c.l.b16 %v210
  %v1370 = vunpack.c.l.b16 %v211
  %v1371 = vunpack.c.l.b16 %v212
  %v1372 = vunpack.c.l.b16 %v213
  %v1373 = vunpack.c.l.b16 %v214
  %v1374 = vunpack.c.l.b16 %v215
  %v1375 = vunpack.c.l.b16 %v216
  %v1376 = vunpack.c.l.b16 %v217
  %v1377 = vunpack.c.l.b16 %v218
  %v1378 = vunpack.c.l.b16 %v219
  %v1379 = vunpack.c.l.b16 %v220
  %v1380 = vunpack.c.l.b16 %v221
  %v1381 = vunpack.c.l.b16 %v222
  %v1382 = vunpack.c.l.b16 %v223
  %v1383 = vunpack.c.l.b16 %v224
  %v1384 = vunpack.c.l.b16 %v225
  %v1385 = vunpack.c.l.b16 %v226
  %v1386 = vunpack.c.l.b16 %v227
  %v1387 = vunpack.c.l.b16 %v228
  %v1388 = vunpack.c.l.b16 %v229
  %v1389 = vunpack.c.l.b16 %v230
  %v1390 = vunpack.c.l.b16 %v231
  %v1391 = vunpack.c.l.b16 %v232
  %v1392 = vunpack.c.l.b16 %v233
  %v1393 = vunpack.c.l.b16 %v234
  %v1394 = vunpack.c.l.b16 %v235
  %v1395 = vunpack.c.l.b16 %v236
  %v1396 = vunpack.c.l.b16 %v237
  %v1397 = vunpack.c.l.b16 %v238
  %v1398 = vunpack.c.l.b16 %v239
  %v1399 = vunpack.c.l.b16 %v240
  %v1400 = vunpack.c.l.b16 %v241
  %v1401 = vunpack.c.l.b16 %v242
  %v1402 = vunpack.c.l.b16 %v243
  %v1403 = vunpack.c.l.b16 %v244
  %v1404 = vunpack.c.l.b16 %v245
  %v1405 = vunpack.c.l.b16 %v246
  %v1406 = vunpack.c.l.b16 %v247
  %v1407 = vunpack.c.l.b16 %v248
  %v1408 = vunpack.c.l.b16 %v249
  %v1409 = vunpack.c.l.b16 %v250
  %v1410 = vunpack.c.l.b16 %v251
  %v1411 = vunpack.c.l.b16 %v252
  %v1412 = vunpack.c.l.b16 %v253
  %v1413 = vunpack.c.l.b16 %v254
  %v1414 = vunpack.c.l.b16 %v255
  %v1415 = vunpack.c.l.b16 %v256
  %v1416 = vunpack.c.l.b16 %v257
  %v1417 = vunpack.c.l.b16 %v258
  %v1418 = vunpack.c.l.b16 %v259
  %v1419 = vunpack.c.l.b16 %v260
  %v1420 = vunpack.c.l.b16 %v261
  %v1421 = vunpack.c.l.b16 %v262
  %v1422 = vunpack.c.l.b16 %v263
  %v1423 = vunpack.c.l.b16 %v264
  %v1424 = vunpack.c.l.b16 %v265
  %v1425 = vunpack.c.l.b16 %v266
  %v1426 = vunpack.c.l.b16 %v267
  %v1427 = vunpack.c.l.b16 %v268
  %v1428 = vunpack.c.l.b16 %v269
  %v1429 = vunpack.c.l.b16 %v270
  %v1430 = vunpack.c.l.b16 %v271
  %v1431 = vunpack.c.l.b16 %v272
  %v1432 = vunpack.c.l.b16 %v273
  %v1433 = vunpack.c.l.b16 %v274
  %v1434 = vunpack.c.l.b16 %v275
  %v1435 = vunpack.c.l.b16 %v276
  %v1436 = vunpack.c.l.b16 %v277
  %v1437 = vunpack.c.l.b16 %v278
  %v1438 = vunpack.c.l.b16 %v279
  %v1439 = vunpack.c.l.b16 %v280
  %v1440 = vunpack.c.l.b16 %v281
  %v1441 = vunpack.c.l.b16 %v282
  %v1442 = vunpack.c.l.b16 %v283
  %v1443 = vunpack.c.l.b16 %v284
  %v1444 = vunpack.c.l.b16 %v285
  %v1445 = vunpack.c.l.b16 %v286
  %v1446 = vunpack.c.l.b16 %v287
  %v1447 = vunpack.c.l.b16 %v288
  %v1448 = vunpack.c.l.b16 %v289
  %v1449 = vunpack.c.l.b16 %v290
  %v1450 = vunpack.c.l.b16 %v291
  %v1451 = vunpack.c.l.b16 %v292
  %v1452 = vunpack.c.l.b16 %v293
  %v1453 = vunpack.c.l.b16 %v294
  %v1454 = vunpack.c.l.b16 %v295
  %v1455 = vunpack.c.l.b16 %v296
  %v1456 = vunpack.c.l.b16 %v297
  %v1457 = vunpack.c.l.b16 %v298
  %v1458 = vunpack.c.l.b16 %v299
  %v1459 = vunpack.c.l.b16 %v300
  %v1460 = vunpack.c.l.b16 %v301
  %v1461 = vunpack.c.l.b16 %v302
  %v1462 = vunpack.c.l.b16 %v303
  %v1463 = vunpack.c.l.b16 %v304
  %v1464 = vunpack.c.l.b16 %v305
  %v1465 = vunpack.c.l.b16 %v306
  %v1466 = vunpack.c.l.b16 %v307
  %v1467 = vunpack.c.l.b16 %v308
  %v1468 = vunpack.c.l.b16 %v309
  %v1469 = vunpack.c.l.b16 %v310
  %v1470 = vunpack.c.l.b16 %v311
  %v1471 = vunpack.c.l.b16 %v312
  %v1472 = vunpack.c.l.b16 %v313
  %v1473 = vunpack.c.l.b16 %v314
  %v1474 = vunpack.c.l.b16 %v315
  %v1475 = vunpack.c.l.b16 %v316
  %v1476 = vunpack.c.l.b16 %v317
  %v1477 = vunpack.c.l.b16 %v318
  %v1478 = vunpack.c.l.b16 %v319
  %v1479 = vunpack.c.l.b16 %v320
  %v1480 = vunpack.c.l.b16 %v321
  %v1481 = vunpack.c.l.b16 %v322
  %v1482 = vunpack.c.l.b16 %v323
  %v1483 = vunpack.c.l.b16 %v324
  %v1484 = vunpack.c.l.b16 %v325
  %v1485 = vunpack.c.l.b16 %v326
  %v1486 = vunpack.c.l.b16 %v327
  %v1487 = vunpack.c.l.b16 %v328
  %v1488 = vunpack.c.l.b16 %v329
  %v1489 = vunpack.c.l.b16 %v330
  %v1490 = vunpack.c.l.b16 %v331
  %v1491 = vunpack.c.l.b16 %v332
  %v1492 = vunpack.c.l.b16 %v333
  %v1493 = vunpack.c.l.b16 %v334
  %v1494 = vunpack.c.l.b16 %v335
  %v1495 = vunpack.c.l.b16 %v336
  %v1496 = vunpack.c.l.b16 %v337
  %v1497 = vunpack.c.l.b16 %v338
  %v1498 = vunpack.c.l.b16 %v339
  %v1499 = vunpack.c.l.b16 %v340
  %v1500 = vunpack.c.l.b16 %v341
  %v1501 = vunpack.c.l.b16 %v342
  %v1502 = vunpack.c.l.b16 %v343
  %v1503 = vunpack.c.l.b16 %v344
  %v1504 = vunpack.c.l.b16 %v345
  %v1505 = vunpack.c.l.b16 %v346
  %v1506 = vunpack.c.l.b16 %v347
  %v1507 = vunpack.c.l.b16 %v348
  %v1508 = vunpack.c.l.b16 %v349
  %v1509 = vunpack.c.l.b16 %v350
  %v1510 = vunpack.c.l.b16 %v351
  %v1511 = vunpack.c.l.b16 %v352
  %v1512 = vunpack.c.l.b16 %v353
  %v1513 = vunpack.c.l.b16 %v354
  %v1514 = vunpack.c.l.b16 %v355
  %v1515 = vunpack.c.l.b16 %v356
  %v1516 = vunpack.c.l.b16 %v357
  %v1517 = vunpack.c.l.b16 %v358
  %v1518 = vunpack.c.l.b16 %v359
  %v1519 = vunpack.c.l.b16 %v360
  %v1520 = vunpack.c.l.b16 %v361
  %v1521 = vunpack.c.l.b16 %v362
  %v1522 = vunpack.c.l.b16 %v363
  %v1523 = vunpack.c.l.b16 %v364
  %v1524 = vunpack.c.l.b16 %v365
  %v1525 = vunpack.c.l.b16 %v366
  %v1526 = vunpack.c.l.b16 %v367
  %v1527 = vunpack.c.l.b16 %v368
  %v1528 = vunpack.c.l.b16 %v369
  %v1529 = vunpack.c.l.b16 %v370
  %v1530 = vunpack.c.l.b16 %v371
  %v1531 = vunpack.c.l.b16 %v372
  %v1532 = vunpack.c.l.b16 %v373
  %v1533 = vunpack.c.l.b16 %v374
  %v1534 = vunpack.c.l.b16 %v375
  %v1535 = vunpack.c.l.b16 %v376
  %v1536 = vunpack.c.l.b16 %v377
  %v1537 = vunpack.c.l.b16 %v378
  %v1538 = vunpack.c.l.b16 %v379
  %v1539 = vunpack.c.l.b16 %v380
  %v1540 = vunpack.c.l.b16 %v381
  %v1541 = vunpack.c.l.b16 %v382
  %v1542 = vunpack.c.l.b16 %v383
  %v1543 = vunpack.c.l.b16 %v384
  %v1544 = vunpack.c.l.b16 %v385
  %v1545 = vunpack.c.l.b16 %v386
  %v1546 = vunpack.c.l.b16 %v387
  %v1547 = vunpack.c.l.b16 %v388
  %v1548 = vunpack.c.l.b16 %v389
  %v1549 = vunpack.c.l.b16 %v390
  %v1550 = vunpack.c.l.b16 %v391
  %v1551 = vunpack.c.l.b16 %v392
  %v1552 = vunpack.c.l.b16 %v393
  %v1553 = vunpack.c.l.b16 %v394
  %v1554 = vunpack.c.l.b16 %v395
  %v1555 = vunpack.c.l.b16 %v396
  %v1556 = vunpack.c.l.b16 %v397
  %v1557 = vunpack.c.l.b16 %v398
  %v1558 = vunpack.c.l.b16 %v399
  %v1559 = vunpack.c.l.b16 %v400
  %v1560 = vunpack.c.l.b16 %v401
  %v1561 = vunpack.c.l.b16 %v402
  %v1562 = vunpack.c.l.b16 %v403
  %v1563 = vunpack.c.l.b16 %v404
  %v1564 = vunpack.c.l.b16 %v405
  %v1565 = vunpack.c.l.b16 %v406
  %v1566 = vunpack.c.l.b16 %v407
  %v1567 = vunpack.c.l.b16 %v408
  %v1568 = vunpack.c.l.b16 %v409
  %v1569 = vunpack.c.l.b16 %v410
  %v1570 = vunpack.c.l.b16 %v411
  %v1571 = vunpack.c.l.b16 %v412
  %v1572 = vunpack.c.l.b16 %v413
  %v1573 = vunpack.c.l.b16 %v414
  %v1574 = vunpack.c.l.b16 %v415
  %v1575 = vunpack.c.l.b16 %v416
  %v1576 = vunpack.c.l.b16 %v417
  %v1577 = vunpack.c.l.b16 %v418
  %v1578 = vunpack.c.l.b16 %v419
  %v1579 = vunpack.c.l.b16 %v420
  %v1580 = vunpack.c.l.b16 %v421
  %v1581 = vunpack.c.l.b16 %v422
  %v1582 = vunpack.c.l.b16 %v423
  %v1583 = vunpack.c.l.b16 %v424
  %v1584 = vunpack.c.l.b16 %v425
  %v1585 = vunpack.c.l.b16 %v426
  %v1586 = vunpack.c.l.b16 %v427
  %v1587 = vunpack.c.l.b16 %v428
  %v1588 = vpack.c.b16 %v1333, %v1332
  %v1589 = vpack.c.b16 %v1335, %v1334
  %v1590 = vpack.c.b16 %v1337, %v1336
  %v1591 = vpack.c.b16 %v1339, %v1338
  %v1592 = vpack.c.b16 %v1341, %v1340
  %v1593 = vpack.c.b16 %v1343, %v1342
  %v1594 = vpack.c.b16 %v1345, %v1344
  %v1595 = vpack.c.b16 %v1347, %v1346
  %v1596 = vpack.c.b16 %v1349, %v1348
  %v1597 = vpack.c.b16 %v1351, %v1350
  %v1598 = vpack.c.b16 %v1353, %v1352
  %v1599 = vpack.c.b16 %v1355, %v1354
  %v1600 = vpack.c.b16 %v1357, %v1356
  %v1601 = vpack.c.b16 %v1359, %v1358
  %v1602 = vpack.c.b16 %v1361, %v1360
  %v1603 = vpack.c.b16 %v1363, %v1362
  %v1604 = vpack.c.b16 %v1365, %v1364
  %v1605 = vpack.c.b16 %v1367, %v1366
  %v1606 = vpack.c.b16 %v1369, %v1368
  %v1607 = vpack.c.b16 %v1371, %v1370
  %v1608 = vpack.c.b16 %v1373, %v1372
  %v1609 = vpack.c.b16 %v1375, %v1374
  %v1610 = vpack.c.b16 %v1377, %v1376
  %v1611 = vpack.c.b16 %v1379, %v1378
  %v1612 = vpack.c.b16 %v1381, %v1380
  %v1613 = vpack.c.b16 %v1383, %v1382
  %v1614 = vpack.c.b16 %v1385, %v1384
  %v1615 = vpack.c.b16 %v1387, %v1386
  %v1616 = vpack.c.b16 %v1389, %v1388
  %v1617 = vpack.c.b16 %v1391, %v1390
  %v1618 = vpack.c.b16 %v1393, %v1392
  %v1619 = vpack.c.b16 %v1395, %v1394
  %v1620 = vpack.c.b16 %v1397, %v1396
  %v1621 = vpack.c.b16 %v1399, %v1398
  %v1622 = vpack.c.b16 %v1401, %v1400
  %v1623 = vpack.c.b16 %v1403, %v1402
  %v1624 = vpack.c.b16 %v1405, %v1404
  %v1625 = vpack.c.b16 %v1407, %v1406
  %v1626 = vpack.c.b16 %v1409, %v1408
  %v1627 = vpack.c.b16 %v1411, %v1410
  %v1628 = vpack.c.b16 %v1413, %v1412
  %v1629 = vpack.c.b16 %v1415, %v1414
  %v1630 = vpack.c.b16 %v1417, %v1416
  %v1631 = vpack.c.b16 %v1419, %v1418
  %v1632 = vpack.c.b16 %v1421, %v1420
  %v1633 = vpack.c.b16 %v1423, %v1422
  %v1634 = vpack.c.b16 %v1425, %v1424
  %v1635 = vpack.c.b16 %v1427, %v1426
  %v1636 = vpack.c.b16 %v1429, %v1428
  %v1637 = vpack.c.b16 %v1431, %v1430
  %v1638 = vpack.c.b16 %v1433, %v1432
  %v1639 = vpack.c.b16 %v1435, %v1434
  %v1640 = vpack.c.b16 %v1437, %v1436
  %v1641 = vpack.c.b16 %v1439, %v1438
  %v1642 = vpack.c.b16 %v1441, %v1440
  %v1643 = vpack.c.b16 %v1443, %v1442
  %v1644 = vpack.c.b16 %v1445, %v1444
  %v1645 = vpack.c.b16 %v1447, %v1446
  %v1646 = vpack.c.b16 %v1449, %v1448
  %v1647 = vpack.c.b16 %v1451, %v1450
  %v1648 = vpack.c.b16 %v1453, %v1452
  %v1649 = vpack.c.b16 %v1455, %v1454
  %v1650 = vpack.c.b16 %v1457, %v1456
  %v1651 = vpack.c.b16 %v1459, %v1458
  %v1652 = vpack.c.b16 %v1461, %v1460
  %v1653 = vpack.c.b16 %v1463, %v1462
  %v1654 = vpack.c.b16 %v1465, %v1464
  %v1655 = vpack.c.b16 %v1467, %v1466
  %v1656 = vpack.c.b16 %v1469, %v1468
  %v1657 = vpack.c.b16 %v1471, %v1470
  %v1658 = vpack.c.b16 %v1473, %v1472
  %v1659 = vpack.c.b16 %v1475, %v1474
  %v1660 = vpack.c.b16 %v1477, %v1476
  %v1661 = vpack.c.b16 %v1479, %v1478
  %v1662 = vpack.c.b16 %v1481, %v1480
  %v1663 = vpack.c.b16 %v1483, %v1482
  %v1664 = vpack.c.b16 %v1485, %v1484
  %v1665 = vpack.c.b16 %v1487, %v1486
  %v1666 = vpack.c.b16 %v1489, %v1488
  %v1667 = vpack.c.b16 %v1491, %v1490
  %v1668 = vpack.c.b16 %v1493, %v1492
  %v1669 = vpack.c.b16 %v1495, %v1494
  %v1670 = vpack.c.b16 %v1497, %v1496
  %v1671 = vpack.c.b16 %v1499, %v1498
  %v1672 = vpack.c.b16 %v1501, %v1500
  %v1673 = vpack.c.b16 %v1503, %v1502
  %v1674 = vpack.c.b16 %v1505, %v1504
  %v1675 = vpack.c.b16 %v1507, %v1506
  %v1676 = vpack.c.b16 %v1509, %v1508
  %v1677 = vpack.c.b16 %v1511, %v1510
  %v1678 = vpack.c.b16 %v1513, %v1512
  %v1679 = vpack.c.b16 %v1515, %v1514
  %v1680 = vpack.c.b16 %v1517, %v1516
  %v1681 = vpack.c.b16 %v1519, %v1518
  %v1682 = vpack.c.b16 %v1521, %v1520
  %v1683 = vpack.c.b16 %v1523, %v1522
  %v1684 = vpack.c.b16 %v1525, %v1524
  %v1685 = vpack.c.b16 %v1527, %v1526
  %v1686 = vpack.c.b16 %v1529, %v1528
  %v1687 = vpack.c.b16 %v1531, %v1530
  %v1688 = vpack.c.b16 %v1533, %v1532
  %v1689 = vpack.c.b16 %v1535, %v1534
  %v1690 = vpack.c.b16 %v1537, %v1536
  %v1691 = vpack.c.b16 %v1539, %v1538
  %v1692 = vpack.c.b16 %v1541, %v1540
  %v1693 = vpack.c.b16 %v1543, %v1542
  %v1694 = vpack.c.b16 %v1545, %v1544
  %v1695 = vpack.c.b16 %v1547, %v1546
  %v1696 = vpack.c.b16 %v1549, %v1548
  %v1697 = vpack.c.b16 %v1551, %v1550
  %v1698 = vpack.c.b16 %v1553, %v1552
  %v1699 = vpack.c.b16 %v1555, %v1554
  %v1700 = vpack.c.b16 %v1557, %v1556
  %v1701 = vpack.c.b16 %v1559, %v1558
  %v1702 = vpack.c.b16 %v1561, %v1560
  %v1703 = vpack.c.b16 %v1563, %v1562
  %v1704 = vpack.c.b16 %v1565, %v1564
  %v1705 = vpack.c.b16 %v1567, %v1566
  %v1706 = vpack.c.b16 %v1569, %v1568
  %v1707 = vpack.c.b16 %v1571, %v1570
  %v1708 = vpack.c.b16 %v1573, %v1572
  %v1709 = vpack.c.b16 %v1575, %v1574
  %v1710 = vpack.c.b16 %v1577, %v1576
  %v1711 = vpack.c.b16 %v1579, %v1578
  %v1712 = vpack.c.b16 %v1581, %v1580
  %v1713 = vpack.c.b16 %v1583, %v1582
  %v1714 = vpack.c.b16 %v1585, %v1584
  %v1715 = vpack.c.b16 %v1587, %v1586
  %1844 = vmatprep.subr.bf16.mxu0 0
  %1845 = vmatpush1.bf16.msra.mxu0 %v1588
  %1846 = vmatprep.subr.bf16.mxu0 0
  %1847 = vmatpush1.bf16.msra.mxu0 %v1589
  %1848 = vmatprep.subr.bf16.mxu0 0
  %1849 = vmatpush1.bf16.msra.mxu0 %v1590
  %1850 = vmatprep.subr.bf16.mxu0 0
  %1851 = vmatpush1.bf16.msra.mxu0 %v1591
  %1852 = vmatprep.subr.bf16.mxu0 0
  %1853 = vmatpush1.bf16.msra.mxu0 %v1592
  %1854 = vmatprep.subr.bf16.mxu0 0
  %1855 = vmatpush1.bf16.msra.mxu0 %v1593
  %1856 = vmatprep.subr.bf16.mxu0 0
  %1857 = vmatpush1.bf16.msra.mxu0 %v1594
  %1858 = vmatprep.subr.bf16.mxu0 0
  %1859 = vmatpush1.bf16.msra.mxu0 %v1595
  %1860 = vmatprep.subr.bf16.mxu0 0
  %1861 = vmatpush1.bf16.msra.mxu0 %v1596
  %1862 = vmatprep.subr.bf16.mxu0 0
  %1863 = vmatpush1.bf16.msra.mxu0 %v1597
  %1864 = vmatprep.subr.bf16.mxu0 0
  %1865 = vmatpush1.bf16.msra.mxu0 %v1598
  %1866 = vmatprep.subr.bf16.mxu0 0
  %1867 = vmatpush1.bf16.msra.mxu0 %v1599
  %1868 = vmatprep.subr.bf16.mxu0 0
  %1869 = vmatpush1.bf16.msra.mxu0 %v1600
  %1870 = vmatprep.subr.bf16.mxu0 0
  %1871 = vmatpush1.bf16.msra.mxu0 %v1601
  %1872 = vmatprep.subr.bf16.mxu0 0
  %1873 = vmatpush1.bf16.msra.mxu0 %v1602
  %1874 = vmatprep.subr.bf16.mxu0 0
  %1875 = vmatpush1.bf16.msra.mxu0 %v1603
  %1876 = vmatprep.mubr.bf16.mxu0 %v821
  %1877 = vmatmul.mubr.bf16.gmra.mrb[0].mxu0 %v820
  %v1878 = vpop.f32.mrb[0].mxu0
  %v1879 = vadd.f32 %v434, %v1878
  %v1880 = vpop.f32.mrb[0].mxu0
  %v1881 = vpop.f32.mrb[0].mxu0
  %v1882 = vadd.f32 %v434, %v1881
  %v1883 = vpop.f32.mrb[0].mxu0
  %1884 = vmatprep.mubr.bf16.mxu0 %v837
  %1885 = vmatmul.mubr.bf16.gmra.mrb[0].mxu0 %v836
  %v1886 = vpop.f32.mrb[0].mxu0
  %v1887 = vadd.f32 %v434, %v1886
  %v1888 = vpop.f32.mrb[0].mxu0
  %v1889 = vpop.f32.mrb[0].mxu0
  %v1890 = vadd.f32 %v434, %v1889
  %v1891 = vpop.f32.mrb[0].mxu0
  %1892 = vmatprep.mubr.bf16.mxu0 %v853
  %1893 = vmatmul.mubr.bf16.gmra.mrb[0].mxu0 %v852
  %v1894 = vpop.f32.mrb[0].mxu0
  %v1895 = vadd.f32 %v434, %v1894
  %v1896 = vpop.f32.mrb[0].mxu0
  %v1897 = vpop.f32.mrb[0].mxu0
  %v1898 = vadd.f32 %v434, %v1897
  %v1899 = vpop.f32.mrb[0].mxu0
  %1900 = vmatprep.mubr.bf16.mxu0 %v869
  %1901 = vmatmul.mubr.bf16.gmra.mrb[0].mxu0 %v868
  %v1902 = vpop.f32.mrb[0].mxu0
  %v1903 = vadd.f32 %v434, %v1902
  %v1904 = vpop.f32.mrb[0].mxu0
  %v1905 = vpop.f32.mrb[0].mxu0
  %v1906 = vadd.f32 %v434, %v1905
  %v1907 = vpop.f32.mrb[0].mxu0
  %1908 = vmatprep.mubr.bf16.mxu0 %v885
  %1909 = vmatmul.mubr.bf16.gmra.mrb[0].mxu0 %v884
  %v1910 = vpop.f32.mrb[0].mxu0
  %v1911 = vadd.f32 %v434, %v1910
  %v1912 = vpop.f32.mrb[0].mxu0
  %v1913 = vpop.f32.mrb[0].mxu0
  %v1914 = vadd.f32 %v434, %v1913
  %v1915 = vpop.f32.mrb[0].mxu0
  %1916 = vmatprep.mubr.bf16.mxu0 %v901
  %1917 = vmatmul.mubr.bf16.gmra.mrb[0].mxu0 %v900
  %v1918 = vpop.f32.mrb[0].mxu0
  %v1919 = vadd.f32 %v434, %v1918
  %v1920 = vpop.f32.mrb[0].mxu0
  %v1921 = vpop.f32.mrb[0].mxu0
  %v1922 = vadd.f32 %v434, %v1921
  %v1923 = vpop.f32.mrb[0].mxu0
  %1924 = vmatprep.mubr.bf16.mxu0 %v917
  %1925 = vmatmul.mubr.bf16.gmra.mrb[0].mxu0 %v916
  %v1926 = vpop.f32.mrb[0].mxu0
  %v1927 = vadd.f32 %v434, %v1926
  %v1928 = vpop.f32.mrb[0].mxu0
  %v1929 = vpop.f32.mrb[0].mxu0
  %v1930 = vadd.f32 %v434, %v1929
  %v1931 = vpop.f32.mrb[0].mxu0
  %1932 = vmatprep.mubr.bf16.mxu0 %v933
  %1933 = vmatmul.mubr.bf16.gmra.mrb[0].mxu0 %v932
  %v1934 = vpop.f32.mrb[0].mxu0
  %v1935 = vadd.f32 %v434, %v1934
  %v1936 = vpop.f32.mrb[0].mxu0
  %v1937 = vpop.f32.mrb[0].mxu0
  %v1938 = vadd.f32 %v434, %v1937
  %v1939 = vpop.f32.mrb[0].mxu0
  %1940 = vdwg.mxu0
  %1941 = vmatprep.subr.bf16.mxu0 0
  %1942 = vmatpush1.bf16.msra.mxu0 %v1604
  %1943 = vmatprep.subr.bf16.mxu0 0
  %1944 = vmatpush1.bf16.msra.mxu0 %v1605
  %1945 = vmatprep.subr.bf16.mxu0 0
  %1946 = vmatpush1.bf16.msra.mxu0 %v1606
  %1947 = vmatprep.subr.bf16.mxu0 0
  %1948 = vmatpush1.bf16.msra.mxu0 %v1607
  %1949 = vmatprep.subr.bf16.mxu0 0
  %1950 = vmatpush1.bf16.msra.mxu0 %v1608
  %1951 = vmatprep.subr.bf16.mxu0 0
  %1952 = vmatpush1.bf16.msra.mxu0 %v1609
  %1953 = vmatprep.subr.bf16.mxu0 0
  %1954 = vmatpush1.bf16.msra.mxu0 %v1610
  %1955 = vmatprep.subr.bf16.mxu0 0
  %1956 = vmatpush1.bf16.msra.mxu0 %v1611
  %1957 = vmatprep.subr.bf16.mxu0 0
  %1958 = vmatpush1.bf16.msra.mxu0 %v1612
  %1959 = vmatprep.subr.bf16.mxu0 0
  %1960 = vmatpush1.bf16.msra.mxu0 %v1613
  %1961 = vmatprep.subr.bf16.mxu0 0
  %1962 = vmatpush1.bf16.msra.mxu0 %v1614
  %1963 = vmatprep.subr.bf16.mxu0 0
  %1964 = vmatpush1.bf16.msra.mxu0 %v1615
  %1965 = vmatprep.subr.bf16.mxu0 0
  %1966 = vmatpush1.bf16.msra.mxu0 %v1616
  %1967 = vmatprep.subr.bf16.mxu0 0
  %1968 = vmatpush1.bf16.msra.mxu0 %v1617
  %1969 = vmatprep.subr.bf16.mxu0 0
  %1970 = vmatpush1.bf16.msra.mxu0 %v1618
  %1971 = vmatprep.subr.bf16.mxu0 0
  %1972 = vmatpush1.bf16.msra.mxu0 %v1619
  %1973 = vmatprep.mubr.bf16.mxu0 %v823
  %1974 = vmatmul.mubr.bf16.gmra.mrb[0].mxu0 %v822
  %v1975 = vpop.f32.mrb[0].mxu0
  %v1976 = vadd.f32 %v1879, %v1975
  %v1977 = vpop.f32.mrb[0].mxu0
  %v1978 = vpop.f32.mrb[0].mxu0
  %v1979 = vadd.f32 %v1882, %v1978
  %v1980 = vpop.f32.mrb[0].mxu0
  %1981 = vmatprep.mubr.bf16.mxu0 %v839
  %1982 = vmatmul.mubr.bf16.gmra.mrb[0].mxu0 %v838
  %v1983 = vpop.f32.mrb[0].mxu0
  %v1984 = vadd.f32 %v1887, %v1983
  %v1985 = vpop.f32.mrb[0].mxu0
  %v1986 = vpop.f32.mrb[0].mxu0
  %v1987 = vadd.f32 %v1890, %v1986
  %v1988 = vpop.f32.mrb[0].mxu0
  %1989 = vmatprep.mubr.bf16.mxu0 %v855
  %1990 = vmatmul.mubr.bf16.gmra.mrb[0].mxu0 %v854
  %v1991 = vpop.f32.mrb[0].mxu0
  %v1992 = vadd.f32 %v1895, %v1991
  %v1993 = vpop.f32.mrb[0].mxu0
  %v1994 = vpop.f32.mrb[0].mxu0
  %v1995 = vadd.f32 %v1898, %v1994
  %v1996 = vpop.f32.mrb[0].mxu0
  %1997 = vmatprep.mubr.bf16.mxu0 %v871
  %1998 = vmatmul.mubr.bf16.gmra.mrb[0].mxu0 %v870
  %v1999 = vpop.f32.mrb[0].mxu0
  %v2000 = vadd.f32 %v1903, %v1999
  %v2001 = vpop.f32.mrb[0].mxu0
  %v2002 = vpop.f32.mrb[0].mxu0
  %v2003 = vadd.f32 %v1906, %v2002
  %v2004 = vpop.f32.mrb[0].mxu0
  %2005 = vmatprep.mubr.bf16.mxu0 %v887
  %2006 = vmatmul.mubr.bf16.gmra.mrb[0].mxu0 %v886
  %v2007 = vpop.f32.mrb[0].mxu0
  %v2008 = vadd.f32 %v1911, %v2007
  %v2009 = vpop.f32.mrb[0].mxu0
  %v2010 = vpop.f32.mrb[0].mxu0
  %v2011 = vadd.f32 %v1914, %v2010
  %v2012 = vpop.f32.mrb[0].mxu0
  %2013 = vmatprep.mubr.bf16.mxu0 %v903
  %2014 = vmatmul.mubr.bf16.gmra.mrb[0].mxu0 %v902
  %v2015 = vpop.f32.mrb[0].mxu0
  %v2016 = vadd.f32 %v1919, %v2015
  %v2017 = vpop.f32.mrb[0].mxu0
  %v2018 = vpop.f32.mrb[0].mxu0
  %v2019 = vadd.f32 %v1922, %v2018
  %v2020 = vpop.f32.mrb[0].mxu0
  %2021 = vmatprep.mubr.bf16.mxu0 %v919
  %2022 = vmatmul.mubr.bf16.gmra.mrb[0].mxu0 %v918
  %v2023 = vpop.f32.mrb[0].mxu0
  %v2024 = vadd.f32 %v1927, %v2023
  %v2025 = vpop.f32.mrb[0].mxu0
  %v2026 = vpop.f32.mrb[0].mxu0
  %v2027 = vadd.f32 %v1930, %v2026
  %v2028 = vpop.f32.mrb[0].mxu0
  %2029 = vmatprep.mubr.bf16.mxu0 %v935
  %2030 = vmatmul.mubr.bf16.gmra.mrb[0].mxu0 %v934
  %v2031 = vpop.f32.mrb[0].mxu0
  %v2032 = vadd.f32 %v1935, %v2031
  %v2033 = vpop.f32.mrb[0].mxu0
  %v2034 = vpop.f32.mrb[0].mxu0
  %v2035 = vadd.f32 %v1938, %v2034
  %v2036 = vpop.f32.mrb[0].mxu0
  %2037 = vdwg.mxu0
  %2038 = vmatprep.subr.bf16.mxu0 0
  %2039 = vmatpush1.bf16.msra.mxu0 %v1620
  %2040 = vmatprep.subr.bf16.mxu0 0
  %2041 = vmatpush1.bf16.msra.mxu0 %v1621
  %2042 = vmatprep.subr.bf16.mxu0 0
  %2043 = vmatpush1.bf16.msra.mxu0 %v1622
  %2044 = vmatprep.subr.bf16.mxu0 0
  %2045 = vmatpush1.bf16.msra.mxu0 %v1623
  %2046 = vmatprep.subr.bf16.mxu0 0
  %2047 = vmatpush1.bf16.msra.mxu0 %v1624
  %2048 = vmatprep.subr.bf16.mxu0 0
  %2049 = vmatpush1.bf16.msra.mxu0 %v1625
  %2050 = vmatprep.subr.bf16.mxu0 0
  %2051 = vmatpush1.bf16.msra.mxu0 %v1626
  %2052 = vmatprep.subr.bf16.mxu0 0
  %2053 = vmatpush1.bf16.msra.mxu0 %v1627
  %2054 = vmatprep.subr.bf16.mxu0 0
  %2055 = vmatpush1.bf16.msra.mxu0 %v1628
  %2056 = vmatprep.subr.bf16.mxu0 0
  %2057 = vmatpush1.bf16.msra.mxu0 %v1629
  %2058 = vmatprep.subr.bf16.mxu0 0
  %2059 = vmatpush1.bf16.msra.mxu0 %v1630
  %2060 = vmatprep.subr.bf16.mxu0 0
  %2061 = vmatpush1.bf16.msra.mxu0 %v1631
  %2062 = vmatprep.subr.bf16.mxu0 0
  %2063 = vmatpush1.bf16.msra.mxu0 %v1632
  %2064 = vmatprep.subr.bf16.mxu0 0
  %2065 = vmatpush1.bf16.msra.mxu0 %v1633
  %2066 = vmatprep.subr.bf16.mxu0 0
  %2067 = vmatpush1.bf16.msra.mxu0 %v1634
  %2068 = vmatprep.subr.bf16.mxu0 0
  %2069 = vmatpush1.bf16.msra.mxu0 %v1635
  %2070 = vmatprep.mubr.bf16.mxu0 %v825
  %2071 = vmatmul.mubr.bf16.gmra.mrb[0].mxu0 %v824
  %v2072 = vpop.f32.mrb[0].mxu0
  %v2073 = vadd.f32 %v1976, %v2072
  %v2074 = vpop.f32.mrb[0].mxu0
  %v2075 = vpop.f32.mrb[0].mxu0
  %v2076 = vadd.f32 %v1979, %v2075
  %v2077 = vpop.f32.mrb[0].mxu0
  %2078 = vmatprep.mubr.bf16.mxu0 %v841
  %2079 = vmatmul.mubr.bf16.gmra.mrb[0].mxu0 %v840
  %v2080 = vpop.f32.mrb[0].mxu0
  %v2081 = vadd.f32 %v1984, %v2080
  %v2082 = vpop.f32.mrb[0].mxu0
  %v2083 = vpop.f32.mrb[0].mxu0
  %v2084 = vadd.f32 %v1987, %v2083
  %v2085 = vpop.f32.mrb[0].mxu0
  %2086 = vmatprep.mubr.bf16.mxu0 %v857
  %2087 = vmatmul.mubr.bf16.gmra.mrb[0].mxu0 %v856
  %v2088 = vpop.f32.mrb[0].mxu0
  %v2089 = vadd.f32 %v1992, %v2088
  %v2090 = vpop.f32.mrb[0].mxu0
  %v2091 = vpop.f32.mrb[0].mxu0
  %v2092 = vadd.f32 %v1995, %v2091
  %v2093 = vpop.f32.mrb[0].mxu0
  %2094 = vmatprep.mubr.bf16.mxu0 %v873
  %2095 = vmatmul.mubr.bf16.gmra.mrb[0].mxu0 %v872
  %v2096 = vpop.f32.mrb[0].mxu0
  %v2097 = vadd.f32 %v2000, %v2096
  %v2098 = vpop.f32.mrb[0].mxu0
  %v2099 = vpop.f32.mrb[0].mxu0
  %v2100 = vadd.f32 %v2003, %v2099
  %v2101 = vpop.f32.mrb[0].mxu0
  %2102 = vmatprep.mubr.bf16.mxu0 %v889
  %2103 = vmatmul.mubr.bf16.gmra.mrb[0].mxu0 %v888
  %v2104 = vpop.f32.mrb[0].mxu0
  %v2105 = vadd.f32 %v2008, %v2104
  %v2106 = vpop.f32.mrb[0].mxu0
  %v2107 = vpop.f32.mrb[0].mxu0
  %v2108 = vadd.f32 %v2011, %v2107
  %v2109 = vpop.f32.mrb[0].mxu0
  %2110 = vmatprep.mubr.bf16.mxu0 %v905
  %2111 = vmatmul.mubr.bf16.gmra.mrb[0].mxu0 %v904
  %v2112 = vpop.f32.mrb[0].mxu0
  %v2113 = vadd.f32 %v2016, %v2112
  %v2114 = vpop.f32.mrb[0].mxu0
  %v2115 = vpop.f32.mrb[0].mxu0
  %v2116 = vadd.f32 %v2019, %v2115
  %v2117 = vpop.f32.mrb[0].mxu0
  %2118 = vmatprep.mubr.bf16.mxu0 %v921
  %2119 = vmatmul.mubr.bf16.gmra.mrb[0].mxu0 %v920
  %v2120 = vpop.f32.mrb[0].mxu0
  %v2121 = vadd.f32 %v2024, %v2120
  %v2122 = vpop.f32.mrb[0].mxu0
  %v2123 = vpop.f32.mrb[0].mxu0
  %v2124 = vadd.f32 %v2027, %v2123
  %v2125 = vpop.f32.mrb[0].mxu0
  %2126 = vmatprep.mubr.bf16.mxu0 %v937
  %2127 = vmatmul.mubr.bf16.gmra.mrb[0].mxu0 %v936
  %v2128 = vpop.f32.mrb[0].mxu0
  %v2129 = vadd.f32 %v2032, %v2128
  %v2130 = vpop.f32.mrb[0].mxu0
  %v2131 = vpop.f32.mrb[0].mxu0
  %v2132 = vadd.f32 %v2035, %v2131
  %v2133 = vpop.f32.mrb[0].mxu0
  %2134 = vdwg.mxu0
  %2135 = vmatprep.subr.bf16.mxu0 0
  %2136 = vmatpush1.bf16.msra.mxu0 %v1636
  %2137 = vmatprep.subr.bf16.mxu0 0
  %2138 = vmatpush1.bf16.msra.mxu0 %v1637
  %2139 = vmatprep.subr.bf16.mxu0 0
  %2140 = vmatpush1.bf16.msra.mxu0 %v1638
  %2141 = vmatprep.subr.bf16.mxu0 0
  %2142 = vmatpush1.bf16.msra.mxu0 %v1639
  %2143 = vmatprep.subr.bf16.mxu0 0
  %2144 = vmatpush1.bf16.msra.mxu0 %v1640
  %2145 = vmatprep.subr.bf16.mxu0 0
  %2146 = vmatpush1.bf16.msra.mxu0 %v1641
  %2147 = vmatprep.subr.bf16.mxu0 0
  %2148 = vmatpush1.bf16.msra.mxu0 %v1642
  %2149 = vmatprep.subr.bf16.mxu0 0
  %2150 = vmatpush1.bf16.msra.mxu0 %v1643
  %2151 = vmatprep.subr.bf16.mxu0 0
  %2152 = vmatpush1.bf16.msra.mxu0 %v1644
  %2153 = vmatprep.subr.bf16.mxu0 0
  %2154 = vmatpush1.bf16.msra.mxu0 %v1645
  %2155 = vmatprep.subr.bf16.mxu0 0
  %2156 = vmatpush1.bf16.msra.mxu0 %v1646
  %2157 = vmatprep.subr.bf16.mxu0 0
  %2158 = vmatpush1.bf16.msra.mxu0 %v1647
  %2159 = vmatprep.subr.bf16.mxu0 0
  %2160 = vmatpush1.bf16.msra.mxu0 %v1648
  %2161 = vmatprep.subr.bf16.mxu0 0
  %2162 = vmatpush1.bf16.msra.mxu0 %v1649
  %2163 = vmatprep.subr.bf16.mxu0 0
  %2164 = vmatpush1.bf16.msra.mxu0 %v1650
  %2165 = vmatprep.subr.bf16.mxu0 0
  %2166 = vmatpush1.bf16.msra.mxu0 %v1651
  %2167 = vmatprep.mubr.bf16.mxu0 %v827
  %2168 = vmatmul.mubr.bf16.gmra.mrb[0].mxu0 %v826
  %v2169 = vpop.f32.mrb[0].mxu0
  %v2170 = vadd.f32 %v2073, %v2169
  %v2171 = vpop.f32.mrb[0].mxu0
  %v2172 = vpop.f32.mrb[0].mxu0
  %v2173 = vadd.f32 %v2076, %v2172
  %v2174 = vpop.f32.mrb[0].mxu0
  %2175 = vmatprep.mubr.bf16.mxu0 %v843
  %2176 = vmatmul.mubr.bf16.gmra.mrb[0].mxu0 %v842
  %v2177 = vpop.f32.mrb[0].mxu0
  %v2178 = vadd.f32 %v2081, %v2177
  %v2179 = vpop.f32.mrb[0].mxu0
  %v2180 = vpop.f32.mrb[0].mxu0
  %v2181 = vadd.f32 %v2084, %v2180
  %v2182 = vpop.f32.mrb[0].mxu0
  %2183 = vmatprep.mubr.bf16.mxu0 %v859
  %2184 = vmatmul.mubr.bf16.gmra.mrb[0].mxu0 %v858
  %v2185 = vpop.f32.mrb[0].mxu0
  %v2186 = vadd.f32 %v2089, %v2185
  %v2187 = vpop.f32.mrb[0].mxu0
  %v2188 = vpop.f32.mrb[0].mxu0
  %v2189 = vadd.f32 %v2092, %v2188
  %v2190 = vpop.f32.mrb[0].mxu0
  %2191 = vmatprep.mubr.bf16.mxu0 %v875
  %2192 = vmatmul.mubr.bf16.gmra.mrb[0].mxu0 %v874
  %v2193 = vpop.f32.mrb[0].mxu0
  %v2194 = vadd.f32 %v2097, %v2193
  %v2195 = vpop.f32.mrb[0].mxu0
  %v2196 = vpop.f32.mrb[0].mxu0
  %v2197 = vadd.f32 %v2100, %v2196
  %v2198 = vpop.f32.mrb[0].mxu0
  %2199 = vmatprep.mubr.bf16.mxu0 %v891
  %2200 = vmatmul.mubr.bf16.gmra.mrb[0].mxu0 %v890
  %v2201 = vpop.f32.mrb[0].mxu0
  %v2202 = vadd.f32 %v2105, %v2201
  %v2203 = vpop.f32.mrb[0].mxu0
  %v2204 = vpop.f32.mrb[0].mxu0
  %v2205 = vadd.f32 %v2108, %v2204
  %v2206 = vpop.f32.mrb[0].mxu0
  %2207 = vmatprep.mubr.bf16.mxu0 %v907
  %2208 = vmatmul.mubr.bf16.gmra.mrb[0].mxu0 %v906
  %v2209 = vpop.f32.mrb[0].mxu0
  %v2210 = vadd.f32 %v2113, %v2209
  %v2211 = vpop.f32.mrb[0].mxu0
  %v2212 = vpop.f32.mrb[0].mxu0
  %v2213 = vadd.f32 %v2116, %v2212
  %v2214 = vpop.f32.mrb[0].mxu0
  %2215 = vmatprep.mubr.bf16.mxu0 %v923
  %2216 = vmatmul.mubr.bf16.gmra.mrb[0].mxu0 %v922
  %v2217 = vpop.f32.mrb[0].mxu0
  %v2218 = vadd.f32 %v2121, %v2217
  %v2219 = vpop.f32.mrb[0].mxu0
  %v2220 = vpop.f32.mrb[0].mxu0
  %v2221 = vadd.f32 %v2124, %v2220
  %v2222 = vpop.f32.mrb[0].mxu0
  %2223 = vmatprep.mubr.bf16.mxu0 %v939
  %2224 = vmatmul.mubr.bf16.gmra.mrb[0].mxu0 %v938
  %v2225 = vpop.f32.mrb[0].mxu0
  %v2226 = vadd.f32 %v2129, %v2225
  %v2227 = vpop.f32.mrb[0].mxu0
  %v2228 = vpop.f32.mrb[0].mxu0
  %v2229 = vadd.f32 %v2132, %v2228
  %v2230 = vpop.f32.mrb[0].mxu0
  %2231 = vdwg.mxu0
  %2232 = vmatprep.subr.bf16.mxu0 0
  %2233 = vmatpush1.bf16.msra.mxu0 %v1652
  %2234 = vmatprep.subr.bf16.mxu0 0
  %2235 = vmatpush1.bf16.msra.mxu0 %v1653
  %2236 = vmatprep.subr.bf16.mxu0 0
  %2237 = vmatpush1.bf16.msra.mxu0 %v1654
  %2238 = vmatprep.subr.bf16.mxu0 0
  %2239 = vmatpush1.bf16.msra.mxu0 %v1655
  %2240 = vmatprep.subr.bf16.mxu0 0
  %2241 = vmatpush1.bf16.msra.mxu0 %v1656
  %2242 = vmatprep.subr.bf16.mxu0 0
  %2243 = vmatpush1.bf16.msra.mxu0 %v1657
  %2244 = vmatprep.subr.bf16.mxu0 0
  %2245 = vmatpush1.bf16.msra.mxu0 %v1658
  %2246 = vmatprep.subr.bf16.mxu0 0
  %2247 = vmatpush1.bf16.msra.mxu0 %v1659
  %2248 = vmatprep.subr.bf16.mxu0 0
  %2249 = vmatpush1.bf16.msra.mxu0 %v1660
  %2250 = vmatprep.subr.bf16.mxu0 0
  %2251 = vmatpush1.bf16.msra.mxu0 %v1661
  %2252 = vmatprep.subr.bf16.mxu0 0
  %2253 = vmatpush1.bf16.msra.mxu0 %v1662
  %2254 = vmatprep.subr.bf16.mxu0 0
  %2255 = vmatpush1.bf16.msra.mxu0 %v1663
  %2256 = vmatprep.subr.bf16.mxu0 0
  %2257 = vmatpush1.bf16.msra.mxu0 %v1664
  %2258 = vmatprep.subr.bf16.mxu0 0
  %2259 = vmatpush1.bf16.msra.mxu0 %v1665
  %2260 = vmatprep.subr.bf16.mxu0 0
  %2261 = vmatpush1.bf16.msra.mxu0 %v1666
  %2262 = vmatprep.subr.bf16.mxu0 0
  %2263 = vmatpush1.bf16.msra.mxu0 %v1667
  %2264 = vmatprep.mubr.bf16.mxu0 %v829
  %2265 = vmatmul.mubr.bf16.gmra.mrb[0].mxu0 %v828
  %v2266 = vpop.f32.mrb[0].mxu0
  %v2267 = vadd.f32 %v2170, %v2266
  %v2268 = vpop.f32.mrb[0].mxu0
  %v2269 = vpop.f32.mrb[0].mxu0
  %v2270 = vadd.f32 %v2173, %v2269
  %v2271 = vpop.f32.mrb[0].mxu0
  %2272 = vmatprep.mubr.bf16.mxu0 %v845
  %2273 = vmatmul.mubr.bf16.gmra.mrb[0].mxu0 %v844
  %v2274 = vpop.f32.mrb[0].mxu0
  %v2275 = vadd.f32 %v2178, %v2274
  %v2276 = vpop.f32.mrb[0].mxu0
  %v2277 = vpop.f32.mrb[0].mxu0
  %v2278 = vadd.f32 %v2181, %v2277
  %v2279 = vpop.f32.mrb[0].mxu0
  %2280 = vmatprep.mubr.bf16.mxu0 %v861
  %2281 = vmatmul.mubr.bf16.gmra.mrb[0].mxu0 %v860
  %v2282 = vpop.f32.mrb[0].mxu0
  %v2283 = vadd.f32 %v2186, %v2282
  %v2284 = vpop.f32.mrb[0].mxu0
  %v2285 = vpop.f32.mrb[0].mxu0
  %v2286 = vadd.f32 %v2189, %v2285
  %v2287 = vpop.f32.mrb[0].mxu0
  %2288 = vmatprep.mubr.bf16.mxu0 %v877
  %2289 = vmatmul.mubr.bf16.gmra.mrb[0].mxu0 %v876
  %v2290 = vpop.f32.mrb[0].mxu0
  %v2291 = vadd.f32 %v2194, %v2290
  %v2292 = vpop.f32.mrb[0].mxu0
  %v2293 = vpop.f32.mrb[0].mxu0
  %v2294 = vadd.f32 %v2197, %v2293
  %v2295 = vpop.f32.mrb[0].mxu0
  %2296 = vmatprep.mubr.bf16.mxu0 %v893
  %2297 = vmatmul.mubr.bf16.gmra.mrb[0].mxu0 %v892
  %v2298 = vpop.f32.mrb[0].mxu0
  %v2299 = vadd.f32 %v2202, %v2298
  %v2300 = vpop.f32.mrb[0].mxu0
  %v2301 = vpop.f32.mrb[0].mxu0
  %v2302 = vadd.f32 %v2205, %v2301
  %v2303 = vpop.f32.mrb[0].mxu0
  %2304 = vmatprep.mubr.bf16.mxu0 %v909
  %2305 = vmatmul.mubr.bf16.gmra.mrb[0].mxu0 %v908
  %v2306 = vpop.f32.mrb[0].mxu0
  %v2307 = vadd.f32 %v2210, %v2306
  %v2308 = vpop.f32.mrb[0].mxu0
  %v2309 = vpop.f32.mrb[0].mxu0
  %v2310 = vadd.f32 %v2213, %v2309
  %v2311 = vpop.f32.mrb[0].mxu0
  %2312 = vmatprep.mubr.bf16.mxu0 %v925
  %2313 = vmatmul.mubr.bf16.gmra.mrb[0].mxu0 %v924
  %v2314 = vpop.f32.mrb[0].mxu0
  %v2315 = vadd.f32 %v2218, %v2314
  %v2316 = vpop.f32.mrb[0].mxu0
  %v2317 = vpop.f32.mrb[0].mxu0
  %v2318 = vadd.f32 %v2221, %v2317
  %v2319 = vpop.f32.mrb[0].mxu0
  %2320 = vmatprep.mubr.bf16.mxu0 %v941
  %2321 = vmatmul.mubr.bf16.gmra.mrb[0].mxu0 %v940
  %v2322 = vpop.f32.mrb[0].mxu0
  %v2323 = vadd.f32 %v2226, %v2322
  %v2324 = vpop.f32.mrb[0].mxu0
  %v2325 = vpop.f32.mrb[0].mxu0
  %v2326 = vadd.f32 %v2229, %v2325
  %v2327 = vpop.f32.mrb[0].mxu0
  %2328 = vdwg.mxu0
  %2329 = vmatprep.subr.bf16.mxu0 0
  %2330 = vmatpush1.bf16.msra.mxu0 %v1668
  %2331 = vmatprep.subr.bf16.mxu0 0
  %2332 = vmatpush1.bf16.msra.mxu0 %v1669
  %2333 = vmatprep.subr.bf16.mxu0 0
  %2334 = vmatpush1.bf16.msra.mxu0 %v1670
  %2335 = vmatprep.subr.bf16.mxu0 0
  %2336 = vmatpush1.bf16.msra.mxu0 %v1671
  %2337 = vmatprep.subr.bf16.mxu0 0
  %2338 = vmatpush1.bf16.msra.mxu0 %v1672
  %2339 = vmatprep.subr.bf16.mxu0 0
  %2340 = vmatpush1.bf16.msra.mxu0 %v1673
  %2341 = vmatprep.subr.bf16.mxu0 0
  %2342 = vmatpush1.bf16.msra.mxu0 %v1674
  %2343 = vmatprep.subr.bf16.mxu0 0
  %2344 = vmatpush1.bf16.msra.mxu0 %v1675
  %2345 = vmatprep.subr.bf16.mxu0 0
  %2346 = vmatpush1.bf16.msra.mxu0 %v1676
  %2347 = vmatprep.subr.bf16.mxu0 0
  %2348 = vmatpush1.bf16.msra.mxu0 %v1677
  %2349 = vmatprep.subr.bf16.mxu0 0
  %2350 = vmatpush1.bf16.msra.mxu0 %v1678
  %2351 = vmatprep.subr.bf16.mxu0 0
  %2352 = vmatpush1.bf16.msra.mxu0 %v1679
  %2353 = vmatprep.subr.bf16.mxu0 0
  %2354 = vmatpush1.bf16.msra.mxu0 %v1680
  %2355 = vmatprep.subr.bf16.mxu0 0
  %2356 = vmatpush1.bf16.msra.mxu0 %v1681
  %2357 = vmatprep.subr.bf16.mxu0 0
  %2358 = vmatpush1.bf16.msra.mxu0 %v1682
  %2359 = vmatprep.subr.bf16.mxu0 0
  %2360 = vmatpush1.bf16.msra.mxu0 %v1683
  %2361 = vmatprep.mubr.bf16.mxu0 %v831
  %2362 = vmatmul.mubr.bf16.gmra.mrb[0].mxu0 %v830
  %v2363 = vpop.f32.mrb[0].mxu0
  %v2364 = vadd.f32 %v2267, %v2363
  %v2365 = vpop.f32.mrb[0].mxu0
  %v2366 = vpop.f32.mrb[0].mxu0
  %v2367 = vadd.f32 %v2270, %v2366
  %v2368 = vpop.f32.mrb[0].mxu0
  %2369 = vmatprep.mubr.bf16.mxu0 %v847
  %2370 = vmatmul.mubr.bf16.gmra.mrb[0].mxu0 %v846
  %v2371 = vpop.f32.mrb[0].mxu0
  %v2372 = vadd.f32 %v2275, %v2371
  %v2373 = vpop.f32.mrb[0].mxu0
  %v2374 = vpop.f32.mrb[0].mxu0
  %v2375 = vadd.f32 %v2278, %v2374
  %v2376 = vpop.f32.mrb[0].mxu0
  %2377 = vmatprep.mubr.bf16.mxu0 %v863
  %2378 = vmatmul.mubr.bf16.gmra.mrb[0].mxu0 %v862
  %v2379 = vpop.f32.mrb[0].mxu0
  %v2380 = vadd.f32 %v2283, %v2379
  %v2381 = vpop.f32.mrb[0].mxu0
  %v2382 = vpop.f32.mrb[0].mxu0
  %v2383 = vadd.f32 %v2286, %v2382
  %v2384 = vpop.f32.mrb[0].mxu0
  %2385 = vmatprep.mubr.bf16.mxu0 %v879
  %2386 = vmatmul.mubr.bf16.gmra.mrb[0].mxu0 %v878
  %v2387 = vpop.f32.mrb[0].mxu0
  %v2388 = vadd.f32 %v2291, %v2387
  %v2389 = vpop.f32.mrb[0].mxu0
  %v2390 = vpop.f32.mrb[0].mxu0
  %v2391 = vadd.f32 %v2294, %v2390
  %v2392 = vpop.f32.mrb[0].mxu0
  %2393 = vmatprep.mubr.bf16.mxu0 %v895
  %2394 = vmatmul.mubr.bf16.gmra.mrb[0].mxu0 %v894
  %v2395 = vpop.f32.mrb[0].mxu0
  %v2396 = vadd.f32 %v2299, %v2395
  %v2397 = vpop.f32.mrb[0].mxu0
  %v2398 = vpop.f32.mrb[0].mxu0
  %v2399 = vadd.f32 %v2302, %v2398
  %v2400 = vpop.f32.mrb[0].mxu0
  %2401 = vmatprep.mubr.bf16.mxu0 %v911
  %2402 = vmatmul.mubr.bf16.gmra.mrb[0].mxu0 %v910
  %v2403 = vpop.f32.mrb[0].mxu0
  %v2404 = vadd.f32 %v2307, %v2403
  %v2405 = vpop.f32.mrb[0].mxu0
  %v2406 = vpop.f32.mrb[0].mxu0
  %v2407 = vadd.f32 %v2310, %v2406
  %v2408 = vpop.f32.mrb[0].mxu0
  %2409 = vmatprep.mubr.bf16.mxu0 %v927
  %2410 = vmatmul.mubr.bf16.gmra.mrb[0].mxu0 %v926
  %v2411 = vpop.f32.mrb[0].mxu0
  %v2412 = vadd.f32 %v2315, %v2411
  %v2413 = vpop.f32.mrb[0].mxu0
  %v2414 = vpop.f32.mrb[0].mxu0
  %v2415 = vadd.f32 %v2318, %v2414
  %v2416 = vpop.f32.mrb[0].mxu0
  %2417 = vmatprep.mubr.bf16.mxu0 %v943
  %2418 = vmatmul.mubr.bf16.gmra.mrb[0].mxu0 %v942
  %v2419 = vpop.f32.mrb[0].mxu0
  %v2420 = vadd.f32 %v2323, %v2419
  %v2421 = vpop.f32.mrb[0].mxu0
  %v2422 = vpop.f32.mrb[0].mxu0
  %v2423 = vadd.f32 %v2326, %v2422
  %v2424 = vpop.f32.mrb[0].mxu0
  %2425 = vdwg.mxu0
  %2426 = vmatprep.subr.bf16.mxu0 0
  %2427 = vmatpush1.bf16.msra.mxu0 %v1684
  %2428 = vmatprep.subr.bf16.mxu0 0
  %2429 = vmatpush1.bf16.msra.mxu0 %v1685
  %2430 = vmatprep.subr.bf16.mxu0 0
  %2431 = vmatpush1.bf16.msra.mxu0 %v1686
  %2432 = vmatprep.subr.bf16.mxu0 0
  %2433 = vmatpush1.bf16.msra.mxu0 %v1687
  %2434 = vmatprep.subr.bf16.mxu0 0
  %2435 = vmatpush1.bf16.msra.mxu0 %v1688
  %2436 = vmatprep.subr.bf16.mxu0 0
  %2437 = vmatpush1.bf16.msra.mxu0 %v1689
  %2438 = vmatprep.subr.bf16.mxu0 0
  %2439 = vmatpush1.bf16.msra.mxu0 %v1690
  %2440 = vmatprep.subr.bf16.mxu0 0
  %2441 = vmatpush1.bf16.msra.mxu0 %v1691
  %2442 = vmatprep.subr.bf16.mxu0 0
  %2443 = vmatpush1.bf16.msra.mxu0 %v1692
  %2444 = vmatprep.subr.bf16.mxu0 0
  %2445 = vmatpush1.bf16.msra.mxu0 %v1693
  %2446 = vmatprep.subr.bf16.mxu0 0
  %2447 = vmatpush1.bf16.msra.mxu0 %v1694
  %2448 = vmatprep.subr.bf16.mxu0 0
  %2449 = vmatpush1.bf16.msra.mxu0 %v1695
  %2450 = vmatprep.subr.bf16.mxu0 0
  %2451 = vmatpush1.bf16.msra.mxu0 %v1696
  %2452 = vmatprep.subr.bf16.mxu0 0
  %2453 = vmatpush1.bf16.msra.mxu0 %v1697
  %2454 = vmatprep.subr.bf16.mxu0 0
  %2455 = vmatpush1.bf16.msra.mxu0 %v1698
  %2456 = vmatprep.subr.bf16.mxu0 0
  %2457 = vmatpush1.bf16.msra.mxu0 %v1699
  %2458 = vmatprep.mubr.bf16.mxu0 %v833
  %2459 = vmatmul.mubr.bf16.gmra.mrb[0].mxu0 %v832
  %v2460 = vpop.f32.mrb[0].mxu0
  %v2461 = vadd.f32 %v2364, %v2460
  %v2462 = vpop.f32.mrb[0].mxu0
  %v2463 = vpop.f32.mrb[0].mxu0
  %v2464 = vadd.f32 %v2367, %v2463
  %v2465 = vpop.f32.mrb[0].mxu0
  %2466 = vmatprep.mubr.bf16.mxu0 %v849
  %2467 = vmatmul.mubr.bf16.gmra.mrb[0].mxu0 %v848
  %v2468 = vpop.f32.mrb[0].mxu0
  %v2469 = vadd.f32 %v2372, %v2468
  %v2470 = vpop.f32.mrb[0].mxu0
  %v2471 = vpop.f32.mrb[0].mxu0
  %v2472 = vadd.f32 %v2375, %v2471
  %v2473 = vpop.f32.mrb[0].mxu0
  %2474 = vmatprep.mubr.bf16.mxu0 %v865
  %2475 = vmatmul.mubr.bf16.gmra.mrb[0].mxu0 %v864
  %v2476 = vpop.f32.mrb[0].mxu0
  %v2477 = vadd.f32 %v2380, %v2476
  %v2478 = vpop.f32.mrb[0].mxu0
  %v2479 = vpop.f32.mrb[0].mxu0
  %v2480 = vadd.f32 %v2383, %v2479
  %v2481 = vpop.f32.mrb[0].mxu0
  %2482 = vmatprep.mubr.bf16.mxu0 %v881
  %2483 = vmatmul.mubr.bf16.gmra.mrb[0].mxu0 %v880
  %v2484 = vpop.f32.mrb[0].mxu0
  %v2485 = vadd.f32 %v2388, %v2484
  %v2486 = vpop.f32.mrb[0].mxu0
  %v2487 = vpop.f32.mrb[0].mxu0
  %v2488 = vadd.f32 %v2391, %v2487
  %v2489 = vpop.f32.mrb[0].mxu0
  %2490 = vmatprep.mubr.bf16.mxu0 %v897
  %2491 = vmatmul.mubr.bf16.gmra.mrb[0].mxu0 %v896
  %v2492 = vpop.f32.mrb[0].mxu0
  %v2493 = vadd.f32 %v2396, %v2492
  %v2494 = vpop.f32.mrb[0].mxu0
  %v2495 = vpop.f32.mrb[0].mxu0
  %v2496 = vadd.f32 %v2399, %v2495
  %v2497 = vpop.f32.mrb[0].mxu0
  %2498 = vmatprep.mubr.bf16.mxu0 %v913
  %2499 = vmatmul.mubr.bf16.gmra.mrb[0].mxu0 %v912
  %v2500 = vpop.f32.mrb[0].mxu0
  %v2501 = vadd.f32 %v2404, %v2500
  %v2502 = vpop.f32.mrb[0].mxu0
  %v2503 = vpop.f32.mrb[0].mxu0
  %v2504 = vadd.f32 %v2407, %v2503
  %v2505 = vpop.f32.mrb[0].mxu0
  %2506 = vmatprep.mubr.bf16.mxu0 %v929
  %2507 = vmatmul.mubr.bf16.gmra.mrb[0].mxu0 %v928
  %v2508 = vpop.f32.mrb[0].mxu0
  %v2509 = vadd.f32 %v2412, %v2508
  %v2510 = vpop.f32.mrb[0].mxu0
  %v2511 = vpop.f32.mrb[0].mxu0
  %v2512 = vadd.f32 %v2415, %v2511
  %v2513 = vpop.f32.mrb[0].mxu0
  %2514 = vmatprep.mubr.bf16.mxu0 %v945
  %2515 = vmatmul.mubr.bf16.gmra.mrb[0].mxu0 %v944
  %v2516 = vpop.f32.mrb[0].mxu0
  %v2517 = vadd.f32 %v2420, %v2516
  %v2518 = vpop.f32.mrb[0].mxu0
  %v2519 = vpop.f32.mrb[0].mxu0
  %v2520 = vadd.f32 %v2423, %v2519
  %v2521 = vpop.f32.mrb[0].mxu0
  %2522 = vdwg.mxu0
  %2523 = vmatprep.subr.bf16.mxu0 0
  %2524 = vmatpush1.bf16.msra.mxu0 %v1700
  %2525 = vmatprep.subr.bf16.mxu0 0
  %2526 = vmatpush1.bf16.msra.mxu0 %v1701
  %2527 = vmatprep.subr.bf16.mxu0 0
  %2528 = vmatpush1.bf16.msra.mxu0 %v1702
  %2529 = vmatprep.subr.bf16.mxu0 0
  %2530 = vmatpush1.bf16.msra.mxu0 %v1703
  %2531 = vmatprep.subr.bf16.mxu0 0
  %2532 = vmatpush1.bf16.msra.mxu0 %v1704
  %2533 = vmatprep.subr.bf16.mxu0 0
  %2534 = vmatpush1.bf16.msra.mxu0 %v1705
  %2535 = vmatprep.subr.bf16.mxu0 0
  %2536 = vmatpush1.bf16.msra.mxu0 %v1706
  %2537 = vmatprep.subr.bf16.mxu0 0
  %2538 = vmatpush1.bf16.msra.mxu0 %v1707
  %2539 = vmatprep.subr.bf16.mxu0 0
  %2540 = vmatpush1.bf16.msra.mxu0 %v1708
  %2541 = vmatprep.subr.bf16.mxu0 0
  %2542 = vmatpush1.bf16.msra.mxu0 %v1709
  %2543 = vmatprep.subr.bf16.mxu0 0
  %2544 = vmatpush1.bf16.msra.mxu0 %v1710
  %2545 = vmatprep.subr.bf16.mxu0 0
  %2546 = vmatpush1.bf16.msra.mxu0 %v1711
  %2547 = vmatprep.subr.bf16.mxu0 0
  %2548 = vmatpush1.bf16.msra.mxu0 %v1712
  %2549 = vmatprep.subr.bf16.mxu0 0
  %2550 = vmatpush1.bf16.msra.mxu0 %v1713
  %2551 = vmatprep.subr.bf16.mxu0 0
  %2552 = vmatpush1.bf16.msra.mxu0 %v1714
  %2553 = vmatprep.subr.bf16.mxu0 0
  %2554 = vmatpush1.bf16.msra.mxu0 %v1715
  %2555 = vmatprep.mubr.bf16.mxu0 %v835
  %2556 = vmatmul.mubr.bf16.gmra.mrb[0].mxu0 %v834
  %v2557 = vpop.f32.mrb[0].mxu0
  %v2558 = vadd.f32 %v2461, %v2557
  %v2559 = vpop.f32.mrb[0].mxu0
  %v2560 = vpop.f32.mrb[0].mxu0
  %v2561 = vadd.f32 %v2464, %v2560
  %v2562 = vpop.f32.mrb[0].mxu0
  %2563 = vmatprep.mubr.bf16.mxu0 %v851
  %2564 = vmatmul.mubr.bf16.gmra.mrb[0].mxu0 %v850
  %v2565 = vpop.f32.mrb[0].mxu0
  %v2566 = vadd.f32 %v2469, %v2565
  %v2567 = vpop.f32.mrb[0].mxu0
  %v2568 = vpop.f32.mrb[0].mxu0
  %v2569 = vadd.f32 %v2472, %v2568
  %v2570 = vpop.f32.mrb[0].mxu0
  %2571 = vmatprep.mubr.bf16.mxu0 %v867
  %2572 = vmatmul.mubr.bf16.gmra.mrb[0].mxu0 %v866
  %v2573 = vpop.f32.mrb[0].mxu0
  %v2574 = vadd.f32 %v2477, %v2573
  %v2575 = vpop.f32.mrb[0].mxu0
  %v2576 = vpop.f32.mrb[0].mxu0
  %v2577 = vadd.f32 %v2480, %v2576
  %v2578 = vpop.f32.mrb[0].mxu0
  %2579 = vmatprep.mubr.bf16.mxu0 %v883
  %2580 = vmatmul.mubr.bf16.gmra.mrb[0].mxu0 %v882
  %v2581 = vpop.f32.mrb[0].mxu0
  %v2582 = vadd.f32 %v2485, %v2581
  %v2583 = vpop.f32.mrb[0].mxu0
  %v2584 = vpop.f32.mrb[0].mxu0
  %v2585 = vadd.f32 %v2488, %v2584
  %v2586 = vpop.f32.mrb[0].mxu0
  %2587 = vmatprep.mubr.bf16.mxu0 %v899
  %2588 = vmatmul.mubr.bf16.gmra.mrb[0].mxu0 %v898
  %v2589 = vpop.f32.mrb[0].mxu0
  %v2590 = vadd.f32 %v2493, %v2589
  %v2591 = vpop.f32.mrb[0].mxu0
  %v2592 = vpop.f32.mrb[0].mxu0
  %v2593 = vadd.f32 %v2496, %v2592
  %v2594 = vpop.f32.mrb[0].mxu0
  %2595 = vmatprep.mubr.bf16.mxu0 %v915
  %2596 = vmatmul.mubr.bf16.gmra.mrb[0].mxu0 %v914
  %v2597 = vpop.f32.mrb[0].mxu0
  %v2598 = vadd.f32 %v2501, %v2597
  %v2599 = vpop.f32.mrb[0].mxu0
  %v2600 = vpop.f32.mrb[0].mxu0
  %v2601 = vadd.f32 %v2504, %v2600
  %v2602 = vpop.f32.mrb[0].mxu0
  %2603 = vmatprep.mubr.bf16.mxu0 %v931
  %2604 = vmatmul.mubr.bf16.gmra.mrb[0].mxu0 %v930
  %v2605 = vpop.f32.mrb[0].mxu0
  %v2606 = vadd.f32 %v2509, %v2605
  %v2607 = vpop.f32.mrb[0].mxu0
  %v2608 = vpop.f32.mrb[0].mxu0
  %v2609 = vadd.f32 %v2512, %v2608
  %v2610 = vpop.f32.mrb[0].mxu0
  %2611 = vmatprep.mubr.bf16.mxu0 %v947
  %2612 = vmatmul.mubr.bf16.gmra.mrb[0].mxu0 %v946
  %v2613 = vpop.f32.mrb[0].mxu0
  %v2614 = vadd.f32 %v2517, %v2613
  %v2615 = vpop.f32.mrb[0].mxu0
  %v2616 = vpop.f32.mrb[0].mxu0
  %v2617 = vadd.f32 %v2520, %v2616
  %v2618 = vpop.f32.mrb[0].mxu0
  %2619 = vdwg.mxu0
  %v2620 = vmax.f32 %v2558, 0.0
  %v2621 = vmax.f32 %v2561, 0.0
  %v2622 = vmax.f32 %v2566, 0.0
  %v2623 = vmax.f32 %v2569, 0.0
  %v2624 = vmax.f32 %v2574, 0.0
  %v2625 = vmax.f32 %v2577, 0.0
  %v2626 = vmax.f32 %v2582, 0.0
  %v2627 = vmax.f32 %v2585, 0.0
  %v2628 = vmax.f32 %v2590, 0.0
  %v2629 = vmax.f32 %v2593, 0.0
  %v2630 = vmax.f32 %v2598, 0.0
  %v2631 = vmax.f32 %v2601, 0.0
  %v2632 = vmax.f32 %v2606, 0.0
  %v2633 = vmax.f32 %v2609, 0.0
  %v2634 = vmax.f32 %v2614, 0.0
  %v2635 = vmax.f32 %v2617, 0.0
  %v2636 = vpack.c.bf16 %v2621, %v2620
  %v2637 = vpack.c.bf16 %v2623, %v2622
  %v2638 = vpack.c.bf16 %v2625, %v2624
  %v2639 = vpack.c.bf16 %v2627, %v2626
  %v2640 = vpack.c.bf16 %v2629, %v2628
  %v2641 = vpack.c.bf16 %v2631, %v2630
  %v2642 = vpack.c.bf16 %v2633, %v2632
  %v2643 = vpack.c.bf16 %v2635, %v2634
  %v2644 = vld [vmem:[%s4] sm:$0xf]
  %v2645 = vld [vmem:[%s4 + $0x4] sm:$0xf]
  %v2646 = vld [vmem:[%s4 + $0x8] sm:$0xf]
  %v2647 = vld [vmem:[%s4 + $0xc] sm:$0xf]
  %v2648 = vld [vmem:[%s4 + $0x10] sm:$0xf]
  %v2649 = vld [vmem:[%s4 + $0x14] sm:$0xf]
  %v2650 = vld [vmem:[%s4 + $0x18] sm:$0xf]
  %v2651 = vld [vmem:[%s4 + $0x1c] sm:$0xf]
  %v2652 = vld [vmem:[%s4 + $0x20] sm:$0xf]
  %v2653 = vld [vmem:[%s4 + $0x24] sm:$0xf]
  %v2654 = vld [vmem:[%s4 + $0x28] sm:$0xf]
  %v2655 = vld [vmem:[%s4 + $0x2c] sm:$0xf]
  %v2656 = vld [vmem:[%s4 + $0x30] sm:$0xf]
  %v2657 = vld [vmem:[%s4 + $0x34] sm:$0xf]
  %v2658 = vld [vmem:[%s4 + $0x38] sm:$0xf]
  %v2659 = vld [vmem:[%s4 + $0x3c] sm:$0xf]
  %v2660 = vld [vmem:[%s4 + $0x40] sm:$0xf]
  %v2661 = vld [vmem:[%s4 + $0x44] sm:$0xf]
  %v2662 = vld [vmem:[%s4 + $0x48] sm:$0xf]
  %v2663 = vld [vmem:[%s4 + $0x4c] sm:$0xf]
  %v2664 = vld [vmem:[%s4 + $0x50] sm:$0xf]
  %v2665 = vld [vmem:[%s4 + $0x54] sm:$0xf]
  %v2666 = vld [vmem:[%s4 + $0x58] sm:$0xf]
  %v2667 = vld [vmem:[%s4 + $0x5c] sm:$0xf]
  %v2668 = vld [vmem:[%s4 + $0x60] sm:$0xf]
  %v2669 = vld [vmem:[%s4 + $0x64] sm:$0xf]
  %v2670 = vld [vmem:[%s4 + $0x68] sm:$0xf]
  %v2671 = vld [vmem:[%s4 + $0x6c] sm:$0xf]
  %v2672 = vld [vmem:[%s4 + $0x70] sm:$0xf]
  %v2673 = vld [vmem:[%s4 + $0x74] sm:$0xf]
  %v2674 = vld [vmem:[%s4 + $0x78] sm:$0xf]
  %v2675 = vld [vmem:[%s4 + $0x7c] sm:$0xf]
  %v2677 = vrot.slane %v2636, 4
  %v2695 = vunpack.c.l.b16 %v2660
  %v2696 = vunpack.c.l.b16 %v2661
  %v2697 = vunpack.c.l.b16 %v2662
  %v2698 = vunpack.c.l.b16 %v2663
  %v2699 = vunpack.c.l.b16 %v2664
  %v2700 = vunpack.c.l.b16 %v2665
  %v2701 = vunpack.c.l.b16 %v2666
  %v2702 = vunpack.c.l.b16 %v2667
  %v2703 = vunpack.c.l.b16 %v2668
  %v2704 = vunpack.c.l.b16 %v2669
  %v2705 = vunpack.c.l.b16 %v2670
  %v2706 = vunpack.c.l.b16 %v2671
  %v2707 = vunpack.c.l.b16 %v2672
  %v2708 = vunpack.c.l.b16 %v2673
  %v2709 = vunpack.c.l.b16 %v2674
  %v2710 = vunpack.c.l.b16 %v2675
  %v2711 = vpack.c.b16 %v2696, %v2695
  %v2712 = vpack.c.b16 %v2698, %v2697
  %v2713 = vpack.c.b16 %v2700, %v2699
  %v2714 = vpack.c.b16 %v2702, %v2701
  %v2715 = vpack.c.b16 %v2704, %v2703
  %v2716 = vpack.c.b16 %v2706, %v2705
  %v2717 = vpack.c.b16 %v2708, %v2707
  %v2718 = vpack.c.b16 %v2710, %v2709
  %2727 = vmatprep.subr.bf16.mxu0 0
  %2728 = vmatpush1.bf16.msra.mxu0 %v2711
  %2729 = vmatprep.subr.bf16.mxu0 0
  %2730 = vmatpush1.bf16.msra.mxu0 %v2712
  %2731 = vmatprep.subr.bf16.mxu0 0
  %2732 = vmatpush1.bf16.msra.mxu0 %v2713
  %2733 = vmatprep.subr.bf16.mxu0 0
  %2734 = vmatpush1.bf16.msra.mxu0 %v2714
  %2735 = vmatprep.subr.bf16.mxu0 0
  %2736 = vmatpush1.bf16.msra.mxu0 %v2715
  %2737 = vmatprep.subr.bf16.mxu0 0
  %2738 = vmatpush1.bf16.msra.mxu0 %v2716
  %2739 = vmatprep.subr.bf16.mxu0 0
  %2740 = vmatpush1.bf16.msra.mxu0 %v2717
  %2741 = vmatprep.subr.bf16.mxu0 0
  %2742 = vmatpush1.bf16.msra.mxu0 %v2718
  %2743 = vmatprep.subr.bf16.mxu0 0
  %2744 = vmatpush1.bf16.msra.mxu0 0
  %2745 = vmatprep.subr.bf16.mxu0 0
  %2746 = vmatpush1.bf16.msra.mxu0 0
  %2747 = vmatprep.subr.bf16.mxu0 0
  %2748 = vmatpush1.bf16.msra.mxu0 0
  %2749 = vmatprep.subr.bf16.mxu0 0
  %2750 = vmatpush1.bf16.msra.mxu0 0
  %2751 = vmatprep.subr.bf16.mxu0 0
  %2752 = vmatpush1.bf16.msra.mxu0 0
  %2753 = vmatprep.subr.bf16.mxu0 0
  %2754 = vmatpush1.bf16.msra.mxu0 0
  %2755 = vmatprep.subr.bf16.mxu0 0
  %2756 = vmatpush1.bf16.msra.mxu0 0
  %2757 = vmatprep.subr.bf16.mxu0 0
  %2758 = vmatpush1.bf16.msra.mxu0 0
  %2759 = vmatprep.mubr.bf16.mxu0 0
  %2760 = vmatmul.mubr.bf16.gmra.mrb[0].mxu0 %v2677
  %v2761 = vpop.f32.mrb[0].mxu0
  %v2762 = vadd.f32 0.0, %v2761
  %v2763 = vpop.f32.mrb[0].mxu0
  %v2764 = vpop.f32.mrb[0].mxu0
  %v2765 = vpop.f32.mrb[0].mxu0
  %2766 = vdwg.mxu0
  %v2783 = vunpack.c.l.b16 %v2644
  %v2784 = vunpack.c.l.b16 %v2645
  %v2785 = vunpack.c.l.b16 %v2646
  %v2786 = vunpack.c.l.b16 %v2647
  %v2787 = vunpack.c.l.b16 %v2648
  %v2788 = vunpack.c.l.b16 %v2649
  %v2789 = vunpack.c.l.b16 %v2650
  %v2790 = vunpack.c.l.b16 %v2651
  %v2791 = vunpack.c.l.b16 %v2652
  %v2792 = vunpack.c.l.b16 %v2653
  %v2793 = vunpack.c.l.b16 %v2654
  %v2794 = vunpack.c.l.b16 %v2655
  %v2795 = vunpack.c.l.b16 %v2656
  %v2796 = vunpack.c.l.b16 %v2657
  %v2797 = vunpack.c.l.b16 %v2658
  %v2798 = vunpack.c.l.b16 %v2659
  %v2799 = vpack.c.b16 %v2784, %v2783
  %v2800 = vpack.c.b16 %v2786, %v2785
  %v2801 = vpack.c.b16 %v2788, %v2787
  %v2802 = vpack.c.b16 %v2790, %v2789
  %v2803 = vpack.c.b16 %v2792, %v2791
  %v2804 = vpack.c.b16 %v2794, %v2793
  %v2805 = vpack.c.b16 %v2796, %v2795
  %v2806 = vpack.c.b16 %v2798, %v2797
  %2815 = vmatprep.subr.bf16.mxu0 0
  %2816 = vmatpush1.bf16.msra.mxu0 %v2799
  %2817 = vmatprep.subr.bf16.mxu0 0
  %2818 = vmatpush1.bf16.msra.mxu0 %v2800
  %2819 = vmatprep.subr.bf16.mxu0 0
  %2820 = vmatpush1.bf16.msra.mxu0 %v2801
  %2821 = vmatprep.subr.bf16.mxu0 0
  %2822 = vmatpush1.bf16.msra.mxu0 %v2802
  %2823 = vmatprep.subr.bf16.mxu0 0
  %2824 = vmatpush1.bf16.msra.mxu0 %v2803
  %2825 = vmatprep.subr.bf16.mxu0 0
  %2826 = vmatpush1.bf16.msra.mxu0 %v2804
  %2827 = vmatprep.subr.bf16.mxu0 0
  %2828 = vmatpush1.bf16.msra.mxu0 %v2805
  %2829 = vmatprep.subr.bf16.mxu0 0
  %2830 = vmatpush1.bf16.msra.mxu0 %v2806
  %2831 = vmatprep.subr.bf16.mxu0 0
  %2832 = vmatpush1.bf16.msra.mxu0 0
  %2833 = vmatprep.subr.bf16.mxu0 0
  %2834 = vmatpush1.bf16.msra.mxu0 0
  %2835 = vmatprep.subr.bf16.mxu0 0
  %2836 = vmatpush1.bf16.msra.mxu0 0
  %2837 = vmatprep.subr.bf16.mxu0 0
  %2838 = vmatpush1.bf16.msra.mxu0 0
  %2839 = vmatprep.subr.bf16.mxu0 0
  %2840 = vmatpush1.bf16.msra.mxu0 0
  %2841 = vmatprep.subr.bf16.mxu0 0
  %2842 = vmatpush1.bf16.msra.mxu0 0
  %2843 = vmatprep.subr.bf16.mxu0 0
  %2844 = vmatpush1.bf16.msra.mxu0 0
  %2845 = vmatprep.subr.bf16.mxu0 0
  %2846 = vmatpush1.bf16.msra.mxu0 0
  %2847 = vmatprep.mubr.bf16.mxu0 0
  %2848 = vmatmul.mubr.bf16.gmra.mrb[0].mxu0 %v2636
  %v2849 = vpop.f32.mrb[0].mxu0
  %v2850 = vadd.f32 %v2762, %v2849
  %v2851 = vpop.f32.mrb[0].mxu0
  %v2852 = vpop.f32.mrb[0].mxu0
  %v2853 = vpop.f32.mrb[0].mxu0
  %2854 = vdwg.mxu0
  %v2855 = vld [vmem:[%s4 + $0x80] sm:$0xf]
  %v2856 = vld [vmem:[%s4 + $0x84] sm:$0xf]
  %v2857 = vld [vmem:[%s4 + $0x88] sm:$0xf]
  %v2858 = vld [vmem:[%s4 + $0x8c] sm:$0xf]
  %v2859 = vld [vmem:[%s4 + $0x90] sm:$0xf]
  %v2860 = vld [vmem:[%s4 + $0x94] sm:$0xf]
  %v2861 = vld [vmem:[%s4 + $0x98] sm:$0xf]
  %v2862 = vld [vmem:[%s4 + $0x9c] sm:$0xf]
  %v2863 = vld [vmem:[%s4 + $0xa0] sm:$0xf]
  %v2864 = vld [vmem:[%s4 + $0xa4] sm:$0xf]
  %v2865 = vld [vmem:[%s4 + $0xa8] sm:$0xf]
  %v2866 = vld [vmem:[%s4 + $0xac] sm:$0xf]
  %v2867 = vld [vmem:[%s4 + $0xb0] sm:$0xf]
  %v2868 = vld [vmem:[%s4 + $0xb4] sm:$0xf]
  %v2869 = vld [vmem:[%s4 + $0xb8] sm:$0xf]
  %v2870 = vld [vmem:[%s4 + $0xbc] sm:$0xf]
  %v2887 = vunpack.c.l.b16 %v2855
  %v2888 = vunpack.c.l.b16 %v2856
  %v2889 = vunpack.c.l.b16 %v2857
  %v2890 = vunpack.c.l.b16 %v2858
  %v2891 = vunpack.c.l.b16 %v2859
  %v2892 = vunpack.c.l.b16 %v2860
  %v2893 = vunpack.c.l.b16 %v2861
  %v2894 = vunpack.c.l.b16 %v2862
  %v2895 = vunpack.c.l.b16 %v2863
  %v2896 = vunpack.c.l.b16 %v2864
  %v2897 = vunpack.c.l.b16 %v2865
  %v2898 = vunpack.c.l.b16 %v2866
  %v2899 = vunpack.c.l.b16 %v2867
  %v2900 = vunpack.c.l.b16 %v2868
  %v2901 = vunpack.c.l.b16 %v2869
  %v2902 = vunpack.c.l.b16 %v2870
  %v2903 = vpack.c.b16 %v2888, %v2887
  %v2904 = vpack.c.b16 %v2890, %v2889
  %v2905 = vpack.c.b16 %v2892, %v2891
  %v2906 = vpack.c.b16 %v2894, %v2893
  %v2907 = vpack.c.b16 %v2896, %v2895
  %v2908 = vpack.c.b16 %v2898, %v2897
  %v2909 = vpack.c.b16 %v2900, %v2899
  %v2910 = vpack.c.b16 %v2902, %v2901
  %2919 = vmatprep.subr.bf16.mxu0 0
  %2920 = vmatpush1.bf16.msra.mxu0 %v2903
  %2921 = vmatprep.subr.bf16.mxu0 0
  %2922 = vmatpush1.bf16.msra.mxu0 %v2904
  %2923 = vmatprep.subr.bf16.mxu0 0
  %2924 = vmatpush1.bf16.msra.mxu0 %v2905
  %2925 = vmatprep.subr.bf16.mxu0 0
  %2926 = vmatpush1.bf16.msra.mxu0 %v2906
  %2927 = vmatprep.subr.bf16.mxu0 0
  %2928 = vmatpush1.bf16.msra.mxu0 %v2907
  %2929 = vmatprep.subr.bf16.mxu0 0
  %2930 = vmatpush1.bf16.msra.mxu0 %v2908
  %2931 = vmatprep.subr.bf16.mxu0 0
  %2932 = vmatpush1.bf16.msra.mxu0 %v2909
  %2933 = vmatprep.subr.bf16.mxu0 0
  %2934 = vmatpush1.bf16.msra.mxu0 %v2910
  %2935 = vmatprep.subr.bf16.mxu0 0
  %2936 = vmatpush1.bf16.msra.mxu0 0
  %2937 = vmatprep.subr.bf16.mxu0 0
  %2938 = vmatpush1.bf16.msra.mxu0 0
  %2939 = vmatprep.subr.bf16.mxu0 0
  %2940 = vmatpush1.bf16.msra.mxu0 0
  %2941 = vmatprep.subr.bf16.mxu0 0
  %2942 = vmatpush1.bf16.msra.mxu0 0
  %2943 = vmatprep.subr.bf16.mxu0 0
  %2944 = vmatpush1.bf16.msra.mxu0 0
  %2945 = vmatprep.subr.bf16.mxu0 0
  %2946 = vmatpush1.bf16.msra.mxu0 0
  %2947 = vmatprep.subr.bf16.mxu0 0
  %2948 = vmatpush1.bf16.msra.mxu0 0
  %2949 = vmatprep.subr.bf16.mxu0 0
  %2950 = vmatpush1.bf16.msra.mxu0 0
  %2951 = vmatprep.mubr.bf16.mxu0 0
  %2952 = vmatmul.mubr.bf16.gmra.mrb[0].mxu0 %v2637
  %v2953 = vpop.f32.mrb[0].mxu0
  %v2954 = vadd.f32 0.0, %v2953
  %v2955 = vpop.f32.mrb[0].mxu0
  %v2956 = vpop.f32.mrb[0].mxu0
  %v2957 = vpop.f32.mrb[0].mxu0
  %2958 = vdwg.mxu0
  %v2959 = vadd.f32 %v2850, %v2954
  %v2960 = vld [vmem:[%s4 + $0xc0] sm:$0xf]
  %v2961 = vld [vmem:[%s4 + $0xc4] sm:$0xf]
  %v2962 = vld [vmem:[%s4 + $0xc8] sm:$0xf]
  %v2963 = vld [vmem:[%s4 + $0xcc] sm:$0xf]
  %v2964 = vld [vmem:[%s4 + $0xd0] sm:$0xf]
  %v2965 = vld [vmem:[%s4 + $0xd4] sm:$0xf]
  %v2966 = vld [vmem:[%s4 + $0xd8] sm:$0xf]
  %v2967 = vld [vmem:[%s4 + $0xdc] sm:$0xf]
  %v2968 = vld [vmem:[%s4 + $0xe0] sm:$0xf]
  %v2969 = vld [vmem:[%s4 + $0xe4] sm:$0xf]
  %v2970 = vld [vmem:[%s4 + $0xe8] sm:$0xf]
  %v2971 = vld [vmem:[%s4 + $0xec] sm:$0xf]
  %v2972 = vld [vmem:[%s4 + $0xf0] sm:$0xf]
  %v2973 = vld [vmem:[%s4 + $0xf4] sm:$0xf]
  %v2974 = vld [vmem:[%s4 + $0xf8] sm:$0xf]
  %v2975 = vld [vmem:[%s4 + $0xfc] sm:$0xf]
  %v2977 = vrot.slane %v2637, 4
  %v2995 = vunpack.c.l.b16 %v2960
  %v2996 = vunpack.c.l.b16 %v2961
  %v2997 = vunpack.c.l.b16 %v2962
  %v2998 = vunpack.c.l.b16 %v2963
  %v2999 = vunpack.c.l.b16 %v2964
  %v3000 = vunpack.c.l.b16 %v2965
  %v3001 = vunpack.c.l.b16 %v2966
  %v3002 = vunpack.c.l.b16 %v2967
  %v3003 = vunpack.c.l.b16 %v2968
  %v3004 = vunpack.c.l.b16 %v2969
  %v3005 = vunpack.c.l.b16 %v2970
  %v3006 = vunpack.c.l.b16 %v2971
  %v3007 = vunpack.c.l.b16 %v2972
  %v3008 = vunpack.c.l.b16 %v2973
  %v3009 = vunpack.c.l.b16 %v2974
  %v3010 = vunpack.c.l.b16 %v2975
  %v3011 = vpack.c.b16 %v2996, %v2995
  %v3012 = vpack.c.b16 %v2998, %v2997
  %v3013 = vpack.c.b16 %v3000, %v2999
  %v3014 = vpack.c.b16 %v3002, %v3001
  %v3015 = vpack.c.b16 %v3004, %v3003
  %v3016 = vpack.c.b16 %v3006, %v3005
  %v3017 = vpack.c.b16 %v3008, %v3007
  %v3018 = vpack.c.b16 %v3010, %v3009
  %3027 = vmatprep.subr.bf16.mxu0 0
  %3028 = vmatpush1.bf16.msra.mxu0 %v3011
  %3029 = vmatprep.subr.bf16.mxu0 0
  %3030 = vmatpush1.bf16.msra.mxu0 %v3012
  %3031 = vmatprep.subr.bf16.mxu0 0
  %3032 = vmatpush1.bf16.msra.mxu0 %v3013
  %3033 = vmatprep.subr.bf16.mxu0 0
  %3034 = vmatpush1.bf16.msra.mxu0 %v3014
  %3035 = vmatprep.subr.bf16.mxu0 0
  %3036 = vmatpush1.bf16.msra.mxu0 %v3015
  %3037 = vmatprep.subr.bf16.mxu0 0
  %3038 = vmatpush1.bf16.msra.mxu0 %v3016
  %3039 = vmatprep.subr.bf16.mxu0 0
  %3040 = vmatpush1.bf16.msra.mxu0 %v3017
  %3041 = vmatprep.subr.bf16.mxu0 0
  %3042 = vmatpush1.bf16.msra.mxu0 %v3018
  %3043 = vmatprep.subr.bf16.mxu0 0
  %3044 = vmatpush1.bf16.msra.mxu0 0
  %3045 = vmatprep.subr.bf16.mxu0 0
  %3046 = vmatpush1.bf16.msra.mxu0 0
  %3047 = vmatprep.subr.bf16.mxu0 0
  %3048 = vmatpush1.bf16.msra.mxu0 0
  %3049 = vmatprep.subr.bf16.mxu0 0
  %3050 = vmatpush1.bf16.msra.mxu0 0
  %3051 = vmatprep.subr.bf16.mxu0 0
  %3052 = vmatpush1.bf16.msra.mxu0 0
  %3053 = vmatprep.subr.bf16.mxu0 0
  %3054 = vmatpush1.bf16.msra.mxu0 0
  %3055 = vmatprep.subr.bf16.mxu0 0
  %3056 = vmatpush1.bf16.msra.mxu0 0
  %3057 = vmatprep.subr.bf16.mxu0 0
  %3058 = vmatpush1.bf16.msra.mxu0 0
  %3059 = vmatprep.mubr.bf16.mxu0 0
  %3060 = vmatmul.mubr.bf16.gmra.mrb[0].mxu0 %v2977
  %v3061 = vpop.f32.mrb[0].mxu0
  %v3062 = vadd.f32 0.0, %v3061
  %v3063 = vpop.f32.mrb[0].mxu0
  %v3064 = vpop.f32.mrb[0].mxu0
  %v3065 = vpop.f32.mrb[0].mxu0
  %3066 = vdwg.mxu0
  %v3067 = vadd.f32 %v2959, %v3062
  %v3068 = vld [vmem:[%s4 + $0x100] sm:$0xf]
  %v3069 = vld [vmem:[%s4 + $0x104] sm:$0xf]
  %v3070 = vld [vmem:[%s4 + $0x108] sm:$0xf]
  %v3071 = vld [vmem:[%s4 + $0x10c] sm:$0xf]
  %v3072 = vld [vmem:[%s4 + $0x110] sm:$0xf]
  %v3073 = vld [vmem:[%s4 + $0x114] sm:$0xf]
  %v3074 = vld [vmem:[%s4 + $0x118] sm:$0xf]
  %v3075 = vld [vmem:[%s4 + $0x11c] sm:$0xf]
  %v3076 = vld [vmem:[%s4 + $0x120] sm:$0xf]
  %v3077 = vld [vmem:[%s4 + $0x124] sm:$0xf]
  %v3078 = vld [vmem:[%s4 + $0x128] sm:$0xf]
  %v3079 = vld [vmem:[%s4 + $0x12c] sm:$0xf]
  %v3080 = vld [vmem:[%s4 + $0x130] sm:$0xf]
  %v3081 = vld [vmem:[%s4 + $0x134] sm:$0xf]
  %v3082 = vld [vmem:[%s4 + $0x138] sm:$0xf]
  %v3083 = vld [vmem:[%s4 + $0x13c] sm:$0xf]
  %v3100 = vunpack.c.l.b16 %v3068
  %v3101 = vunpack.c.l.b16 %v3069
  %v3102 = vunpack.c.l.b16 %v3070
  %v3103 = vunpack.c.l.b16 %v3071
  %v3104 = vunpack.c.l.b16 %v3072
  %v3105 = vunpack.c.l.b16 %v3073
  %v3106 = vunpack.c.l.b16 %v3074
  %v3107 = vunpack.c.l.b16 %v3075
  %v3108 = vunpack.c.l.b16 %v3076
  %v3109 = vunpack.c.l.b16 %v3077
  %v3110 = vunpack.c.l.b16 %v3078
  %v3111 = vunpack.c.l.b16 %v3079
  %v3112 = vunpack.c.l.b16 %v3080
  %v3113 = vunpack.c.l.b16 %v3081
  %v3114 = vunpack.c.l.b16 %v3082
  %v3115 = vunpack.c.l.b16 %v3083
  %v3116 = vpack.c.b16 %v3101, %v3100
  %v3117 = vpack.c.b16 %v3103, %v3102
  %v3118 = vpack.c.b16 %v3105, %v3104
  %v3119 = vpack.c.b16 %v3107, %v3106
  %v3120 = vpack.c.b16 %v3109, %v3108
  %v3121 = vpack.c.b16 %v3111, %v3110
  %v3122 = vpack.c.b16 %v3113, %v3112
  %v3123 = vpack.c.b16 %v3115, %v3114
  %3132 = vmatprep.subr.bf16.mxu0 0
  %3133 = vmatpush1.bf16.msra.mxu0 %v3116
  %3134 = vmatprep.subr.bf16.mxu0 0
  %3135 = vmatpush1.bf16.msra.mxu0 %v3117
  %3136 = vmatprep.subr.bf16.mxu0 0
  %3137 = vmatpush1.bf16.msra.mxu0 %v3118
  %3138 = vmatprep.subr.bf16.mxu0 0
  %3139 = vmatpush1.bf16.msra.mxu0 %v3119
  %3140 = vmatprep.subr.bf16.mxu0 0
  %3141 = vmatpush1.bf16.msra.mxu0 %v3120
  %3142 = vmatprep.subr.bf16.mxu0 0
  %3143 = vmatpush1.bf16.msra.mxu0 %v3121
  %3144 = vmatprep.subr.bf16.mxu0 0
  %3145 = vmatpush1.bf16.msra.mxu0 %v3122
  %3146 = vmatprep.subr.bf16.mxu0 0
  %3147 = vmatpush1.bf16.msra.mxu0 %v3123
  %3148 = vmatprep.subr.bf16.mxu0 0
  %3149 = vmatpush1.bf16.msra.mxu0 0
  %3150 = vmatprep.subr.bf16.mxu0 0
  %3151 = vmatpush1.bf16.msra.mxu0 0
  %3152 = vmatprep.subr.bf16.mxu0 0
  %3153 = vmatpush1.bf16.msra.mxu0 0
  %3154 = vmatprep.subr.bf16.mxu0 0
  %3155 = vmatpush1.bf16.msra.mxu0 0
  %3156 = vmatprep.subr.bf16.mxu0 0
  %3157 = vmatpush1.bf16.msra.mxu0 0
  %3158 = vmatprep.subr.bf16.mxu0 0
  %3159 = vmatpush1.bf16.msra.mxu0 0
  %3160 = vmatprep.subr.bf16.mxu0 0
  %3161 = vmatpush1.bf16.msra.mxu0 0
  %3162 = vmatprep.subr.bf16.mxu0 0
  %3163 = vmatpush1.bf16.msra.mxu0 0
  %3164 = vmatprep.mubr.bf16.mxu0 0
  %3165 = vmatmul.mubr.bf16.gmra.mrb[0].mxu0 %v2638
  %v3166 = vpop.f32.mrb[0].mxu0
  %v3167 = vadd.f32 0.0, %v3166
  %v3168 = vpop.f32.mrb[0].mxu0
  %v3169 = vpop.f32.mrb[0].mxu0
  %v3170 = vpop.f32.mrb[0].mxu0
  %3171 = vdwg.mxu0
  %v3172 = vadd.f32 %v3067, %v3167
  %v3173 = vld [vmem:[%s4 + $0x140] sm:$0xf]
  %v3174 = vld [vmem:[%s4 + $0x144] sm:$0xf]
  %v3175 = vld [vmem:[%s4 + $0x148] sm:$0xf]
  %v3176 = vld [vmem:[%s4 + $0x14c] sm:$0xf]
  %v3177 = vld [vmem:[%s4 + $0x150] sm:$0xf]
  %v3178 = vld [vmem:[%s4 + $0x154] sm:$0xf]
  %v3179 = vld [vmem:[%s4 + $0x158] sm:$0xf]
  %v3180 = vld [vmem:[%s4 + $0x15c] sm:$0xf]
  %v3181 = vld [vmem:[%s4 + $0x160] sm:$0xf]
  %v3182 = vld [vmem:[%s4 + $0x164] sm:$0xf]
  %v3183 = vld [vmem:[%s4 + $0x168] sm:$0xf]
  %v3184 = vld [vmem:[%s4 + $0x16c] sm:$0xf]
  %v3185 = vld [vmem:[%s4 + $0x170] sm:$0xf]
  %v3186 = vld [vmem:[%s4 + $0x174] sm:$0xf]
  %v3187 = vld [vmem:[%s4 + $0x178] sm:$0xf]
  %v3188 = vld [vmem:[%s4 + $0x17c] sm:$0xf]
  %v3190 = vrot.slane %v2638, 4
  %v3208 = vunpack.c.l.b16 %v3173
  %v3209 = vunpack.c.l.b16 %v3174
  %v3210 = vunpack.c.l.b16 %v3175
  %v3211 = vunpack.c.l.b16 %v3176
  %v3212 = vunpack.c.l.b16 %v3177
  %v3213 = vunpack.c.l.b16 %v3178
  %v3214 = vunpack.c.l.b16 %v3179
  %v3215 = vunpack.c.l.b16 %v3180
  %v3216 = vunpack.c.l.b16 %v3181
  %v3217 = vunpack.c.l.b16 %v3182
  %v3218 = vunpack.c.l.b16 %v3183
  %v3219 = vunpack.c.l.b16 %v3184
  %v3220 = vunpack.c.l.b16 %v3185
  %v3221 = vunpack.c.l.b16 %v3186
  %v3222 = vunpack.c.l.b16 %v3187
  %v3223 = vunpack.c.l.b16 %v3188
  %v3224 = vpack.c.b16 %v3209, %v3208
  %v3225 = vpack.c.b16 %v3211, %v3210
  %v3226 = vpack.c.b16 %v3213, %v3212
  %v3227 = vpack.c.b16 %v3215, %v3214
  %v3228 = vpack.c.b16 %v3217, %v3216
  %v3229 = vpack.c.b16 %v3219, %v3218
  %v3230 = vpack.c.b16 %v3221, %v3220
  %v3231 = vpack.c.b16 %v3223, %v3222
  %3240 = vmatprep.subr.bf16.mxu0 0
  %3241 = vmatpush1.bf16.msra.mxu0 %v3224
  %3242 = vmatprep.subr.bf16.mxu0 0
  %3243 = vmatpush1.bf16.msra.mxu0 %v3225
  %3244 = vmatprep.subr.bf16.mxu0 0
  %3245 = vmatpush1.bf16.msra.mxu0 %v3226
  %3246 = vmatprep.subr.bf16.mxu0 0
  %3247 = vmatpush1.bf16.msra.mxu0 %v3227
  %3248 = vmatprep.subr.bf16.mxu0 0
  %3249 = vmatpush1.bf16.msra.mxu0 %v3228
  %3250 = vmatprep.subr.bf16.mxu0 0
  %3251 = vmatpush1.bf16.msra.mxu0 %v3229
  %3252 = vmatprep.subr.bf16.mxu0 0
  %3253 = vmatpush1.bf16.msra.mxu0 %v3230
  %3254 = vmatprep.subr.bf16.mxu0 0
  %3255 = vmatpush1.bf16.msra.mxu0 %v3231
  %3256 = vmatprep.subr.bf16.mxu0 0
  %3257 = vmatpush1.bf16.msra.mxu0 0
  %3258 = vmatprep.subr.bf16.mxu0 0
  %3259 = vmatpush1.bf16.msra.mxu0 0
  %3260 = vmatprep.subr.bf16.mxu0 0
  %3261 = vmatpush1.bf16.msra.mxu0 0
  %3262 = vmatprep.subr.bf16.mxu0 0
  %3263 = vmatpush1.bf16.msra.mxu0 0
  %3264 = vmatprep.subr.bf16.mxu0 0
  %3265 = vmatpush1.bf16.msra.mxu0 0
  %3266 = vmatprep.subr.bf16.mxu0 0
  %3267 = vmatpush1.bf16.msra.mxu0 0
  %3268 = vmatprep.subr.bf16.mxu0 0
  %3269 = vmatpush1.bf16.msra.mxu0 0
  %3270 = vmatprep.subr.bf16.mxu0 0
  %3271 = vmatpush1.bf16.msra.mxu0 0
  %3272 = vmatprep.mubr.bf16.mxu0 0
  %3273 = vmatmul.mubr.bf16.gmra.mrb[0].mxu0 %v3190
  %v3274 = vpop.f32.mrb[0].mxu0
  %v3275 = vadd.f32 0.0, %v3274
  %v3276 = vpop.f32.mrb[0].mxu0
  %v3277 = vpop.f32.mrb[0].mxu0
  %v3278 = vpop.f32.mrb[0].mxu0
  %3279 = vdwg.mxu0
  %v3280 = vadd.f32 %v3172, %v3275
  %v3281 = vld [vmem:[%s4 + $0x180] sm:$0xf]
  %v3282 = vld [vmem:[%s4 + $0x184] sm:$0xf]
  %v3283 = vld [vmem:[%s4 + $0x188] sm:$0xf]
  %v3284 = vld [vmem:[%s4 + $0x18c] sm:$0xf]
  %v3285 = vld [vmem:[%s4 + $0x190] sm:$0xf]
  %v3286 = vld [vmem:[%s4 + $0x194] sm:$0xf]
  %v3287 = vld [vmem:[%s4 + $0x198] sm:$0xf]
  %v3288 = vld [vmem:[%s4 + $0x19c] sm:$0xf]
  %v3289 = vld [vmem:[%s4 + $0x1a0] sm:$0xf]
  %v3290 = vld [vmem:[%s4 + $0x1a4] sm:$0xf]
  %v3291 = vld [vmem:[%s4 + $0x1a8] sm:$0xf]
  %v3292 = vld [vmem:[%s4 + $0x1ac] sm:$0xf]
  %v3293 = vld [vmem:[%s4 + $0x1b0] sm:$0xf]
  %v3294 = vld [vmem:[%s4 + $0x1b4] sm:$0xf]
  %v3295 = vld [vmem:[%s4 + $0x1b8] sm:$0xf]
  %v3296 = vld [vmem:[%s4 + $0x1bc] sm:$0xf]
  %v3313 = vunpack.c.l.b16 %v3281
  %v3314 = vunpack.c.l.b16 %v3282
  %v3315 = vunpack.c.l.b16 %v3283
  %v3316 = vunpack.c.l.b16 %v3284
  %v3317 = vunpack.c.l.b16 %v3285
  %v3318 = vunpack.c.l.b16 %v3286
  %v3319 = vunpack.c.l.b16 %v3287
  %v3320 = vunpack.c.l.b16 %v3288
  %v3321 = vunpack.c.l.b16 %v3289
  %v3322 = vunpack.c.l.b16 %v3290
  %v3323 = vunpack.c.l.b16 %v3291
  %v3324 = vunpack.c.l.b16 %v3292
  %v3325 = vunpack.c.l.b16 %v3293
  %v3326 = vunpack.c.l.b16 %v3294
  %v3327 = vunpack.c.l.b16 %v3295
  %v3328 = vunpack.c.l.b16 %v3296
  %v3329 = vpack.c.b16 %v3314, %v3313
  %v3330 = vpack.c.b16 %v3316, %v3315
  %v3331 = vpack.c.b16 %v3318, %v3317
  %v3332 = vpack.c.b16 %v3320, %v3319
  %v3333 = vpack.c.b16 %v3322, %v3321
  %v3334 = vpack.c.b16 %v3324, %v3323
  %v3335 = vpack.c.b16 %v3326, %v3325
  %v3336 = vpack.c.b16 %v3328, %v3327
  %3345 = vmatprep.subr.bf16.mxu0 0
  %3346 = vmatpush1.bf16.msra.mxu0 %v3329
  %3347 = vmatprep.subr.bf16.mxu0 0
  %3348 = vmatpush1.bf16.msra.mxu0 %v3330
  %3349 = vmatprep.subr.bf16.mxu0 0
  %3350 = vmatpush1.bf16.msra.mxu0 %v3331
  %3351 = vmatprep.subr.bf16.mxu0 0
  %3352 = vmatpush1.bf16.msra.mxu0 %v3332
  %3353 = vmatprep.subr.bf16.mxu0 0
  %3354 = vmatpush1.bf16.msra.mxu0 %v3333
  %3355 = vmatprep.subr.bf16.mxu0 0
  %3356 = vmatpush1.bf16.msra.mxu0 %v3334
  %3357 = vmatprep.subr.bf16.mxu0 0
  %3358 = vmatpush1.bf16.msra.mxu0 %v3335
  %3359 = vmatprep.subr.bf16.mxu0 0
  %3360 = vmatpush1.bf16.msra.mxu0 %v3336
  %3361 = vmatprep.subr.bf16.mxu0 0
  %3362 = vmatpush1.bf16.msra.mxu0 0
  %3363 = vmatprep.subr.bf16.mxu0 0
  %3364 = vmatpush1.bf16.msra.mxu0 0
  %3365 = vmatprep.subr.bf16.mxu0 0
  %3366 = vmatpush1.bf16.msra.mxu0 0
  %3367 = vmatprep.subr.bf16.mxu0 0
  %3368 = vmatpush1.bf16.msra.mxu0 0
  %3369 = vmatprep.subr.bf16.mxu0 0
  %3370 = vmatpush1.bf16.msra.mxu0 0
  %3371 = vmatprep.subr.bf16.mxu0 0
  %3372 = vmatpush1.bf16.msra.mxu0 0
  %3373 = vmatprep.subr.bf16.mxu0 0
  %3374 = vmatpush1.bf16.msra.mxu0 0
  %3375 = vmatprep.subr.bf16.mxu0 0
  %3376 = vmatpush1.bf16.msra.mxu0 0
  %3377 = vmatprep.mubr.bf16.mxu0 0
  %3378 = vmatmul.mubr.bf16.gmra.mrb[0].mxu0 %v2639
  %v3379 = vpop.f32.mrb[0].mxu0
  %v3380 = vadd.f32 0.0, %v3379
  %v3381 = vpop.f32.mrb[0].mxu0
  %v3382 = vpop.f32.mrb[0].mxu0
  %v3383 = vpop.f32.mrb[0].mxu0
  %3384 = vdwg.mxu0
  %v3385 = vadd.f32 %v3280, %v3380
  %v3386 = vld [vmem:[%s4 + $0x1c0] sm:$0xf]
  %v3387 = vld [vmem:[%s4 + $0x1c4] sm:$0xf]
  %v3388 = vld [vmem:[%s4 + $0x1c8] sm:$0xf]
  %v3389 = vld [vmem:[%s4 + $0x1cc] sm:$0xf]
  %v3390 = vld [vmem:[%s4 + $0x1d0] sm:$0xf]
  %v3391 = vld [vmem:[%s4 + $0x1d4] sm:$0xf]
  %v3392 = vld [vmem:[%s4 + $0x1d8] sm:$0xf]
  %v3393 = vld [vmem:[%s4 + $0x1dc] sm:$0xf]
  %v3394 = vld [vmem:[%s4 + $0x1e0] sm:$0xf]
  %v3395 = vld [vmem:[%s4 + $0x1e4] sm:$0xf]
  %v3396 = vld [vmem:[%s4 + $0x1e8] sm:$0xf]
  %v3397 = vld [vmem:[%s4 + $0x1ec] sm:$0xf]
  %v3398 = vld [vmem:[%s4 + $0x1f0] sm:$0xf]
  %v3399 = vld [vmem:[%s4 + $0x1f4] sm:$0xf]
  %v3400 = vld [vmem:[%s4 + $0x1f8] sm:$0xf]
  %v3401 = vld [vmem:[%s4 + $0x1fc] sm:$0xf]
  %v3403 = vrot.slane %v2639, 4
  %v3421 = vunpack.c.l.b16 %v3386
  %v3422 = vunpack.c.l.b16 %v3387
  %v3423 = vunpack.c.l.b16 %v3388
  %v3424 = vunpack.c.l.b16 %v3389
  %v3425 = vunpack.c.l.b16 %v3390
  %v3426 = vunpack.c.l.b16 %v3391
  %v3427 = vunpack.c.l.b16 %v3392
  %v3428 = vunpack.c.l.b16 %v3393
  %v3429 = vunpack.c.l.b16 %v3394
  %v3430 = vunpack.c.l.b16 %v3395
  %v3431 = vunpack.c.l.b16 %v3396
  %v3432 = vunpack.c.l.b16 %v3397
  %v3433 = vunpack.c.l.b16 %v3398
  %v3434 = vunpack.c.l.b16 %v3399
  %v3435 = vunpack.c.l.b16 %v3400
  %v3436 = vunpack.c.l.b16 %v3401
  %v3437 = vpack.c.b16 %v3422, %v3421
  %v3438 = vpack.c.b16 %v3424, %v3423
  %v3439 = vpack.c.b16 %v3426, %v3425
  %v3440 = vpack.c.b16 %v3428, %v3427
  %v3441 = vpack.c.b16 %v3430, %v3429
  %v3442 = vpack.c.b16 %v3432, %v3431
  %v3443 = vpack.c.b16 %v3434, %v3433
  %v3444 = vpack.c.b16 %v3436, %v3435
  %3453 = vmatprep.subr.bf16.mxu0 0
  %3454 = vmatpush1.bf16.msra.mxu0 %v3437
  %3455 = vmatprep.subr.bf16.mxu0 0
  %3456 = vmatpush1.bf16.msra.mxu0 %v3438
  %3457 = vmatprep.subr.bf16.mxu0 0
  %3458 = vmatpush1.bf16.msra.mxu0 %v3439
  %3459 = vmatprep.subr.bf16.mxu0 0
  %3460 = vmatpush1.bf16.msra.mxu0 %v3440
  %3461 = vmatprep.subr.bf16.mxu0 0
  %3462 = vmatpush1.bf16.msra.mxu0 %v3441
  %3463 = vmatprep.subr.bf16.mxu0 0
  %3464 = vmatpush1.bf16.msra.mxu0 %v3442
  %3465 = vmatprep.subr.bf16.mxu0 0
  %3466 = vmatpush1.bf16.msra.mxu0 %v3443
  %3467 = vmatprep.subr.bf16.mxu0 0
  %3468 = vmatpush1.bf16.msra.mxu0 %v3444
  %3469 = vmatprep.subr.bf16.mxu0 0
  %3470 = vmatpush1.bf16.msra.mxu0 0
  %3471 = vmatprep.subr.bf16.mxu0 0
  %3472 = vmatpush1.bf16.msra.mxu0 0
  %3473 = vmatprep.subr.bf16.mxu0 0
  %3474 = vmatpush1.bf16.msra.mxu0 0
  %3475 = vmatprep.subr.bf16.mxu0 0
  %3476 = vmatpush1.bf16.msra.mxu0 0
  %3477 = vmatprep.subr.bf16.mxu0 0
  %3478 = vmatpush1.bf16.msra.mxu0 0
  %3479 = vmatprep.subr.bf16.mxu0 0
  %3480 = vmatpush1.bf16.msra.mxu0 0
  %3481 = vmatprep.subr.bf16.mxu0 0
  %3482 = vmatpush1.bf16.msra.mxu0 0
  %3483 = vmatprep.subr.bf16.mxu0 0
  %3484 = vmatpush1.bf16.msra.mxu0 0
  %3485 = vmatprep.mubr.bf16.mxu0 0
  %3486 = vmatmul.mubr.bf16.gmra.mrb[0].mxu0 %v3403
  %v3487 = vpop.f32.mrb[0].mxu0
  %v3488 = vadd.f32 0.0, %v3487
  %v3489 = vpop.f32.mrb[0].mxu0
  %v3490 = vpop.f32.mrb[0].mxu0
  %v3491 = vpop.f32.mrb[0].mxu0
  %3492 = vdwg.mxu0
  %v3493 = vadd.f32 %v3385, %v3488
  %v3494 = vld [vmem:[%s4 + $0x200] sm:$0xf]
  %v3495 = vld [vmem:[%s4 + $0x204] sm:$0xf]
  %v3496 = vld [vmem:[%s4 + $0x208] sm:$0xf]
  %v3497 = vld [vmem:[%s4 + $0x20c] sm:$0xf]
  %v3498 = vld [vmem:[%s4 + $0x210] sm:$0xf]
  %v3499 = vld [vmem:[%s4 + $0x214] sm:$0xf]
  %v3500 = vld [vmem:[%s4 + $0x218] sm:$0xf]
  %v3501 = vld [vmem:[%s4 + $0x21c] sm:$0xf]
  %v3502 = vld [vmem:[%s4 + $0x220] sm:$0xf]
  %v3503 = vld [vmem:[%s4 + $0x224] sm:$0xf]
  %v3504 = vld [vmem:[%s4 + $0x228] sm:$0xf]
  %v3505 = vld [vmem:[%s4 + $0x22c] sm:$0xf]
  %v3506 = vld [vmem:[%s4 + $0x230] sm:$0xf]
  %v3507 = vld [vmem:[%s4 + $0x234] sm:$0xf]
  %v3508 = vld [vmem:[%s4 + $0x238] sm:$0xf]
  %v3509 = vld [vmem:[%s4 + $0x23c] sm:$0xf]
  %v3526 = vunpack.c.l.b16 %v3494
  %v3527 = vunpack.c.l.b16 %v3495
  %v3528 = vunpack.c.l.b16 %v3496
  %v3529 = vunpack.c.l.b16 %v3497
  %v3530 = vunpack.c.l.b16 %v3498
  %v3531 = vunpack.c.l.b16 %v3499
  %v3532 = vunpack.c.l.b16 %v3500
  %v3533 = vunpack.c.l.b16 %v3501
  %v3534 = vunpack.c.l.b16 %v3502
  %v3535 = vunpack.c.l.b16 %v3503
  %v3536 = vunpack.c.l.b16 %v3504
  %v3537 = vunpack.c.l.b16 %v3505
  %v3538 = vunpack.c.l.b16 %v3506
  %v3539 = vunpack.c.l.b16 %v3507
  %v3540 = vunpack.c.l.b16 %v3508
  %v3541 = vunpack.c.l.b16 %v3509
  %v3542 = vpack.c.b16 %v3527, %v3526
  %v3543 = vpack.c.b16 %v3529, %v3528
  %v3544 = vpack.c.b16 %v3531, %v3530
  %v3545 = vpack.c.b16 %v3533, %v3532
  %v3546 = vpack.c.b16 %v3535, %v3534
  %v3547 = vpack.c.b16 %v3537, %v3536
  %v3548 = vpack.c.b16 %v3539, %v3538
  %v3549 = vpack.c.b16 %v3541, %v3540
  %3558 = vmatprep.subr.bf16.mxu0 0
  %3559 = vmatpush1.bf16.msra.mxu0 %v3542
  %3560 = vmatprep.subr.bf16.mxu0 0
  %3561 = vmatpush1.bf16.msra.mxu0 %v3543
  %3562 = vmatprep.subr.bf16.mxu0 0
  %3563 = vmatpush1.bf16.msra.mxu0 %v3544
  %3564 = vmatprep.subr.bf16.mxu0 0
  %3565 = vmatpush1.bf16.msra.mxu0 %v3545
  %3566 = vmatprep.subr.bf16.mxu0 0
  %3567 = vmatpush1.bf16.msra.mxu0 %v3546
  %3568 = vmatprep.subr.bf16.mxu0 0
  %3569 = vmatpush1.bf16.msra.mxu0 %v3547
  %3570 = vmatprep.subr.bf16.mxu0 0
  %3571 = vmatpush1.bf16.msra.mxu0 %v3548
  %3572 = vmatprep.subr.bf16.mxu0 0
  %3573 = vmatpush1.bf16.msra.mxu0 %v3549
  %3574 = vmatprep.subr.bf16.mxu0 0
  %3575 = vmatpush1.bf16.msra.mxu0 0
  %3576 = vmatprep.subr.bf16.mxu0 0
  %3577 = vmatpush1.bf16.msra.mxu0 0
  %3578 = vmatprep.subr.bf16.mxu0 0
  %3579 = vmatpush1.bf16.msra.mxu0 0
  %3580 = vmatprep.subr.bf16.mxu0 0
  %3581 = vmatpush1.bf16.msra.mxu0 0
  %3582 = vmatprep.subr.bf16.mxu0 0
  %3583 = vmatpush1.bf16.msra.mxu0 0
  %3584 = vmatprep.subr.bf16.mxu0 0
  %3585 = vmatpush1.bf16.msra.mxu0 0
  %3586 = vmatprep.subr.bf16.mxu0 0
  %3587 = vmatpush1.bf16.msra.mxu0 0
  %3588 = vmatprep.subr.bf16.mxu0 0
  %3589 = vmatpush1.bf16.msra.mxu0 0
  %3590 = vmatprep.mubr.bf16.mxu0 0
  %3591 = vmatmul.mubr.bf16.gmra.mrb[0].mxu0 %v2640
  %v3592 = vpop.f32.mrb[0].mxu0
  %v3593 = vadd.f32 0.0, %v3592
  %v3594 = vpop.f32.mrb[0].mxu0
  %v3595 = vpop.f32.mrb[0].mxu0
  %v3596 = vpop.f32.mrb[0].mxu0
  %3597 = vdwg.mxu0
  %v3598 = vadd.f32 %v3493, %v3593
  %v3599 = vld [vmem:[%s4 + $0x240] sm:$0xf]
  %v3600 = vld [vmem:[%s4 + $0x244] sm:$0xf]
  %v3601 = vld [vmem:[%s4 + $0x248] sm:$0xf]
  %v3602 = vld [vmem:[%s4 + $0x24c] sm:$0xf]
  %v3603 = vld [vmem:[%s4 + $0x250] sm:$0xf]
  %v3604 = vld [vmem:[%s4 + $0x254] sm:$0xf]
  %v3605 = vld [vmem:[%s4 + $0x258] sm:$0xf]
  %v3606 = vld [vmem:[%s4 + $0x25c] sm:$0xf]
  %v3607 = vld [vmem:[%s4 + $0x260] sm:$0xf]
  %v3608 = vld [vmem:[%s4 + $0x264] sm:$0xf]
  %v3609 = vld [vmem:[%s4 + $0x268] sm:$0xf]
  %v3610 = vld [vmem:[%s4 + $0x26c] sm:$0xf]
  %v3611 = vld [vmem:[%s4 + $0x270] sm:$0xf]
  %v3612 = vld [vmem:[%s4 + $0x274] sm:$0xf]
  %v3613 = vld [vmem:[%s4 + $0x278] sm:$0xf]
  %v3614 = vld [vmem:[%s4 + $0x27c] sm:$0xf]
  %v3616 = vrot.slane %v2640, 4
  %v3634 = vunpack.c.l.b16 %v3599
  %v3635 = vunpack.c.l.b16 %v3600
  %v3636 = vunpack.c.l.b16 %v3601
  %v3637 = vunpack.c.l.b16 %v3602
  %v3638 = vunpack.c.l.b16 %v3603
  %v3639 = vunpack.c.l.b16 %v3604
  %v3640 = vunpack.c.l.b16 %v3605
  %v3641 = vunpack.c.l.b16 %v3606
  %v3642 = vunpack.c.l.b16 %v3607
  %v3643 = vunpack.c.l.b16 %v3608
  %v3644 = vunpack.c.l.b16 %v3609
  %v3645 = vunpack.c.l.b16 %v3610
  %v3646 = vunpack.c.l.b16 %v3611
  %v3647 = vunpack.c.l.b16 %v3612
  %v3648 = vunpack.c.l.b16 %v3613
  %v3649 = vunpack.c.l.b16 %v3614
  %v3650 = vpack.c.b16 %v3635, %v3634
  %v3651 = vpack.c.b16 %v3637, %v3636
  %v3652 = vpack.c.b16 %v3639, %v3638
  %v3653 = vpack.c.b16 %v3641, %v3640
  %v3654 = vpack.c.b16 %v3643, %v3642
  %v3655 = vpack.c.b16 %v3645, %v3644
  %v3656 = vpack.c.b16 %v3647, %v3646
  %v3657 = vpack.c.b16 %v3649, %v3648
  %3666 = vmatprep.subr.bf16.mxu0 0
  %3667 = vmatpush1.bf16.msra.mxu0 %v3650
  %3668 = vmatprep.subr.bf16.mxu0 0
  %3669 = vmatpush1.bf16.msra.mxu0 %v3651
  %3670 = vmatprep.subr.bf16.mxu0 0
  %3671 = vmatpush1.bf16.msra.mxu0 %v3652
  %3672 = vmatprep.subr.bf16.mxu0 0
  %3673 = vmatpush1.bf16.msra.mxu0 %v3653
  %3674 = vmatprep.subr.bf16.mxu0 0
  %3675 = vmatpush1.bf16.msra.mxu0 %v3654
  %3676 = vmatprep.subr.bf16.mxu0 0
  %3677 = vmatpush1.bf16.msra.mxu0 %v3655
  %3678 = vmatprep.subr.bf16.mxu0 0
  %3679 = vmatpush1.bf16.msra.mxu0 %v3656
  %3680 = vmatprep.subr.bf16.mxu0 0
  %3681 = vmatpush1.bf16.msra.mxu0 %v3657
  %3682 = vmatprep.subr.bf16.mxu0 0
  %3683 = vmatpush1.bf16.msra.mxu0 0
  %3684 = vmatprep.subr.bf16.mxu0 0
  %3685 = vmatpush1.bf16.msra.mxu0 0
  %3686 = vmatprep.subr.bf16.mxu0 0
  %3687 = vmatpush1.bf16.msra.mxu0 0
  %3688 = vmatprep.subr.bf16.mxu0 0
  %3689 = vmatpush1.bf16.msra.mxu0 0
  %3690 = vmatprep.subr.bf16.mxu0 0
  %3691 = vmatpush1.bf16.msra.mxu0 0
  %3692 = vmatprep.subr.bf16.mxu0 0
  %3693 = vmatpush1.bf16.msra.mxu0 0
  %3694 = vmatprep.subr.bf16.mxu0 0
  %3695 = vmatpush1.bf16.msra.mxu0 0
  %3696 = vmatprep.subr.bf16.mxu0 0
  %3697 = vmatpush1.bf16.msra.mxu0 0
  %3698 = vmatprep.mubr.bf16.mxu0 0
  %3699 = vmatmul.mubr.bf16.gmra.mrb[0].mxu0 %v3616
  %v3700 = vpop.f32.mrb[0].mxu0
  %v3701 = vadd.f32 0.0, %v3700
  %v3702 = vpop.f32.mrb[0].mxu0
  %v3703 = vpop.f32.mrb[0].mxu0
  %v3704 = vpop.f32.mrb[0].mxu0
  %3705 = vdwg.mxu0
  %v3706 = vadd.f32 %v3598, %v3701
  %v3707 = vld [vmem:[%s4 + $0x280] sm:$0xf]
  %v3708 = vld [vmem:[%s4 + $0x284] sm:$0xf]
  %v3709 = vld [vmem:[%s4 + $0x288] sm:$0xf]
  %v3710 = vld [vmem:[%s4 + $0x28c] sm:$0xf]
  %v3711 = vld [vmem:[%s4 + $0x290] sm:$0xf]
  %v3712 = vld [vmem:[%s4 + $0x294] sm:$0xf]
  %v3713 = vld [vmem:[%s4 + $0x298] sm:$0xf]
  %v3714 = vld [vmem:[%s4 + $0x29c] sm:$0xf]
  %v3715 = vld [vmem:[%s4 + $0x2a0] sm:$0xf]
  %v3716 = vld [vmem:[%s4 + $0x2a4] sm:$0xf]
  %v3717 = vld [vmem:[%s4 + $0x2a8] sm:$0xf]
  %v3718 = vld [vmem:[%s4 + $0x2ac] sm:$0xf]
  %v3719 = vld [vmem:[%s4 + $0x2b0] sm:$0xf]
  %v3720 = vld [vmem:[%s4 + $0x2b4] sm:$0xf]
  %v3721 = vld [vmem:[%s4 + $0x2b8] sm:$0xf]
  %v3722 = vld [vmem:[%s4 + $0x2bc] sm:$0xf]
  %v3739 = vunpack.c.l.b16 %v3707
  %v3740 = vunpack.c.l.b16 %v3708
  %v3741 = vunpack.c.l.b16 %v3709
  %v3742 = vunpack.c.l.b16 %v3710
  %v3743 = vunpack.c.l.b16 %v3711
  %v3744 = vunpack.c.l.b16 %v3712
  %v3745 = vunpack.c.l.b16 %v3713
  %v3746 = vunpack.c.l.b16 %v3714
  %v3747 = vunpack.c.l.b16 %v3715
  %v3748 = vunpack.c.l.b16 %v3716
  %v3749 = vunpack.c.l.b16 %v3717
  %v3750 = vunpack.c.l.b16 %v3718
  %v3751 = vunpack.c.l.b16 %v3719
  %v3752 = vunpack.c.l.b16 %v3720
  %v3753 = vunpack.c.l.b16 %v3721
  %v3754 = vunpack.c.l.b16 %v3722
  %v3755 = vpack.c.b16 %v3740, %v3739
  %v3756 = vpack.c.b16 %v3742, %v3741
  %v3757 = vpack.c.b16 %v3744, %v3743
  %v3758 = vpack.c.b16 %v3746, %v3745
  %v3759 = vpack.c.b16 %v3748, %v3747
  %v3760 = vpack.c.b16 %v3750, %v3749
  %v3761 = vpack.c.b16 %v3752, %v3751
  %v3762 = vpack.c.b16 %v3754, %v3753
  %3771 = vmatprep.subr.bf16.mxu0 0
  %3772 = vmatpush1.bf16.msra.mxu0 %v3755
  %3773 = vmatprep.subr.bf16.mxu0 0
  %3774 = vmatpush1.bf16.msra.mxu0 %v3756
  %3775 = vmatprep.subr.bf16.mxu0 0
  %3776 = vmatpush1.bf16.msra.mxu0 %v3757
  %3777 = vmatprep.subr.bf16.mxu0 0
  %3778 = vmatpush1.bf16.msra.mxu0 %v3758
  %3779 = vmatprep.subr.bf16.mxu0 0
  %3780 = vmatpush1.bf16.msra.mxu0 %v3759
  %3781 = vmatprep.subr.bf16.mxu0 0
  %3782 = vmatpush1.bf16.msra.mxu0 %v3760
  %3783 = vmatprep.subr.bf16.mxu0 0
  %3784 = vmatpush1.bf16.msra.mxu0 %v3761
  %3785 = vmatprep.subr.bf16.mxu0 0
  %3786 = vmatpush1.bf16.msra.mxu0 %v3762
  %3787 = vmatprep.subr.bf16.mxu0 0
  %3788 = vmatpush1.bf16.msra.mxu0 0
  %3789 = vmatprep.subr.bf16.mxu0 0
  %3790 = vmatpush1.bf16.msra.mxu0 0
  %3791 = vmatprep.subr.bf16.mxu0 0
  %3792 = vmatpush1.bf16.msra.mxu0 0
  %3793 = vmatprep.subr.bf16.mxu0 0
  %3794 = vmatpush1.bf16.msra.mxu0 0
  %3795 = vmatprep.subr.bf16.mxu0 0
  %3796 = vmatpush1.bf16.msra.mxu0 0
  %3797 = vmatprep.subr.bf16.mxu0 0
  %3798 = vmatpush1.bf16.msra.mxu0 0
  %3799 = vmatprep.subr.bf16.mxu0 0
  %3800 = vmatpush1.bf16.msra.mxu0 0
  %3801 = vmatprep.subr.bf16.mxu0 0
  %3802 = vmatpush1.bf16.msra.mxu0 0
  %3803 = vmatprep.mubr.bf16.mxu0 0
  %3804 = vmatmul.mubr.bf16.gmra.mrb[0].mxu0 %v2641
  %v3805 = vpop.f32.mrb[0].mxu0
  %v3806 = vadd.f32 0.0, %v3805
  %v3807 = vpop.f32.mrb[0].mxu0
  %v3808 = vpop.f32.mrb[0].mxu0
  %v3809 = vpop.f32.mrb[0].mxu0
  %3810 = vdwg.mxu0
  %v3811 = vadd.f32 %v3706, %v3806
  %v3812 = vld [vmem:[%s4 + $0x2c0] sm:$0xf]
  %v3813 = vld [vmem:[%s4 + $0x2c4] sm:$0xf]
  %v3814 = vld [vmem:[%s4 + $0x2c8] sm:$0xf]
  %v3815 = vld [vmem:[%s4 + $0x2cc] sm:$0xf]
  %v3816 = vld [vmem:[%s4 + $0x2d0] sm:$0xf]
  %v3817 = vld [vmem:[%s4 + $0x2d4] sm:$0xf]
  %v3818 = vld [vmem:[%s4 + $0x2d8] sm:$0xf]
  %v3819 = vld [vmem:[%s4 + $0x2dc] sm:$0xf]
  %v3820 = vld [vmem:[%s4 + $0x2e0] sm:$0xf]
  %v3821 = vld [vmem:[%s4 + $0x2e4] sm:$0xf]
  %v3822 = vld [vmem:[%s4 + $0x2e8] sm:$0xf]
  %v3823 = vld [vmem:[%s4 + $0x2ec] sm:$0xf]
  %v3824 = vld [vmem:[%s4 + $0x2f0] sm:$0xf]
  %v3825 = vld [vmem:[%s4 + $0x2f4] sm:$0xf]
  %v3826 = vld [vmem:[%s4 + $0x2f8] sm:$0xf]
  %v3827 = vld [vmem:[%s4 + $0x2fc] sm:$0xf]
  %v3829 = vrot.slane %v2641, 4
  %v3847 = vunpack.c.l.b16 %v3812
  %v3848 = vunpack.c.l.b16 %v3813
  %v3849 = vunpack.c.l.b16 %v3814
  %v3850 = vunpack.c.l.b16 %v3815
  %v3851 = vunpack.c.l.b16 %v3816
  %v3852 = vunpack.c.l.b16 %v3817
  %v3853 = vunpack.c.l.b16 %v3818
  %v3854 = vunpack.c.l.b16 %v3819
  %v3855 = vunpack.c.l.b16 %v3820
  %v3856 = vunpack.c.l.b16 %v3821
  %v3857 = vunpack.c.l.b16 %v3822
  %v3858 = vunpack.c.l.b16 %v3823
  %v3859 = vunpack.c.l.b16 %v3824
  %v3860 = vunpack.c.l.b16 %v3825
  %v3861 = vunpack.c.l.b16 %v3826
  %v3862 = vunpack.c.l.b16 %v3827
  %v3863 = vpack.c.b16 %v3848, %v3847
  %v3864 = vpack.c.b16 %v3850, %v3849
  %v3865 = vpack.c.b16 %v3852, %v3851
  %v3866 = vpack.c.b16 %v3854, %v3853
  %v3867 = vpack.c.b16 %v3856, %v3855
  %v3868 = vpack.c.b16 %v3858, %v3857
  %v3869 = vpack.c.b16 %v3860, %v3859
  %v3870 = vpack.c.b16 %v3862, %v3861
  %3879 = vmatprep.subr.bf16.mxu0 0
  %3880 = vmatpush1.bf16.msra.mxu0 %v3863
  %3881 = vmatprep.subr.bf16.mxu0 0
  %3882 = vmatpush1.bf16.msra.mxu0 %v3864
  %3883 = vmatprep.subr.bf16.mxu0 0
  %3884 = vmatpush1.bf16.msra.mxu0 %v3865
  %3885 = vmatprep.subr.bf16.mxu0 0
  %3886 = vmatpush1.bf16.msra.mxu0 %v3866
  %3887 = vmatprep.subr.bf16.mxu0 0
  %3888 = vmatpush1.bf16.msra.mxu0 %v3867
  %3889 = vmatprep.subr.bf16.mxu0 0
  %3890 = vmatpush1.bf16.msra.mxu0 %v3868
  %3891 = vmatprep.subr.bf16.mxu0 0
  %3892 = vmatpush1.bf16.msra.mxu0 %v3869
  %3893 = vmatprep.subr.bf16.mxu0 0
  %3894 = vmatpush1.bf16.msra.mxu0 %v3870
  %3895 = vmatprep.subr.bf16.mxu0 0
  %3896 = vmatpush1.bf16.msra.mxu0 0
  %3897 = vmatprep.subr.bf16.mxu0 0
  %3898 = vmatpush1.bf16.msra.mxu0 0
  %3899 = vmatprep.subr.bf16.mxu0 0
  %3900 = vmatpush1.bf16.msra.mxu0 0
  %3901 = vmatprep.subr.bf16.mxu0 0
  %3902 = vmatpush1.bf16.msra.mxu0 0
  %3903 = vmatprep.subr.bf16.mxu0 0
  %3904 = vmatpush1.bf16.msra.mxu0 0
  %3905 = vmatprep.subr.bf16.mxu0 0
  %3906 = vmatpush1.bf16.msra.mxu0 0
  %3907 = vmatprep.subr.bf16.mxu0 0
  %3908 = vmatpush1.bf16.msra.mxu0 0
  %3909 = vmatprep.subr.bf16.mxu0 0
  %3910 = vmatpush1.bf16.msra.mxu0 0
  %3911 = vmatprep.mubr.bf16.mxu0 0
  %3912 = vmatmul.mubr.bf16.gmra.mrb[0].mxu0 %v3829
  %v3913 = vpop.f32.mrb[0].mxu0
  %v3914 = vadd.f32 0.0, %v3913
  %v3915 = vpop.f32.mrb[0].mxu0
  %v3916 = vpop.f32.mrb[0].mxu0
  %v3917 = vpop.f32.mrb[0].mxu0
  %3918 = vdwg.mxu0
  %v3919 = vadd.f32 %v3811, %v3914
  %v3920 = vld [vmem:[%s4 + $0x300] sm:$0xf]
  %v3921 = vld [vmem:[%s4 + $0x304] sm:$0xf]
  %v3922 = vld [vmem:[%s4 + $0x308] sm:$0xf]
  %v3923 = vld [vmem:[%s4 + $0x30c] sm:$0xf]
  %v3924 = vld [vmem:[%s4 + $0x310] sm:$0xf]
  %v3925 = vld [vmem:[%s4 + $0x314] sm:$0xf]
  %v3926 = vld [vmem:[%s4 + $0x318] sm:$0xf]
  %v3927 = vld [vmem:[%s4 + $0x31c] sm:$0xf]
  %v3928 = vld [vmem:[%s4 + $0x320] sm:$0xf]
  %v3929 = vld [vmem:[%s4 + $0x324] sm:$0xf]
  %v3930 = vld [vmem:[%s4 + $0x328] sm:$0xf]
  %v3931 = vld [vmem:[%s4 + $0x32c] sm:$0xf]
  %v3932 = vld [vmem:[%s4 + $0x330] sm:$0xf]
  %v3933 = vld [vmem:[%s4 + $0x334] sm:$0xf]
  %v3934 = vld [vmem:[%s4 + $0x338] sm:$0xf]
  %v3935 = vld [vmem:[%s4 + $0x33c] sm:$0xf]
  %v3952 = vunpack.c.l.b16 %v3920
  %v3953 = vunpack.c.l.b16 %v3921
  %v3954 = vunpack.c.l.b16 %v3922
  %v3955 = vunpack.c.l.b16 %v3923
  %v3956 = vunpack.c.l.b16 %v3924
  %v3957 = vunpack.c.l.b16 %v3925
  %v3958 = vunpack.c.l.b16 %v3926
  %v3959 = vunpack.c.l.b16 %v3927
  %v3960 = vunpack.c.l.b16 %v3928
  %v3961 = vunpack.c.l.b16 %v3929
  %v3962 = vunpack.c.l.b16 %v3930
  %v3963 = vunpack.c.l.b16 %v3931
  %v3964 = vunpack.c.l.b16 %v3932
  %v3965 = vunpack.c.l.b16 %v3933
  %v3966 = vunpack.c.l.b16 %v3934
  %v3967 = vunpack.c.l.b16 %v3935
  %v3968 = vpack.c.b16 %v3953, %v3952
  %v3969 = vpack.c.b16 %v3955, %v3954
  %v3970 = vpack.c.b16 %v3957, %v3956
  %v3971 = vpack.c.b16 %v3959, %v3958
  %v3972 = vpack.c.b16 %v3961, %v3960
  %v3973 = vpack.c.b16 %v3963, %v3962
  %v3974 = vpack.c.b16 %v3965, %v3964
  %v3975 = vpack.c.b16 %v3967, %v3966
  %3984 = vmatprep.subr.bf16.mxu0 0
  %3985 = vmatpush1.bf16.msra.mxu0 %v3968
  %3986 = vmatprep.subr.bf16.mxu0 0
  %3987 = vmatpush1.bf16.msra.mxu0 %v3969
  %3988 = vmatprep.subr.bf16.mxu0 0
  %3989 = vmatpush1.bf16.msra.mxu0 %v3970
  %3990 = vmatprep.subr.bf16.mxu0 0
  %3991 = vmatpush1.bf16.msra.mxu0 %v3971
  %3992 = vmatprep.subr.bf16.mxu0 0
  %3993 = vmatpush1.bf16.msra.mxu0 %v3972
  %3994 = vmatprep.subr.bf16.mxu0 0
  %3995 = vmatpush1.bf16.msra.mxu0 %v3973
  %3996 = vmatprep.subr.bf16.mxu0 0
  %3997 = vmatpush1.bf16.msra.mxu0 %v3974
  %3998 = vmatprep.subr.bf16.mxu0 0
  %3999 = vmatpush1.bf16.msra.mxu0 %v3975
  %4000 = vmatprep.subr.bf16.mxu0 0
  %4001 = vmatpush1.bf16.msra.mxu0 0
  %4002 = vmatprep.subr.bf16.mxu0 0
  %4003 = vmatpush1.bf16.msra.mxu0 0
  %4004 = vmatprep.subr.bf16.mxu0 0
  %4005 = vmatpush1.bf16.msra.mxu0 0
  %4006 = vmatprep.subr.bf16.mxu0 0
  %4007 = vmatpush1.bf16.msra.mxu0 0
  %4008 = vmatprep.subr.bf16.mxu0 0
  %4009 = vmatpush1.bf16.msra.mxu0 0
  %4010 = vmatprep.subr.bf16.mxu0 0
  %4011 = vmatpush1.bf16.msra.mxu0 0
  %4012 = vmatprep.subr.bf16.mxu0 0
  %4013 = vmatpush1.bf16.msra.mxu0 0
  %4014 = vmatprep.subr.bf16.mxu0 0
  %4015 = vmatpush1.bf16.msra.mxu0 0
  %4016 = vmatprep.mubr.bf16.mxu0 0
  %4017 = vmatmul.mubr.bf16.gmra.mrb[0].mxu0 %v2642
  %v4018 = vpop.f32.mrb[0].mxu0
  %v4019 = vadd.f32 0.0, %v4018
  %v4020 = vpop.f32.mrb[0].mxu0
  %v4021 = vpop.f32.mrb[0].mxu0
  %v4022 = vpop.f32.mrb[0].mxu0
  %4023 = vdwg.mxu0
  %v4024 = vadd.f32 %v3919, %v4019
  %v4025 = vld [vmem:[%s4 + $0x340] sm:$0xf]
  %v4026 = vld [vmem:[%s4 + $0x344] sm:$0xf]
  %v4027 = vld [vmem:[%s4 + $0x348] sm:$0xf]
  %v4028 = vld [vmem:[%s4 + $0x34c] sm:$0xf]
  %v4029 = vld [vmem:[%s4 + $0x350] sm:$0xf]
  %v4030 = vld [vmem:[%s4 + $0x354] sm:$0xf]
  %v4031 = vld [vmem:[%s4 + $0x358] sm:$0xf]
  %v4032 = vld [vmem:[%s4 + $0x35c] sm:$0xf]
  %v4033 = vld [vmem:[%s4 + $0x360] sm:$0xf]
  %v4034 = vld [vmem:[%s4 + $0x364] sm:$0xf]
  %v4035 = vld [vmem:[%s4 + $0x368] sm:$0xf]
  %v4036 = vld [vmem:[%s4 + $0x36c] sm:$0xf]
  %v4037 = vld [vmem:[%s4 + $0x370] sm:$0xf]
  %v4038 = vld [vmem:[%s4 + $0x374] sm:$0xf]
  %v4039 = vld [vmem:[%s4 + $0x378] sm:$0xf]
  %v4040 = vld [vmem:[%s4 + $0x37c] sm:$0xf]
  %v4042 = vrot.slane %v2642, 4
  %v4060 = vunpack.c.l.b16 %v4025
  %v4061 = vunpack.c.l.b16 %v4026
  %v4062 = vunpack.c.l.b16 %v4027
  %v4063 = vunpack.c.l.b16 %v4028
  %v4064 = vunpack.c.l.b16 %v4029
  %v4065 = vunpack.c.l.b16 %v4030
  %v4066 = vunpack.c.l.b16 %v4031
  %v4067 = vunpack.c.l.b16 %v4032
  %v4068 = vunpack.c.l.b16 %v4033
  %v4069 = vunpack.c.l.b16 %v4034
  %v4070 = vunpack.c.l.b16 %v4035
  %v4071 = vunpack.c.l.b16 %v4036
  %v4072 = vunpack.c.l.b16 %v4037
  %v4073 = vunpack.c.l.b16 %v4038
  %v4074 = vunpack.c.l.b16 %v4039
  %v4075 = vunpack.c.l.b16 %v4040
  %v4076 = vpack.c.b16 %v4061, %v4060
  %v4077 = vpack.c.b16 %v4063, %v4062
  %v4078 = vpack.c.b16 %v4065, %v4064
  %v4079 = vpack.c.b16 %v4067, %v4066
  %v4080 = vpack.c.b16 %v4069, %v4068
  %v4081 = vpack.c.b16 %v4071, %v4070
  %v4082 = vpack.c.b16 %v4073, %v4072
  %v4083 = vpack.c.b16 %v4075, %v4074
  %4092 = vmatprep.subr.bf16.mxu0 0
  %4093 = vmatpush1.bf16.msra.mxu0 %v4076
  %4094 = vmatprep.subr.bf16.mxu0 0
  %4095 = vmatpush1.bf16.msra.mxu0 %v4077
  %4096 = vmatprep.subr.bf16.mxu0 0
  %4097 = vmatpush1.bf16.msra.mxu0 %v4078
  %4098 = vmatprep.subr.bf16.mxu0 0
  %4099 = vmatpush1.bf16.msra.mxu0 %v4079
  %4100 = vmatprep.subr.bf16.mxu0 0
  %4101 = vmatpush1.bf16.msra.mxu0 %v4080
  %4102 = vmatprep.subr.bf16.mxu0 0
  %4103 = vmatpush1.bf16.msra.mxu0 %v4081
  %4104 = vmatprep.subr.bf16.mxu0 0
  %4105 = vmatpush1.bf16.msra.mxu0 %v4082
  %4106 = vmatprep.subr.bf16.mxu0 0
  %4107 = vmatpush1.bf16.msra.mxu0 %v4083
  %4108 = vmatprep.subr.bf16.mxu0 0
  %4109 = vmatpush1.bf16.msra.mxu0 0
  %4110 = vmatprep.subr.bf16.mxu0 0
  %4111 = vmatpush1.bf16.msra.mxu0 0
  %4112 = vmatprep.subr.bf16.mxu0 0
  %4113 = vmatpush1.bf16.msra.mxu0 0
  %4114 = vmatprep.subr.bf16.mxu0 0
  %4115 = vmatpush1.bf16.msra.mxu0 0
  %4116 = vmatprep.subr.bf16.mxu0 0
  %4117 = vmatpush1.bf16.msra.mxu0 0
  %4118 = vmatprep.subr.bf16.mxu0 0
  %4119 = vmatpush1.bf16.msra.mxu0 0
  %4120 = vmatprep.subr.bf16.mxu0 0
  %4121 = vmatpush1.bf16.msra.mxu0 0
  %4122 = vmatprep.subr.bf16.mxu0 0
  %4123 = vmatpush1.bf16.msra.mxu0 0
  %4124 = vmatprep.mubr.bf16.mxu0 0
  %4125 = vmatmul.mubr.bf16.gmra.mrb[0].mxu0 %v4042
  %v4126 = vpop.f32.mrb[0].mxu0
  %v4127 = vadd.f32 0.0, %v4126
  %v4128 = vpop.f32.mrb[0].mxu0
  %v4129 = vpop.f32.mrb[0].mxu0
  %v4130 = vpop.f32.mrb[0].mxu0
  %4131 = vdwg.mxu0
  %v4132 = vadd.f32 %v4024, %v4127
  %v4133 = vld [vmem:[%s4 + $0x380] sm:$0xf]
  %v4134 = vld [vmem:[%s4 + $0x384] sm:$0xf]
  %v4135 = vld [vmem:[%s4 + $0x388] sm:$0xf]
  %v4136 = vld [vmem:[%s4 + $0x38c] sm:$0xf]
  %v4137 = vld [vmem:[%s4 + $0x390] sm:$0xf]
  %v4138 = vld [vmem:[%s4 + $0x394] sm:$0xf]
  %v4139 = vld [vmem:[%s4 + $0x398] sm:$0xf]
  %v4140 = vld [vmem:[%s4 + $0x39c] sm:$0xf]
  %v4141 = vld [vmem:[%s4 + $0x3a0] sm:$0xf]
  %v4142 = vld [vmem:[%s4 + $0x3a4] sm:$0xf]
  %v4143 = vld [vmem:[%s4 + $0x3a8] sm:$0xf]
  %v4144 = vld [vmem:[%s4 + $0x3ac] sm:$0xf]
  %v4145 = vld [vmem:[%s4 + $0x3b0] sm:$0xf]
  %v4146 = vld [vmem:[%s4 + $0x3b4] sm:$0xf]
  %v4147 = vld [vmem:[%s4 + $0x3b8] sm:$0xf]
  %v4148 = vld [vmem:[%s4 + $0x3bc] sm:$0xf]
  %v4165 = vunpack.c.l.b16 %v4133
  %v4166 = vunpack.c.l.b16 %v4134
  %v4167 = vunpack.c.l.b16 %v4135
  %v4168 = vunpack.c.l.b16 %v4136
  %v4169 = vunpack.c.l.b16 %v4137
  %v4170 = vunpack.c.l.b16 %v4138
  %v4171 = vunpack.c.l.b16 %v4139
  %v4172 = vunpack.c.l.b16 %v4140
  %v4173 = vunpack.c.l.b16 %v4141
  %v4174 = vunpack.c.l.b16 %v4142
  %v4175 = vunpack.c.l.b16 %v4143
  %v4176 = vunpack.c.l.b16 %v4144
  %v4177 = vunpack.c.l.b16 %v4145
  %v4178 = vunpack.c.l.b16 %v4146
  %v4179 = vunpack.c.l.b16 %v4147
  %v4180 = vunpack.c.l.b16 %v4148
  %v4181 = vpack.c.b16 %v4166, %v4165
  %v4182 = vpack.c.b16 %v4168, %v4167
  %v4183 = vpack.c.b16 %v4170, %v4169
  %v4184 = vpack.c.b16 %v4172, %v4171
  %v4185 = vpack.c.b16 %v4174, %v4173
  %v4186 = vpack.c.b16 %v4176, %v4175
  %v4187 = vpack.c.b16 %v4178, %v4177
  %v4188 = vpack.c.b16 %v4180, %v4179
  %4197 = vmatprep.subr.bf16.mxu0 0
  %4198 = vmatpush1.bf16.msra.mxu0 %v4181
  %4199 = vmatprep.subr.bf16.mxu0 0
  %4200 = vmatpush1.bf16.msra.mxu0 %v4182
  %4201 = vmatprep.subr.bf16.mxu0 0
  %4202 = vmatpush1.bf16.msra.mxu0 %v4183
  %4203 = vmatprep.subr.bf16.mxu0 0
  %4204 = vmatpush1.bf16.msra.mxu0 %v4184
  %4205 = vmatprep.subr.bf16.mxu0 0
  %4206 = vmatpush1.bf16.msra.mxu0 %v4185
  %4207 = vmatprep.subr.bf16.mxu0 0
  %4208 = vmatpush1.bf16.msra.mxu0 %v4186
  %4209 = vmatprep.subr.bf16.mxu0 0
  %4210 = vmatpush1.bf16.msra.mxu0 %v4187
  %4211 = vmatprep.subr.bf16.mxu0 0
  %4212 = vmatpush1.bf16.msra.mxu0 %v4188
  %4213 = vmatprep.subr.bf16.mxu0 0
  %4214 = vmatpush1.bf16.msra.mxu0 0
  %4215 = vmatprep.subr.bf16.mxu0 0
  %4216 = vmatpush1.bf16.msra.mxu0 0
  %4217 = vmatprep.subr.bf16.mxu0 0
  %4218 = vmatpush1.bf16.msra.mxu0 0
  %4219 = vmatprep.subr.bf16.mxu0 0
  %4220 = vmatpush1.bf16.msra.mxu0 0
  %4221 = vmatprep.subr.bf16.mxu0 0
  %4222 = vmatpush1.bf16.msra.mxu0 0
  %4223 = vmatprep.subr.bf16.mxu0 0
  %4224 = vmatpush1.bf16.msra.mxu0 0
  %4225 = vmatprep.subr.bf16.mxu0 0
  %4226 = vmatpush1.bf16.msra.mxu0 0
  %4227 = vmatprep.subr.bf16.mxu0 0
  %4228 = vmatpush1.bf16.msra.mxu0 0
  %4229 = vmatprep.mubr.bf16.mxu0 0
  %4230 = vmatmul.mubr.bf16.gmra.mrb[0].mxu0 %v2643
  %v4231 = vpop.f32.mrb[0].mxu0
  %v4232 = vadd.f32 0.0, %v4231
  %v4233 = vpop.f32.mrb[0].mxu0
  %v4234 = vpop.f32.mrb[0].mxu0
  %v4235 = vpop.f32.mrb[0].mxu0
  %4236 = vdwg.mxu0
  %v4237 = vadd.f32 %v4132, %v4232
  %v4238 = vld [vmem:[%s4 + $0x3c0] sm:$0xf]
  %v4239 = vld [vmem:[%s4 + $0x3c4] sm:$0xf]
  %v4240 = vld [vmem:[%s4 + $0x3c8] sm:$0xf]
  %v4241 = vld [vmem:[%s4 + $0x3cc] sm:$0xf]
  %v4242 = vld [vmem:[%s4 + $0x3d0] sm:$0xf]
  %v4243 = vld [vmem:[%s4 + $0x3d4] sm:$0xf]
  %v4244 = vld [vmem:[%s4 + $0x3d8] sm:$0xf]
  %v4245 = vld [vmem:[%s4 + $0x3dc] sm:$0xf]
  %v4246 = vld [vmem:[%s4 + $0x3e0] sm:$0xf]
  %v4247 = vld [vmem:[%s4 + $0x3e4] sm:$0xf]
  %v4248 = vld [vmem:[%s4 + $0x3e8] sm:$0xf]
  %v4249 = vld [vmem:[%s4 + $0x3ec] sm:$0xf]
  %v4250 = vld [vmem:[%s4 + $0x3f0] sm:$0xf]
  %v4251 = vld [vmem:[%s4 + $0x3f4] sm:$0xf]
  %v4252 = vld [vmem:[%s4 + $0x3f8] sm:$0xf]
  %v4253 = vld [vmem:[%s4 + $0x3fc] sm:$0xf]
  %v4255 = vrot.slane %v2643, 4
  %v4273 = vunpack.c.l.b16 %v4238
  %v4274 = vunpack.c.l.b16 %v4239
  %v4275 = vunpack.c.l.b16 %v4240
  %v4276 = vunpack.c.l.b16 %v4241
  %v4277 = vunpack.c.l.b16 %v4242
  %v4278 = vunpack.c.l.b16 %v4243
  %v4279 = vunpack.c.l.b16 %v4244
  %v4280 = vunpack.c.l.b16 %v4245
  %v4281 = vunpack.c.l.b16 %v4246
  %v4282 = vunpack.c.l.b16 %v4247
  %v4283 = vunpack.c.l.b16 %v4248
  %v4284 = vunpack.c.l.b16 %v4249
  %v4285 = vunpack.c.l.b16 %v4250
  %v4286 = vunpack.c.l.b16 %v4251
  %v4287 = vunpack.c.l.b16 %v4252
  %v4288 = vunpack.c.l.b16 %v4253
  %v4289 = vpack.c.b16 %v4274, %v4273
  %v4290 = vpack.c.b16 %v4276, %v4275
  %v4291 = vpack.c.b16 %v4278, %v4277
  %v4292 = vpack.c.b16 %v4280, %v4279
  %v4293 = vpack.c.b16 %v4282, %v4281
  %v4294 = vpack.c.b16 %v4284, %v4283
  %v4295 = vpack.c.b16 %v4286, %v4285
  %v4296 = vpack.c.b16 %v4288, %v4287
  %4305 = vmatprep.subr.bf16.mxu0 0
  %4306 = vmatpush1.bf16.msra.mxu0 %v4289
  %4307 = vmatprep.subr.bf16.mxu0 0
  %4308 = vmatpush1.bf16.msra.mxu0 %v4290
  %4309 = vmatprep.subr.bf16.mxu0 0
  %4310 = vmatpush1.bf16.msra.mxu0 %v4291
  %4311 = vmatprep.subr.bf16.mxu0 0
  %4312 = vmatpush1.bf16.msra.mxu0 %v4292
  %4313 = vmatprep.subr.bf16.mxu0 0
  %4314 = vmatpush1.bf16.msra.mxu0 %v4293
  %4315 = vmatprep.subr.bf16.mxu0 0
  %4316 = vmatpush1.bf16.msra.mxu0 %v4294
  %4317 = vmatprep.subr.bf16.mxu0 0
  %4318 = vmatpush1.bf16.msra.mxu0 %v4295
  %4319 = vmatprep.subr.bf16.mxu0 0
  %4320 = vmatpush1.bf16.msra.mxu0 %v4296
  %4321 = vmatprep.subr.bf16.mxu0 0
  %4322 = vmatpush1.bf16.msra.mxu0 0
  %4323 = vmatprep.subr.bf16.mxu0 0
  %4324 = vmatpush1.bf16.msra.mxu0 0
  %4325 = vmatprep.subr.bf16.mxu0 0
  %4326 = vmatpush1.bf16.msra.mxu0 0
  %4327 = vmatprep.subr.bf16.mxu0 0
  %4328 = vmatpush1.bf16.msra.mxu0 0
  %4329 = vmatprep.subr.bf16.mxu0 0
  %4330 = vmatpush1.bf16.msra.mxu0 0
  %4331 = vmatprep.subr.bf16.mxu0 0
  %4332 = vmatpush1.bf16.msra.mxu0 0
  %4333 = vmatprep.subr.bf16.mxu0 0
  %4334 = vmatpush1.bf16.msra.mxu0 0
  %4335 = vmatprep.subr.bf16.mxu0 0
  %4336 = vmatpush1.bf16.msra.mxu0 0
  %4337 = vmatprep.mubr.bf16.mxu0 0
  %4338 = vmatmul.mubr.bf16.gmra.mrb[0].mxu0 %v4255
  %v4339 = vpop.f32.mrb[0].mxu0
  %v4340 = vadd.f32 0.0, %v4339
  %v4341 = vpop.f32.mrb[0].mxu0
  %v4342 = vpop.f32.mrb[0].mxu0
  %v4343 = vpop.f32.mrb[0].mxu0
  %4344 = vdwg.mxu0
  %v4345 = vadd.f32 %v4237, %v4340
  %v4346 = vld [vmem:[%s5] sm:$0x1]
  %v4348 = vlaneseq
  %v4349 = vshrl.u32 %v4348, 7
  %v4350 = vsub.s32 0, %v4349
  %v4351 = vrot.slane %v4346, %v4350
  %v4353 = vadd.f32 %v4345, %v4351
  %v4354 = vmax.f32 %v4353, 0.0
  %v4355 = vpack.c.bf16 %v4354, %v4354
  %v4356 = vld [vmem:[%s6] sm:$0xff]
  %v4357 = vld [vmem:[%s6 + $0x8] sm:$0xff]
  %v4358 = vld [vmem:[%s6 + $0x10] sm:$0xff]
  %v4359 = vld [vmem:[%s6 + $0x18] sm:$0xff]
  %v4360 = vld [vmem:[%s6 + $0x20] sm:$0xff]
  %v4361 = vld [vmem:[%s6 + $0x28] sm:$0xff]
  %v4362 = vld [vmem:[%s6 + $0x30] sm:$0xff]
  %v4363 = vld [vmem:[%s6 + $0x38] sm:$0xff]
  %v4364 = vld [vmem:[%s6 + $0x40] sm:$0xff]
  %v4365 = vld [vmem:[%s6 + $0x48] sm:$0xff]
  %v4366 = vld [vmem:[%s6 + $0x50] sm:$0xff]
  %v4367 = vld [vmem:[%s6 + $0x58] sm:$0xff]
  %v4368 = vld [vmem:[%s6 + $0x60] sm:$0xff]
  %v4369 = vld [vmem:[%s6 + $0x68] sm:$0xff]
  %v4370 = vld [vmem:[%s6 + $0x70] sm:$0xff]
  %v4371 = vld [vmem:[%s6 + $0x78] sm:$0xff]
  %v4372 = vld [vmem:[%s1] sm:$0xf]
  %v4373 = vld [vmem:[%s7] sm:$0xff]
  %v4374 = vld [vmem:[%s7 + $0x8] sm:$0xff]
  %v4375 = vld [vmem:[%s7 + $0x10] sm:$0xff]
  %v4376 = vld [vmem:[%s7 + $0x18] sm:$0xff]
  %v4377 = vld [vmem:[%s7 + $0x20] sm:$0xff]
  %v4378 = vld [vmem:[%s7 + $0x28] sm:$0xff]
  %v4379 = vld [vmem:[%s7 + $0x30] sm:$0xff]
  %v4380 = vld [vmem:[%s7 + $0x38] sm:$0xff]
  %v4381 = vld [vmem:[%s7 + $0x40] sm:$0xff]
  %v4382 = vld [vmem:[%s7 + $0x48] sm:$0xff]
  %v4383 = vld [vmem:[%s7 + $0x50] sm:$0xff]
  %v4384 = vld [vmem:[%s7 + $0x58] sm:$0xff]
  %v4385 = vld [vmem:[%s7 + $0x60] sm:$0xff]
  %v4386 = vld [vmem:[%s7 + $0x68] sm:$0xff]
  %v4387 = vld [vmem:[%s7 + $0x70] sm:$0xff]
  %v4388 = vld [vmem:[%s7 + $0x78] sm:$0xff]
  %v4405 = vunpack.c.l.b16 %v4373
  %v4406 = vunpack.c.h.b16 %v4373
  %v4407 = vunpack.c.l.b16 %v4374
  %v4408 = vunpack.c.h.b16 %v4374
  %v4409 = vunpack.c.l.b16 %v4375
  %v4410 = vunpack.c.h.b16 %v4375
  %v4411 = vunpack.c.l.b16 %v4376
  %v4412 = vunpack.c.h.b16 %v4376
  %v4413 = vunpack.c.l.b16 %v4377
  %v4414 = vunpack.c.h.b16 %v4377
  %v4415 = vunpack.c.l.b16 %v4378
  %v4416 = vunpack.c.h.b16 %v4378
  %v4417 = vunpack.c.l.b16 %v4379
  %v4418 = vunpack.c.h.b16 %v4379
  %v4419 = vunpack.c.l.b16 %v4380
  %v4420 = vunpack.c.h.b16 %v4380
  %v4421 = vunpack.c.l.b16 %v4381
  %v4422 = vunpack.c.h.b16 %v4381
  %v4423 = vunpack.c.l.b16 %v4382
  %v4424 = vunpack.c.h.b16 %v4382
  %v4425 = vunpack.c.l.b16 %v4383
  %v4426 = vunpack.c.h.b16 %v4383
  %v4427 = vunpack.c.l.b16 %v4384
  %v4428 = vunpack.c.h.b16 %v4384
  %v4429 = vunpack.c.l.b16 %v4385
  %v4430 = vunpack.c.h.b16 %v4385
  %v4431 = vunpack.c.l.b16 %v4386
  %v4432 = vunpack.c.h.b16 %v4386
  %v4433 = vunpack.c.l.b16 %v4387
  %v4434 = vunpack.c.h.b16 %v4387
  %v4435 = vunpack.c.l.b16 %v4388
  %v4436 = vunpack.c.h.b16 %v4388
  %v4437 = vpack.c.b16 %v4407, %v4405
  %v4438 = vpack.c.b16 %v4408, %v4406
  %v4439 = vpack.c.b16 %v4411, %v4409
  %v4440 = vpack.c.b16 %v4412, %v4410
  %v4441 = vpack.c.b16 %v4415, %v4413
  %v4442 = vpack.c.b16 %v4416, %v4414
  %v4443 = vpack.c.b16 %v4419, %v4417
  %v4444 = vpack.c.b16 %v4420, %v4418
  %v4445 = vpack.c.b16 %v4423, %v4421
  %v4446 = vpack.c.b16 %v4424, %v4422
  %v4447 = vpack.c.b16 %v4427, %v4425
  %v4448 = vpack.c.b16 %v4428, %v4426
  %v4449 = vpack.c.b16 %v4431, %v4429
  %v4450 = vpack.c.b16 %v4432, %v4430
  %v4451 = vpack.c.b16 %v4435, %v4433
  %v4452 = vpack.c.b16 %v4436, %v4434
  %4469 = vmatprep.subr.bf16.mxu0 %v4438
  %4470 = vmatpush1.bf16.msra.mxu0 %v4437
  %4471 = vmatprep.subr.bf16.mxu0 %v4440
  %4472 = vmatpush1.bf16.msra.mxu0 %v4439
  %4473 = vmatprep.subr.bf16.mxu0 %v4442
  %4474 = vmatpush1.bf16.msra.mxu0 %v4441
  %4475 = vmatprep.subr.bf16.mxu0 %v4444
  %4476 = vmatpush1.bf16.msra.mxu0 %v4443
  %4477 = vmatprep.subr.bf16.mxu0 %v4446
  %4478 = vmatpush1.bf16.msra.mxu0 %v4445
  %4479 = vmatprep.subr.bf16.mxu0 %v4448
  %4480 = vmatpush1.bf16.msra.mxu0 %v4447
  %4481 = vmatprep.subr.bf16.mxu0 %v4450
  %4482 = vmatpush1.bf16.msra.mxu0 %v4449
  %4483 = vmatprep.subr.bf16.mxu0 %v4452
  %4484 = vmatpush1.bf16.msra.mxu0 %v4451
  %4485 = vmatprep.subr.bf16.mxu0 0
  %4486 = vmatpush1.bf16.msra.mxu0 0
  %4487 = vmatprep.subr.bf16.mxu0 0
  %4488 = vmatpush1.bf16.msra.mxu0 0
  %4489 = vmatprep.subr.bf16.mxu0 0
  %4490 = vmatpush1.bf16.msra.mxu0 0
  %4491 = vmatprep.subr.bf16.mxu0 0
  %4492 = vmatpush1.bf16.msra.mxu0 0
  %4493 = vmatprep.subr.bf16.mxu0 0
  %4494 = vmatpush1.bf16.msra.mxu0 0
  %4495 = vmatprep.subr.bf16.mxu0 0
  %4496 = vmatpush1.bf16.msra.mxu0 0
  %4497 = vmatprep.subr.bf16.mxu0 0
  %4498 = vmatpush1.bf16.msra.mxu0 0
  %4499 = vmatprep.subr.bf16.mxu0 0
  %4500 = vmatpush1.bf16.msra.mxu0 0
  %4501 = vmatprep.mubr.bf16.mxu0 0
  %4502 = vmatmul.mubr.bf16.gmra.mrb[0].mxu0 %v4372
  %v4503 = vpop.f32.mrb[0].mxu0
  %v4504 = vadd.f32 0.0, %v4503
  %v4505 = vpop.f32.mrb[0].mxu0
  %v4506 = vadd.f32 0.0, %v4505
  %v4507 = vpop.f32.mrb[0].mxu0
  %v4508 = vpop.f32.mrb[0].mxu0
  %4509 = vdwg.mxu0
  %v4526 = vunpack.c.l.b16 %v4356
  %v4527 = vunpack.c.h.b16 %v4356
  %v4528 = vunpack.c.l.b16 %v4357
  %v4529 = vunpack.c.h.b16 %v4357
  %v4530 = vunpack.c.l.b16 %v4358
  %v4531 = vunpack.c.h.b16 %v4358
  %v4532 = vunpack.c.l.b16 %v4359
  %v4533 = vunpack.c.h.b16 %v4359
  %v4534 = vunpack.c.l.b16 %v4360
  %v4535 = vunpack.c.h.b16 %v4360
  %v4536 = vunpack.c.l.b16 %v4361
  %v4537 = vunpack.c.h.b16 %v4361
  %v4538 = vunpack.c.l.b16 %v4362
  %v4539 = vunpack.c.h.b16 %v4362
  %v4540 = vunpack.c.l.b16 %v4363
  %v4541 = vunpack.c.h.b16 %v4363
  %v4542 = vunpack.c.l.b16 %v4364
  %v4543 = vunpack.c.h.b16 %v4364
  %v4544 = vunpack.c.l.b16 %v4365
  %v4545 = vunpack.c.h.b16 %v4365
  %v4546 = vunpack.c.l.b16 %v4366
  %v4547 = vunpack.c.h.b16 %v4366
  %v4548 = vunpack.c.l.b16 %v4367
  %v4549 = vunpack.c.h.b16 %v4367
  %v4550 = vunpack.c.l.b16 %v4368
  %v4551 = vunpack.c.h.b16 %v4368
  %v4552 = vunpack.c.l.b16 %v4369
  %v4553 = vunpack.c.h.b16 %v4369
  %v4554 = vunpack.c.l.b16 %v4370
  %v4555 = vunpack.c.h.b16 %v4370
  %v4556 = vunpack.c.l.b16 %v4371
  %v4557 = vunpack.c.h.b16 %v4371
  %v4558 = vpack.c.b16 %v4528, %v4526
  %v4559 = vpack.c.b16 %v4529, %v4527
  %v4560 = vpack.c.b16 %v4532, %v4530
  %v4561 = vpack.c.b16 %v4533, %v4531
  %v4562 = vpack.c.b16 %v4536, %v4534
  %v4563 = vpack.c.b16 %v4537, %v4535
  %v4564 = vpack.c.b16 %v4540, %v4538
  %v4565 = vpack.c.b16 %v4541, %v4539
  %v4566 = vpack.c.b16 %v4544, %v4542
  %v4567 = vpack.c.b16 %v4545, %v4543
  %v4568 = vpack.c.b16 %v4548, %v4546
  %v4569 = vpack.c.b16 %v4549, %v4547
  %v4570 = vpack.c.b16 %v4552, %v4550
  %v4571 = vpack.c.b16 %v4553, %v4551
  %v4572 = vpack.c.b16 %v4556, %v4554
  %v4573 = vpack.c.b16 %v4557, %v4555
  %4590 = vmatprep.subr.bf16.mxu0 %v4559
  %4591 = vmatpush1.bf16.msra.mxu0 %v4558
  %4592 = vmatprep.subr.bf16.mxu0 %v4561
  %4593 = vmatpush1.bf16.msra.mxu0 %v4560
  %4594 = vmatprep.subr.bf16.mxu0 %v4563
  %4595 = vmatpush1.bf16.msra.mxu0 %v4562
  %4596 = vmatprep.subr.bf16.mxu0 %v4565
  %4597 = vmatpush1.bf16.msra.mxu0 %v4564
  %4598 = vmatprep.subr.bf16.mxu0 %v4567
  %4599 = vmatpush1.bf16.msra.mxu0 %v4566
  %4600 = vmatprep.subr.bf16.mxu0 %v4569
  %4601 = vmatpush1.bf16.msra.mxu0 %v4568
  %4602 = vmatprep.subr.bf16.mxu0 %v4571
  %4603 = vmatpush1.bf16.msra.mxu0 %v4570
  %4604 = vmatprep.subr.bf16.mxu0 %v4573
  %4605 = vmatpush1.bf16.msra.mxu0 %v4572
  %4606 = vmatprep.subr.bf16.mxu0 0
  %4607 = vmatpush1.bf16.msra.mxu0 0
  %4608 = vmatprep.subr.bf16.mxu0 0
  %4609 = vmatpush1.bf16.msra.mxu0 0
  %4610 = vmatprep.subr.bf16.mxu0 0
  %4611 = vmatpush1.bf16.msra.mxu0 0
  %4612 = vmatprep.subr.bf16.mxu0 0
  %4613 = vmatpush1.bf16.msra.mxu0 0
  %4614 = vmatprep.subr.bf16.mxu0 0
  %4615 = vmatpush1.bf16.msra.mxu0 0
  %4616 = vmatprep.subr.bf16.mxu0 0
  %4617 = vmatpush1.bf16.msra.mxu0 0
  %4618 = vmatprep.subr.bf16.mxu0 0
  %4619 = vmatpush1.bf16.msra.mxu0 0
  %4620 = vmatprep.subr.bf16.mxu0 0
  %4621 = vmatpush1.bf16.msra.mxu0 0
  %4622 = vmatprep.mubr.bf16.mxu0 0
  %4623 = vmatmul.mubr.bf16.gmra.mrb[0].mxu0 %v4355
  %v4624 = vpop.f32.mrb[0].mxu0
  %v4625 = vadd.f32 %v4504, %v4624
  %v4626 = vpop.f32.mrb[0].mxu0
  %v4627 = vadd.f32 %v4506, %v4626
  %v4628 = vpop.f32.mrb[0].mxu0
  %v4629 = vpop.f32.mrb[0].mxu0
  %4630 = vdwg.mxu0
  %v4631 = vld [vmem:[%s8] sm:$0x3]
  %v4633 = vlaneseq
  %v4634 = vshrl.u32 %v4633, 7
  %v4635 = vsub.s32 0, %v4634
  %v4636 = vrot.slane %v4631, %v4635
  %v4637 = vlaneseq
  %v4638 = vshrl.u32 %v4637, 7
  %v4639 = vsub.s32 1, %v4638
  %v4640 = vrot.slane %v4631, %v4639
  %v4643 = vadd.f32 %v4625, %v4636
  %v4644 = vadd.f32 %v4627, %v4640
  %v4645 = vmax.f32 %v4643, 0.0
  %v4646 = vmax.f32 %v4644, 0.0
  %v4647 = vpack.c.bf16 %v4645, %v4645
  %v4648 = vpack.c.bf16 %v4646, %v4646
  %v4649 = vld [vmem:[%s9] sm:$0xff]
  %v4650 = vld [vmem:[%s9 + $0x8] sm:$0xff]
  %v4651 = vld [vmem:[%s9 + $0x10] sm:$0xff]
  %v4652 = vld [vmem:[%s9 + $0x18] sm:$0xff]
  %v4653 = vld [vmem:[%s9 + $0x20] sm:$0xff]
  %v4654 = vld [vmem:[%s9 + $0x28] sm:$0xff]
  %v4655 = vld [vmem:[%s9 + $0x30] sm:$0xff]
  %v4656 = vld [vmem:[%s9 + $0x38] sm:$0xff]
  %v4657 = vld [vmem:[%s9 + $0x40] sm:$0xff]
  %v4658 = vld [vmem:[%s9 + $0x48] sm:$0xff]
  %v4659 = vld [vmem:[%s9 + $0x50] sm:$0xff]
  %v4660 = vld [vmem:[%s9 + $0x58] sm:$0xff]
  %v4661 = vld [vmem:[%s9 + $0x60] sm:$0xff]
  %v4662 = vld [vmem:[%s9 + $0x68] sm:$0xff]
  %v4663 = vld [vmem:[%s9 + $0x70] sm:$0xff]
  %v4664 = vld [vmem:[%s9 + $0x78] sm:$0xff]
  %v4665 = vld [vmem:[%s9 + $0x80] sm:$0xff]
  %v4666 = vld [vmem:[%s9 + $0x88] sm:$0xff]
  %v4667 = vld [vmem:[%s9 + $0x90] sm:$0xff]
  %v4668 = vld [vmem:[%s9 + $0x98] sm:$0xff]
  %v4669 = vld [vmem:[%s9 + $0xa0] sm:$0xff]
  %v4670 = vld [vmem:[%s9 + $0xa8] sm:$0xff]
  %v4671 = vld [vmem:[%s9 + $0xb0] sm:$0xff]
  %v4672 = vld [vmem:[%s9 + $0xb8] sm:$0xff]
  %v4673 = vld [vmem:[%s9 + $0xc0] sm:$0xff]
  %v4674 = vld [vmem:[%s9 + $0xc8] sm:$0xff]
  %v4675 = vld [vmem:[%s9 + $0xd0] sm:$0xff]
  %v4676 = vld [vmem:[%s9 + $0xd8] sm:$0xff]
  %v4677 = vld [vmem:[%s9 + $0xe0] sm:$0xff]
  %v4678 = vld [vmem:[%s9 + $0xe8] sm:$0xff]
  %v4679 = vld [vmem:[%s9 + $0xf0] sm:$0xff]
  %v4680 = vld [vmem:[%s9 + $0xf8] sm:$0xff]
  %v4681 = vld [vmem:[%s10] sm:$0x3]
  %v4683 = vlaneseq
  %v4684 = vshrl.u32 %v4683, 7
  %v4685 = vsub.s32 0, %v4684
  %v4686 = vrot.slane %v4681, %v4685
  %v4687 = vlaneseq
  %v4688 = vshrl.u32 %v4687, 7
  %v4689 = vsub.s32 1, %v4688
  %v4690 = vrot.slane %v4681, %v4689
  %v4725 = vunpack.c.l.b16 %v4649
  %v4726 = vunpack.c.h.b16 %v4649
  %v4727 = vunpack.c.l.b16 %v4650
  %v4728 = vunpack.c.h.b16 %v4650
  %v4729 = vunpack.c.l.b16 %v4651
  %v4730 = vunpack.c.h.b16 %v4651
  %v4731 = vunpack.c.l.b16 %v4652
  %v4732 = vunpack.c.h.b16 %v4652
  %v4733 = vunpack.c.l.b16 %v4653
  %v4734 = vunpack.c.h.b16 %v4653
  %v4735 = vunpack.c.l.b16 %v4654
  %v4736 = vunpack.c.h.b16 %v4654
  %v4737 = vunpack.c.l.b16 %v4655
  %v4738 = vunpack.c.h.b16 %v4655
  %v4739 = vunpack.c.l.b16 %v4656
  %v4740 = vunpack.c.h.b16 %v4656
  %v4741 = vunpack.c.l.b16 %v4657
  %v4742 = vunpack.c.h.b16 %v4657
  %v4743 = vunpack.c.l.b16 %v4658
  %v4744 = vunpack.c.h.b16 %v4658
  %v4745 = vunpack.c.l.b16 %v4659
  %v4746 = vunpack.c.h.b16 %v4659
  %v4747 = vunpack.c.l.b16 %v4660
  %v4748 = vunpack.c.h.b16 %v4660
  %v4749 = vunpack.c.l.b16 %v4661
  %v4750 = vunpack.c.h.b16 %v4661
  %v4751 = vunpack.c.l.b16 %v4662
  %v4752 = vunpack.c.h.b16 %v4662
  %v4753 = vunpack.c.l.b16 %v4663
  %v4754 = vunpack.c.h.b16 %v4663
  %v4755 = vunpack.c.l.b16 %v4664
  %v4756 = vunpack.c.h.b16 %v4664
  %v4757 = vunpack.c.l.b16 %v4665
  %v4758 = vunpack.c.h.b16 %v4665
  %v4759 = vunpack.c.l.b16 %v4666
  %v4760 = vunpack.c.h.b16 %v4666
  %v4761 = vunpack.c.l.b16 %v4667
  %v4762 = vunpack.c.h.b16 %v4667
  %v4763 = vunpack.c.l.b16 %v4668
  %v4764 = vunpack.c.h.b16 %v4668
  %v4765 = vunpack.c.l.b16 %v4669
  %v4766 = vunpack.c.h.b16 %v4669
  %v4767 = vunpack.c.l.b16 %v4670
  %v4768 = vunpack.c.h.b16 %v4670
  %v4769 = vunpack.c.l.b16 %v4671
  %v4770 = vunpack.c.h.b16 %v4671
  %v4771 = vunpack.c.l.b16 %v4672
  %v4772 = vunpack.c.h.b16 %v4672
  %v4773 = vunpack.c.l.b16 %v4673
  %v4774 = vunpack.c.h.b16 %v4673
  %v4775 = vunpack.c.l.b16 %v4674
  %v4776 = vunpack.c.h.b16 %v4674
  %v4777 = vunpack.c.l.b16 %v4675
  %v4778 = vunpack.c.h.b16 %v4675
  %v4779 = vunpack.c.l.b16 %v4676
  %v4780 = vunpack.c.h.b16 %v4676
  %v4781 = vunpack.c.l.b16 %v4677
  %v4782 = vunpack.c.h.b16 %v4677
  %v4783 = vunpack.c.l.b16 %v4678
  %v4784 = vunpack.c.h.b16 %v4678
  %v4785 = vunpack.c.l.b16 %v4679
  %v4786 = vunpack.c.h.b16 %v4679
  %v4787 = vunpack.c.l.b16 %v4680
  %v4788 = vunpack.c.h.b16 %v4680
  %v4789 = vpack.c.b16 %v4727, %v4725
  %v4790 = vpack.c.b16 %v4728, %v4726
  %v4791 = vpack.c.b16 %v4731, %v4729
  %v4792 = vpack.c.b16 %v4732, %v4730
  %v4793 = vpack.c.b16 %v4735, %v4733
  %v4794 = vpack.c.b16 %v4736, %v4734
  %v4795 = vpack.c.b16 %v4739, %v4737
  %v4796 = vpack.c.b16 %v4740, %v4738
  %v4797 = vpack.c.b16 %v4743, %v4741
  %v4798 = vpack.c.b16 %v4744, %v4742
  %v4799 = vpack.c.b16 %v4747, %v4745
  %v4800 = vpack.c.b16 %v4748, %v4746
  %v4801 = vpack.c.b16 %v4751, %v4749
  %v4802 = vpack.c.b16 %v4752, %v4750
  %v4803 = vpack.c.b16 %v4755, %v4753
  %v4804 = vpack.c.b16 %v4756, %v4754
  %v4805 = vpack.c.b16 %v4759, %v4757
  %v4806 = vpack.c.b16 %v4760, %v4758
  %v4807 = vpack.c.b16 %v4763, %v4761
  %v4808 = vpack.c.b16 %v4764, %v4762
  %v4809 = vpack.c.b16 %v4767, %v4765
  %v4810 = vpack.c.b16 %v4768, %v4766
  %v4811 = vpack.c.b16 %v4771, %v4769
  %v4812 = vpack.c.b16 %v4772, %v4770
  %v4813 = vpack.c.b16 %v4775, %v4773
  %v4814 = vpack.c.b16 %v4776, %v4774
  %v4815 = vpack.c.b16 %v4779, %v4777
  %v4816 = vpack.c.b16 %v4780, %v4778
  %v4817 = vpack.c.b16 %v4783, %v4781
  %v4818 = vpack.c.b16 %v4784, %v4782
  %v4819 = vpack.c.b16 %v4787, %v4785
  %v4820 = vpack.c.b16 %v4788, %v4786
  %4853 = vmatprep.subr.bf16.mxu0 %v4790
  %4854 = vmatpush1.bf16.msra.mxu0 %v4789
  %4855 = vmatprep.subr.bf16.mxu0 %v4792
  %4856 = vmatpush1.bf16.msra.mxu0 %v4791
  %4857 = vmatprep.subr.bf16.mxu0 %v4794
  %4858 = vmatpush1.bf16.msra.mxu0 %v4793
  %4859 = vmatprep.subr.bf16.mxu0 %v4796
  %4860 = vmatpush1.bf16.msra.mxu0 %v4795
  %4861 = vmatprep.subr.bf16.mxu0 %v4798
  %4862 = vmatpush1.bf16.msra.mxu0 %v4797
  %4863 = vmatprep.subr.bf16.mxu0 %v4800
  %4864 = vmatpush1.bf16.msra.mxu0 %v4799
  %4865 = vmatprep.subr.bf16.mxu0 %v4802
  %4866 = vmatpush1.bf16.msra.mxu0 %v4801
  %4867 = vmatprep.subr.bf16.mxu0 %v4804
  %4868 = vmatpush1.bf16.msra.mxu0 %v4803
  %4869 = vmatprep.subr.bf16.mxu0 %v4806
  %4870 = vmatpush1.bf16.msra.mxu0 %v4805
  %4871 = vmatprep.subr.bf16.mxu0 %v4808
  %4872 = vmatpush1.bf16.msra.mxu0 %v4807
  %4873 = vmatprep.subr.bf16.mxu0 %v4810
  %4874 = vmatpush1.bf16.msra.mxu0 %v4809
  %4875 = vmatprep.subr.bf16.mxu0 %v4812
  %4876 = vmatpush1.bf16.msra.mxu0 %v4811
  %4877 = vmatprep.subr.bf16.mxu0 %v4814
  %4878 = vmatpush1.bf16.msra.mxu0 %v4813
  %4879 = vmatprep.subr.bf16.mxu0 %v4816
  %4880 = vmatpush1.bf16.msra.mxu0 %v4815
  %4881 = vmatprep.subr.bf16.mxu0 %v4818
  %4882 = vmatpush1.bf16.msra.mxu0 %v4817
  %4883 = vmatprep.subr.bf16.mxu0 %v4820
  %4884 = vmatpush1.bf16.msra.mxu0 %v4819
  %4885 = vmatprep.mubr.bf16.mxu0 %v4648
  %4886 = vmatmul.mubr.bf16.gmra.mrb[0].mxu0 %v4647
  %v4887 = vpop.f32.mrb[0].mxu0
  %v4888 = vadd.f32 %v4686, %v4887
  %v4889 = vpop.f32.mrb[0].mxu0
  %v4890 = vadd.f32 %v4690, %v4889
  %v4891 = vpop.f32.mrb[0].mxu0
  %v4892 = vpop.f32.mrb[0].mxu0
  %4893 = vdwg.mxu0
  %v4894 = vmax.f32 %v4888, 0.0
  %v4895 = vmax.f32 %v4890, 0.0
  %v4896 = vld [vmem:[%s11] sm:$0x3]
  %v4898 = vlaneseq
  %v4899 = vshrl.u32 %v4898, 7
  %v4900 = vsub.s32 0, %v4899
  %v4901 = vrot.slane %v4896, %v4900
  %v4902 = vlaneseq
  %v4903 = vshrl.u32 %v4902, 7
  %v4904 = vsub.s32 1, %v4903
  %v4905 = vrot.slane %v4896, %v4904
  %v4908 = vmul.f32 %v4894, %v4901
  %v4909 = vmul.f32 %v4895, %v4905
  %v4910 = vadd.f32 %v4908, %v4909
  %4911 = vadd.xlane.f32.xlu0 %v4910
  %v4912 = vpop.xlane.xlu0 %4911
  %v4913 = vld [vmem:[%s12] sm:$0x1]
  %v4915 = vlaneseq
  %v4916 = vshrl.u32 %v4915, 7
  %v4917 = vsub.s32 0, %v4916
  %v4918 = vrot.slane %v4913, %v4917
  %v4920 = vadd.f32 %v4912, %v4918
  %4921 = vst [vmem:[%s13] sm:$0xff] %v4920
  // Predicated region
  $region54: #{vanilla_cnn_q_forward.5} parent=0 // pred_check
    _
  $region55: #{vanilla_cnn_q_forward.5} parent=0 // pred_check_branch
    %4923 = sbr.rel (0) target = $region57
  $region56: #{vanilla_cnn_q_forward.5} parent=0 // pred_region
    _
  $region57: #{vanilla_cnn_q_forward.5} parent=0 // pred_fallthru
    _
  // Predicated region
  $region58: #{vanilla_cnn_q_forward.5} parent=0 // pred_check
    _
  $region59: #{vanilla_cnn_q_forward.5} parent=0 // pred_check_branch
    %4925 = sbr.rel (0) target = $region61
  $region60: #{vanilla_cnn_q_forward.5} parent=0 // pred_region
    _
  $region61: #{vanilla_cnn_q_forward.5} parent=0 // pred_fallthru
    _

</llo_original>
